<compile_context>
chip_gen: v5e
topology: v5e:2x2
jax: 0.10.0
libtpu: 0.0.40
codegen_flags: <defaults>
</compile_context>

<pallas_src>
import functools

import jax
import jax.numpy as jnp
from jax.experimental import pallas as pl
from jax.experimental.pallas import tpu as pltpu


# ----------------------------- fused kernel (one image per grid step) -----------------------------
def _cross_attention_kernel(
    temp_ref,            # (1, C)  f32   temperature expanded per channel
    hbias_ref,           # (C, C)  f32   0 within a head, -1e9 across heads
    eye_ref,             # (C, C)  f32   identity (MXU transpose of q for the gram matrix)
    ms_ref, pan_ref,     # (Nf, C) bf16  halo-padded + flattened inputs, Nf = (H+4)*Wp
    mt_ref,              # (Nf, 1) f32   1.0 at original pixels of the padded frame
    mv_ref,              # (No, 1) f32   1.0 at valid columns of the output window, No = H*Wp
    qw_ref, qb_ref, qdw_ref, qdb_ref,
    kvw_ref, kvb_ref, kvdw_ref, kvdb_ref,
    pw_ref, pb_ref,
    o_ref,               # (No, C) f32
    *, H, Wp, C,
):
    f32 = jnp.float32
    bf16 = jnp.bfloat16
    No = H * Wp
    Nw = No + 2 * Wp          # window covering all three ky offsets

    mt = mt_ref[...]
    mv = mv_ref[...]

    # ---- q branch: 1x1 conv + full 3x3 conv, bf16 MXU matmuls with f32 accumulation ----
    tq = (jnp.dot(ms_ref[...], qw_ref[...], preferred_element_type=f32) + qb_ref[...]) * mt
    tq_b = tq.astype(bf16)
    qdw = qdw_ref[...]
    q_acc = jnp.zeros((No, C), f32)
    for kx in range(3):
        # one column-shifted window per kx; Wp % 8 == 0 makes every ky sub-slice sublane aligned
        start = Wp + (kx - 1)
        win = tq_b[start:start + Nw, :]
        for ky in range(3):
            tap = ky * 3 + kx
            q_acc = q_acc + jnp.dot(win[ky * Wp:ky * Wp + No, :],
                                    qdw[tap * C:(tap + 1) * C, :],
                                    preferred_element_type=f32)
    q_full = (q_acc + qdb_ref[...]) * mv          # exactly zero on invalid (padded) columns

    # ---- kv branch: 1x1 conv (MXU) + depthwise 3x3 (VPU), kept f32 ----
    tkv = (jnp.dot(pan_ref[...], kvw_ref[...], preferred_element_type=f32) + kvb_ref[...]) * mt
    kvdw = kvdw_ref[...]
    kv_acc = jnp.zeros((No, 2 * C), f32)
    for kx in range(3):
        start = Wp + (kx - 1)
        win = tkv[start:start + Nw, :]
        for ky in range(3):
            tap = ky * 3 + kx
            kv_acc = kv_acc + win[ky * Wp:ky * Wp + No, :] * kvdw[tap:tap + 1, :]
    kv_full = (kv_acc + kvdb_ref[...]) * mv
    k_full = kv_full[:, :C]
    v_full = kv_full[:, C:]

    # ---- channel attention: gram matrix + (C, C) softmax + apply, all on the MXU ----
    # F.normalize over pixels folded into a row rescale of q (with temperature) and a column
    # rescale of the tiny gram matrix.
    nq = jnp.sum(q_full * q_full, axis=0, keepdims=True)             # (1, C)
    nk = jnp.sum(k_full * k_full, axis=0, keepdims=True)             # (1, C)
    rq = jax.lax.rsqrt(jnp.maximum(nq, 1e-24))                       # == 1 / max(||q||_2, 1e-12)
    rk = jax.lax.rsqrt(jnp.maximum(nk, 1e-24))
    q_scaled = q_full * (rq * temp_ref[...])                         # one (No, C) VPU pass

    # transpose q via the MXU (NT form), then gram S[i, j] = sum_n q_scaled[n, i] * k_full[n, j]
    qsT = jax.lax.dot_general(eye_ref[...], q_scaled, (((1,), (1,)), ((), ())),
                              preferred_element_type=f32)            # (C, No)
    S = jnp.dot(qsT, k_full, preferred_element_type=f32)             # (C, C)
    logits = S * rk + hbias_ref[...]                                 # block-diagonal head mask

    m = jnp.max(logits, axis=-1, keepdims=True)
    e = jnp.exp(logits - m)
    denom = jnp.sum(e, axis=-1, keepdims=True)
    P = e * pl.reciprocal(denom, approx=True)                        # (C, C); zero across heads

    # attention apply + output projection as two dense (No, C) matmuls
    attn_out = jax.lax.dot_general(v_full, P, (((1,), (1,)), ((), ())),
                                   preferred_element_type=f32)       # out[n, i] = sum_j P[i,j] v[n,j]
    y = jnp.dot(attn_out.astype(bf16), pw_ref[...], preferred_element_type=f32) + pb_ref[...]
    o_ref[...] = y.astype(o_ref.dtype)


# ----------------------------------------- wrapper ------------------------------------------------
def cross_attention(params, ms, pan, *, num_heads):
    """ms, pan: (B, C, H, W) float32 (PyTorch NCHW). Returns (B, C, H, W)."""
    B, C, H, W = ms.shape
    assert C % num_heads == 0
    ch = C // num_heads
    Wp = ((W + 2 + 7) // 8) * 8          # padded width, multiple of 8 -> aligned ky tap offsets
    Nf = (H + 4) * Wp                    # halo-padded, flattened pixel count
    No = H * Wp                          # output window (all image rows, padded columns kept)

    def prep(x):
        x = jnp.transpose(x, (0, 2, 3, 1)).astype(jnp.float32)        # NHWC
        x = jnp.pad(x, ((0, 0), (2, 2), (1, Wp - W - 1), (0, 0)))     # row halo + aligned col pad
        return x.reshape(B, Nf, C).astype(jnp.bfloat16)               # bf16 MXU operands

    ms_f, pan_f = prep(ms), prep(pan)

    # tiny masks / constants, computed once in glue
    col = jnp.arange(Wp)
    row = jnp.arange(H + 4)
    cmask = (col >= 1) & (col <= W)
    rmask = (row >= 2) & (row < H + 2)
    mask_t = (rmask[:, None] & cmask[None, :]).astype(jnp.float32).reshape(Nf, 1)
    mask_v = jnp.broadcast_to(cmask[None, :], (H, Wp)).astype(jnp.float32).reshape(No, 1)

    head = jnp.arange(C) // ch
    head_bias = jnp.where(head[:, None] == head[None, :], 0.0, -1e9).astype(jnp.float32)
    eye = jnp.eye(C, dtype=jnp.float32)
    temp_row = jnp.repeat(params["temperature"].reshape(-1), ch).reshape(1, C).astype(jnp.float32)

    bf = lambda a: a.astype(jnp.bfloat16)

    # explicit VMEM budget with headroom (tiny at these shapes; capped well below v7x's 64 MiB)
    est = 4 * (8 * Nf * C + 24 * No * C + 64 * C * C) + (2 << 20)
    vmem_limit = int(min(48 * 2 ** 20, max(2 * est, 16 * 2 ** 20)))

    kernel = functools.partial(_cross_attention_kernel, H=H, Wp=Wp, C=C)

    def _rep(shape):
        return pl.BlockSpec(shape, lambda b: (0,) * len(shape))

    out = pl.pallas_call(
        kernel,
        out_shape=jax.ShapeDtypeStruct((B, No, C), jnp.float32),
        grid=(B,),
        in_specs=[
            _rep((1, C)),                                      # temperature (per channel)
            _rep((C, C)),                                      # head bias mask
            _rep((C, C)),                                      # identity
            pl.BlockSpec((None, Nf, C), lambda b: (b, 0, 0)),  # ms (padded, flat, bf16)
            pl.BlockSpec((None, Nf, C), lambda b: (b, 0, 0)),  # pan (padded, flat, bf16)
            _rep((Nf, 1)),                                     # mask_t
            _rep((No, 1)),                                     # mask_v
            _rep((C, C)),                                      # q_w
            _rep((1, C)),                                      # q_b
            _rep((9 * C, C)),                                  # qdw_w
            _rep((1, C)),                                      # qdw_b
            _rep((C, 2 * C)),                                  # kv_w
            _rep((1, 2 * C)),                                  # kv_b
            _rep((9, 2 * C)),                                  # kvdw_w
            _rep((1, 2 * C)),                                  # kvdw_b
            _rep((C, C)),                                      # proj_w
            _rep((1, C)),                                      # proj_b
        ],
        out_specs=pl.BlockSpec((None, No, C), lambda b: (b, 0, 0)),
        compiler_params=pltpu.CompilerParams(
            dimension_semantics=("parallel",),
            vmem_limit_bytes=vmem_limit,
        ),
    )(temp_row, head_bias, eye, ms_f, pan_f, mask_t, mask_v,
      bf(params["q_w"]), params["q_b"], bf(params["qdw_w"]), params["qdw_b"],
      bf(params["kv_w"]), params["kv_b"], params["kvdw_w"], params["kvdw_b"],
      bf(params["proj_w"]), params["proj_b"])

    y = out.reshape(B, H, Wp, C)[:, :, 1:W + 1, :]     # drop the padded columns
    return jnp.transpose(y, (0, 3, 1, 2))              # back to NCHW


# --------------------------------- pure-JAX reference (for checking) ------------------------------
def _reference_forward(params, ms, pan, *, num_heads):
    B, C, H, W = ms.shape
    ch = C // num_heads
    hp = jax.lax.Precision.HIGHEST

    def conv1x1(x, w, b):
        return jnp.einsum('bchw,cd->bdhw', x, w, precision=hp) + b.reshape(1, -1, 1, 1)

    def conv3x3_full(x, w, b):
        cin, cout = x.shape[1], w.shape[1]
        w4 = w.reshape(3, 3, cin, cout)
        xp = jnp.pad(x, ((0, 0), (0, 0), (1, 1), (1, 1)))
        y = jnp.zeros((B, cout, H, W), jnp.float32)
        for ky in range(3):
            for kx in range(3):
                y = y + jnp.einsum('bchw,cd->bdhw', xp[:, :, ky:ky + H, kx:kx + W],
                                   w4[ky, kx], precision=hp)
        return y + b.reshape(1, -1, 1, 1)

    def conv3x3_dw(x, w, b):
        cch = x.shape[1]
        w4 = w.reshape(3, 3, cch)
        xp = jnp.pad(x, ((0, 0), (0, 0), (1, 1), (1, 1)))
        y = jnp.zeros_like(x)
        for ky in range(3):
            for kx in range(3):
                y = y + xp[:, :, ky:ky + H, kx:kx + W] * w4[ky, kx].reshape(1, cch, 1, 1)
        return y + b.reshape(1, -1, 1, 1)

    kv = conv3x3_dw(conv1x1(pan, params["kv_w"], params["kv_b"]), params["kvdw_w"], params["kvdw_b"])
    k, v = kv[:, :C], kv[:, C:]
    q = conv3x3_full(conv1x1(ms, params["q_w"], params["q_b"]), params["qdw_w"], params["qdw_b"])

    def to_heads(x):
        return x.reshape(B, num_heads, ch, H * W)

    q, k, v = to_heads(q), to_heads(k), to_heads(v)

    def l2n(x):
        n = jnp.sqrt(jnp.sum(x * x, axis=-1, keepdims=True))
        return x / jnp.maximum(n, 1e-12)

    qn, kn = l2n(q), l2n(k)
    attn = jnp.einsum('bhcp,bhdp->bhcd', qn, kn, precision=hp)
    attn = attn * params["temperature"].reshape(1, num_heads, 1, 1)
    attn = jax.nn.softmax(attn, axis=-1)
    out = jnp.einsum('bhcd,bhdp->bhcp', attn, v, precision=hp).reshape(B, C, H, W)
    return conv1x1(out, params["proj_w"], params["proj_b"])


# ----------------------------------- synthetic parameter init -------------------------------------
def init_params(key, dim, num_heads):
    C = dim
    ks = jax.random.split(key, 10)

    def w(k, shape):
        return jax.random.normal(k, shape, jnp.float32) / jnp.sqrt(shape[0])

    def b(k, n):
        return 0.1 * jax.random.normal(k, (1, n), jnp.float32)

    return {
        "q_w": w(ks[0], (C, C)),         "q_b": b(ks[1], C),
        "qdw_w": w(ks[2], (9 * C, C)),   "qdw_b": b(ks[3], C),
        "kv_w": w(ks[4], (C, 2 * C)),    "kv_b": b(ks[5], 2 * C),
        "kvdw_w": w(ks[6], (9, 2 * C)),  "kvdw_b": b(ks[7], 2 * C),
        "proj_w": w(ks[8], (C, C)),      "proj_b": b(ks[9], C),
        "temperature": jnp.ones((1, num_heads), jnp.float32),
    }


if __name__ == "__main__":
    key = jax.random.PRNGKey(0)
    k1, k2, kp = jax.random.split(key, 3)
    B, C, H, W = 2, 4, 16, 16
    num_heads = 2

    ms = jax.random.normal(k1, (B, C, H, W), jnp.float32)
    pan = jax.random.normal(k2, (B, C, H, W), jnp.float32)
    params = init_params(kp, C, num_heads)

    fwd = jax.jit(functools.partial(cross_attention, params, num_heads=num_heads))
    out = fwd(ms, pan)
    jax.block_until_ready(out)
    assert out.shape == (B, C, H, W), out.shape

    ref = _reference_forward(params, ms, pan, num_heads=num_heads)
    # tolerance covers the bf16 conv/projection operands + approx reciprocal in the softmax
    err = float(jnp.max(jnp.abs(out - ref)))
    assert err < 5e-2, f"mismatch vs reference: max abs err {err}"

    print("KERNEL_OK")
</pallas_src>

<mosaic_0001>
module attributes {stable_mosaic.version = 11 : i64} {
  func.func @_cross_attention_kernel(%arg0: i32, %arg1: memref<1x4xf32, #tpu.memory_space<vmem>>, %arg2: memref<4x4xf32, #tpu.memory_space<vmem>>, %arg3: memref<4x4xf32, #tpu.memory_space<vmem>>, %arg4: memref<1x480x4xbf16, #tpu.memory_space<vmem>>, %arg5: memref<1x480x4xbf16, #tpu.memory_space<vmem>>, %arg6: memref<480x1xf32, #tpu.memory_space<vmem>>, %arg7: memref<384x1xf32, #tpu.memory_space<vmem>>, %arg8: memref<4x4xbf16, #tpu.memory_space<vmem>>, %arg9: memref<1x4xf32, #tpu.memory_space<vmem>>, %arg10: memref<36x4xbf16, #tpu.memory_space<vmem>>, %arg11: memref<1x4xf32, #tpu.memory_space<vmem>>, %arg12: memref<4x8xbf16, #tpu.memory_space<vmem>>, %arg13: memref<1x8xf32, #tpu.memory_space<vmem>>, %arg14: memref<9x8xf32, #tpu.memory_space<vmem>>, %arg15: memref<1x8xf32, #tpu.memory_space<vmem>>, %arg16: memref<4x4xbf16, #tpu.memory_space<vmem>>, %arg17: memref<1x4xf32, #tpu.memory_space<vmem>>, %arg18: memref<1x384x4xf32, #tpu.memory_space<vmem>>) attributes {dimension_semantics = [#tpu.dimension_semantics<parallel>], iteration_bounds = array<i64: 2>, scalar_prefetch = 0 : i64, scratch_operands = 0 : i64, tpu.core_type = #tpu.core_type<tc>, window_params = [{pipeline_mode = #tpu.pipeline_mode<synchronous>, transform_indices = @transform_0, window_bounds = array<i64: 1, 4>}, {pipeline_mode = #tpu.pipeline_mode<synchronous>, transform_indices = @transform_1, window_bounds = array<i64: 4, 4>}, {pipeline_mode = #tpu.pipeline_mode<synchronous>, transform_indices = @transform_2, window_bounds = array<i64: 4, 4>}, {transform_indices = @transform_3, window_bounds = array<i64: 1, 480, 4>}, {transform_indices = @transform_4, window_bounds = array<i64: 1, 480, 4>}, {pipeline_mode = #tpu.pipeline_mode<synchronous>, transform_indices = @transform_5, window_bounds = array<i64: 480, 1>}, {pipeline_mode = #tpu.pipeline_mode<synchronous>, transform_indices = @transform_6, window_bounds = array<i64: 384, 1>}, {pipeline_mode = #tpu.pipeline_mode<synchronous>, transform_indices = @transform_7, window_bounds = array<i64: 4, 4>}, {pipeline_mode = #tpu.pipeline_mode<synchronous>, transform_indices = @transform_8, window_bounds = array<i64: 1, 4>}, {pipeline_mode = #tpu.pipeline_mode<synchronous>, transform_indices = @transform_9, window_bounds = array<i64: 36, 4>}, {pipeline_mode = #tpu.pipeline_mode<synchronous>, transform_indices = @transform_10, window_bounds = array<i64: 1, 4>}, {pipeline_mode = #tpu.pipeline_mode<synchronous>, transform_indices = @transform_11, window_bounds = array<i64: 4, 8>}, {pipeline_mode = #tpu.pipeline_mode<synchronous>, transform_indices = @transform_12, window_bounds = array<i64: 1, 8>}, {pipeline_mode = #tpu.pipeline_mode<synchronous>, transform_indices = @transform_13, window_bounds = array<i64: 9, 8>}, {pipeline_mode = #tpu.pipeline_mode<synchronous>, transform_indices = @transform_14, window_bounds = array<i64: 1, 8>}, {pipeline_mode = #tpu.pipeline_mode<synchronous>, transform_indices = @transform_15, window_bounds = array<i64: 4, 4>}, {pipeline_mode = #tpu.pipeline_mode<synchronous>, transform_indices = @transform_16, window_bounds = array<i64: 1, 4>}, {transform_indices = @transform_17, window_bounds = array<i64: 1, 384, 4>}]} {
    %c0 = arith.constant 0 : index
    %c0_0 = arith.constant 0 : index
    %0 = vector.load %arg6[%c0, %c0_0] : memref<480x1xf32, #tpu.memory_space<vmem>>, vector<480x1xf32>
    %c0_1 = arith.constant 0 : index
    %c0_2 = arith.constant 0 : index
    %1 = vector.load %arg7[%c0_1, %c0_2] : memref<384x1xf32, #tpu.memory_space<vmem>>, vector<384x1xf32>
    %c0_3 = arith.constant 0 : index
    %c0_4 = arith.constant 0 : index
    %c0_5 = arith.constant 0 : index
    %2 = vector.load %arg4[%c0_3, %c0_4, %c0_5] : memref<1x480x4xbf16, #tpu.memory_space<vmem>>, vector<1x480x4xbf16>
    %3 = vector.shape_cast %2 : vector<1x480x4xbf16> to vector<480x4xbf16>
    %c0_6 = arith.constant 0 : index
    %c0_7 = arith.constant 0 : index
    %4 = vector.load %arg8[%c0_6, %c0_7] : memref<4x4xbf16, #tpu.memory_space<vmem>>, vector<4x4xbf16>
    %cst = arith.constant dense<0.000000e+00> : vector<480x4xf32>
    %5 = tpu.matmul %3, %4, %cst {dimension_numbers = #tpu.dot_dimension_numbers<[1], [0], [0], [1], [0, 0, 1, 1], [], []>} : vector<480x4xbf16>, vector<4x4xbf16>, vector<480x4xf32> -> vector<480x4xf32>
    %c0_8 = arith.constant 0 : index
    %c0_9 = arith.constant 0 : index
    %6 = vector.load %arg9[%c0_8, %c0_9] : memref<1x4xf32, #tpu.memory_space<vmem>>, vector<1x4xf32>
    %7 = vector.broadcast %6 : vector<1x4xf32> to vector<480x4xf32>
    %8 = arith.addf %5, %7 : vector<480x4xf32>
    %9 = vector.broadcast %0 : vector<480x1xf32> to vector<480x4xf32>
    %10 = arith.mulf %8, %9 : vector<480x4xf32>
    %11 = arith.truncf %10 : vector<480x4xf32> to vector<480x4xbf16>
    %c0_10 = arith.constant 0 : index
    %c0_11 = arith.constant 0 : index
    %12 = vector.load %arg10[%c0_10, %c0_11] : memref<36x4xbf16, #tpu.memory_space<vmem>>, vector<36x4xbf16>
    %cst_12 = arith.constant 0.000000e+00 : f32
    %13 = vector.broadcast %cst_12 : f32 to vector<384x4xf32>
    %14 = vector.extract_strided_slice %11 {offsets = [23, 0], sizes = [432, 4], strides = [1, 1]} : vector<480x4xbf16> to vector<432x4xbf16>
    %15 = vector.extract_strided_slice %14 {offsets = [0, 0], sizes = [384, 4], strides = [1, 1]} : vector<432x4xbf16> to vector<384x4xbf16>
    %16 = vector.extract_strided_slice %12 {offsets = [0, 0], sizes = [4, 4], strides = [1, 1]} : vector<36x4xbf16> to vector<4x4xbf16>
    %cst_13 = arith.constant dense<0.000000e+00> : vector<384x4xf32>
    %17 = tpu.matmul %15, %16, %cst_13 {dimension_numbers = #tpu.dot_dimension_numbers<[1], [0], [0], [1], [0, 0, 1, 1], [], []>} : vector<384x4xbf16>, vector<4x4xbf16>, vector<384x4xf32> -> vector<384x4xf32>
    %18 = arith.addf %13, %17 : vector<384x4xf32>
    %19 = vector.extract_strided_slice %14 {offsets = [24, 0], sizes = [384, 4], strides = [1, 1]} : vector<432x4xbf16> to vector<384x4xbf16>
    %20 = vector.extract_strided_slice %12 {offsets = [12, 0], sizes = [4, 4], strides = [1, 1]} : vector<36x4xbf16> to vector<4x4xbf16>
    %cst_14 = arith.constant dense<0.000000e+00> : vector<384x4xf32>
    %21 = tpu.matmul %19, %20, %cst_14 {dimension_numbers = #tpu.dot_dimension_numbers<[1], [0], [0], [1], [0, 0, 1, 1], [], []>} : vector<384x4xbf16>, vector<4x4xbf16>, vector<384x4xf32> -> vector<384x4xf32>
    %22 = arith.addf %18, %21 : vector<384x4xf32>
    %23 = vector.extract_strided_slice %14 {offsets = [48, 0], sizes = [384, 4], strides = [1, 1]} : vector<432x4xbf16> to vector<384x4xbf16>
    %24 = vector.extract_strided_slice %12 {offsets = [24, 0], sizes = [4, 4], strides = [1, 1]} : vector<36x4xbf16> to vector<4x4xbf16>
    %cst_15 = arith.constant dense<0.000000e+00> : vector<384x4xf32>
    %25 = tpu.matmul %23, %24, %cst_15 {dimension_numbers = #tpu.dot_dimension_numbers<[1], [0], [0], [1], [0, 0, 1, 1], [], []>} : vector<384x4xbf16>, vector<4x4xbf16>, vector<384x4xf32> -> vector<384x4xf32>
    %26 = arith.addf %22, %25 : vector<384x4xf32>
    %27 = vector.extract_strided_slice %11 {offsets = [24, 0], sizes = [432, 4], strides = [1, 1]} : vector<480x4xbf16> to vector<432x4xbf16>
    %28 = vector.extract_strided_slice %27 {offsets = [0, 0], sizes = [384, 4], strides = [1, 1]} : vector<432x4xbf16> to vector<384x4xbf16>
    %29 = vector.extract_strided_slice %12 {offsets = [4, 0], sizes = [4, 4], strides = [1, 1]} : vector<36x4xbf16> to vector<4x4xbf16>
    %cst_16 = arith.constant dense<0.000000e+00> : vector<384x4xf32>
    %30 = tpu.matmul %28, %29, %cst_16 {dimension_numbers = #tpu.dot_dimension_numbers<[1], [0], [0], [1], [0, 0, 1, 1], [], []>} : vector<384x4xbf16>, vector<4x4xbf16>, vector<384x4xf32> -> vector<384x4xf32>
    %31 = arith.addf %26, %30 : vector<384x4xf32>
    %32 = vector.extract_strided_slice %27 {offsets = [24, 0], sizes = [384, 4], strides = [1, 1]} : vector<432x4xbf16> to vector<384x4xbf16>
    %33 = vector.extract_strided_slice %12 {offsets = [16, 0], sizes = [4, 4], strides = [1, 1]} : vector<36x4xbf16> to vector<4x4xbf16>
    %cst_17 = arith.constant dense<0.000000e+00> : vector<384x4xf32>
    %34 = tpu.matmul %32, %33, %cst_17 {dimension_numbers = #tpu.dot_dimension_numbers<[1], [0], [0], [1], [0, 0, 1, 1], [], []>} : vector<384x4xbf16>, vector<4x4xbf16>, vector<384x4xf32> -> vector<384x4xf32>
    %35 = arith.addf %31, %34 : vector<384x4xf32>
    %36 = vector.extract_strided_slice %27 {offsets = [48, 0], sizes = [384, 4], strides = [1, 1]} : vector<432x4xbf16> to vector<384x4xbf16>
    %37 = vector.extract_strided_slice %12 {offsets = [28, 0], sizes = [4, 4], strides = [1, 1]} : vector<36x4xbf16> to vector<4x4xbf16>
    %cst_18 = arith.constant dense<0.000000e+00> : vector<384x4xf32>
    %38 = tpu.matmul %36, %37, %cst_18 {dimension_numbers = #tpu.dot_dimension_numbers<[1], [0], [0], [1], [0, 0, 1, 1], [], []>} : vector<384x4xbf16>, vector<4x4xbf16>, vector<384x4xf32> -> vector<384x4xf32>
    %39 = arith.addf %35, %38 : vector<384x4xf32>
    %40 = vector.extract_strided_slice %11 {offsets = [25, 0], sizes = [432, 4], strides = [1, 1]} : vector<480x4xbf16> to vector<432x4xbf16>
    %41 = vector.extract_strided_slice %40 {offsets = [0, 0], sizes = [384, 4], strides = [1, 1]} : vector<432x4xbf16> to vector<384x4xbf16>
    %42 = vector.extract_strided_slice %12 {offsets = [8, 0], sizes = [4, 4], strides = [1, 1]} : vector<36x4xbf16> to vector<4x4xbf16>
    %cst_19 = arith.constant dense<0.000000e+00> : vector<384x4xf32>
    %43 = tpu.matmul %41, %42, %cst_19 {dimension_numbers = #tpu.dot_dimension_numbers<[1], [0], [0], [1], [0, 0, 1, 1], [], []>} : vector<384x4xbf16>, vector<4x4xbf16>, vector<384x4xf32> -> vector<384x4xf32>
    %44 = arith.addf %39, %43 : vector<384x4xf32>
    %45 = vector.extract_strided_slice %40 {offsets = [24, 0], sizes = [384, 4], strides = [1, 1]} : vector<432x4xbf16> to vector<384x4xbf16>
    %46 = vector.extract_strided_slice %12 {offsets = [20, 0], sizes = [4, 4], strides = [1, 1]} : vector<36x4xbf16> to vector<4x4xbf16>
    %cst_20 = arith.constant dense<0.000000e+00> : vector<384x4xf32>
    %47 = tpu.matmul %45, %46, %cst_20 {dimension_numbers = #tpu.dot_dimension_numbers<[1], [0], [0], [1], [0, 0, 1, 1], [], []>} : vector<384x4xbf16>, vector<4x4xbf16>, vector<384x4xf32> -> vector<384x4xf32>
    %48 = arith.addf %44, %47 : vector<384x4xf32>
    %49 = vector.extract_strided_slice %40 {offsets = [48, 0], sizes = [384, 4], strides = [1, 1]} : vector<432x4xbf16> to vector<384x4xbf16>
    %50 = vector.extract_strided_slice %12 {offsets = [32, 0], sizes = [4, 4], strides = [1, 1]} : vector<36x4xbf16> to vector<4x4xbf16>
    %cst_21 = arith.constant dense<0.000000e+00> : vector<384x4xf32>
    %51 = tpu.matmul %49, %50, %cst_21 {dimension_numbers = #tpu.dot_dimension_numbers<[1], [0], [0], [1], [0, 0, 1, 1], [], []>} : vector<384x4xbf16>, vector<4x4xbf16>, vector<384x4xf32> -> vector<384x4xf32>
    %52 = arith.addf %48, %51 : vector<384x4xf32>
    %c0_22 = arith.constant 0 : index
    %c0_23 = arith.constant 0 : index
    %53 = vector.load %arg11[%c0_22, %c0_23] : memref<1x4xf32, #tpu.memory_space<vmem>>, vector<1x4xf32>
    %54 = vector.broadcast %53 : vector<1x4xf32> to vector<384x4xf32>
    %55 = arith.addf %52, %54 : vector<384x4xf32>
    %56 = vector.broadcast %1 : vector<384x1xf32> to vector<384x4xf32>
    %57 = arith.mulf %55, %56 : vector<384x4xf32>
    %c0_24 = arith.constant 0 : index
    %c0_25 = arith.constant 0 : index
    %c0_26 = arith.constant 0 : index
    %58 = vector.load %arg5[%c0_24, %c0_25, %c0_26] : memref<1x480x4xbf16, #tpu.memory_space<vmem>>, vector<1x480x4xbf16>
    %59 = vector.shape_cast %58 : vector<1x480x4xbf16> to vector<480x4xbf16>
    %c0_27 = arith.constant 0 : index
    %c0_28 = arith.constant 0 : index
    %60 = vector.load %arg12[%c0_27, %c0_28] : memref<4x8xbf16, #tpu.memory_space<vmem>>, vector<4x8xbf16>
    %cst_29 = arith.constant dense<0.000000e+00> : vector<480x8xf32>
    %61 = tpu.matmul %59, %60, %cst_29 {dimension_numbers = #tpu.dot_dimension_numbers<[1], [0], [0], [1], [0, 0, 1, 1], [], []>} : vector<480x4xbf16>, vector<4x8xbf16>, vector<480x8xf32> -> vector<480x8xf32>
    %c0_30 = arith.constant 0 : index
    %c0_31 = arith.constant 0 : index
    %62 = vector.load %arg13[%c0_30, %c0_31] : memref<1x8xf32, #tpu.memory_space<vmem>>, vector<1x8xf32>
    %63 = vector.broadcast %62 : vector<1x8xf32> to vector<480x8xf32>
    %64 = arith.addf %61, %63 : vector<480x8xf32>
    %65 = vector.broadcast %0 : vector<480x1xf32> to vector<480x8xf32>
    %66 = arith.mulf %64, %65 : vector<480x8xf32>
    %c0_32 = arith.constant 0 : index
    %c0_33 = arith.constant 0 : index
    %67 = vector.load %arg14[%c0_32, %c0_33] : memref<9x8xf32, #tpu.memory_space<vmem>>, vector<9x8xf32>
    %cst_34 = arith.constant 0.000000e+00 : f32
    %68 = vector.broadcast %cst_34 : f32 to vector<384x8xf32>
    %69 = vector.extract_strided_slice %66 {offsets = [23, 0], sizes = [432, 8], strides = [1, 1]} : vector<480x8xf32> to vector<432x8xf32>
    %70 = vector.extract_strided_slice %69 {offsets = [0, 0], sizes = [384, 8], strides = [1, 1]} : vector<432x8xf32> to vector<384x8xf32>
    %71 = vector.extract_strided_slice %67 {offsets = [0, 0], sizes = [1, 8], strides = [1, 1]} : vector<9x8xf32> to vector<1x8xf32>
    %72 = vector.broadcast %71 : vector<1x8xf32> to vector<384x8xf32>
    %73 = arith.mulf %70, %72 : vector<384x8xf32>
    %74 = arith.addf %68, %73 : vector<384x8xf32>
    %75 = vector.extract_strided_slice %69 {offsets = [24, 0], sizes = [384, 8], strides = [1, 1]} : vector<432x8xf32> to vector<384x8xf32>
    %76 = vector.extract_strided_slice %67 {offsets = [3, 0], sizes = [1, 8], strides = [1, 1]} : vector<9x8xf32> to vector<1x8xf32>
    %77 = vector.broadcast %76 : vector<1x8xf32> to vector<384x8xf32>
    %78 = arith.mulf %75, %77 : vector<384x8xf32>
    %79 = arith.addf %74, %78 : vector<384x8xf32>
    %80 = vector.extract_strided_slice %69 {offsets = [48, 0], sizes = [384, 8], strides = [1, 1]} : vector<432x8xf32> to vector<384x8xf32>
    %81 = vector.extract_strided_slice %67 {offsets = [6, 0], sizes = [1, 8], strides = [1, 1]} : vector<9x8xf32> to vector<1x8xf32>
    %82 = vector.broadcast %81 : vector<1x8xf32> to vector<384x8xf32>
    %83 = arith.mulf %80, %82 : vector<384x8xf32>
    %84 = arith.addf %79, %83 : vector<384x8xf32>
    %85 = vector.extract_strided_slice %66 {offsets = [24, 0], sizes = [432, 8], strides = [1, 1]} : vector<480x8xf32> to vector<432x8xf32>
    %86 = vector.extract_strided_slice %85 {offsets = [0, 0], sizes = [384, 8], strides = [1, 1]} : vector<432x8xf32> to vector<384x8xf32>
    %87 = vector.extract_strided_slice %67 {offsets = [1, 0], sizes = [1, 8], strides = [1, 1]} : vector<9x8xf32> to vector<1x8xf32>
    %88 = vector.broadcast %87 : vector<1x8xf32> to vector<384x8xf32>
    %89 = arith.mulf %86, %88 : vector<384x8xf32>
    %90 = arith.addf %84, %89 : vector<384x8xf32>
    %91 = vector.extract_strided_slice %85 {offsets = [24, 0], sizes = [384, 8], strides = [1, 1]} : vector<432x8xf32> to vector<384x8xf32>
    %92 = vector.extract_strided_slice %67 {offsets = [4, 0], sizes = [1, 8], strides = [1, 1]} : vector<9x8xf32> to vector<1x8xf32>
    %93 = vector.broadcast %92 : vector<1x8xf32> to vector<384x8xf32>
    %94 = arith.mulf %91, %93 : vector<384x8xf32>
    %95 = arith.addf %90, %94 : vector<384x8xf32>
    %96 = vector.extract_strided_slice %85 {offsets = [48, 0], sizes = [384, 8], strides = [1, 1]} : vector<432x8xf32> to vector<384x8xf32>
    %97 = vector.extract_strided_slice %67 {offsets = [7, 0], sizes = [1, 8], strides = [1, 1]} : vector<9x8xf32> to vector<1x8xf32>
    %98 = vector.broadcast %97 : vector<1x8xf32> to vector<384x8xf32>
    %99 = arith.mulf %96, %98 : vector<384x8xf32>
    %100 = arith.addf %95, %99 : vector<384x8xf32>
    %101 = vector.extract_strided_slice %66 {offsets = [25, 0], sizes = [432, 8], strides = [1, 1]} : vector<480x8xf32> to vector<432x8xf32>
    %102 = vector.extract_strided_slice %101 {offsets = [0, 0], sizes = [384, 8], strides = [1, 1]} : vector<432x8xf32> to vector<384x8xf32>
    %103 = vector.extract_strided_slice %67 {offsets = [2, 0], sizes = [1, 8], strides = [1, 1]} : vector<9x8xf32> to vector<1x8xf32>
    %104 = vector.broadcast %103 : vector<1x8xf32> to vector<384x8xf32>
    %105 = arith.mulf %102, %104 : vector<384x8xf32>
    %106 = arith.addf %100, %105 : vector<384x8xf32>
    %107 = vector.extract_strided_slice %101 {offsets = [24, 0], sizes = [384, 8], strides = [1, 1]} : vector<432x8xf32> to vector<384x8xf32>
    %108 = vector.extract_strided_slice %67 {offsets = [5, 0], sizes = [1, 8], strides = [1, 1]} : vector<9x8xf32> to vector<1x8xf32>
    %109 = vector.broadcast %108 : vector<1x8xf32> to vector<384x8xf32>
    %110 = arith.mulf %107, %109 : vector<384x8xf32>
    %111 = arith.addf %106, %110 : vector<384x8xf32>
    %112 = vector.extract_strided_slice %101 {offsets = [48, 0], sizes = [384, 8], strides = [1, 1]} : vector<432x8xf32> to vector<384x8xf32>
    %113 = vector.extract_strided_slice %67 {offsets = [8, 0], sizes = [1, 8], strides = [1, 1]} : vector<9x8xf32> to vector<1x8xf32>
    %114 = vector.broadcast %113 : vector<1x8xf32> to vector<384x8xf32>
    %115 = arith.mulf %112, %114 : vector<384x8xf32>
    %116 = arith.addf %111, %115 : vector<384x8xf32>
    %c0_35 = arith.constant 0 : index
    %c0_36 = arith.constant 0 : index
    %117 = vector.load %arg15[%c0_35, %c0_36] : memref<1x8xf32, #tpu.memory_space<vmem>>, vector<1x8xf32>
    %118 = vector.broadcast %117 : vector<1x8xf32> to vector<384x8xf32>
    %119 = arith.addf %116, %118 : vector<384x8xf32>
    %120 = vector.broadcast %1 : vector<384x1xf32> to vector<384x8xf32>
    %121 = arith.mulf %119, %120 : vector<384x8xf32>
    %122 = vector.extract_strided_slice %121 {offsets = [0, 0], sizes = [384, 4], strides = [1, 1]} : vector<384x8xf32> to vector<384x4xf32>
    %123 = vector.extract_strided_slice %121 {offsets = [0, 4], sizes = [384, 4], strides = [1, 1]} : vector<384x8xf32> to vector<384x4xf32>
    %124 = arith.mulf %57, %57 : vector<384x4xf32>
    %cst_37 = arith.constant dense<0.000000e+00> : vector<4xf32>
    %125 = vector.multi_reduction <add>, %124, %cst_37 [0] : vector<384x4xf32> to vector<4xf32>
    %126 = vector.shape_cast %125 : vector<4xf32> to vector<1x4xf32>
    %127 = arith.mulf %122, %122 : vector<384x4xf32>
    %cst_38 = arith.constant dense<0.000000e+00> : vector<4xf32>
    %128 = vector.multi_reduction <add>, %127, %cst_38 [0] : vector<384x4xf32> to vector<4xf32>
    %129 = vector.shape_cast %128 : vector<4xf32> to vector<1x4xf32>
    %cst_39 = arith.constant 1.000000e-24 : f32
    %130 = vector.broadcast %cst_39 : f32 to vector<1x4xf32>
    %131 = arith.maximumf %126, %130 : vector<1x4xf32>
    %132 = math.rsqrt %131 : vector<1x4xf32>
    %cst_40 = arith.constant 1.000000e-24 : f32
    %133 = vector.broadcast %cst_40 : f32 to vector<1x4xf32>
    %134 = arith.maximumf %129, %133 : vector<1x4xf32>
    %135 = math.rsqrt %134 : vector<1x4xf32>
    %c0_41 = arith.constant 0 : index
    %c0_42 = arith.constant 0 : index
    %136 = vector.load %arg1[%c0_41, %c0_42] : memref<1x4xf32, #tpu.memory_space<vmem>>, vector<1x4xf32>
    %137 = arith.mulf %132, %136 : vector<1x4xf32>
    %138 = vector.broadcast %137 : vector<1x4xf32> to vector<384x4xf32>
    %139 = arith.mulf %57, %138 : vector<384x4xf32>
    %c0_43 = arith.constant 0 : index
    %c0_44 = arith.constant 0 : index
    %140 = vector.load %arg3[%c0_43, %c0_44] : memref<4x4xf32, #tpu.memory_space<vmem>>, vector<4x4xf32>
    %cst_45 = arith.constant dense<0.000000e+00> : vector<4x384xf32>
    %141 = tpu.matmul %140, %139, %cst_45 {dimension_numbers = #tpu.dot_dimension_numbers<[1], [1], [0], [0], [0, 0, 1, 0], [], []>} : vector<4x4xf32>, vector<384x4xf32>, vector<4x384xf32> -> vector<4x384xf32>
    %cst_46 = arith.constant dense<0.000000e+00> : vector<4x4xf32>
    %142 = tpu.matmul %141, %122, %cst_46 {dimension_numbers = #tpu.dot_dimension_numbers<[1], [0], [0], [1], [0, 0, 1, 1], [], []>} : vector<4x384xf32>, vector<384x4xf32>, vector<4x4xf32> -> vector<4x4xf32>
    %143 = vector.broadcast %135 : vector<1x4xf32> to vector<4x4xf32>
    %144 = arith.mulf %142, %143 : vector<4x4xf32>
    %c0_47 = arith.constant 0 : index
    %c0_48 = arith.constant 0 : index
    %145 = vector.load %arg2[%c0_47, %c0_48] : memref<4x4xf32, #tpu.memory_space<vmem>>, vector<4x4xf32>
    %146 = arith.addf %144, %145 : vector<4x4xf32>
    %cst_49 = arith.constant dense<0xFF800000> : vector<4xf32>
    %147 = vector.multi_reduction <maximumf>, %146, %cst_49 [1] : vector<4x4xf32> to vector<4xf32>
    %148 = vector.shape_cast %147 : vector<4xf32> to vector<4x1xf32>
    %149 = vector.broadcast %148 : vector<4x1xf32> to vector<4x4xf32>
    %150 = arith.subf %146, %149 : vector<4x4xf32>
    %151 = math.exp %150 : vector<4x4xf32>
    %cst_50 = arith.constant dense<0.000000e+00> : vector<4xf32>
    %152 = vector.multi_reduction <add>, %151, %cst_50 [1] : vector<4x4xf32> to vector<4xf32>
    %153 = vector.shape_cast %152 : vector<4xf32> to vector<4x1xf32>
    %154 = tpu.reciprocal %153 {approx = true} : vector<4x1xf32> -> vector<4x1xf32>
    %155 = vector.broadcast %154 : vector<4x1xf32> to vector<4x4xf32>
    %156 = arith.mulf %151, %155 : vector<4x4xf32>
    %cst_51 = arith.constant dense<0.000000e+00> : vector<384x4xf32>
    %157 = tpu.matmul %123, %156, %cst_51 {dimension_numbers = #tpu.dot_dimension_numbers<[1], [1], [0], [0], [0, 0, 1, 0], [], []>} : vector<384x4xf32>, vector<4x4xf32>, vector<384x4xf32> -> vector<384x4xf32>
    %158 = arith.truncf %157 : vector<384x4xf32> to vector<384x4xbf16>
    %c0_52 = arith.constant 0 : index
    %c0_53 = arith.constant 0 : index
    %159 = vector.load %arg16[%c0_52, %c0_53] : memref<4x4xbf16, #tpu.memory_space<vmem>>, vector<4x4xbf16>
    %cst_54 = arith.constant dense<0.000000e+00> : vector<384x4xf32>
    %160 = tpu.matmul %158, %159, %cst_54 {dimension_numbers = #tpu.dot_dimension_numbers<[1], [0], [0], [1], [0, 0, 1, 1], [], []>} : vector<384x4xbf16>, vector<4x4xbf16>, vector<384x4xf32> -> vector<384x4xf32>
    %c0_55 = arith.constant 0 : index
    %c0_56 = arith.constant 0 : index
    %161 = vector.load %arg17[%c0_55, %c0_56] : memref<1x4xf32, #tpu.memory_space<vmem>>, vector<1x4xf32>
    %162 = vector.broadcast %161 : vector<1x4xf32> to vector<384x4xf32>
    %163 = arith.addf %160, %162 : vector<384x4xf32>
    %c0_57 = arith.constant 0 : index
    %c0_58 = arith.constant 0 : index
    %c0_59 = arith.constant 0 : index
    %164 = vector.load %arg18[%c0_57, %c0_58, %c0_59] : memref<1x384x4xf32, #tpu.memory_space<vmem>>, vector<1x384x4xf32>
    %165 = vector.shape_cast %164 : vector<1x384x4xf32> to vector<384x4xf32>
    %166 = vector.shape_cast %163 : vector<384x4xf32> to vector<1x384x4xf32>
    tpu.vector_store %arg18[%c0_57, %c0_58, %c0_59], %166 {strides = array<i32>} : memref<1x384x4xf32, #tpu.memory_space<vmem>>, vector<1x384x4xf32>,
    return
  }
  func.func @transform_0(%arg0: i32) -> (i32, i32) {
    %c0_i32 = arith.constant 0 : i32
    %c0_i32_0 = arith.constant 0 : i32
    %c0_i32_1 = arith.constant 0 : i32
    return %c0_i32, %c0_i32_0 : i32, i32
  }
  func.func @transform_1(%arg0: i32) -> (i32, i32) {
    %c0_i32 = arith.constant 0 : i32
    %c0_i32_0 = arith.constant 0 : i32
    %c0_i32_1 = arith.constant 0 : i32
    return %c0_i32, %c0_i32_0 : i32, i32
  }
  func.func @transform_2(%arg0: i32) -> (i32, i32) {
    %c0_i32 = arith.constant 0 : i32
    %c0_i32_0 = arith.constant 0 : i32
    %c0_i32_1 = arith.constant 0 : i32
    return %c0_i32, %c0_i32_0 : i32, i32
  }
  func.func @transform_3(%arg0: i32) -> (i32, i32, i32) {
    %c0_i32 = arith.constant 0 : i32
    %c0_i32_0 = arith.constant 0 : i32
    %c0_i32_1 = arith.constant 0 : i32
    return %arg0, %c0_i32, %c0_i32_0 : i32, i32, i32
  }
  func.func @transform_4(%arg0: i32) -> (i32, i32, i32) {
    %c0_i32 = arith.constant 0 : i32
    %c0_i32_0 = arith.constant 0 : i32
    %c0_i32_1 = arith.constant 0 : i32
    return %arg0, %c0_i32, %c0_i32_0 : i32, i32, i32
  }
  func.func @transform_5(%arg0: i32) -> (i32, i32) {
    %c0_i32 = arith.constant 0 : i32
    %c0_i32_0 = arith.constant 0 : i32
    %c0_i32_1 = arith.constant 0 : i32
    return %c0_i32, %c0_i32_0 : i32, i32
  }
  func.func @transform_6(%arg0: i32) -> (i32, i32) {
    %c0_i32 = arith.constant 0 : i32
    %c0_i32_0 = arith.constant 0 : i32
    %c0_i32_1 = arith.constant 0 : i32
    return %c0_i32, %c0_i32_0 : i32, i32
  }
  func.func @transform_7(%arg0: i32) -> (i32, i32) {
    %c0_i32 = arith.constant 0 : i32
    %c0_i32_0 = arith.constant 0 : i32
    %c0_i32_1 = arith.constant 0 : i32
    return %c0_i32, %c0_i32_0 : i32, i32
  }
  func.func @transform_8(%arg0: i32) -> (i32, i32) {
    %c0_i32 = arith.constant 0 : i32
    %c0_i32_0 = arith.constant 0 : i32
    %c0_i32_1 = arith.constant 0 : i32
    return %c0_i32, %c0_i32_0 : i32, i32
  }
  func.func @transform_9(%arg0: i32) -> (i32, i32) {
    %c0_i32 = arith.constant 0 : i32
    %c0_i32_0 = arith.constant 0 : i32
    %c0_i32_1 = arith.constant 0 : i32
    return %c0_i32, %c0_i32_0 : i32, i32
  }
  func.func @transform_10(%arg0: i32) -> (i32, i32) {
    %c0_i32 = arith.constant 0 : i32
    %c0_i32_0 = arith.constant 0 : i32
    %c0_i32_1 = arith.constant 0 : i32
    return %c0_i32, %c0_i32_0 : i32, i32
  }
  func.func @transform_11(%arg0: i32) -> (i32, i32) {
    %c0_i32 = arith.constant 0 : i32
    %c0_i32_0 = arith.constant 0 : i32
    %c0_i32_1 = arith.constant 0 : i32
    return %c0_i32, %c0_i32_0 : i32, i32
  }
  func.func @transform_12(%arg0: i32) -> (i32, i32) {
    %c0_i32 = arith.constant 0 : i32
    %c0_i32_0 = arith.constant 0 : i32
    %c0_i32_1 = arith.constant 0 : i32
    return %c0_i32, %c0_i32_0 : i32, i32
  }
  func.func @transform_13(%arg0: i32) -> (i32, i32) {
    %c0_i32 = arith.constant 0 : i32
    %c0_i32_0 = arith.constant 0 : i32
    %c0_i32_1 = arith.constant 0 : i32
    return %c0_i32, %c0_i32_0 : i32, i32
  }
  func.func @transform_14(%arg0: i32) -> (i32, i32) {
    %c0_i32 = arith.constant 0 : i32
    %c0_i32_0 = arith.constant 0 : i32
    %c0_i32_1 = arith.constant 0 : i32
    return %c0_i32, %c0_i32_0 : i32, i32
  }
  func.func @transform_15(%arg0: i32) -> (i32, i32) {
    %c0_i32 = arith.constant 0 : i32
    %c0_i32_0 = arith.constant 0 : i32
    %c0_i32_1 = arith.constant 0 : i32
    return %c0_i32, %c0_i32_0 : i32, i32
  }
  func.func @transform_16(%arg0: i32) -> (i32, i32) {
    %c0_i32 = arith.constant 0 : i32
    %c0_i32_0 = arith.constant 0 : i32
    %c0_i32_1 = arith.constant 0 : i32
    return %c0_i32, %c0_i32_0 : i32, i32
  }
  func.func @transform_17(%arg0: i32) -> (i32, i32, i32) {
    %c0_i32 = arith.constant 0 : i32
    %c0_i32_0 = arith.constant 0 : i32
    %c0_i32_1 = arith.constant 0 : i32
    return %arg0, %c0_i32, %c0_i32_0 : i32, i32, i32
  }
}

</mosaic_0001>

<llo_original>
// kernel: cross_attention.1
$region0: #{cross_attention.1}
  #allocation0 [shape = 'u32[]', space=smem, size = 0x4, offset = 0x4, fixed_abs, tag = 'smem constant byte address 0x4 - core index']
  #allocation1 [shape = 'u32[72,128]{1,0:T(1,128)}', space=vmem, size = 0x9000, scoped, tag = 'internal scratch']
  %s0 = inlined_call_operand.vmem [shape: f32[1,4], index: 0, kind: input, shape index: {}]
  %s1 = inlined_call_operand.vmem [shape: f32[4,4], index: 1, kind: input, shape index: {}]
  %s2 = inlined_call_operand.vmem [shape: f32[4,4], index: 2, kind: input, shape index: {}]
  %s3 = inlined_call_operand.vmem [shape: bf16[2,480,4], index: 3, kind: input, shape index: {}]
  %s4 = inlined_call_operand.vmem [shape: bf16[2,480,4], index: 4, kind: input, shape index: {}]
  %s5 = inlined_call_operand.vmem [shape: f32[480,1], index: 5, kind: input, shape index: {}]
  %s6 = inlined_call_operand.vmem [shape: f32[384,1], index: 6, kind: input, shape index: {}]
  %s7 = inlined_call_operand.vmem [shape: bf16[4,4], index: 7, kind: input, shape index: {}]
  %s8 = inlined_call_operand.vmem [shape: f32[1,4], index: 8, kind: input, shape index: {}]
  %s9 = inlined_call_operand.vmem [shape: bf16[36,4], index: 9, kind: input, shape index: {}]
  %s10 = inlined_call_operand.vmem [shape: f32[1,4], index: 10, kind: input, shape index: {}]
  %s11 = inlined_call_operand.vmem [shape: bf16[4,8], index: 11, kind: input, shape index: {}]
  %s12 = inlined_call_operand.vmem [shape: f32[1,8], index: 12, kind: input, shape index: {}]
  %s13 = inlined_call_operand.vmem [shape: f32[9,8], index: 13, kind: input, shape index: {}]
  %s14 = inlined_call_operand.vmem [shape: f32[1,8], index: 14, kind: input, shape index: {}]
  %s15 = inlined_call_operand.vmem [shape: bf16[4,4], index: 15, kind: input, shape index: {}]
  %s16 = inlined_call_operand.vmem [shape: f32[1,4], index: 16, kind: input, shape index: {}]
  %s17 = inlined_call_operand.vmem [shape: f32[2,384,4], index: 17, kind: output, shape index: {}]
  %s18 = sld [smem:[#allocation0]]
  $region101: #{cross_attention.1} parent=0
    _
  %s20 = ssub.s32 1, %s18
  %s21 = scalar_select 0, %s20, %s18
  loop: start=0, step=1, limit=4
  $region2: #{cross_attention.1} parent=0 // loop_pre_header
    _
  $region3: #{cross_attention.1} parent=0 // loop_header
    %s23 = sphi 0, %s27
    %p24 = scmp.ge.s32.totalorder %s23, 4
    %s31 = sphi 0, %s31
    %s33 = sphi 0, %s31
    %s34 = sphi 0, %s33
    %s48 = sphi 0, %s34
    %s52 = sphi 0, %s52
    %s54 = sphi 0, %s52
    %s55 = sphi 0, %s54
    %s69 = sphi 0, %s55
    %s73 = sphi 0, %s73
    %s75 = sphi 0, %s73
    %s76 = sphi 0, %s75
    %s90 = sphi 0, %s76
    %s96 = sphi 0, %s98
    %s99 = sphi 0, %s96
    %s100 = sphi 0, %s99
    %s116 = sphi 0, %s100
    %s122 = sphi 0, %s124
    %s125 = sphi 0, %s122
    %s126 = sphi 0, %s125
    %s142 = sphi 0, %s126
    %s146 = sphi 0, %s146
    %s148 = sphi 0, %s146
    %s149 = sphi 0, %s148
    %s163 = sphi 0, %s149
    %s167 = sphi 0, %s167
    %s169 = sphi 0, %s167
    %s170 = sphi 0, %s169
    %s184 = sphi 0, %s170
    %s188 = sphi 0, %s188
    %s190 = sphi 0, %s188
    %s191 = sphi 0, %s190
    %s205 = sphi 0, %s191
    %s209 = sphi 0, %s209
    %s211 = sphi 0, %s209
    %s212 = sphi 0, %s211
    %s226 = sphi 0, %s212
    %s230 = sphi 0, %s230
    %s232 = sphi 0, %s230
    %s233 = sphi 0, %s232
    %s247 = sphi 0, %s233
    %s251 = sphi 0, %s251
    %s253 = sphi 0, %s251
    %s254 = sphi 0, %s253
    %s268 = sphi 0, %s254
    %s272 = sphi 0, %s272
    %s274 = sphi 0, %s272
    %s275 = sphi 0, %s274
    %s289 = sphi 0, %s275
    %s293 = sphi 0, %s293
    %s295 = sphi 0, %s293
    %s296 = sphi 0, %s295
    %s310 = sphi 0, %s296
    %s314 = sphi 0, %s314
    %s316 = sphi 0, %s314
    %s317 = sphi 0, %s316
    %s331 = sphi 0, %s317
    %s335 = sphi 0, %s335
    %s337 = sphi 0, %s335
    %s338 = sphi 0, %s337
    %s352 = sphi 0, %s338
    %s356 = sphi 0, %s356
    %s358 = sphi 0, %s356
    %s359 = sphi 0, %s358
    %s373 = sphi 0, %s359
    %s377 = sphi 0, %s377
    %s379 = sphi 0, %s377
    %s380 = sphi 0, %s379
    %s394 = sphi 0, %s380
    %s400 = sphi 0, %s402
    %s403 = sphi 0, %s400
    %s404 = sphi 0, %s403
    %s420 = sphi 0, %s404
  $region4: #{cross_attention.1} parent=0 // loop_header_branch
    %26 = sbr.rel (%p24) target = $region8
  $region5: #{cross_attention.1} parent=0 // loop_body
    %s28 = ssub.s32 %s23, 1
    %s29 = ssub.s32 %s23, 2
    %s30 = sadd.s32 %s23, 1
    %s32 = sadd.s32 %s31, 1
    %p35 = scmp.eq.s32.totalorder %s23, 1
    %p36 = scmp.ne.s32.totalorder %s31, %s33
    %p37 = scmp.eq.s32.totalorder %s23, 0
    %p38 = por %p36, %p37
    %p39 = scmp.ne.s32.totalorder %s31, %s33
    %p40 = scmp.eq.s32.totalorder %s28, 1
    %p41 = por %p39, %p40
    %p42 = scmp.ne.s32.totalorder %s33, %s34
    %p43 = scmp.eq.s32.totalorder %s28, 0
    %p44 = por %p42, %p43
    %p45 = scmp.ne.s32.totalorder %s33, %s34
    %p46 = scmp.eq.s32.totalorder %s29, 1
    %p47 = por %p45, %p46
    %p49 = scmp.ne.s32.totalorder %s34, %s48
    %p50 = scmp.eq.s32.totalorder %s29, 0
    %p51 = por %p49, %p50
    %s53 = sadd.s32 %s52, 1
    %p56 = scmp.eq.s32.totalorder %s23, 1
    %p57 = scmp.ne.s32.totalorder %s52, %s54
    %p58 = scmp.eq.s32.totalorder %s23, 0
    %p59 = por %p57, %p58
    %p60 = scmp.ne.s32.totalorder %s52, %s54
    %p61 = scmp.eq.s32.totalorder %s28, 1
    %p62 = por %p60, %p61
    %p63 = scmp.ne.s32.totalorder %s54, %s55
    %p64 = scmp.eq.s32.totalorder %s28, 0
    %p65 = por %p63, %p64
    %p66 = scmp.ne.s32.totalorder %s54, %s55
    %p67 = scmp.eq.s32.totalorder %s29, 1
    %p68 = por %p66, %p67
    %p70 = scmp.ne.s32.totalorder %s55, %s69
    %p71 = scmp.eq.s32.totalorder %s29, 0
    %p72 = por %p70, %p71
    %s74 = sadd.s32 %s73, 1
    %p77 = scmp.eq.s32.totalorder %s23, 1
    %p78 = scmp.ne.s32.totalorder %s73, %s75
    %p79 = scmp.eq.s32.totalorder %s23, 0
    %p80 = por %p78, %p79
    %p81 = scmp.ne.s32.totalorder %s73, %s75
    %p82 = scmp.eq.s32.totalorder %s28, 1
    %p83 = por %p81, %p82
    %p84 = scmp.ne.s32.totalorder %s75, %s76
    %p85 = scmp.eq.s32.totalorder %s28, 0
    %p86 = por %p84, %p85
    %p87 = scmp.ne.s32.totalorder %s75, %s76
    %p88 = scmp.eq.s32.totalorder %s29, 1
    %p89 = por %p87, %p88
    %p91 = scmp.ne.s32.totalorder %s76, %s90
    %p92 = scmp.eq.s32.totalorder %s29, 0
    %p93 = por %p91, %p92
    %s94 = ssub.s32 %s23, %s30
    %p95 = scmp.eq.s32.totalorder %s94, 0
    %s97 = sadd.s32 %s96, 1
    %s98 = scalar_select %p95, %s96, %s97
    %p101 = pneg %p95
    %p102 = scmp.eq.s32.totalorder %s23, 1
    %p103 = por %p101, %p102
    %p104 = scmp.ne.s32.totalorder %s96, %s99
    %p105 = scmp.eq.s32.totalorder %s23, 0
    %p106 = por %p104, %p105
    %p107 = scmp.ne.s32.totalorder %s96, %s99
    %p108 = scmp.eq.s32.totalorder %s28, 1
    %p109 = por %p107, %p108
    %p110 = scmp.ne.s32.totalorder %s99, %s100
    %p111 = scmp.eq.s32.totalorder %s28, 0
    %p112 = por %p110, %p111
    %p113 = scmp.ne.s32.totalorder %s99, %s100
    %p114 = scmp.eq.s32.totalorder %s29, 1
    %p115 = por %p113, %p114
    %p117 = scmp.ne.s32.totalorder %s100, %s116
    %p118 = scmp.eq.s32.totalorder %s29, 0
    %p119 = por %p117, %p118
    %s120 = ssub.s32 %s23, %s30
    %p121 = scmp.eq.s32.totalorder %s120, 0
    %s123 = sadd.s32 %s122, 1
    %s124 = scalar_select %p121, %s122, %s123
    %p127 = pneg %p121
    %p128 = scmp.eq.s32.totalorder %s23, 1
    %p129 = por %p127, %p128
    %p130 = scmp.ne.s32.totalorder %s122, %s125
    %p131 = scmp.eq.s32.totalorder %s23, 0
    %p132 = por %p130, %p131
    %p133 = scmp.ne.s32.totalorder %s122, %s125
    %p134 = scmp.eq.s32.totalorder %s28, 1
    %p135 = por %p133, %p134
    %p136 = scmp.ne.s32.totalorder %s125, %s126
    %p137 = scmp.eq.s32.totalorder %s28, 0
    %p138 = por %p136, %p137
    %p139 = scmp.ne.s32.totalorder %s125, %s126
    %p140 = scmp.eq.s32.totalorder %s29, 1
    %p141 = por %p139, %p140
    %p143 = scmp.ne.s32.totalorder %s126, %s142
    %p144 = scmp.eq.s32.totalorder %s29, 0
    %p145 = por %p143, %p144
    %s147 = sadd.s32 %s146, 1
    %p150 = scmp.eq.s32.totalorder %s23, 1
    %p151 = scmp.ne.s32.totalorder %s146, %s148
    %p152 = scmp.eq.s32.totalorder %s23, 0
    %p153 = por %p151, %p152
    %p154 = scmp.ne.s32.totalorder %s146, %s148
    %p155 = scmp.eq.s32.totalorder %s28, 1
    %p156 = por %p154, %p155
    %p157 = scmp.ne.s32.totalorder %s148, %s149
    %p158 = scmp.eq.s32.totalorder %s28, 0
    %p159 = por %p157, %p158
    %p160 = scmp.ne.s32.totalorder %s148, %s149
    %p161 = scmp.eq.s32.totalorder %s29, 1
    %p162 = por %p160, %p161
    %p164 = scmp.ne.s32.totalorder %s149, %s163
    %p165 = scmp.eq.s32.totalorder %s29, 0
    %p166 = por %p164, %p165
    %s168 = sadd.s32 %s167, 1
    %p171 = scmp.eq.s32.totalorder %s23, 1
    %p172 = scmp.ne.s32.totalorder %s167, %s169
    %p173 = scmp.eq.s32.totalorder %s23, 0
    %p174 = por %p172, %p173
    %p175 = scmp.ne.s32.totalorder %s167, %s169
    %p176 = scmp.eq.s32.totalorder %s28, 1
    %p177 = por %p175, %p176
    %p178 = scmp.ne.s32.totalorder %s169, %s170
    %p179 = scmp.eq.s32.totalorder %s28, 0
    %p180 = por %p178, %p179
    %p181 = scmp.ne.s32.totalorder %s169, %s170
    %p182 = scmp.eq.s32.totalorder %s29, 1
    %p183 = por %p181, %p182
    %p185 = scmp.ne.s32.totalorder %s170, %s184
    %p186 = scmp.eq.s32.totalorder %s29, 0
    %p187 = por %p185, %p186
    %s189 = sadd.s32 %s188, 1
    %p192 = scmp.eq.s32.totalorder %s23, 1
    %p193 = scmp.ne.s32.totalorder %s188, %s190
    %p194 = scmp.eq.s32.totalorder %s23, 0
    %p195 = por %p193, %p194
    %p196 = scmp.ne.s32.totalorder %s188, %s190
    %p197 = scmp.eq.s32.totalorder %s28, 1
    %p198 = por %p196, %p197
    %p199 = scmp.ne.s32.totalorder %s190, %s191
    %p200 = scmp.eq.s32.totalorder %s28, 0
    %p201 = por %p199, %p200
    %p202 = scmp.ne.s32.totalorder %s190, %s191
    %p203 = scmp.eq.s32.totalorder %s29, 1
    %p204 = por %p202, %p203
    %p206 = scmp.ne.s32.totalorder %s191, %s205
    %p207 = scmp.eq.s32.totalorder %s29, 0
    %p208 = por %p206, %p207
    %s210 = sadd.s32 %s209, 1
    %p213 = scmp.eq.s32.totalorder %s23, 1
    %p214 = scmp.ne.s32.totalorder %s209, %s211
    %p215 = scmp.eq.s32.totalorder %s23, 0
    %p216 = por %p214, %p215
    %p217 = scmp.ne.s32.totalorder %s209, %s211
    %p218 = scmp.eq.s32.totalorder %s28, 1
    %p219 = por %p217, %p218
    %p220 = scmp.ne.s32.totalorder %s211, %s212
    %p221 = scmp.eq.s32.totalorder %s28, 0
    %p222 = por %p220, %p221
    %p223 = scmp.ne.s32.totalorder %s211, %s212
    %p224 = scmp.eq.s32.totalorder %s29, 1
    %p225 = por %p223, %p224
    %p227 = scmp.ne.s32.totalorder %s212, %s226
    %p228 = scmp.eq.s32.totalorder %s29, 0
    %p229 = por %p227, %p228
    %s231 = sadd.s32 %s230, 1
    %p234 = scmp.eq.s32.totalorder %s23, 1
    %p235 = scmp.ne.s32.totalorder %s230, %s232
    %p236 = scmp.eq.s32.totalorder %s23, 0
    %p237 = por %p235, %p236
    %p238 = scmp.ne.s32.totalorder %s230, %s232
    %p239 = scmp.eq.s32.totalorder %s28, 1
    %p240 = por %p238, %p239
    %p241 = scmp.ne.s32.totalorder %s232, %s233
    %p242 = scmp.eq.s32.totalorder %s28, 0
    %p243 = por %p241, %p242
    %p244 = scmp.ne.s32.totalorder %s232, %s233
    %p245 = scmp.eq.s32.totalorder %s29, 1
    %p246 = por %p244, %p245
    %p248 = scmp.ne.s32.totalorder %s233, %s247
    %p249 = scmp.eq.s32.totalorder %s29, 0
    %p250 = por %p248, %p249
    %s252 = sadd.s32 %s251, 1
    %p255 = scmp.eq.s32.totalorder %s23, 1
    %p256 = scmp.ne.s32.totalorder %s251, %s253
    %p257 = scmp.eq.s32.totalorder %s23, 0
    %p258 = por %p256, %p257
    %p259 = scmp.ne.s32.totalorder %s251, %s253
    %p260 = scmp.eq.s32.totalorder %s28, 1
    %p261 = por %p259, %p260
    %p262 = scmp.ne.s32.totalorder %s253, %s254
    %p263 = scmp.eq.s32.totalorder %s28, 0
    %p264 = por %p262, %p263
    %p265 = scmp.ne.s32.totalorder %s253, %s254
    %p266 = scmp.eq.s32.totalorder %s29, 1
    %p267 = por %p265, %p266
    %p269 = scmp.ne.s32.totalorder %s254, %s268
    %p270 = scmp.eq.s32.totalorder %s29, 0
    %p271 = por %p269, %p270
    %s273 = sadd.s32 %s272, 1
    %p276 = scmp.eq.s32.totalorder %s23, 1
    %p277 = scmp.ne.s32.totalorder %s272, %s274
    %p278 = scmp.eq.s32.totalorder %s23, 0
    %p279 = por %p277, %p278
    %p280 = scmp.ne.s32.totalorder %s272, %s274
    %p281 = scmp.eq.s32.totalorder %s28, 1
    %p282 = por %p280, %p281
    %p283 = scmp.ne.s32.totalorder %s274, %s275
    %p284 = scmp.eq.s32.totalorder %s28, 0
    %p285 = por %p283, %p284
    %p286 = scmp.ne.s32.totalorder %s274, %s275
    %p287 = scmp.eq.s32.totalorder %s29, 1
    %p288 = por %p286, %p287
    %p290 = scmp.ne.s32.totalorder %s275, %s289
    %p291 = scmp.eq.s32.totalorder %s29, 0
    %p292 = por %p290, %p291
    %s294 = sadd.s32 %s293, 1
    %p297 = scmp.eq.s32.totalorder %s23, 1
    %p298 = scmp.ne.s32.totalorder %s293, %s295
    %p299 = scmp.eq.s32.totalorder %s23, 0
    %p300 = por %p298, %p299
    %p301 = scmp.ne.s32.totalorder %s293, %s295
    %p302 = scmp.eq.s32.totalorder %s28, 1
    %p303 = por %p301, %p302
    %p304 = scmp.ne.s32.totalorder %s295, %s296
    %p305 = scmp.eq.s32.totalorder %s28, 0
    %p306 = por %p304, %p305
    %p307 = scmp.ne.s32.totalorder %s295, %s296
    %p308 = scmp.eq.s32.totalorder %s29, 1
    %p309 = por %p307, %p308
    %p311 = scmp.ne.s32.totalorder %s296, %s310
    %p312 = scmp.eq.s32.totalorder %s29, 0
    %p313 = por %p311, %p312
    %s315 = sadd.s32 %s314, 1
    %p318 = scmp.eq.s32.totalorder %s23, 1
    %p319 = scmp.ne.s32.totalorder %s314, %s316
    %p320 = scmp.eq.s32.totalorder %s23, 0
    %p321 = por %p319, %p320
    %p322 = scmp.ne.s32.totalorder %s314, %s316
    %p323 = scmp.eq.s32.totalorder %s28, 1
    %p324 = por %p322, %p323
    %p325 = scmp.ne.s32.totalorder %s316, %s317
    %p326 = scmp.eq.s32.totalorder %s28, 0
    %p327 = por %p325, %p326
    %p328 = scmp.ne.s32.totalorder %s316, %s317
    %p329 = scmp.eq.s32.totalorder %s29, 1
    %p330 = por %p328, %p329
    %p332 = scmp.ne.s32.totalorder %s317, %s331
    %p333 = scmp.eq.s32.totalorder %s29, 0
    %p334 = por %p332, %p333
    %s336 = sadd.s32 %s335, 1
    %p339 = scmp.eq.s32.totalorder %s23, 1
    %p340 = scmp.ne.s32.totalorder %s335, %s337
    %p341 = scmp.eq.s32.totalorder %s23, 0
    %p342 = por %p340, %p341
    %p343 = scmp.ne.s32.totalorder %s335, %s337
    %p344 = scmp.eq.s32.totalorder %s28, 1
    %p345 = por %p343, %p344
    %p346 = scmp.ne.s32.totalorder %s337, %s338
    %p347 = scmp.eq.s32.totalorder %s28, 0
    %p348 = por %p346, %p347
    %p349 = scmp.ne.s32.totalorder %s337, %s338
    %p350 = scmp.eq.s32.totalorder %s29, 1
    %p351 = por %p349, %p350
    %p353 = scmp.ne.s32.totalorder %s338, %s352
    %p354 = scmp.eq.s32.totalorder %s29, 0
    %p355 = por %p353, %p354
    %s357 = sadd.s32 %s356, 1
    %p360 = scmp.eq.s32.totalorder %s23, 1
    %p361 = scmp.ne.s32.totalorder %s356, %s358
    %p362 = scmp.eq.s32.totalorder %s23, 0
    %p363 = por %p361, %p362
    %p364 = scmp.ne.s32.totalorder %s356, %s358
    %p365 = scmp.eq.s32.totalorder %s28, 1
    %p366 = por %p364, %p365
    %p367 = scmp.ne.s32.totalorder %s358, %s359
    %p368 = scmp.eq.s32.totalorder %s28, 0
    %p369 = por %p367, %p368
    %p370 = scmp.ne.s32.totalorder %s358, %s359
    %p371 = scmp.eq.s32.totalorder %s29, 1
    %p372 = por %p370, %p371
    %p374 = scmp.ne.s32.totalorder %s359, %s373
    %p375 = scmp.eq.s32.totalorder %s29, 0
    %p376 = por %p374, %p375
    %s378 = sadd.s32 %s377, 1
    %p381 = scmp.eq.s32.totalorder %s23, 1
    %p382 = scmp.ne.s32.totalorder %s377, %s379
    %p383 = scmp.eq.s32.totalorder %s23, 0
    %p384 = por %p382, %p383
    %p385 = scmp.ne.s32.totalorder %s377, %s379
    %p386 = scmp.eq.s32.totalorder %s28, 1
    %p387 = por %p385, %p386
    %p388 = scmp.ne.s32.totalorder %s379, %s380
    %p389 = scmp.eq.s32.totalorder %s28, 0
    %p390 = por %p388, %p389
    %p391 = scmp.ne.s32.totalorder %s379, %s380
    %p392 = scmp.eq.s32.totalorder %s29, 1
    %p393 = por %p391, %p392
    %p395 = scmp.ne.s32.totalorder %s380, %s394
    %p396 = scmp.eq.s32.totalorder %s29, 0
    %p397 = por %p395, %p396
    %s398 = ssub.s32 %s23, %s30
    %p399 = scmp.eq.s32.totalorder %s398, 0
    %s401 = sadd.s32 %s400, 1
    %s402 = scalar_select %p399, %s400, %s401
    %p405 = pneg %p399
    %p406 = scmp.eq.s32.totalorder %s23, 1
    %p407 = por %p405, %p406
    %p408 = scmp.ne.s32.totalorder %s400, %s403
    %p409 = scmp.eq.s32.totalorder %s23, 0
    %p410 = por %p408, %p409
    %p411 = scmp.ne.s32.totalorder %s400, %s403
    %p412 = scmp.eq.s32.totalorder %s28, 1
    %p413 = por %p411, %p412
    %p414 = scmp.ne.s32.totalorder %s403, %s404
    %p415 = scmp.eq.s32.totalorder %s28, 0
    %p416 = por %p414, %p415
    %p417 = scmp.ne.s32.totalorder %s403, %s404
    %p418 = scmp.eq.s32.totalorder %s29, 1
    %p419 = por %p417, %p418
    %p421 = scmp.ne.s32.totalorder %s404, %s420
    %p422 = scmp.eq.s32.totalorder %s29, 0
    %p423 = por %p421, %p422
    %p424 = scmp.le.s32.totalorder 1, %s23
    %p425 = scmp.lt.s32.totalorder %s23, 3
    %p426 = pnand %p424, %p425
    %p427 = pneg %p426
    // Predicated region
    $region9: #{cross_attention.1} parent=5 // pred_check
      _
    $region10: #{cross_attention.1} parent=5 // pred_check_branch
      %429 = sbr.rel (%p426) target = $region12
    $region11: #{cross_attention.1} parent=5 // pred_region
      %s430 = ssub.s32 %s23, 1
      // Predicated region
      $region13: #{cross_attention.1} parent=11 // pred_check
        %p431 = pneg %p44
      $region14: #{cross_attention.1} parent=11 // pred_check_branch
        %433 = sbr.rel (%p431) target = $region16
      $region15: #{cross_attention.1} parent=11 // pred_region
        _
      $region16: #{cross_attention.1} parent=11 // pred_fallthru
        _
      // Predicated region
      $region17: #{cross_attention.1} parent=11 // pred_check
        %p434 = pneg %p65
      $region18: #{cross_attention.1} parent=11 // pred_check_branch
        %436 = sbr.rel (%p434) target = $region20
      $region19: #{cross_attention.1} parent=11 // pred_region
        _
      $region20: #{cross_attention.1} parent=11 // pred_fallthru
        _
      // Predicated region
      $region21: #{cross_attention.1} parent=11 // pred_check
        %p437 = pneg %p86
      $region22: #{cross_attention.1} parent=11 // pred_check_branch
        %439 = sbr.rel (%p437) target = $region24
      $region23: #{cross_attention.1} parent=11 // pred_region
        _
      $region24: #{cross_attention.1} parent=11 // pred_fallthru
        _
      // Predicated region
      $region25: #{cross_attention.1} parent=11 // pred_check
        %p440 = pneg %p159
      $region26: #{cross_attention.1} parent=11 // pred_check_branch
        %442 = sbr.rel (%p440) target = $region28
      $region27: #{cross_attention.1} parent=11 // pred_region
        _
      $region28: #{cross_attention.1} parent=11 // pred_fallthru
        _
      // Predicated region
      $region29: #{cross_attention.1} parent=11 // pred_check
        %p443 = pneg %p180
      $region30: #{cross_attention.1} parent=11 // pred_check_branch
        %445 = sbr.rel (%p443) target = $region32
      $region31: #{cross_attention.1} parent=11 // pred_region
        _
      $region32: #{cross_attention.1} parent=11 // pred_fallthru
        _
      // Predicated region
      $region33: #{cross_attention.1} parent=11 // pred_check
        %p446 = pneg %p201
      $region34: #{cross_attention.1} parent=11 // pred_check_branch
        %448 = sbr.rel (%p446) target = $region36
      $region35: #{cross_attention.1} parent=11 // pred_region
        _
      $region36: #{cross_attention.1} parent=11 // pred_fallthru
        _
      // Predicated region
      $region37: #{cross_attention.1} parent=11 // pred_check
        %p449 = pneg %p222
      $region38: #{cross_attention.1} parent=11 // pred_check_branch
        %451 = sbr.rel (%p449) target = $region40
      $region39: #{cross_attention.1} parent=11 // pred_region
        _
      $region40: #{cross_attention.1} parent=11 // pred_fallthru
        _
      // Predicated region
      $region41: #{cross_attention.1} parent=11 // pred_check
        %p452 = pneg %p243
      $region42: #{cross_attention.1} parent=11 // pred_check_branch
        %454 = sbr.rel (%p452) target = $region44
      $region43: #{cross_attention.1} parent=11 // pred_region
        _
      $region44: #{cross_attention.1} parent=11 // pred_fallthru
        _
      // Predicated region
      $region45: #{cross_attention.1} parent=11 // pred_check
        %p455 = pneg %p264
      $region46: #{cross_attention.1} parent=11 // pred_check_branch
        %457 = sbr.rel (%p455) target = $region48
      $region47: #{cross_attention.1} parent=11 // pred_region
        _
      $region48: #{cross_attention.1} parent=11 // pred_fallthru
        _
      // Predicated region
      $region49: #{cross_attention.1} parent=11 // pred_check
        %p458 = pneg %p285
      $region50: #{cross_attention.1} parent=11 // pred_check_branch
        %460 = sbr.rel (%p458) target = $region52
      $region51: #{cross_attention.1} parent=11 // pred_region
        _
      $region52: #{cross_attention.1} parent=11 // pred_fallthru
        _
      // Predicated region
      $region53: #{cross_attention.1} parent=11 // pred_check
        %p461 = pneg %p306
      $region54: #{cross_attention.1} parent=11 // pred_check_branch
        %463 = sbr.rel (%p461) target = $region56
      $region55: #{cross_attention.1} parent=11 // pred_region
        _
      $region56: #{cross_attention.1} parent=11 // pred_fallthru
        _
      // Predicated region
      $region57: #{cross_attention.1} parent=11 // pred_check
        %p464 = pneg %p327
      $region58: #{cross_attention.1} parent=11 // pred_check_branch
        %466 = sbr.rel (%p464) target = $region60
      $region59: #{cross_attention.1} parent=11 // pred_region
        _
      $region60: #{cross_attention.1} parent=11 // pred_fallthru
        _
      // Predicated region
      $region61: #{cross_attention.1} parent=11 // pred_check
        %p467 = pneg %p348
      $region62: #{cross_attention.1} parent=11 // pred_check_branch
        %469 = sbr.rel (%p467) target = $region64
      $region63: #{cross_attention.1} parent=11 // pred_region
        _
      $region64: #{cross_attention.1} parent=11 // pred_fallthru
        _
      // Predicated region
      $region65: #{cross_attention.1} parent=11 // pred_check
        %p470 = pneg %p369
      $region66: #{cross_attention.1} parent=11 // pred_check_branch
        %472 = sbr.rel (%p470) target = $region68
      $region67: #{cross_attention.1} parent=11 // pred_region
        _
      $region68: #{cross_attention.1} parent=11 // pred_fallthru
        _
      // Predicated region
      $region69: #{cross_attention.1} parent=11 // pred_check
        %p473 = pneg %p390
      $region70: #{cross_attention.1} parent=11 // pred_check_branch
        %475 = sbr.rel (%p473) target = $region72
      $region71: #{cross_attention.1} parent=11 // pred_region
        _
      $region72: #{cross_attention.1} parent=11 // pred_fallthru
        _
    $region12: #{cross_attention.1} parent=5 // pred_fallthru
      _
    %p476 = scmp.lt.s32.totalorder %s23, 2
    // Predicated region
    $region73: #{cross_attention.1} parent=5 // pred_check
      %p477 = pneg %p476
    $region74: #{cross_attention.1} parent=5 // pred_check_branch
      %479 = sbr.rel (%p477) target = $region76
    $region75: #{cross_attention.1} parent=5 // pred_region
      // Predicated region
      $region77: #{cross_attention.1} parent=75 // pred_check
        %p480 = pneg %p106
      $region78: #{cross_attention.1} parent=75 // pred_check_branch
        %482 = sbr.rel (%p480) target = $region80
      $region79: #{cross_attention.1} parent=75 // pred_region
        %p483 = scmp.lt.s32.totalorder %s23, 1
        %s484 = scalar_select %p483, %s23, 1
        %s485 = smul.addr %s484, 60
        %s486 = smul.addr %s485, 4
        %s487 = scalar_lea.vmem %s3, %s486
      $region80: #{cross_attention.1} parent=75 // pred_fallthru
        _
      // Predicated region
      $region81: #{cross_attention.1} parent=75 // pred_check
        %p488 = pneg %p132
      $region82: #{cross_attention.1} parent=75 // pred_check_branch
        %490 = sbr.rel (%p488) target = $region84
      $region83: #{cross_attention.1} parent=75 // pred_region
        %p491 = scmp.lt.s32.totalorder %s23, 1
        %s492 = scalar_select %p491, %s23, 1
        %s493 = smul.addr %s492, 60
        %s494 = smul.addr %s493, 4
        %s495 = scalar_lea.vmem %s4, %s494
      $region84: #{cross_attention.1} parent=75 // pred_fallthru
        _
    $region76: #{cross_attention.1} parent=5 // pred_fallthru
      _
    %p496 = scmp.le.s32.totalorder 1, %s23
    %p497 = scmp.lt.s32.totalorder %s23, 3
    %p498 = pnand %p496, %p497
    %p499 = pneg %p498
    // Predicated region
    $region85: #{cross_attention.1} parent=5 // pred_check
      _
    $region86: #{cross_attention.1} parent=5 // pred_check_branch
      %501 = sbr.rel (%p498) target = $region88
    $region87: #{cross_attention.1} parent=5 // pred_region
      %s502 = ssub.s32 %s23, 1
      %p503 = pneg %p44
      %p504 = pneg %p41
      %p505 = pneg %p65
      %p506 = pneg %p62
      %p507 = pneg %p86
      %p508 = pneg %p83
      %p509 = scmp.lt.s32.totalorder %s28, 1
      %s510 = scalar_select %p509, %s28, 1
      %s511 = smul.addr %s510, 60
      %s512 = smul.addr %s511, 4
      %s513 = scalar_lea.vmem %s3, %s512
      %p514 = pneg %p112
      %p515 = pneg %p109
      %p516 = scmp.lt.s32.totalorder %s28, 1
      %s517 = scalar_select %p516, %s28, 1
      %s518 = smul.addr %s517, 60
      %s519 = smul.addr %s518, 4
      %s520 = scalar_lea.vmem %s4, %s519
      %p521 = pneg %p138
      %p522 = pneg %p135
      %p523 = pneg %p159
      %p524 = pneg %p156
      %p525 = pneg %p180
      %p526 = pneg %p177
      %p527 = pneg %p201
      %p528 = pneg %p198
      %p529 = pneg %p222
      %p530 = pneg %p219
      %p531 = pneg %p243
      %p532 = pneg %p240
      %p533 = pneg %p264
      %p534 = pneg %p261
      %p535 = pneg %p285
      %p536 = pneg %p282
      %p537 = pneg %p306
      %p538 = pneg %p303
      %p539 = pneg %p327
      %p540 = pneg %p324
      %p541 = pneg %p348
      %p542 = pneg %p345
      %p543 = pneg %p369
      %p544 = pneg %p366
      %p545 = pneg %p390
      %p546 = pneg %p387
      %p547 = pneg %p416
      %p548 = pneg %p413
      %p549 = scmp.lt.s32.totalorder %s28, 1
      %s550 = scalar_select %p549, %s28, 1
      %s551 = smul.addr %s550, 48
      %s552 = smul.addr %s551, 8
      %s553 = scalar_lea.vmem %s17, %s552
      %p554 = scmp.lt.s32.totalorder %s28, 1
      %s555 = scalar_select %p554, %s28, 1
      %s556 = smul.addr %s555, 60
      %s557 = smul.addr %s556, 4
      %s558 = scalar_lea.vmem %s3, %s557
      %p559 = scmp.lt.s32.totalorder %s28, 1
      %s560 = scalar_select %p559, %s28, 1
      %s561 = smul.addr %s560, 60
      %s562 = smul.addr %s561, 4
      %s563 = scalar_lea.vmem %s4, %s562
      %p564 = scmp.lt.s32.totalorder %s28, 1
      %s565 = scalar_select %p564, %s28, 1
      %s566 = smul.addr %s565, 48
      %s567 = smul.addr %s566, 8
      %s568 = scalar_lea.vmem %s17, %s567
      %v570 = vld [vmem:[%s5 + $0x10] sm:$0xff]
      %v571 = vld [vmem:[%s5 + $0x18] sm:$0xff]
      %v572 = vld [vmem:[%s5 + $0x20] sm:$0xff]
      %v573 = vld [vmem:[%s5 + $0x28] sm:$0xff]
      %v574 = vld [vmem:[%s5 + $0x30] sm:$0xff]
      %v575 = vld [vmem:[%s5 + $0x38] sm:$0xff]
      %v576 = vld [vmem:[%s5 + $0x40] sm:$0xff]
      %v577 = vld [vmem:[%s5 + $0x48] sm:$0xff]
      %v578 = vld [vmem:[%s5 + $0x50] sm:$0xff]
      %v579 = vld [vmem:[%s5 + $0x58] sm:$0xff]
      %v580 = vld [vmem:[%s5 + $0x60] sm:$0xff]
      %v581 = vld [vmem:[%s5 + $0x68] sm:$0xff]
      %v582 = vld [vmem:[%s5 + $0x70] sm:$0xff]
      %v583 = vld [vmem:[%s5 + $0x78] sm:$0xff]
      %v584 = vld [vmem:[%s5 + $0x80] sm:$0xff]
      %v585 = vld [vmem:[%s5 + $0x88] sm:$0xff]
      %v586 = vld [vmem:[%s5 + $0x90] sm:$0xff]
      %v587 = vld [vmem:[%s5 + $0x98] sm:$0xff]
      %v588 = vld [vmem:[%s5 + $0xa0] sm:$0xff]
      %v589 = vld [vmem:[%s5 + $0xa8] sm:$0xff]
      %v590 = vld [vmem:[%s5 + $0xb0] sm:$0xff]
      %v591 = vld [vmem:[%s5 + $0xb8] sm:$0xff]
      %v592 = vld [vmem:[%s5 + $0xc0] sm:$0xff]
      %v593 = vld [vmem:[%s5 + $0xc8] sm:$0xff]
      %v594 = vld [vmem:[%s5 + $0xd0] sm:$0xff]
      %v595 = vld [vmem:[%s5 + $0xd8] sm:$0xff]
      %v596 = vld [vmem:[%s5 + $0xe0] sm:$0xff]
      %v597 = vld [vmem:[%s5 + $0xe8] sm:$0xff]
      %v598 = vld [vmem:[%s5 + $0xf0] sm:$0xff]
      %v599 = vld [vmem:[%s5 + $0xf8] sm:$0xff]
      %v600 = vld [vmem:[%s5 + $0x100] sm:$0xff]
      %v601 = vld [vmem:[%s5 + $0x108] sm:$0xff]
      %v602 = vld [vmem:[%s5 + $0x110] sm:$0xff]
      %v603 = vld [vmem:[%s5 + $0x118] sm:$0xff]
      %v604 = vld [vmem:[%s5 + $0x120] sm:$0xff]
      %v605 = vld [vmem:[%s5 + $0x128] sm:$0xff]
      %v606 = vld [vmem:[%s5 + $0x130] sm:$0xff]
      %v607 = vld [vmem:[%s5 + $0x138] sm:$0xff]
      %v608 = vld [vmem:[%s5 + $0x140] sm:$0xff]
      %v609 = vld [vmem:[%s5 + $0x148] sm:$0xff]
      %v610 = vld [vmem:[%s5 + $0x150] sm:$0xff]
      %v611 = vld [vmem:[%s5 + $0x158] sm:$0xff]
      %v612 = vld [vmem:[%s5 + $0x160] sm:$0xff]
      %v613 = vld [vmem:[%s5 + $0x168] sm:$0xff]
      %v614 = vld [vmem:[%s5 + $0x170] sm:$0xff]
      %v615 = vld [vmem:[%s5 + $0x178] sm:$0xff]
      %v616 = vld [vmem:[%s5 + $0x180] sm:$0xff]
      %v617 = vld [vmem:[%s5 + $0x188] sm:$0xff]
      %v618 = vld [vmem:[%s5 + $0x190] sm:$0xff]
      %v619 = vld [vmem:[%s5 + $0x198] sm:$0xff]
      %v620 = vld [vmem:[%s5 + $0x1a0] sm:$0xff]
      %v621 = vld [vmem:[%s5 + $0x1a8] sm:$0xff]
      %v622 = vld [vmem:[%s5 + $0x1b0] sm:$0xff]
      %v623 = vld [vmem:[%s5 + $0x1b8] sm:$0xff]
      %v624 = vld [vmem:[%s5 + $0x1c0] sm:$0xff]
      %v625 = vld [vmem:[%s5 + $0x1c8] sm:$0xff]
      %v626 = vld [vmem:[%s6] sm:$0xff]
      %v627 = vld [vmem:[%s6 + $0x8] sm:$0xff]
      %v628 = vld [vmem:[%s6 + $0x10] sm:$0xff]
      %v629 = vld [vmem:[%s6 + $0x18] sm:$0xff]
      %v630 = vld [vmem:[%s6 + $0x20] sm:$0xff]
      %v631 = vld [vmem:[%s6 + $0x28] sm:$0xff]
      %v632 = vld [vmem:[%s6 + $0x30] sm:$0xff]
      %v633 = vld [vmem:[%s6 + $0x38] sm:$0xff]
      %v634 = vld [vmem:[%s6 + $0x40] sm:$0xff]
      %v635 = vld [vmem:[%s6 + $0x48] sm:$0xff]
      %v636 = vld [vmem:[%s6 + $0x50] sm:$0xff]
      %v637 = vld [vmem:[%s6 + $0x58] sm:$0xff]
      %v638 = vld [vmem:[%s6 + $0x60] sm:$0xff]
      %v639 = vld [vmem:[%s6 + $0x68] sm:$0xff]
      %v640 = vld [vmem:[%s6 + $0x70] sm:$0xff]
      %v641 = vld [vmem:[%s6 + $0x78] sm:$0xff]
      %v642 = vld [vmem:[%s6 + $0x80] sm:$0xff]
      %v643 = vld [vmem:[%s6 + $0x88] sm:$0xff]
      %v644 = vld [vmem:[%s6 + $0x90] sm:$0xff]
      %v645 = vld [vmem:[%s6 + $0x98] sm:$0xff]
      %v646 = vld [vmem:[%s6 + $0xa0] sm:$0xff]
      %v647 = vld [vmem:[%s6 + $0xa8] sm:$0xff]
      %v648 = vld [vmem:[%s6 + $0xb0] sm:$0xff]
      %v649 = vld [vmem:[%s6 + $0xb8] sm:$0xff]
      %v650 = vld [vmem:[%s6 + $0xc0] sm:$0xff]
      %v651 = vld [vmem:[%s6 + $0xc8] sm:$0xff]
      %v652 = vld [vmem:[%s6 + $0xd0] sm:$0xff]
      %v653 = vld [vmem:[%s6 + $0xd8] sm:$0xff]
      %v654 = vld [vmem:[%s6 + $0xe0] sm:$0xff]
      %v655 = vld [vmem:[%s6 + $0xe8] sm:$0xff]
      %v656 = vld [vmem:[%s6 + $0xf0] sm:$0xff]
      %v657 = vld [vmem:[%s6 + $0xf8] sm:$0xff]
      %v658 = vld [vmem:[%s6 + $0x100] sm:$0xff]
      %v659 = vld [vmem:[%s6 + $0x108] sm:$0xff]
      %v660 = vld [vmem:[%s6 + $0x110] sm:$0xff]
      %v661 = vld [vmem:[%s6 + $0x118] sm:$0xff]
      %v662 = vld [vmem:[%s6 + $0x120] sm:$0xff]
      %v663 = vld [vmem:[%s6 + $0x128] sm:$0xff]
      %v664 = vld [vmem:[%s6 + $0x130] sm:$0xff]
      %v665 = vld [vmem:[%s6 + $0x138] sm:$0xff]
      %v666 = vld [vmem:[%s6 + $0x140] sm:$0xff]
      %v667 = vld [vmem:[%s6 + $0x148] sm:$0xff]
      %v668 = vld [vmem:[%s6 + $0x150] sm:$0xff]
      %v669 = vld [vmem:[%s6 + $0x158] sm:$0xff]
      %v670 = vld [vmem:[%s6 + $0x160] sm:$0xff]
      %v671 = vld [vmem:[%s6 + $0x168] sm:$0xff]
      %v672 = vld [vmem:[%s6 + $0x170] sm:$0xff]
      %v673 = vld [vmem:[%s6 + $0x178] sm:$0xff]
      %v674 = vld [vmem:[%s558] sm:$0xf]
      %v675 = vld [vmem:[%s558 + $0x4] sm:$0xf]
      %v676 = vld [vmem:[%s558 + $0x8] sm:$0xf]
      %v677 = vld [vmem:[%s558 + $0xc] sm:$0xf]
      %v678 = vld [vmem:[%s558 + $0x10] sm:$0xf]
      %v679 = vld [vmem:[%s558 + $0x14] sm:$0xf]
      %v680 = vld [vmem:[%s558 + $0x18] sm:$0xf]
      %v681 = vld [vmem:[%s558 + $0x1c] sm:$0xf]
      %v682 = vld [vmem:[%s558 + $0x20] sm:$0xf]
      %v683 = vld [vmem:[%s558 + $0x24] sm:$0xf]
      %v684 = vld [vmem:[%s558 + $0x28] sm:$0xf]
      %v685 = vld [vmem:[%s558 + $0x2c] sm:$0xf]
      %v686 = vld [vmem:[%s558 + $0x30] sm:$0xf]
      %v687 = vld [vmem:[%s558 + $0x34] sm:$0xf]
      %v688 = vld [vmem:[%s558 + $0x38] sm:$0xf]
      %v689 = vld [vmem:[%s558 + $0x3c] sm:$0xf]
      %v690 = vld [vmem:[%s558 + $0x40] sm:$0xf]
      %v691 = vld [vmem:[%s558 + $0x44] sm:$0xf]
      %v692 = vld [vmem:[%s558 + $0x48] sm:$0xf]
      %v693 = vld [vmem:[%s558 + $0x4c] sm:$0xf]
      %v694 = vld [vmem:[%s558 + $0x50] sm:$0xf]
      %v695 = vld [vmem:[%s558 + $0x54] sm:$0xf]
      %v696 = vld [vmem:[%s558 + $0x58] sm:$0xf]
      %v697 = vld [vmem:[%s558 + $0x5c] sm:$0xf]
      %v698 = vld [vmem:[%s558 + $0x60] sm:$0xf]
      %v699 = vld [vmem:[%s558 + $0x64] sm:$0xf]
      %v700 = vld [vmem:[%s558 + $0x68] sm:$0xf]
      %v701 = vld [vmem:[%s558 + $0x6c] sm:$0xf]
      %v702 = vld [vmem:[%s558 + $0x70] sm:$0xf]
      %v703 = vld [vmem:[%s558 + $0x74] sm:$0xf]
      %v704 = vld [vmem:[%s558 + $0x78] sm:$0xf]
      %v705 = vld [vmem:[%s558 + $0x7c] sm:$0xf]
      %v706 = vld [vmem:[%s558 + $0x80] sm:$0xf]
      %v707 = vld [vmem:[%s558 + $0x84] sm:$0xf]
      %v708 = vld [vmem:[%s558 + $0x88] sm:$0xf]
      %v709 = vld [vmem:[%s558 + $0x8c] sm:$0xf]
      %v710 = vld [vmem:[%s558 + $0x90] sm:$0xf]
      %v711 = vld [vmem:[%s558 + $0x94] sm:$0xf]
      %v712 = vld [vmem:[%s558 + $0x98] sm:$0xf]
      %v713 = vld [vmem:[%s558 + $0x9c] sm:$0xf]
      %v714 = vld [vmem:[%s558 + $0xa0] sm:$0xf]
      %v715 = vld [vmem:[%s558 + $0xa4] sm:$0xf]
      %v716 = vld [vmem:[%s558 + $0xa8] sm:$0xf]
      %v717 = vld [vmem:[%s558 + $0xac] sm:$0xf]
      %v718 = vld [vmem:[%s558 + $0xb0] sm:$0xf]
      %v719 = vld [vmem:[%s558 + $0xb4] sm:$0xf]
      %v720 = vld [vmem:[%s558 + $0xb8] sm:$0xf]
      %v721 = vld [vmem:[%s558 + $0xbc] sm:$0xf]
      %v722 = vld [vmem:[%s558 + $0xc0] sm:$0xf]
      %v723 = vld [vmem:[%s558 + $0xc4] sm:$0xf]
      %v724 = vld [vmem:[%s558 + $0xc8] sm:$0xf]
      %v725 = vld [vmem:[%s558 + $0xcc] sm:$0xf]
      %v726 = vld [vmem:[%s558 + $0xd0] sm:$0xf]
      %v727 = vld [vmem:[%s558 + $0xd4] sm:$0xf]
      %v728 = vld [vmem:[%s558 + $0xd8] sm:$0xf]
      %v729 = vld [vmem:[%s558 + $0xdc] sm:$0xf]
      %v730 = vld [vmem:[%s558 + $0xe0] sm:$0xf]
      %v731 = vld [vmem:[%s558 + $0xe4] sm:$0xf]
      %v732 = vld [vmem:[%s558 + $0xe8] sm:$0xf]
      %v733 = vld [vmem:[%s558 + $0xec] sm:$0xf]
      %v734 = vld [vmem:[%s7] sm:$0x3]
      %v735 = vld [vmem:[%s8] sm:$0x1]
      %v737 = vperm.slane %v735, 0
      %v799 = vunpack.c.l.b16 %v674
      %v800 = vunpack.c.l.b16 %v675
      %v801 = vunpack.c.l.b16 %v676
      %v802 = vunpack.c.l.b16 %v677
      %v803 = vunpack.c.l.b16 %v678
      %v804 = vunpack.c.l.b16 %v679
      %v805 = vunpack.c.l.b16 %v680
      %v806 = vunpack.c.l.b16 %v681
      %v807 = vunpack.c.l.b16 %v682
      %v808 = vunpack.c.l.b16 %v683
      %v809 = vunpack.c.l.b16 %v684
      %v810 = vunpack.c.l.b16 %v685
      %v811 = vunpack.c.l.b16 %v686
      %v812 = vunpack.c.l.b16 %v687
      %v813 = vunpack.c.l.b16 %v688
      %v814 = vunpack.c.l.b16 %v689
      %v815 = vunpack.c.l.b16 %v690
      %v816 = vunpack.c.l.b16 %v691
      %v817 = vunpack.c.l.b16 %v692
      %v818 = vunpack.c.l.b16 %v693
      %v819 = vunpack.c.l.b16 %v694
      %v820 = vunpack.c.l.b16 %v695
      %v821 = vunpack.c.l.b16 %v696
      %v822 = vunpack.c.l.b16 %v697
      %v823 = vunpack.c.l.b16 %v698
      %v824 = vunpack.c.l.b16 %v699
      %v825 = vunpack.c.l.b16 %v700
      %v826 = vunpack.c.l.b16 %v701
      %v827 = vunpack.c.l.b16 %v702
      %v828 = vunpack.c.l.b16 %v703
      %v829 = vunpack.c.l.b16 %v704
      %v830 = vunpack.c.l.b16 %v705
      %v831 = vunpack.c.l.b16 %v706
      %v832 = vunpack.c.l.b16 %v707
      %v833 = vunpack.c.l.b16 %v708
      %v834 = vunpack.c.l.b16 %v709
      %v835 = vunpack.c.l.b16 %v710
      %v836 = vunpack.c.l.b16 %v711
      %v837 = vunpack.c.l.b16 %v712
      %v838 = vunpack.c.l.b16 %v713
      %v839 = vunpack.c.l.b16 %v714
      %v840 = vunpack.c.l.b16 %v715
      %v841 = vunpack.c.l.b16 %v716
      %v842 = vunpack.c.l.b16 %v717
      %v843 = vunpack.c.l.b16 %v718
      %v844 = vunpack.c.l.b16 %v719
      %v845 = vunpack.c.l.b16 %v720
      %v846 = vunpack.c.l.b16 %v721
      %v847 = vunpack.c.l.b16 %v722
      %v848 = vunpack.c.l.b16 %v723
      %v849 = vunpack.c.l.b16 %v724
      %v850 = vunpack.c.l.b16 %v725
      %v851 = vunpack.c.l.b16 %v726
      %v852 = vunpack.c.l.b16 %v727
      %v853 = vunpack.c.l.b16 %v728
      %v854 = vunpack.c.l.b16 %v729
      %v855 = vunpack.c.l.b16 %v730
      %v856 = vunpack.c.l.b16 %v731
      %v857 = vunpack.c.l.b16 %v732
      %v858 = vunpack.c.l.b16 %v733
      %v859 = vpack.c.b16 %v800, %v799
      %v860 = vpack.c.b16 %v802, %v801
      %v861 = vpack.c.b16 %v804, %v803
      %v862 = vpack.c.b16 %v806, %v805
      %v863 = vpack.c.b16 %v808, %v807
      %v864 = vpack.c.b16 %v810, %v809
      %v865 = vpack.c.b16 %v812, %v811
      %v866 = vpack.c.b16 %v814, %v813
      %v867 = vpack.c.b16 %v816, %v815
      %v868 = vpack.c.b16 %v818, %v817
      %v869 = vpack.c.b16 %v820, %v819
      %v870 = vpack.c.b16 %v822, %v821
      %v871 = vpack.c.b16 %v824, %v823
      %v872 = vpack.c.b16 %v826, %v825
      %v873 = vpack.c.b16 %v828, %v827
      %v874 = vpack.c.b16 %v830, %v829
      %v875 = vpack.c.b16 %v832, %v831
      %v876 = vpack.c.b16 %v834, %v833
      %v877 = vpack.c.b16 %v836, %v835
      %v878 = vpack.c.b16 %v838, %v837
      %v879 = vpack.c.b16 %v840, %v839
      %v880 = vpack.c.b16 %v842, %v841
      %v881 = vpack.c.b16 %v844, %v843
      %v882 = vpack.c.b16 %v846, %v845
      %v883 = vpack.c.b16 %v848, %v847
      %v884 = vpack.c.b16 %v850, %v849
      %v885 = vpack.c.b16 %v852, %v851
      %v886 = vpack.c.b16 %v854, %v853
      %v887 = vpack.c.b16 %v856, %v855
      %v888 = vpack.c.b16 %v858, %v857
      %vm889 = vcmask 31744
      %v891 = vsel %vm889, %v859, 0
      %v894 = vsel %vm889, %v860, 0
      %v897 = vsel %vm889, %v861, 0
      %v900 = vsel %vm889, %v862, 0
      %v903 = vsel %vm889, %v863, 0
      %v906 = vsel %vm889, %v864, 0
      %v909 = vsel %vm889, %v865, 0
      %v912 = vsel %vm889, %v866, 0
      %v915 = vsel %vm889, %v867, 0
      %v918 = vsel %vm889, %v868, 0
      %v921 = vsel %vm889, %v869, 0
      %v924 = vsel %vm889, %v870, 0
      %v927 = vsel %vm889, %v871, 0
      %v930 = vsel %vm889, %v872, 0
      %v933 = vsel %vm889, %v873, 0
      %v936 = vsel %vm889, %v874, 0
      %v939 = vsel %vm889, %v875, 0
      %v942 = vsel %vm889, %v876, 0
      %v945 = vsel %vm889, %v877, 0
      %v948 = vsel %vm889, %v878, 0
      %v951 = vsel %vm889, %v879, 0
      %v954 = vsel %vm889, %v880, 0
      %v957 = vsel %vm889, %v881, 0
      %v960 = vsel %vm889, %v882, 0
      %v963 = vsel %vm889, %v883, 0
      %v966 = vsel %vm889, %v884, 0
      %v969 = vsel %vm889, %v885, 0
      %v972 = vsel %vm889, %v886, 0
      %v975 = vsel %vm889, %v887, 0
      %v978 = vsel %vm889, %v888, 0
      %vm980 = vcmask 1041408
      %v982 = vsel %vm980, %v734, 0
      %984 = vmatpush.bf16.msra.mxu0 0
      %985 = vmatpush.bf16.msra.mxu0 0
      %986 = vmatpush.bf16.msra.mxu0 0
      %987 = vmatpush.bf16.msra.mxu0 0
      %988 = vmatpush.bf16.msra.mxu0 0
      %989 = vmatpush.bf16.msra.mxu0 0
      %990 = vmatpush.bf16.msra.mxu0 0
      %991 = vmatpush.bf16.msra.mxu0 %v982
      %992 = vmatmul.bf16.gmra.mxu0 %v891
      %v993 = vpop.f32.mrf.mxu0
      %v994 = vpop.f32.mrf.mxu0
      %995 = vmatmul.bf16.gmra.mxu0 %v894
      %v996 = vpop.f32.mrf.mxu0
      %v997 = vadd.f32 %v737, %v996
      %v998 = vpop.f32.mrf.mxu0
      %v999 = vadd.f32 %v737, %v998
      %1000 = vmatmul.bf16.gmra.mxu0 %v897
      %v1001 = vpop.f32.mrf.mxu0
      %v1002 = vadd.f32 %v737, %v1001
      %v1003 = vpop.f32.mrf.mxu0
      %v1004 = vadd.f32 %v737, %v1003
      %1005 = vmatmul.bf16.gmra.mxu0 %v900
      %v1006 = vpop.f32.mrf.mxu0
      %v1007 = vadd.f32 %v737, %v1006
      %v1008 = vpop.f32.mrf.mxu0
      %v1009 = vadd.f32 %v737, %v1008
      %1010 = vmatmul.bf16.gmra.mxu0 %v903
      %v1011 = vpop.f32.mrf.mxu0
      %v1012 = vadd.f32 %v737, %v1011
      %v1013 = vpop.f32.mrf.mxu0
      %v1014 = vadd.f32 %v737, %v1013
      %1015 = vmatmul.bf16.gmra.mxu0 %v906
      %v1016 = vpop.f32.mrf.mxu0
      %v1017 = vadd.f32 %v737, %v1016
      %v1018 = vpop.f32.mrf.mxu0
      %v1019 = vadd.f32 %v737, %v1018
      %1020 = vmatmul.bf16.gmra.mxu0 %v909
      %v1021 = vpop.f32.mrf.mxu0
      %v1022 = vadd.f32 %v737, %v1021
      %v1023 = vpop.f32.mrf.mxu0
      %v1024 = vadd.f32 %v737, %v1023
      %1025 = vmatmul.bf16.gmra.mxu0 %v912
      %v1026 = vpop.f32.mrf.mxu0
      %v1027 = vadd.f32 %v737, %v1026
      %v1028 = vpop.f32.mrf.mxu0
      %v1029 = vadd.f32 %v737, %v1028
      %1030 = vmatmul.bf16.gmra.mxu0 %v915
      %v1031 = vpop.f32.mrf.mxu0
      %v1032 = vadd.f32 %v737, %v1031
      %v1033 = vpop.f32.mrf.mxu0
      %v1034 = vadd.f32 %v737, %v1033
      %1035 = vmatmul.bf16.gmra.mxu0 %v918
      %v1036 = vpop.f32.mrf.mxu0
      %v1037 = vadd.f32 %v737, %v1036
      %v1038 = vpop.f32.mrf.mxu0
      %v1039 = vadd.f32 %v737, %v1038
      %1040 = vmatmul.bf16.gmra.mxu0 %v921
      %v1041 = vpop.f32.mrf.mxu0
      %v1042 = vadd.f32 %v737, %v1041
      %v1043 = vpop.f32.mrf.mxu0
      %v1044 = vadd.f32 %v737, %v1043
      %1045 = vmatmul.bf16.gmra.mxu0 %v924
      %v1046 = vpop.f32.mrf.mxu0
      %v1047 = vadd.f32 %v737, %v1046
      %v1048 = vpop.f32.mrf.mxu0
      %v1049 = vadd.f32 %v737, %v1048
      %1050 = vmatmul.bf16.gmra.mxu0 %v927
      %v1051 = vpop.f32.mrf.mxu0
      %v1052 = vadd.f32 %v737, %v1051
      %v1053 = vpop.f32.mrf.mxu0
      %v1054 = vadd.f32 %v737, %v1053
      %1055 = vmatmul.bf16.gmra.mxu0 %v930
      %v1056 = vpop.f32.mrf.mxu0
      %v1057 = vadd.f32 %v737, %v1056
      %v1058 = vpop.f32.mrf.mxu0
      %v1059 = vadd.f32 %v737, %v1058
      %1060 = vmatmul.bf16.gmra.mxu0 %v933
      %v1061 = vpop.f32.mrf.mxu0
      %v1062 = vadd.f32 %v737, %v1061
      %v1063 = vpop.f32.mrf.mxu0
      %v1064 = vadd.f32 %v737, %v1063
      %1065 = vmatmul.bf16.gmra.mxu0 %v936
      %v1066 = vpop.f32.mrf.mxu0
      %v1067 = vadd.f32 %v737, %v1066
      %v1068 = vpop.f32.mrf.mxu0
      %v1069 = vadd.f32 %v737, %v1068
      %1070 = vmatmul.bf16.gmra.mxu0 %v939
      %v1071 = vpop.f32.mrf.mxu0
      %v1072 = vadd.f32 %v737, %v1071
      %v1073 = vpop.f32.mrf.mxu0
      %v1074 = vadd.f32 %v737, %v1073
      %1075 = vmatmul.bf16.gmra.mxu0 %v942
      %v1076 = vpop.f32.mrf.mxu0
      %v1077 = vadd.f32 %v737, %v1076
      %v1078 = vpop.f32.mrf.mxu0
      %v1079 = vadd.f32 %v737, %v1078
      %1080 = vmatmul.bf16.gmra.mxu0 %v945
      %v1081 = vpop.f32.mrf.mxu0
      %v1082 = vadd.f32 %v737, %v1081
      %v1083 = vpop.f32.mrf.mxu0
      %v1084 = vadd.f32 %v737, %v1083
      %1085 = vmatmul.bf16.gmra.mxu0 %v948
      %v1086 = vpop.f32.mrf.mxu0
      %v1087 = vadd.f32 %v737, %v1086
      %v1088 = vpop.f32.mrf.mxu0
      %v1089 = vadd.f32 %v737, %v1088
      %1090 = vmatmul.bf16.gmra.mxu0 %v951
      %v1091 = vpop.f32.mrf.mxu0
      %v1092 = vadd.f32 %v737, %v1091
      %v1093 = vpop.f32.mrf.mxu0
      %v1094 = vadd.f32 %v737, %v1093
      %1095 = vmatmul.bf16.gmra.mxu0 %v954
      %v1096 = vpop.f32.mrf.mxu0
      %v1097 = vadd.f32 %v737, %v1096
      %v1098 = vpop.f32.mrf.mxu0
      %v1099 = vadd.f32 %v737, %v1098
      %1100 = vmatmul.bf16.gmra.mxu0 %v957
      %v1101 = vpop.f32.mrf.mxu0
      %v1102 = vadd.f32 %v737, %v1101
      %v1103 = vpop.f32.mrf.mxu0
      %v1104 = vadd.f32 %v737, %v1103
      %1105 = vmatmul.bf16.gmra.mxu0 %v960
      %v1106 = vpop.f32.mrf.mxu0
      %v1107 = vadd.f32 %v737, %v1106
      %v1108 = vpop.f32.mrf.mxu0
      %v1109 = vadd.f32 %v737, %v1108
      %1110 = vmatmul.bf16.gmra.mxu0 %v963
      %v1111 = vpop.f32.mrf.mxu0
      %v1112 = vadd.f32 %v737, %v1111
      %v1113 = vpop.f32.mrf.mxu0
      %v1114 = vadd.f32 %v737, %v1113
      %1115 = vmatmul.bf16.gmra.mxu0 %v966
      %v1116 = vpop.f32.mrf.mxu0
      %v1117 = vadd.f32 %v737, %v1116
      %v1118 = vpop.f32.mrf.mxu0
      %v1119 = vadd.f32 %v737, %v1118
      %1120 = vmatmul.bf16.gmra.mxu0 %v969
      %v1121 = vpop.f32.mrf.mxu0
      %v1122 = vadd.f32 %v737, %v1121
      %v1123 = vpop.f32.mrf.mxu0
      %v1124 = vadd.f32 %v737, %v1123
      %1125 = vmatmul.bf16.gmra.mxu0 %v972
      %v1126 = vpop.f32.mrf.mxu0
      %v1127 = vadd.f32 %v737, %v1126
      %v1128 = vpop.f32.mrf.mxu0
      %v1129 = vadd.f32 %v737, %v1128
      %1130 = vmatmul.bf16.gmra.mxu0 %v975
      %v1131 = vpop.f32.mrf.mxu0
      %v1132 = vadd.f32 %v737, %v1131
      %v1133 = vpop.f32.mrf.mxu0
      %v1134 = vadd.f32 %v737, %v1133
      %1135 = vmatmul.bf16.gmra.mxu0 %v978
      %v1136 = vpop.f32.mrf.mxu0
      %v1137 = vpop.f32.mrf.mxu0
      %1138 = vdwg.mxu0
      %1140 = vset.pattern.permute.xlu0 0
      %1141 = vperm.xlu0 %1140, %v570
      %v1142 = vpop.permute.xlu0 %1141
      %1145 = vset.pattern.permute.xlu0 0
      %1146 = vperm.xlu0 %1145, %v571
      %v1147 = vpop.permute.xlu0 %1146
      %1150 = vset.pattern.permute.xlu0 0
      %1151 = vperm.xlu0 %1150, %v572
      %v1152 = vpop.permute.xlu0 %1151
      %1155 = vset.pattern.permute.xlu0 0
      %1156 = vperm.xlu0 %1155, %v573
      %v1157 = vpop.permute.xlu0 %1156
      %1160 = vset.pattern.permute.xlu0 0
      %1161 = vperm.xlu0 %1160, %v574
      %v1162 = vpop.permute.xlu0 %1161
      %1165 = vset.pattern.permute.xlu0 0
      %1166 = vperm.xlu0 %1165, %v575
      %v1167 = vpop.permute.xlu0 %1166
      %1170 = vset.pattern.permute.xlu0 0
      %1171 = vperm.xlu0 %1170, %v576
      %v1172 = vpop.permute.xlu0 %1171
      %1175 = vset.pattern.permute.xlu0 0
      %1176 = vperm.xlu0 %1175, %v577
      %v1177 = vpop.permute.xlu0 %1176
      %1180 = vset.pattern.permute.xlu0 0
      %1181 = vperm.xlu0 %1180, %v578
      %v1182 = vpop.permute.xlu0 %1181
      %1185 = vset.pattern.permute.xlu0 0
      %1186 = vperm.xlu0 %1185, %v579
      %v1187 = vpop.permute.xlu0 %1186
      %1190 = vset.pattern.permute.xlu0 0
      %1191 = vperm.xlu0 %1190, %v580
      %v1192 = vpop.permute.xlu0 %1191
      %1195 = vset.pattern.permute.xlu0 0
      %1196 = vperm.xlu0 %1195, %v581
      %v1197 = vpop.permute.xlu0 %1196
      %1200 = vset.pattern.permute.xlu0 0
      %1201 = vperm.xlu0 %1200, %v582
      %v1202 = vpop.permute.xlu0 %1201
      %1205 = vset.pattern.permute.xlu0 0
      %1206 = vperm.xlu0 %1205, %v583
      %v1207 = vpop.permute.xlu0 %1206
      %1210 = vset.pattern.permute.xlu0 0
      %1211 = vperm.xlu0 %1210, %v584
      %v1212 = vpop.permute.xlu0 %1211
      %1215 = vset.pattern.permute.xlu0 0
      %1216 = vperm.xlu0 %1215, %v585
      %v1217 = vpop.permute.xlu0 %1216
      %1220 = vset.pattern.permute.xlu0 0
      %1221 = vperm.xlu0 %1220, %v586
      %v1222 = vpop.permute.xlu0 %1221
      %1225 = vset.pattern.permute.xlu0 0
      %1226 = vperm.xlu0 %1225, %v587
      %v1227 = vpop.permute.xlu0 %1226
      %1230 = vset.pattern.permute.xlu0 0
      %1231 = vperm.xlu0 %1230, %v588
      %v1232 = vpop.permute.xlu0 %1231
      %1235 = vset.pattern.permute.xlu0 0
      %1236 = vperm.xlu0 %1235, %v589
      %v1237 = vpop.permute.xlu0 %1236
      %1240 = vset.pattern.permute.xlu0 0
      %1241 = vperm.xlu0 %1240, %v590
      %v1242 = vpop.permute.xlu0 %1241
      %1245 = vset.pattern.permute.xlu0 0
      %1246 = vperm.xlu0 %1245, %v591
      %v1247 = vpop.permute.xlu0 %1246
      %1250 = vset.pattern.permute.xlu0 0
      %1251 = vperm.xlu0 %1250, %v592
      %v1252 = vpop.permute.xlu0 %1251
      %1255 = vset.pattern.permute.xlu0 0
      %1256 = vperm.xlu0 %1255, %v593
      %v1257 = vpop.permute.xlu0 %1256
      %1260 = vset.pattern.permute.xlu0 0
      %1261 = vperm.xlu0 %1260, %v594
      %v1262 = vpop.permute.xlu0 %1261
      %1265 = vset.pattern.permute.xlu0 0
      %1266 = vperm.xlu0 %1265, %v595
      %v1267 = vpop.permute.xlu0 %1266
      %1270 = vset.pattern.permute.xlu0 0
      %1271 = vperm.xlu0 %1270, %v596
      %v1272 = vpop.permute.xlu0 %1271
      %1275 = vset.pattern.permute.xlu0 0
      %1276 = vperm.xlu0 %1275, %v597
      %v1277 = vpop.permute.xlu0 %1276
      %1280 = vset.pattern.permute.xlu0 0
      %1281 = vperm.xlu0 %1280, %v598
      %v1282 = vpop.permute.xlu0 %1281
      %1285 = vset.pattern.permute.xlu0 0
      %1286 = vperm.xlu0 %1285, %v599
      %v1287 = vpop.permute.xlu0 %1286
      %1290 = vset.pattern.permute.xlu0 0
      %1291 = vperm.xlu0 %1290, %v600
      %v1292 = vpop.permute.xlu0 %1291
      %1295 = vset.pattern.permute.xlu0 0
      %1296 = vperm.xlu0 %1295, %v601
      %v1297 = vpop.permute.xlu0 %1296
      %1300 = vset.pattern.permute.xlu0 0
      %1301 = vperm.xlu0 %1300, %v602
      %v1302 = vpop.permute.xlu0 %1301
      %1305 = vset.pattern.permute.xlu0 0
      %1306 = vperm.xlu0 %1305, %v603
      %v1307 = vpop.permute.xlu0 %1306
      %1310 = vset.pattern.permute.xlu0 0
      %1311 = vperm.xlu0 %1310, %v604
      %v1312 = vpop.permute.xlu0 %1311
      %1315 = vset.pattern.permute.xlu0 0
      %1316 = vperm.xlu0 %1315, %v605
      %v1317 = vpop.permute.xlu0 %1316
      %1320 = vset.pattern.permute.xlu0 0
      %1321 = vperm.xlu0 %1320, %v606
      %v1322 = vpop.permute.xlu0 %1321
      %1325 = vset.pattern.permute.xlu0 0
      %1326 = vperm.xlu0 %1325, %v607
      %v1327 = vpop.permute.xlu0 %1326
      %1330 = vset.pattern.permute.xlu0 0
      %1331 = vperm.xlu0 %1330, %v608
      %v1332 = vpop.permute.xlu0 %1331
      %1335 = vset.pattern.permute.xlu0 0
      %1336 = vperm.xlu0 %1335, %v609
      %v1337 = vpop.permute.xlu0 %1336
      %1340 = vset.pattern.permute.xlu0 0
      %1341 = vperm.xlu0 %1340, %v610
      %v1342 = vpop.permute.xlu0 %1341
      %1345 = vset.pattern.permute.xlu0 0
      %1346 = vperm.xlu0 %1345, %v611
      %v1347 = vpop.permute.xlu0 %1346
      %1350 = vset.pattern.permute.xlu0 0
      %1351 = vperm.xlu0 %1350, %v612
      %v1352 = vpop.permute.xlu0 %1351
      %1355 = vset.pattern.permute.xlu0 0
      %1356 = vperm.xlu0 %1355, %v613
      %v1357 = vpop.permute.xlu0 %1356
      %1360 = vset.pattern.permute.xlu0 0
      %1361 = vperm.xlu0 %1360, %v614
      %v1362 = vpop.permute.xlu0 %1361
      %1365 = vset.pattern.permute.xlu0 0
      %1366 = vperm.xlu0 %1365, %v615
      %v1367 = vpop.permute.xlu0 %1366
      %1370 = vset.pattern.permute.xlu0 0
      %1371 = vperm.xlu0 %1370, %v616
      %v1372 = vpop.permute.xlu0 %1371
      %1375 = vset.pattern.permute.xlu0 0
      %1376 = vperm.xlu0 %1375, %v617
      %v1377 = vpop.permute.xlu0 %1376
      %1380 = vset.pattern.permute.xlu0 0
      %1381 = vperm.xlu0 %1380, %v618
      %v1382 = vpop.permute.xlu0 %1381
      %1385 = vset.pattern.permute.xlu0 0
      %1386 = vperm.xlu0 %1385, %v619
      %v1387 = vpop.permute.xlu0 %1386
      %1390 = vset.pattern.permute.xlu0 0
      %1391 = vperm.xlu0 %1390, %v620
      %v1392 = vpop.permute.xlu0 %1391
      %1395 = vset.pattern.permute.xlu0 0
      %1396 = vperm.xlu0 %1395, %v621
      %v1397 = vpop.permute.xlu0 %1396
      %1400 = vset.pattern.permute.xlu0 0
      %1401 = vperm.xlu0 %1400, %v622
      %v1402 = vpop.permute.xlu0 %1401
      %1405 = vset.pattern.permute.xlu0 0
      %1406 = vperm.xlu0 %1405, %v623
      %v1407 = vpop.permute.xlu0 %1406
      %1410 = vset.pattern.permute.xlu0 0
      %1411 = vperm.xlu0 %1410, %v624
      %v1412 = vpop.permute.xlu0 %1411
      %1415 = vset.pattern.permute.xlu0 0
      %1416 = vperm.xlu0 %1415, %v625
      %v1417 = vpop.permute.xlu0 %1416
      %v1419 = vmul.f32 %v997, %v1142
      %v1420 = vmul.f32 %v999, %v1147
      %v1421 = vmul.f32 %v1002, %v1152
      %v1422 = vmul.f32 %v1004, %v1157
      %v1423 = vmul.f32 %v1007, %v1162
      %v1424 = vmul.f32 %v1009, %v1167
      %v1425 = vmul.f32 %v1012, %v1172
      %v1426 = vmul.f32 %v1014, %v1177
      %v1427 = vmul.f32 %v1017, %v1182
      %v1428 = vmul.f32 %v1019, %v1187
      %v1429 = vmul.f32 %v1022, %v1192
      %v1430 = vmul.f32 %v1024, %v1197
      %v1431 = vmul.f32 %v1027, %v1202
      %v1432 = vmul.f32 %v1029, %v1207
      %v1433 = vmul.f32 %v1032, %v1212
      %v1434 = vmul.f32 %v1034, %v1217
      %v1435 = vmul.f32 %v1037, %v1222
      %v1436 = vmul.f32 %v1039, %v1227
      %v1437 = vmul.f32 %v1042, %v1232
      %v1438 = vmul.f32 %v1044, %v1237
      %v1439 = vmul.f32 %v1047, %v1242
      %v1440 = vmul.f32 %v1049, %v1247
      %v1441 = vmul.f32 %v1052, %v1252
      %v1442 = vmul.f32 %v1054, %v1257
      %v1443 = vmul.f32 %v1057, %v1262
      %v1444 = vmul.f32 %v1059, %v1267
      %v1445 = vmul.f32 %v1062, %v1272
      %v1446 = vmul.f32 %v1064, %v1277
      %v1447 = vmul.f32 %v1067, %v1282
      %v1448 = vmul.f32 %v1069, %v1287
      %v1449 = vmul.f32 %v1072, %v1292
      %v1450 = vmul.f32 %v1074, %v1297
      %v1451 = vmul.f32 %v1077, %v1302
      %v1452 = vmul.f32 %v1079, %v1307
      %v1453 = vmul.f32 %v1082, %v1312
      %v1454 = vmul.f32 %v1084, %v1317
      %v1455 = vmul.f32 %v1087, %v1322
      %v1456 = vmul.f32 %v1089, %v1327
      %v1457 = vmul.f32 %v1092, %v1332
      %v1458 = vmul.f32 %v1094, %v1337
      %v1459 = vmul.f32 %v1097, %v1342
      %v1460 = vmul.f32 %v1099, %v1347
      %v1461 = vmul.f32 %v1102, %v1352
      %v1462 = vmul.f32 %v1104, %v1357
      %v1463 = vmul.f32 %v1107, %v1362
      %v1464 = vmul.f32 %v1109, %v1367
      %v1465 = vmul.f32 %v1112, %v1372
      %v1466 = vmul.f32 %v1114, %v1377
      %v1467 = vmul.f32 %v1117, %v1382
      %v1468 = vmul.f32 %v1119, %v1387
      %v1469 = vmul.f32 %v1122, %v1392
      %v1470 = vmul.f32 %v1124, %v1397
      %v1471 = vmul.f32 %v1127, %v1402
      %v1472 = vmul.f32 %v1129, %v1407
      %v1473 = vmul.f32 %v1132, %v1412
      %v1474 = vmul.f32 %v1134, %v1417
      %v1475 = vpack.c.bf16 %v1419, %v1419
      %v1476 = vpack.c.bf16 %v1420, %v1420
      %v1477 = vpack.c.bf16 %v1421, %v1421
      %v1478 = vpack.c.bf16 %v1422, %v1422
      %v1479 = vpack.c.bf16 %v1423, %v1423
      %v1480 = vpack.c.bf16 %v1424, %v1424
      %v1481 = vpack.c.bf16 %v1425, %v1425
      %v1482 = vpack.c.bf16 %v1426, %v1426
      %v1483 = vpack.c.bf16 %v1427, %v1427
      %v1484 = vpack.c.bf16 %v1428, %v1428
      %v1485 = vpack.c.bf16 %v1429, %v1429
      %v1486 = vpack.c.bf16 %v1430, %v1430
      %v1487 = vpack.c.bf16 %v1431, %v1431
      %v1488 = vpack.c.bf16 %v1432, %v1432
      %v1489 = vpack.c.bf16 %v1433, %v1433
      %v1490 = vpack.c.bf16 %v1434, %v1434
      %v1491 = vpack.c.bf16 %v1435, %v1435
      %v1492 = vpack.c.bf16 %v1436, %v1436
      %v1493 = vpack.c.bf16 %v1437, %v1437
      %v1494 = vpack.c.bf16 %v1438, %v1438
      %v1495 = vpack.c.bf16 %v1439, %v1439
      %v1496 = vpack.c.bf16 %v1440, %v1440
      %v1497 = vpack.c.bf16 %v1441, %v1441
      %v1498 = vpack.c.bf16 %v1442, %v1442
      %v1499 = vpack.c.bf16 %v1443, %v1443
      %v1500 = vpack.c.bf16 %v1444, %v1444
      %v1501 = vpack.c.bf16 %v1445, %v1445
      %v1502 = vpack.c.bf16 %v1446, %v1446
      %v1503 = vpack.c.bf16 %v1447, %v1447
      %v1504 = vpack.c.bf16 %v1448, %v1448
      %v1505 = vpack.c.bf16 %v1449, %v1449
      %v1506 = vpack.c.bf16 %v1450, %v1450
      %v1507 = vpack.c.bf16 %v1451, %v1451
      %v1508 = vpack.c.bf16 %v1452, %v1452
      %v1509 = vpack.c.bf16 %v1453, %v1453
      %v1510 = vpack.c.bf16 %v1454, %v1454
      %v1511 = vpack.c.bf16 %v1455, %v1455
      %v1512 = vpack.c.bf16 %v1456, %v1456
      %v1513 = vpack.c.bf16 %v1457, %v1457
      %v1514 = vpack.c.bf16 %v1458, %v1458
      %v1515 = vpack.c.bf16 %v1459, %v1459
      %v1516 = vpack.c.bf16 %v1460, %v1460
      %v1517 = vpack.c.bf16 %v1461, %v1461
      %v1518 = vpack.c.bf16 %v1462, %v1462
      %v1519 = vpack.c.bf16 %v1463, %v1463
      %v1520 = vpack.c.bf16 %v1464, %v1464
      %v1521 = vpack.c.bf16 %v1465, %v1465
      %v1522 = vpack.c.bf16 %v1466, %v1466
      %v1523 = vpack.c.bf16 %v1467, %v1467
      %v1524 = vpack.c.bf16 %v1468, %v1468
      %v1525 = vpack.c.bf16 %v1469, %v1469
      %v1526 = vpack.c.bf16 %v1470, %v1470
      %v1527 = vpack.c.bf16 %v1471, %v1471
      %v1528 = vpack.c.bf16 %v1472, %v1472
      %v1529 = vpack.c.bf16 %v1473, %v1473
      %v1530 = vpack.c.bf16 %v1474, %v1474
      %v1531 = vld [vmem:[%s9] sm:$0xf]
      %v1532 = vld [vmem:[%s9 + $0x4] sm:$0xf]
      %v1533 = vld [vmem:[%s9 + $0x8] sm:$0xf]
      %v1534 = vld [vmem:[%s9 + $0xc] sm:$0xf]
      %v1535 = vld [vmem:[%s9 + $0x10] sm:$0x3]
      %v1585 = vunpack.c.l.b16 %v1478
      %v1586 = vunpack.c.l.b16 %v1479
      %v1587 = vunpack.c.l.b16 %v1480
      %v1588 = vunpack.c.l.b16 %v1481
      %v1589 = vunpack.c.l.b16 %v1482
      %v1590 = vunpack.c.l.b16 %v1483
      %v1591 = vunpack.c.l.b16 %v1484
      %v1592 = vunpack.c.l.b16 %v1485
      %v1593 = vunpack.c.l.b16 %v1486
      %v1594 = vunpack.c.l.b16 %v1487
      %v1595 = vunpack.c.l.b16 %v1488
      %v1596 = vunpack.c.l.b16 %v1489
      %v1597 = vunpack.c.l.b16 %v1490
      %v1598 = vunpack.c.l.b16 %v1491
      %v1599 = vunpack.c.l.b16 %v1492
      %v1600 = vunpack.c.l.b16 %v1493
      %v1601 = vunpack.c.l.b16 %v1494
      %v1602 = vunpack.c.l.b16 %v1495
      %v1603 = vunpack.c.l.b16 %v1496
      %v1604 = vunpack.c.l.b16 %v1497
      %v1605 = vunpack.c.l.b16 %v1498
      %v1606 = vunpack.c.l.b16 %v1499
      %v1607 = vunpack.c.l.b16 %v1500
      %v1608 = vunpack.c.l.b16 %v1501
      %v1609 = vunpack.c.l.b16 %v1502
      %v1610 = vunpack.c.l.b16 %v1503
      %v1611 = vunpack.c.l.b16 %v1504
      %v1612 = vunpack.c.l.b16 %v1505
      %v1613 = vunpack.c.l.b16 %v1506
      %v1614 = vunpack.c.l.b16 %v1507
      %v1615 = vunpack.c.l.b16 %v1508
      %v1616 = vunpack.c.l.b16 %v1509
      %v1617 = vunpack.c.l.b16 %v1510
      %v1618 = vunpack.c.l.b16 %v1511
      %v1619 = vunpack.c.l.b16 %v1512
      %v1620 = vunpack.c.l.b16 %v1513
      %v1621 = vunpack.c.l.b16 %v1514
      %v1622 = vunpack.c.l.b16 %v1515
      %v1623 = vunpack.c.l.b16 %v1516
      %v1624 = vunpack.c.l.b16 %v1517
      %v1625 = vunpack.c.l.b16 %v1518
      %v1626 = vunpack.c.l.b16 %v1519
      %v1627 = vunpack.c.l.b16 %v1520
      %v1628 = vunpack.c.l.b16 %v1521
      %v1629 = vunpack.c.l.b16 %v1522
      %v1630 = vunpack.c.l.b16 %v1523
      %v1631 = vunpack.c.l.b16 %v1524
      %v1632 = vunpack.c.l.b16 %v1525
      %v1633 = vunpack.c.l.b16 %v1526
      %v1634 = vpack.c.b16 %v1586, %v1585
      %v1635 = vpack.c.b16 %v1588, %v1587
      %v1636 = vpack.c.b16 %v1590, %v1589
      %v1637 = vpack.c.b16 %v1592, %v1591
      %v1638 = vpack.c.b16 %v1594, %v1593
      %v1639 = vpack.c.b16 %v1596, %v1595
      %v1640 = vpack.c.b16 %v1598, %v1597
      %v1641 = vpack.c.b16 %v1600, %v1599
      %v1642 = vpack.c.b16 %v1602, %v1601
      %v1643 = vpack.c.b16 %v1604, %v1603
      %v1644 = vpack.c.b16 %v1606, %v1605
      %v1645 = vpack.c.b16 %v1608, %v1607
      %v1646 = vpack.c.b16 %v1610, %v1609
      %v1647 = vpack.c.b16 %v1612, %v1611
      %v1648 = vpack.c.b16 %v1614, %v1613
      %v1649 = vpack.c.b16 %v1616, %v1615
      %v1650 = vpack.c.b16 %v1618, %v1617
      %v1651 = vpack.c.b16 %v1620, %v1619
      %v1652 = vpack.c.b16 %v1622, %v1621
      %v1653 = vpack.c.b16 %v1624, %v1623
      %v1654 = vpack.c.b16 %v1626, %v1625
      %v1655 = vpack.c.b16 %v1628, %v1627
      %v1656 = vpack.c.b16 %v1630, %v1629
      %v1657 = vpack.c.b16 %v1632, %v1631
      %v1658 = vpack.c.b16 %v1633, %v1633
      %vm1659 = vsmask.f32 4352
      %v1661 = vshrl.u32 %v1634, 16
      %v1663 = vrot.slane %v1661, 3
      %v1664 = vshll.u32 %v1634, 16
      %v1666 = vrot.slane %v1664, 4
      %v1667 = vor.u32 %v1663, %v1666
      %v1669 = vshrl.u32 %v1635, 16
      %v1671 = vrot.slane %v1669, 3
      %v1672 = vshll.u32 %v1635, 16
      %v1674 = vrot.slane %v1672, 4
      %v1675 = vor.u32 %v1671, %v1674
      %v1676 = vsel %vm1659, %v1667, %v1675
      %v1678 = vshrl.u32 %v1636, 16
      %v1680 = vrot.slane %v1678, 3
      %v1681 = vshll.u32 %v1636, 16
      %v1683 = vrot.slane %v1681, 4
      %v1684 = vor.u32 %v1680, %v1683
      %v1685 = vsel %vm1659, %v1675, %v1684
      %v1687 = vshrl.u32 %v1637, 16
      %v1689 = vrot.slane %v1687, 3
      %v1690 = vshll.u32 %v1637, 16
      %v1692 = vrot.slane %v1690, 4
      %v1693 = vor.u32 %v1689, %v1692
      %v1694 = vsel %vm1659, %v1684, %v1693
      %v1696 = vshrl.u32 %v1638, 16
      %v1698 = vrot.slane %v1696, 3
      %v1699 = vshll.u32 %v1638, 16
      %v1701 = vrot.slane %v1699, 4
      %v1702 = vor.u32 %v1698, %v1701
      %v1703 = vsel %vm1659, %v1693, %v1702
      %v1705 = vshrl.u32 %v1639, 16
      %v1707 = vrot.slane %v1705, 3
      %v1708 = vshll.u32 %v1639, 16
      %v1710 = vrot.slane %v1708, 4
      %v1711 = vor.u32 %v1707, %v1710
      %v1712 = vsel %vm1659, %v1702, %v1711
      %v1714 = vshrl.u32 %v1640, 16
      %v1716 = vrot.slane %v1714, 3
      %v1717 = vshll.u32 %v1640, 16
      %v1719 = vrot.slane %v1717, 4
      %v1720 = vor.u32 %v1716, %v1719
      %v1721 = vsel %vm1659, %v1711, %v1720
      %v1723 = vshrl.u32 %v1641, 16
      %v1725 = vrot.slane %v1723, 3
      %v1726 = vshll.u32 %v1641, 16
      %v1728 = vrot.slane %v1726, 4
      %v1729 = vor.u32 %v1725, %v1728
      %v1730 = vsel %vm1659, %v1720, %v1729
      %v1732 = vshrl.u32 %v1642, 16
      %v1734 = vrot.slane %v1732, 3
      %v1735 = vshll.u32 %v1642, 16
      %v1737 = vrot.slane %v1735, 4
      %v1738 = vor.u32 %v1734, %v1737
      %v1739 = vsel %vm1659, %v1729, %v1738
      %v1741 = vshrl.u32 %v1643, 16
      %v1743 = vrot.slane %v1741, 3
      %v1744 = vshll.u32 %v1643, 16
      %v1746 = vrot.slane %v1744, 4
      %v1747 = vor.u32 %v1743, %v1746
      %v1748 = vsel %vm1659, %v1738, %v1747
      %v1750 = vshrl.u32 %v1644, 16
      %v1752 = vrot.slane %v1750, 3
      %v1753 = vshll.u32 %v1644, 16
      %v1755 = vrot.slane %v1753, 4
      %v1756 = vor.u32 %v1752, %v1755
      %v1757 = vsel %vm1659, %v1747, %v1756
      %v1759 = vshrl.u32 %v1645, 16
      %v1761 = vrot.slane %v1759, 3
      %v1762 = vshll.u32 %v1645, 16
      %v1764 = vrot.slane %v1762, 4
      %v1765 = vor.u32 %v1761, %v1764
      %v1766 = vsel %vm1659, %v1756, %v1765
      %v1768 = vshrl.u32 %v1646, 16
      %v1770 = vrot.slane %v1768, 3
      %v1771 = vshll.u32 %v1646, 16
      %v1773 = vrot.slane %v1771, 4
      %v1774 = vor.u32 %v1770, %v1773
      %v1775 = vsel %vm1659, %v1765, %v1774
      %v1777 = vshrl.u32 %v1647, 16
      %v1779 = vrot.slane %v1777, 3
      %v1780 = vshll.u32 %v1647, 16
      %v1782 = vrot.slane %v1780, 4
      %v1783 = vor.u32 %v1779, %v1782
      %v1784 = vsel %vm1659, %v1774, %v1783
      %v1786 = vshrl.u32 %v1648, 16
      %v1788 = vrot.slane %v1786, 3
      %v1789 = vshll.u32 %v1648, 16
      %v1791 = vrot.slane %v1789, 4
      %v1792 = vor.u32 %v1788, %v1791
      %v1793 = vsel %vm1659, %v1783, %v1792
      %v1795 = vshrl.u32 %v1649, 16
      %v1797 = vrot.slane %v1795, 3
      %v1798 = vshll.u32 %v1649, 16
      %v1800 = vrot.slane %v1798, 4
      %v1801 = vor.u32 %v1797, %v1800
      %v1802 = vsel %vm1659, %v1792, %v1801
      %v1804 = vshrl.u32 %v1650, 16
      %v1806 = vrot.slane %v1804, 3
      %v1807 = vshll.u32 %v1650, 16
      %v1809 = vrot.slane %v1807, 4
      %v1810 = vor.u32 %v1806, %v1809
      %v1811 = vsel %vm1659, %v1801, %v1810
      %v1813 = vshrl.u32 %v1651, 16
      %v1815 = vrot.slane %v1813, 3
      %v1816 = vshll.u32 %v1651, 16
      %v1818 = vrot.slane %v1816, 4
      %v1819 = vor.u32 %v1815, %v1818
      %v1820 = vsel %vm1659, %v1810, %v1819
      %v1822 = vshrl.u32 %v1652, 16
      %v1824 = vrot.slane %v1822, 3
      %v1825 = vshll.u32 %v1652, 16
      %v1827 = vrot.slane %v1825, 4
      %v1828 = vor.u32 %v1824, %v1827
      %v1829 = vsel %vm1659, %v1819, %v1828
      %v1831 = vshrl.u32 %v1653, 16
      %v1833 = vrot.slane %v1831, 3
      %v1834 = vshll.u32 %v1653, 16
      %v1836 = vrot.slane %v1834, 4
      %v1837 = vor.u32 %v1833, %v1836
      %v1838 = vsel %vm1659, %v1828, %v1837
      %v1840 = vshrl.u32 %v1654, 16
      %v1842 = vrot.slane %v1840, 3
      %v1843 = vshll.u32 %v1654, 16
      %v1845 = vrot.slane %v1843, 4
      %v1846 = vor.u32 %v1842, %v1845
      %v1847 = vsel %vm1659, %v1837, %v1846
      %v1849 = vshrl.u32 %v1655, 16
      %v1851 = vrot.slane %v1849, 3
      %v1852 = vshll.u32 %v1655, 16
      %v1854 = vrot.slane %v1852, 4
      %v1855 = vor.u32 %v1851, %v1854
      %v1856 = vsel %vm1659, %v1846, %v1855
      %v1858 = vshrl.u32 %v1656, 16
      %v1860 = vrot.slane %v1858, 3
      %v1861 = vshll.u32 %v1656, 16
      %v1863 = vrot.slane %v1861, 4
      %v1864 = vor.u32 %v1860, %v1863
      %v1865 = vsel %vm1659, %v1855, %v1864
      %v1867 = vshrl.u32 %v1657, 16
      %v1869 = vrot.slane %v1867, 3
      %v1870 = vshll.u32 %v1657, 16
      %v1872 = vrot.slane %v1870, 4
      %v1873 = vor.u32 %v1869, %v1872
      %v1874 = vsel %vm1659, %v1864, %v1873
      %v1876 = vshrl.u32 %v1658, 16
      %v1878 = vrot.slane %v1876, 3
      %v1879 = vshll.u32 %v1658, 16
      %v1881 = vrot.slane %v1879, 4
      %v1882 = vor.u32 %v1878, %v1881
      %v1883 = vsel %vm1659, %v1873, %v1882
      %v1885 = vunpack.c.l.b16 %v1532
      %v1886 = vpack.c.b16 %v1885, %v1885
      %v1887 = vrot.slane %v1886, 2
      %v1889 = vsel %vm889, %v1676, 0
      %v1892 = vsel %vm889, %v1685, 0
      %v1895 = vsel %vm889, %v1694, 0
      %v1898 = vsel %vm889, %v1703, 0
      %v1901 = vsel %vm889, %v1712, 0
      %v1904 = vsel %vm889, %v1721, 0
      %v1907 = vsel %vm889, %v1730, 0
      %v1910 = vsel %vm889, %v1739, 0
      %v1913 = vsel %vm889, %v1748, 0
      %v1916 = vsel %vm889, %v1757, 0
      %v1919 = vsel %vm889, %v1766, 0
      %v1922 = vsel %vm889, %v1775, 0
      %v1925 = vsel %vm889, %v1784, 0
      %v1928 = vsel %vm889, %v1793, 0
      %v1931 = vsel %vm889, %v1802, 0
      %v1934 = vsel %vm889, %v1811, 0
      %v1937 = vsel %vm889, %v1820, 0
      %v1940 = vsel %vm889, %v1829, 0
      %v1943 = vsel %vm889, %v1838, 0
      %v1946 = vsel %vm889, %v1847, 0
      %v1949 = vsel %vm889, %v1856, 0
      %v1952 = vsel %vm889, %v1865, 0
      %v1955 = vsel %vm889, %v1874, 0
      %v1958 = vsel %vm889, %v1883, 0
      %v1961 = vsel %vm980, %v1887, 0
      %1963 = vmatpush.bf16.msra.mxu0 0
      %1964 = vmatpush.bf16.msra.mxu0 0
      %1965 = vmatpush.bf16.msra.mxu0 0
      %1966 = vmatpush.bf16.msra.mxu0 0
      %1967 = vmatpush.bf16.msra.mxu0 0
      %1968 = vmatpush.bf16.msra.mxu0 0
      %1969 = vmatpush.bf16.msra.mxu0 0
      %1970 = vmatpush.bf16.msra.mxu0 %v1961
      %1971 = vmatmul.bf16.gmra.mxu0 %v1889
      %v1972 = vpop.f32.mrf.mxu0
      %v1973 = vadd.f32 0.0, %v1972
      %v1974 = vpop.f32.mrf.mxu0
      %v1975 = vadd.f32 0.0, %v1974
      %1976 = vmatmul.bf16.gmra.mxu0 %v1892
      %v1977 = vpop.f32.mrf.mxu0
      %v1978 = vadd.f32 0.0, %v1977
      %v1979 = vpop.f32.mrf.mxu0
      %v1980 = vadd.f32 0.0, %v1979
      %1981 = vmatmul.bf16.gmra.mxu0 %v1895
      %v1982 = vpop.f32.mrf.mxu0
      %v1983 = vadd.f32 0.0, %v1982
      %v1984 = vpop.f32.mrf.mxu0
      %v1985 = vadd.f32 0.0, %v1984
      %1986 = vmatmul.bf16.gmra.mxu0 %v1898
      %v1987 = vpop.f32.mrf.mxu0
      %v1988 = vadd.f32 0.0, %v1987
      %v1989 = vpop.f32.mrf.mxu0
      %v1990 = vadd.f32 0.0, %v1989
      %1991 = vmatmul.bf16.gmra.mxu0 %v1901
      %v1992 = vpop.f32.mrf.mxu0
      %v1993 = vadd.f32 0.0, %v1992
      %v1994 = vpop.f32.mrf.mxu0
      %v1995 = vadd.f32 0.0, %v1994
      %1996 = vmatmul.bf16.gmra.mxu0 %v1904
      %v1997 = vpop.f32.mrf.mxu0
      %v1998 = vadd.f32 0.0, %v1997
      %v1999 = vpop.f32.mrf.mxu0
      %v2000 = vadd.f32 0.0, %v1999
      %2001 = vmatmul.bf16.gmra.mxu0 %v1907
      %v2002 = vpop.f32.mrf.mxu0
      %v2003 = vadd.f32 0.0, %v2002
      %v2004 = vpop.f32.mrf.mxu0
      %v2005 = vadd.f32 0.0, %v2004
      %2006 = vmatmul.bf16.gmra.mxu0 %v1910
      %v2007 = vpop.f32.mrf.mxu0
      %v2008 = vadd.f32 0.0, %v2007
      %v2009 = vpop.f32.mrf.mxu0
      %v2010 = vadd.f32 0.0, %v2009
      %2011 = vmatmul.bf16.gmra.mxu0 %v1913
      %v2012 = vpop.f32.mrf.mxu0
      %v2013 = vadd.f32 0.0, %v2012
      %v2014 = vpop.f32.mrf.mxu0
      %v2015 = vadd.f32 0.0, %v2014
      %2016 = vmatmul.bf16.gmra.mxu0 %v1916
      %v2017 = vpop.f32.mrf.mxu0
      %v2018 = vadd.f32 0.0, %v2017
      %v2019 = vpop.f32.mrf.mxu0
      %v2020 = vadd.f32 0.0, %v2019
      %2021 = vmatmul.bf16.gmra.mxu0 %v1919
      %v2022 = vpop.f32.mrf.mxu0
      %v2023 = vadd.f32 0.0, %v2022
      %v2024 = vpop.f32.mrf.mxu0
      %v2025 = vadd.f32 0.0, %v2024
      %2026 = vmatmul.bf16.gmra.mxu0 %v1922
      %v2027 = vpop.f32.mrf.mxu0
      %v2028 = vadd.f32 0.0, %v2027
      %v2029 = vpop.f32.mrf.mxu0
      %v2030 = vadd.f32 0.0, %v2029
      %2031 = vmatmul.bf16.gmra.mxu0 %v1925
      %v2032 = vpop.f32.mrf.mxu0
      %v2033 = vadd.f32 0.0, %v2032
      %v2034 = vpop.f32.mrf.mxu0
      %v2035 = vadd.f32 0.0, %v2034
      %2036 = vmatmul.bf16.gmra.mxu0 %v1928
      %v2037 = vpop.f32.mrf.mxu0
      %v2038 = vadd.f32 0.0, %v2037
      %v2039 = vpop.f32.mrf.mxu0
      %v2040 = vadd.f32 0.0, %v2039
      %2041 = vmatmul.bf16.gmra.mxu0 %v1931
      %v2042 = vpop.f32.mrf.mxu0
      %v2043 = vadd.f32 0.0, %v2042
      %v2044 = vpop.f32.mrf.mxu0
      %v2045 = vadd.f32 0.0, %v2044
      %2046 = vmatmul.bf16.gmra.mxu0 %v1934
      %v2047 = vpop.f32.mrf.mxu0
      %v2048 = vadd.f32 0.0, %v2047
      %v2049 = vpop.f32.mrf.mxu0
      %v2050 = vadd.f32 0.0, %v2049
      %2051 = vmatmul.bf16.gmra.mxu0 %v1937
      %v2052 = vpop.f32.mrf.mxu0
      %v2053 = vadd.f32 0.0, %v2052
      %v2054 = vpop.f32.mrf.mxu0
      %v2055 = vadd.f32 0.0, %v2054
      %2056 = vmatmul.bf16.gmra.mxu0 %v1940
      %v2057 = vpop.f32.mrf.mxu0
      %v2058 = vadd.f32 0.0, %v2057
      %v2059 = vpop.f32.mrf.mxu0
      %v2060 = vadd.f32 0.0, %v2059
      %2061 = vmatmul.bf16.gmra.mxu0 %v1943
      %v2062 = vpop.f32.mrf.mxu0
      %v2063 = vadd.f32 0.0, %v2062
      %v2064 = vpop.f32.mrf.mxu0
      %v2065 = vadd.f32 0.0, %v2064
      %2066 = vmatmul.bf16.gmra.mxu0 %v1946
      %v2067 = vpop.f32.mrf.mxu0
      %v2068 = vadd.f32 0.0, %v2067
      %v2069 = vpop.f32.mrf.mxu0
      %v2070 = vadd.f32 0.0, %v2069
      %2071 = vmatmul.bf16.gmra.mxu0 %v1949
      %v2072 = vpop.f32.mrf.mxu0
      %v2073 = vadd.f32 0.0, %v2072
      %v2074 = vpop.f32.mrf.mxu0
      %v2075 = vadd.f32 0.0, %v2074
      %2076 = vmatmul.bf16.gmra.mxu0 %v1952
      %v2077 = vpop.f32.mrf.mxu0
      %v2078 = vadd.f32 0.0, %v2077
      %v2079 = vpop.f32.mrf.mxu0
      %v2080 = vadd.f32 0.0, %v2079
      %2081 = vmatmul.bf16.gmra.mxu0 %v1955
      %v2082 = vpop.f32.mrf.mxu0
      %v2083 = vadd.f32 0.0, %v2082
      %v2084 = vpop.f32.mrf.mxu0
      %v2085 = vadd.f32 0.0, %v2084
      %2086 = vmatmul.bf16.gmra.mxu0 %v1958
      %v2087 = vpop.f32.mrf.mxu0
      %v2088 = vadd.f32 0.0, %v2087
      %v2089 = vpop.f32.mrf.mxu0
      %v2090 = vadd.f32 0.0, %v2089
      %2091 = vdwg.mxu0
      %v2095 = vunpack.c.l.b16 %v1475
      %v2096 = vunpack.c.l.b16 %v1476
      %v2097 = vunpack.c.l.b16 %v1477
      %v2098 = vpack.c.b16 %v2096, %v2095
      %v2099 = vpack.c.b16 %v1585, %v2097
      %v2100 = vpack.c.b16 %v1587, %v1586
      %v2101 = vpack.c.b16 %v1589, %v1588
      %v2102 = vpack.c.b16 %v1591, %v1590
      %v2103 = vpack.c.b16 %v1593, %v1592
      %v2104 = vpack.c.b16 %v1595, %v1594
      %v2105 = vpack.c.b16 %v1597, %v1596
      %v2106 = vpack.c.b16 %v1599, %v1598
      %v2107 = vpack.c.b16 %v1601, %v1600
      %v2108 = vpack.c.b16 %v1603, %v1602
      %v2109 = vpack.c.b16 %v1605, %v1604
      %v2110 = vpack.c.b16 %v1607, %v1606
      %v2111 = vpack.c.b16 %v1609, %v1608
      %v2112 = vpack.c.b16 %v1611, %v1610
      %v2113 = vpack.c.b16 %v1613, %v1612
      %v2114 = vpack.c.b16 %v1615, %v1614
      %v2115 = vpack.c.b16 %v1617, %v1616
      %v2116 = vpack.c.b16 %v1619, %v1618
      %v2117 = vpack.c.b16 %v1621, %v1620
      %v2118 = vpack.c.b16 %v1623, %v1622
      %v2119 = vpack.c.b16 %v1625, %v1624
      %v2120 = vpack.c.b16 %v1627, %v1626
      %v2121 = vpack.c.b16 %v1629, %v1628
      %v2122 = vpack.c.b16 %v1630, %v1630
      %v2124 = vshrl.u32 %v2098, 16
      %v2126 = vrot.slane %v2124, 3
      %v2127 = vshll.u32 %v2098, 16
      %v2129 = vrot.slane %v2127, 4
      %v2130 = vor.u32 %v2126, %v2129
      %v2132 = vshrl.u32 %v2099, 16
      %v2134 = vrot.slane %v2132, 3
      %v2135 = vshll.u32 %v2099, 16
      %v2137 = vrot.slane %v2135, 4
      %v2138 = vor.u32 %v2134, %v2137
      %v2139 = vsel %vm1659, %v2130, %v2138
      %v2141 = vshrl.u32 %v2100, 16
      %v2143 = vrot.slane %v2141, 3
      %v2144 = vshll.u32 %v2100, 16
      %v2146 = vrot.slane %v2144, 4
      %v2147 = vor.u32 %v2143, %v2146
      %v2148 = vsel %vm1659, %v2138, %v2147
      %v2150 = vshrl.u32 %v2101, 16
      %v2152 = vrot.slane %v2150, 3
      %v2153 = vshll.u32 %v2101, 16
      %v2155 = vrot.slane %v2153, 4
      %v2156 = vor.u32 %v2152, %v2155
      %v2157 = vsel %vm1659, %v2147, %v2156
      %v2159 = vshrl.u32 %v2102, 16
      %v2161 = vrot.slane %v2159, 3
      %v2162 = vshll.u32 %v2102, 16
      %v2164 = vrot.slane %v2162, 4
      %v2165 = vor.u32 %v2161, %v2164
      %v2166 = vsel %vm1659, %v2156, %v2165
      %v2168 = vshrl.u32 %v2103, 16
      %v2170 = vrot.slane %v2168, 3
      %v2171 = vshll.u32 %v2103, 16
      %v2173 = vrot.slane %v2171, 4
      %v2174 = vor.u32 %v2170, %v2173
      %v2175 = vsel %vm1659, %v2165, %v2174
      %v2177 = vshrl.u32 %v2104, 16
      %v2179 = vrot.slane %v2177, 3
      %v2180 = vshll.u32 %v2104, 16
      %v2182 = vrot.slane %v2180, 4
      %v2183 = vor.u32 %v2179, %v2182
      %v2184 = vsel %vm1659, %v2174, %v2183
      %v2186 = vshrl.u32 %v2105, 16
      %v2188 = vrot.slane %v2186, 3
      %v2189 = vshll.u32 %v2105, 16
      %v2191 = vrot.slane %v2189, 4
      %v2192 = vor.u32 %v2188, %v2191
      %v2193 = vsel %vm1659, %v2183, %v2192
      %v2195 = vshrl.u32 %v2106, 16
      %v2197 = vrot.slane %v2195, 3
      %v2198 = vshll.u32 %v2106, 16
      %v2200 = vrot.slane %v2198, 4
      %v2201 = vor.u32 %v2197, %v2200
      %v2202 = vsel %vm1659, %v2192, %v2201
      %v2204 = vshrl.u32 %v2107, 16
      %v2206 = vrot.slane %v2204, 3
      %v2207 = vshll.u32 %v2107, 16
      %v2209 = vrot.slane %v2207, 4
      %v2210 = vor.u32 %v2206, %v2209
      %v2211 = vsel %vm1659, %v2201, %v2210
      %v2213 = vshrl.u32 %v2108, 16
      %v2215 = vrot.slane %v2213, 3
      %v2216 = vshll.u32 %v2108, 16
      %v2218 = vrot.slane %v2216, 4
      %v2219 = vor.u32 %v2215, %v2218
      %v2220 = vsel %vm1659, %v2210, %v2219
      %v2222 = vshrl.u32 %v2109, 16
      %v2224 = vrot.slane %v2222, 3
      %v2225 = vshll.u32 %v2109, 16
      %v2227 = vrot.slane %v2225, 4
      %v2228 = vor.u32 %v2224, %v2227
      %v2229 = vsel %vm1659, %v2219, %v2228
      %v2231 = vshrl.u32 %v2110, 16
      %v2233 = vrot.slane %v2231, 3
      %v2234 = vshll.u32 %v2110, 16
      %v2236 = vrot.slane %v2234, 4
      %v2237 = vor.u32 %v2233, %v2236
      %v2238 = vsel %vm1659, %v2228, %v2237
      %v2240 = vshrl.u32 %v2111, 16
      %v2242 = vrot.slane %v2240, 3
      %v2243 = vshll.u32 %v2111, 16
      %v2245 = vrot.slane %v2243, 4
      %v2246 = vor.u32 %v2242, %v2245
      %v2247 = vsel %vm1659, %v2237, %v2246
      %v2249 = vshrl.u32 %v2112, 16
      %v2251 = vrot.slane %v2249, 3
      %v2252 = vshll.u32 %v2112, 16
      %v2254 = vrot.slane %v2252, 4
      %v2255 = vor.u32 %v2251, %v2254
      %v2256 = vsel %vm1659, %v2246, %v2255
      %v2258 = vshrl.u32 %v2113, 16
      %v2260 = vrot.slane %v2258, 3
      %v2261 = vshll.u32 %v2113, 16
      %v2263 = vrot.slane %v2261, 4
      %v2264 = vor.u32 %v2260, %v2263
      %v2265 = vsel %vm1659, %v2255, %v2264
      %v2267 = vshrl.u32 %v2114, 16
      %v2269 = vrot.slane %v2267, 3
      %v2270 = vshll.u32 %v2114, 16
      %v2272 = vrot.slane %v2270, 4
      %v2273 = vor.u32 %v2269, %v2272
      %v2274 = vsel %vm1659, %v2264, %v2273
      %v2276 = vshrl.u32 %v2115, 16
      %v2278 = vrot.slane %v2276, 3
      %v2279 = vshll.u32 %v2115, 16
      %v2281 = vrot.slane %v2279, 4
      %v2282 = vor.u32 %v2278, %v2281
      %v2283 = vsel %vm1659, %v2273, %v2282
      %v2285 = vshrl.u32 %v2116, 16
      %v2287 = vrot.slane %v2285, 3
      %v2288 = vshll.u32 %v2116, 16
      %v2290 = vrot.slane %v2288, 4
      %v2291 = vor.u32 %v2287, %v2290
      %v2292 = vsel %vm1659, %v2282, %v2291
      %v2294 = vshrl.u32 %v2117, 16
      %v2296 = vrot.slane %v2294, 3
      %v2297 = vshll.u32 %v2117, 16
      %v2299 = vrot.slane %v2297, 4
      %v2300 = vor.u32 %v2296, %v2299
      %v2301 = vsel %vm1659, %v2291, %v2300
      %v2303 = vshrl.u32 %v2118, 16
      %v2305 = vrot.slane %v2303, 3
      %v2306 = vshll.u32 %v2118, 16
      %v2308 = vrot.slane %v2306, 4
      %v2309 = vor.u32 %v2305, %v2308
      %v2310 = vsel %vm1659, %v2300, %v2309
      %v2312 = vshrl.u32 %v2119, 16
      %v2314 = vrot.slane %v2312, 3
      %v2315 = vshll.u32 %v2119, 16
      %v2317 = vrot.slane %v2315, 4
      %v2318 = vor.u32 %v2314, %v2317
      %v2319 = vsel %vm1659, %v2309, %v2318
      %v2321 = vshrl.u32 %v2120, 16
      %v2323 = vrot.slane %v2321, 3
      %v2324 = vshll.u32 %v2120, 16
      %v2326 = vrot.slane %v2324, 4
      %v2327 = vor.u32 %v2323, %v2326
      %v2328 = vsel %vm1659, %v2318, %v2327
      %v2330 = vshrl.u32 %v2121, 16
      %v2332 = vrot.slane %v2330, 3
      %v2333 = vshll.u32 %v2121, 16
      %v2335 = vrot.slane %v2333, 4
      %v2336 = vor.u32 %v2332, %v2335
      %v2337 = vsel %vm1659, %v2327, %v2336
      %v2339 = vshrl.u32 %v2122, 16
      %v2341 = vrot.slane %v2339, 3
      %v2342 = vshll.u32 %v2122, 16
      %v2344 = vrot.slane %v2342, 4
      %v2345 = vor.u32 %v2341, %v2344
      %v2346 = vsel %vm1659, %v2336, %v2345
      %v2348 = vsel %vm889, %v2139, 0
      %v2351 = vsel %vm889, %v2148, 0
      %v2354 = vsel %vm889, %v2157, 0
      %v2357 = vsel %vm889, %v2166, 0
      %v2360 = vsel %vm889, %v2175, 0
      %v2363 = vsel %vm889, %v2184, 0
      %v2366 = vsel %vm889, %v2193, 0
      %v2369 = vsel %vm889, %v2202, 0
      %v2372 = vsel %vm889, %v2211, 0
      %v2375 = vsel %vm889, %v2220, 0
      %v2378 = vsel %vm889, %v2229, 0
      %v2381 = vsel %vm889, %v2238, 0
      %v2384 = vsel %vm889, %v2247, 0
      %v2387 = vsel %vm889, %v2256, 0
      %v2390 = vsel %vm889, %v2265, 0
      %v2393 = vsel %vm889, %v2274, 0
      %v2396 = vsel %vm889, %v2283, 0
      %v2399 = vsel %vm889, %v2292, 0
      %v2402 = vsel %vm889, %v2301, 0
      %v2405 = vsel %vm889, %v2310, 0
      %v2408 = vsel %vm889, %v2319, 0
      %v2411 = vsel %vm889, %v2328, 0
      %v2414 = vsel %vm889, %v2337, 0
      %v2417 = vsel %vm889, %v2346, 0
      %v2420 = vsel %vm980, %v1531, 0
      %2422 = vmatpush.bf16.msra.mxu0 0
      %2423 = vmatpush.bf16.msra.mxu0 0
      %2424 = vmatpush.bf16.msra.mxu0 0
      %2425 = vmatpush.bf16.msra.mxu0 0
      %2426 = vmatpush.bf16.msra.mxu0 0
      %2427 = vmatpush.bf16.msra.mxu0 0
      %2428 = vmatpush.bf16.msra.mxu0 0
      %2429 = vmatpush.bf16.msra.mxu0 %v2420
      %2430 = vmatmul.bf16.gmra.mxu0 %v2348
      %v2431 = vpop.f32.mrf.mxu0
      %v2432 = vadd.f32 %v1973, %v2431
      %v2433 = vpop.f32.mrf.mxu0
      %v2434 = vadd.f32 %v1975, %v2433
      %2435 = vmatmul.bf16.gmra.mxu0 %v2351
      %v2436 = vpop.f32.mrf.mxu0
      %v2437 = vadd.f32 %v1978, %v2436
      %v2438 = vpop.f32.mrf.mxu0
      %v2439 = vadd.f32 %v1980, %v2438
      %2440 = vmatmul.bf16.gmra.mxu0 %v2354
      %v2441 = vpop.f32.mrf.mxu0
      %v2442 = vadd.f32 %v1983, %v2441
      %v2443 = vpop.f32.mrf.mxu0
      %v2444 = vadd.f32 %v1985, %v2443
      %2445 = vmatmul.bf16.gmra.mxu0 %v2357
      %v2446 = vpop.f32.mrf.mxu0
      %v2447 = vadd.f32 %v1988, %v2446
      %v2448 = vpop.f32.mrf.mxu0
      %v2449 = vadd.f32 %v1990, %v2448
      %2450 = vmatmul.bf16.gmra.mxu0 %v2360
      %v2451 = vpop.f32.mrf.mxu0
      %v2452 = vadd.f32 %v1993, %v2451
      %v2453 = vpop.f32.mrf.mxu0
      %v2454 = vadd.f32 %v1995, %v2453
      %2455 = vmatmul.bf16.gmra.mxu0 %v2363
      %v2456 = vpop.f32.mrf.mxu0
      %v2457 = vadd.f32 %v1998, %v2456
      %v2458 = vpop.f32.mrf.mxu0
      %v2459 = vadd.f32 %v2000, %v2458
      %2460 = vmatmul.bf16.gmra.mxu0 %v2366
      %v2461 = vpop.f32.mrf.mxu0
      %v2462 = vadd.f32 %v2003, %v2461
      %v2463 = vpop.f32.mrf.mxu0
      %v2464 = vadd.f32 %v2005, %v2463
      %2465 = vmatmul.bf16.gmra.mxu0 %v2369
      %v2466 = vpop.f32.mrf.mxu0
      %v2467 = vadd.f32 %v2008, %v2466
      %v2468 = vpop.f32.mrf.mxu0
      %v2469 = vadd.f32 %v2010, %v2468
      %2470 = vmatmul.bf16.gmra.mxu0 %v2372
      %v2471 = vpop.f32.mrf.mxu0
      %v2472 = vadd.f32 %v2013, %v2471
      %v2473 = vpop.f32.mrf.mxu0
      %v2474 = vadd.f32 %v2015, %v2473
      %2475 = vmatmul.bf16.gmra.mxu0 %v2375
      %v2476 = vpop.f32.mrf.mxu0
      %v2477 = vadd.f32 %v2018, %v2476
      %v2478 = vpop.f32.mrf.mxu0
      %v2479 = vadd.f32 %v2020, %v2478
      %2480 = vmatmul.bf16.gmra.mxu0 %v2378
      %v2481 = vpop.f32.mrf.mxu0
      %v2482 = vadd.f32 %v2023, %v2481
      %v2483 = vpop.f32.mrf.mxu0
      %v2484 = vadd.f32 %v2025, %v2483
      %2485 = vmatmul.bf16.gmra.mxu0 %v2381
      %v2486 = vpop.f32.mrf.mxu0
      %v2487 = vadd.f32 %v2028, %v2486
      %v2488 = vpop.f32.mrf.mxu0
      %v2489 = vadd.f32 %v2030, %v2488
      %2490 = vmatmul.bf16.gmra.mxu0 %v2384
      %v2491 = vpop.f32.mrf.mxu0
      %v2492 = vadd.f32 %v2033, %v2491
      %v2493 = vpop.f32.mrf.mxu0
      %v2494 = vadd.f32 %v2035, %v2493
      %2495 = vmatmul.bf16.gmra.mxu0 %v2387
      %v2496 = vpop.f32.mrf.mxu0
      %v2497 = vadd.f32 %v2038, %v2496
      %v2498 = vpop.f32.mrf.mxu0
      %v2499 = vadd.f32 %v2040, %v2498
      %2500 = vmatmul.bf16.gmra.mxu0 %v2390
      %v2501 = vpop.f32.mrf.mxu0
      %v2502 = vadd.f32 %v2043, %v2501
      %v2503 = vpop.f32.mrf.mxu0
      %v2504 = vadd.f32 %v2045, %v2503
      %2505 = vmatmul.bf16.gmra.mxu0 %v2393
      %v2506 = vpop.f32.mrf.mxu0
      %v2507 = vadd.f32 %v2048, %v2506
      %v2508 = vpop.f32.mrf.mxu0
      %v2509 = vadd.f32 %v2050, %v2508
      %2510 = vmatmul.bf16.gmra.mxu0 %v2396
      %v2511 = vpop.f32.mrf.mxu0
      %v2512 = vadd.f32 %v2053, %v2511
      %v2513 = vpop.f32.mrf.mxu0
      %v2514 = vadd.f32 %v2055, %v2513
      %2515 = vmatmul.bf16.gmra.mxu0 %v2399
      %v2516 = vpop.f32.mrf.mxu0
      %v2517 = vadd.f32 %v2058, %v2516
      %v2518 = vpop.f32.mrf.mxu0
      %v2519 = vadd.f32 %v2060, %v2518
      %2520 = vmatmul.bf16.gmra.mxu0 %v2402
      %v2521 = vpop.f32.mrf.mxu0
      %v2522 = vadd.f32 %v2063, %v2521
      %v2523 = vpop.f32.mrf.mxu0
      %v2524 = vadd.f32 %v2065, %v2523
      %2525 = vmatmul.bf16.gmra.mxu0 %v2405
      %v2526 = vpop.f32.mrf.mxu0
      %v2527 = vadd.f32 %v2068, %v2526
      %v2528 = vpop.f32.mrf.mxu0
      %v2529 = vadd.f32 %v2070, %v2528
      %2530 = vmatmul.bf16.gmra.mxu0 %v2408
      %v2531 = vpop.f32.mrf.mxu0
      %v2532 = vadd.f32 %v2073, %v2531
      %v2533 = vpop.f32.mrf.mxu0
      %v2534 = vadd.f32 %v2075, %v2533
      %2535 = vmatmul.bf16.gmra.mxu0 %v2411
      %v2536 = vpop.f32.mrf.mxu0
      %v2537 = vadd.f32 %v2078, %v2536
      %v2538 = vpop.f32.mrf.mxu0
      %v2539 = vadd.f32 %v2080, %v2538
      %2540 = vmatmul.bf16.gmra.mxu0 %v2414
      %v2541 = vpop.f32.mrf.mxu0
      %v2542 = vadd.f32 %v2083, %v2541
      %v2543 = vpop.f32.mrf.mxu0
      %v2544 = vadd.f32 %v2085, %v2543
      %2545 = vmatmul.bf16.gmra.mxu0 %v2417
      %v2546 = vpop.f32.mrf.mxu0
      %v2547 = vadd.f32 %v2088, %v2546
      %v2548 = vpop.f32.mrf.mxu0
      %v2549 = vadd.f32 %v2090, %v2548
      %2550 = vdwg.mxu0
      %v2554 = vunpack.c.l.b16 %v1527
      %v2555 = vunpack.c.l.b16 %v1528
      %v2556 = vunpack.c.l.b16 %v1529
      %v2557 = vpack.c.b16 %v1631, %v1630
      %v2558 = vpack.c.b16 %v1633, %v1632
      %v2559 = vpack.c.b16 %v2555, %v2554
      %v2560 = vpack.c.b16 %v2556, %v2556
      %v2562 = vshrl.u32 %v2557, 16
      %v2564 = vrot.slane %v2562, 3
      %v2565 = vshll.u32 %v2557, 16
      %v2567 = vrot.slane %v2565, 4
      %v2568 = vor.u32 %v2564, %v2567
      %v2569 = vsel %vm1659, %v2336, %v2568
      %v2571 = vshrl.u32 %v2558, 16
      %v2573 = vrot.slane %v2571, 3
      %v2574 = vshll.u32 %v2558, 16
      %v2576 = vrot.slane %v2574, 4
      %v2577 = vor.u32 %v2573, %v2576
      %v2578 = vsel %vm1659, %v2568, %v2577
      %v2580 = vshrl.u32 %v2559, 16
      %v2582 = vrot.slane %v2580, 3
      %v2583 = vshll.u32 %v2559, 16
      %v2585 = vrot.slane %v2583, 4
      %v2586 = vor.u32 %v2582, %v2585
      %v2587 = vsel %vm1659, %v2577, %v2586
      %v2589 = vshrl.u32 %v2560, 16
      %v2591 = vrot.slane %v2589, 3
      %v2592 = vshll.u32 %v2560, 16
      %v2594 = vrot.slane %v2592, 4
      %v2595 = vor.u32 %v2591, %v2594
      %v2596 = vsel %vm1659, %v2586, %v2595
      %v2598 = vsel %vm889, %v2569, 0
      %v2601 = vsel %vm889, %v2578, 0
      %v2604 = vsel %vm889, %v2587, 0
      %v2607 = vsel %vm889, %v2596, 0
      %v2610 = vsel %vm980, %v1534, 0
      %2612 = vmatpush.bf16.msra.mxu0 0
      %2613 = vmatpush.bf16.msra.mxu0 0
      %2614 = vmatpush.bf16.msra.mxu0 0
      %2615 = vmatpush.bf16.msra.mxu0 0
      %2616 = vmatpush.bf16.msra.mxu0 0
      %2617 = vmatpush.bf16.msra.mxu0 0
      %2618 = vmatpush.bf16.msra.mxu0 0
      %2619 = vmatpush.bf16.msra.mxu0 %v2610
      %2620 = vmatmul.bf16.gmra.mxu0 %v2357
      %v2621 = vpop.f32.mrf.mxu0
      %v2622 = vadd.f32 0.0, %v2621
      %v2623 = vpop.f32.mrf.mxu0
      %v2624 = vadd.f32 0.0, %v2623
      %2625 = vmatmul.bf16.gmra.mxu0 %v2360
      %v2626 = vpop.f32.mrf.mxu0
      %v2627 = vadd.f32 0.0, %v2626
      %v2628 = vpop.f32.mrf.mxu0
      %v2629 = vadd.f32 0.0, %v2628
      %2630 = vmatmul.bf16.gmra.mxu0 %v2363
      %v2631 = vpop.f32.mrf.mxu0
      %v2632 = vadd.f32 0.0, %v2631
      %v2633 = vpop.f32.mrf.mxu0
      %v2634 = vadd.f32 0.0, %v2633
      %2635 = vmatmul.bf16.gmra.mxu0 %v2366
      %v2636 = vpop.f32.mrf.mxu0
      %v2637 = vadd.f32 0.0, %v2636
      %v2638 = vpop.f32.mrf.mxu0
      %v2639 = vadd.f32 0.0, %v2638
      %2640 = vmatmul.bf16.gmra.mxu0 %v2369
      %v2641 = vpop.f32.mrf.mxu0
      %v2642 = vadd.f32 0.0, %v2641
      %v2643 = vpop.f32.mrf.mxu0
      %v2644 = vadd.f32 0.0, %v2643
      %2645 = vmatmul.bf16.gmra.mxu0 %v2372
      %v2646 = vpop.f32.mrf.mxu0
      %v2647 = vadd.f32 0.0, %v2646
      %v2648 = vpop.f32.mrf.mxu0
      %v2649 = vadd.f32 0.0, %v2648
      %2650 = vmatmul.bf16.gmra.mxu0 %v2375
      %v2651 = vpop.f32.mrf.mxu0
      %v2652 = vadd.f32 0.0, %v2651
      %v2653 = vpop.f32.mrf.mxu0
      %v2654 = vadd.f32 0.0, %v2653
      %2655 = vmatmul.bf16.gmra.mxu0 %v2378
      %v2656 = vpop.f32.mrf.mxu0
      %v2657 = vadd.f32 0.0, %v2656
      %v2658 = vpop.f32.mrf.mxu0
      %v2659 = vadd.f32 0.0, %v2658
      %2660 = vmatmul.bf16.gmra.mxu0 %v2381
      %v2661 = vpop.f32.mrf.mxu0
      %v2662 = vadd.f32 0.0, %v2661
      %v2663 = vpop.f32.mrf.mxu0
      %v2664 = vadd.f32 0.0, %v2663
      %2665 = vmatmul.bf16.gmra.mxu0 %v2384
      %v2666 = vpop.f32.mrf.mxu0
      %v2667 = vadd.f32 0.0, %v2666
      %v2668 = vpop.f32.mrf.mxu0
      %v2669 = vadd.f32 0.0, %v2668
      %2670 = vmatmul.bf16.gmra.mxu0 %v2387
      %v2671 = vpop.f32.mrf.mxu0
      %v2672 = vadd.f32 0.0, %v2671
      %v2673 = vpop.f32.mrf.mxu0
      %v2674 = vadd.f32 0.0, %v2673
      %2675 = vmatmul.bf16.gmra.mxu0 %v2390
      %v2676 = vpop.f32.mrf.mxu0
      %v2677 = vadd.f32 0.0, %v2676
      %v2678 = vpop.f32.mrf.mxu0
      %v2679 = vadd.f32 0.0, %v2678
      %2680 = vmatmul.bf16.gmra.mxu0 %v2393
      %v2681 = vpop.f32.mrf.mxu0
      %v2682 = vadd.f32 0.0, %v2681
      %v2683 = vpop.f32.mrf.mxu0
      %v2684 = vadd.f32 0.0, %v2683
      %2685 = vmatmul.bf16.gmra.mxu0 %v2396
      %v2686 = vpop.f32.mrf.mxu0
      %v2687 = vadd.f32 0.0, %v2686
      %v2688 = vpop.f32.mrf.mxu0
      %v2689 = vadd.f32 0.0, %v2688
      %2690 = vmatmul.bf16.gmra.mxu0 %v2399
      %v2691 = vpop.f32.mrf.mxu0
      %v2692 = vadd.f32 0.0, %v2691
      %v2693 = vpop.f32.mrf.mxu0
      %v2694 = vadd.f32 0.0, %v2693
      %2695 = vmatmul.bf16.gmra.mxu0 %v2402
      %v2696 = vpop.f32.mrf.mxu0
      %v2697 = vadd.f32 0.0, %v2696
      %v2698 = vpop.f32.mrf.mxu0
      %v2699 = vadd.f32 0.0, %v2698
      %2700 = vmatmul.bf16.gmra.mxu0 %v2405
      %v2701 = vpop.f32.mrf.mxu0
      %v2702 = vadd.f32 0.0, %v2701
      %v2703 = vpop.f32.mrf.mxu0
      %v2704 = vadd.f32 0.0, %v2703
      %2705 = vmatmul.bf16.gmra.mxu0 %v2408
      %v2706 = vpop.f32.mrf.mxu0
      %v2707 = vadd.f32 0.0, %v2706
      %v2708 = vpop.f32.mrf.mxu0
      %v2709 = vadd.f32 0.0, %v2708
      %2710 = vmatmul.bf16.gmra.mxu0 %v2411
      %v2711 = vpop.f32.mrf.mxu0
      %v2712 = vadd.f32 0.0, %v2711
      %v2713 = vpop.f32.mrf.mxu0
      %v2714 = vadd.f32 0.0, %v2713
      %2715 = vmatmul.bf16.gmra.mxu0 %v2414
      %v2716 = vpop.f32.mrf.mxu0
      %v2717 = vadd.f32 0.0, %v2716
      %v2718 = vpop.f32.mrf.mxu0
      %v2719 = vadd.f32 0.0, %v2718
      %2720 = vmatmul.bf16.gmra.mxu0 %v2598
      %v2721 = vpop.f32.mrf.mxu0
      %v2722 = vadd.f32 0.0, %v2721
      %v2723 = vpop.f32.mrf.mxu0
      %v2724 = vadd.f32 0.0, %v2723
      %2725 = vmatmul.bf16.gmra.mxu0 %v2601
      %v2726 = vpop.f32.mrf.mxu0
      %v2727 = vadd.f32 0.0, %v2726
      %v2728 = vpop.f32.mrf.mxu0
      %v2729 = vadd.f32 0.0, %v2728
      %2730 = vmatmul.bf16.gmra.mxu0 %v2604
      %v2731 = vpop.f32.mrf.mxu0
      %v2732 = vadd.f32 0.0, %v2731
      %v2733 = vpop.f32.mrf.mxu0
      %v2734 = vadd.f32 0.0, %v2733
      %2735 = vmatmul.bf16.gmra.mxu0 %v2607
      %v2736 = vpop.f32.mrf.mxu0
      %v2737 = vadd.f32 0.0, %v2736
      %v2738 = vpop.f32.mrf.mxu0
      %v2739 = vadd.f32 0.0, %v2738
      %2740 = vdwg.mxu0
      %v2741 = vadd.f32 %v2432, %v2622
      %v2742 = vadd.f32 %v2434, %v2624
      %v2743 = vadd.f32 %v2437, %v2627
      %v2744 = vadd.f32 %v2439, %v2629
      %v2745 = vadd.f32 %v2442, %v2632
      %v2746 = vadd.f32 %v2444, %v2634
      %v2747 = vadd.f32 %v2447, %v2637
      %v2748 = vadd.f32 %v2449, %v2639
      %v2749 = vadd.f32 %v2452, %v2642
      %v2750 = vadd.f32 %v2454, %v2644
      %v2751 = vadd.f32 %v2457, %v2647
      %v2752 = vadd.f32 %v2459, %v2649
      %v2753 = vadd.f32 %v2462, %v2652
      %v2754 = vadd.f32 %v2464, %v2654
      %v2755 = vadd.f32 %v2467, %v2657
      %v2756 = vadd.f32 %v2469, %v2659
      %v2757 = vadd.f32 %v2472, %v2662
      %v2758 = vadd.f32 %v2474, %v2664
      %v2759 = vadd.f32 %v2477, %v2667
      %v2760 = vadd.f32 %v2479, %v2669
      %v2761 = vadd.f32 %v2482, %v2672
      %v2762 = vadd.f32 %v2484, %v2674
      %v2763 = vadd.f32 %v2487, %v2677
      %v2764 = vadd.f32 %v2489, %v2679
      %v2765 = vadd.f32 %v2492, %v2682
      %v2766 = vadd.f32 %v2494, %v2684
      %v2767 = vadd.f32 %v2497, %v2687
      %v2768 = vadd.f32 %v2499, %v2689
      %v2769 = vadd.f32 %v2502, %v2692
      %v2770 = vadd.f32 %v2504, %v2694
      %v2771 = vadd.f32 %v2507, %v2697
      %v2772 = vadd.f32 %v2509, %v2699
      %v2773 = vadd.f32 %v2512, %v2702
      %v2774 = vadd.f32 %v2514, %v2704
      %v2775 = vadd.f32 %v2517, %v2707
      %v2776 = vadd.f32 %v2519, %v2709
      %v2777 = vadd.f32 %v2522, %v2712
      %v2778 = vadd.f32 %v2524, %v2714
      %v2779 = vadd.f32 %v2527, %v2717
      %v2780 = vadd.f32 %v2529, %v2719
      %v2781 = vadd.f32 %v2532, %v2722
      %v2782 = vadd.f32 %v2534, %v2724
      %v2783 = vadd.f32 %v2537, %v2727
      %v2784 = vadd.f32 %v2539, %v2729
      %v2785 = vadd.f32 %v2542, %v2732
      %v2786 = vadd.f32 %v2544, %v2734
      %v2787 = vadd.f32 %v2547, %v2737
      %v2788 = vadd.f32 %v2549, %v2739
      %v2789 = vpack.c.b16 %v2097, %v2096
      %v2791 = vunpack.c.l.b16 %v1531
      %v2792 = vpack.c.b16 %v2791, %v2791
      %v2793 = vrot.slane %v2792, 2
      %v2795 = vsel %vm889, %v2789, 0
      %v2797 = vsel %vm889, %v1634, 0
      %v2799 = vsel %vm889, %v1635, 0
      %v2801 = vsel %vm889, %v1636, 0
      %v2803 = vsel %vm889, %v1637, 0
      %v2805 = vsel %vm889, %v1638, 0
      %v2807 = vsel %vm889, %v1639, 0
      %v2809 = vsel %vm889, %v1640, 0
      %v2811 = vsel %vm889, %v1641, 0
      %v2813 = vsel %vm889, %v1642, 0
      %v2815 = vsel %vm889, %v1643, 0
      %v2817 = vsel %vm889, %v1644, 0
      %v2819 = vsel %vm889, %v1645, 0
      %v2821 = vsel %vm889, %v1646, 0
      %v2823 = vsel %vm889, %v1647, 0
      %v2825 = vsel %vm889, %v1648, 0
      %v2827 = vsel %vm889, %v1649, 0
      %v2829 = vsel %vm889, %v1650, 0
      %v2831 = vsel %vm889, %v1651, 0
      %v2833 = vsel %vm889, %v1652, 0
      %v2835 = vsel %vm889, %v1653, 0
      %v2837 = vsel %vm889, %v1654, 0
      %v2839 = vsel %vm889, %v1655, 0
      %v2841 = vsel %vm889, %v1656, 0
      %v2844 = vsel %vm980, %v2793, 0
      %2846 = vmatpush.bf16.msra.mxu0 0
      %2847 = vmatpush.bf16.msra.mxu0 0
      %2848 = vmatpush.bf16.msra.mxu0 0
      %2849 = vmatpush.bf16.msra.mxu0 0
      %2850 = vmatpush.bf16.msra.mxu0 0
      %2851 = vmatpush.bf16.msra.mxu0 0
      %2852 = vmatpush.bf16.msra.mxu0 0
      %2853 = vmatpush.bf16.msra.mxu0 %v2844
      %2854 = vmatmul.bf16.gmra.mxu0 %v2795
      %v2855 = vpop.f32.mrf.mxu0
      %v2856 = vadd.f32 0.0, %v2855
      %v2857 = vpop.f32.mrf.mxu0
      %v2858 = vadd.f32 0.0, %v2857
      %2859 = vmatmul.bf16.gmra.mxu0 %v2797
      %v2860 = vpop.f32.mrf.mxu0
      %v2861 = vadd.f32 0.0, %v2860
      %v2862 = vpop.f32.mrf.mxu0
      %v2863 = vadd.f32 0.0, %v2862
      %2864 = vmatmul.bf16.gmra.mxu0 %v2799
      %v2865 = vpop.f32.mrf.mxu0
      %v2866 = vadd.f32 0.0, %v2865
      %v2867 = vpop.f32.mrf.mxu0
      %v2868 = vadd.f32 0.0, %v2867
      %2869 = vmatmul.bf16.gmra.mxu0 %v2801
      %v2870 = vpop.f32.mrf.mxu0
      %v2871 = vadd.f32 0.0, %v2870
      %v2872 = vpop.f32.mrf.mxu0
      %v2873 = vadd.f32 0.0, %v2872
      %2874 = vmatmul.bf16.gmra.mxu0 %v2803
      %v2875 = vpop.f32.mrf.mxu0
      %v2876 = vadd.f32 0.0, %v2875
      %v2877 = vpop.f32.mrf.mxu0
      %v2878 = vadd.f32 0.0, %v2877
      %2879 = vmatmul.bf16.gmra.mxu0 %v2805
      %v2880 = vpop.f32.mrf.mxu0
      %v2881 = vadd.f32 0.0, %v2880
      %v2882 = vpop.f32.mrf.mxu0
      %v2883 = vadd.f32 0.0, %v2882
      %2884 = vmatmul.bf16.gmra.mxu0 %v2807
      %v2885 = vpop.f32.mrf.mxu0
      %v2886 = vadd.f32 0.0, %v2885
      %v2887 = vpop.f32.mrf.mxu0
      %v2888 = vadd.f32 0.0, %v2887
      %2889 = vmatmul.bf16.gmra.mxu0 %v2809
      %v2890 = vpop.f32.mrf.mxu0
      %v2891 = vadd.f32 0.0, %v2890
      %v2892 = vpop.f32.mrf.mxu0
      %v2893 = vadd.f32 0.0, %v2892
      %2894 = vmatmul.bf16.gmra.mxu0 %v2811
      %v2895 = vpop.f32.mrf.mxu0
      %v2896 = vadd.f32 0.0, %v2895
      %v2897 = vpop.f32.mrf.mxu0
      %v2898 = vadd.f32 0.0, %v2897
      %2899 = vmatmul.bf16.gmra.mxu0 %v2813
      %v2900 = vpop.f32.mrf.mxu0
      %v2901 = vadd.f32 0.0, %v2900
      %v2902 = vpop.f32.mrf.mxu0
      %v2903 = vadd.f32 0.0, %v2902
      %2904 = vmatmul.bf16.gmra.mxu0 %v2815
      %v2905 = vpop.f32.mrf.mxu0
      %v2906 = vadd.f32 0.0, %v2905
      %v2907 = vpop.f32.mrf.mxu0
      %v2908 = vadd.f32 0.0, %v2907
      %2909 = vmatmul.bf16.gmra.mxu0 %v2817
      %v2910 = vpop.f32.mrf.mxu0
      %v2911 = vadd.f32 0.0, %v2910
      %v2912 = vpop.f32.mrf.mxu0
      %v2913 = vadd.f32 0.0, %v2912
      %2914 = vmatmul.bf16.gmra.mxu0 %v2819
      %v2915 = vpop.f32.mrf.mxu0
      %v2916 = vadd.f32 0.0, %v2915
      %v2917 = vpop.f32.mrf.mxu0
      %v2918 = vadd.f32 0.0, %v2917
      %2919 = vmatmul.bf16.gmra.mxu0 %v2821
      %v2920 = vpop.f32.mrf.mxu0
      %v2921 = vadd.f32 0.0, %v2920
      %v2922 = vpop.f32.mrf.mxu0
      %v2923 = vadd.f32 0.0, %v2922
      %2924 = vmatmul.bf16.gmra.mxu0 %v2823
      %v2925 = vpop.f32.mrf.mxu0
      %v2926 = vadd.f32 0.0, %v2925
      %v2927 = vpop.f32.mrf.mxu0
      %v2928 = vadd.f32 0.0, %v2927
      %2929 = vmatmul.bf16.gmra.mxu0 %v2825
      %v2930 = vpop.f32.mrf.mxu0
      %v2931 = vadd.f32 0.0, %v2930
      %v2932 = vpop.f32.mrf.mxu0
      %v2933 = vadd.f32 0.0, %v2932
      %2934 = vmatmul.bf16.gmra.mxu0 %v2827
      %v2935 = vpop.f32.mrf.mxu0
      %v2936 = vadd.f32 0.0, %v2935
      %v2937 = vpop.f32.mrf.mxu0
      %v2938 = vadd.f32 0.0, %v2937
      %2939 = vmatmul.bf16.gmra.mxu0 %v2829
      %v2940 = vpop.f32.mrf.mxu0
      %v2941 = vadd.f32 0.0, %v2940
      %v2942 = vpop.f32.mrf.mxu0
      %v2943 = vadd.f32 0.0, %v2942
      %2944 = vmatmul.bf16.gmra.mxu0 %v2831
      %v2945 = vpop.f32.mrf.mxu0
      %v2946 = vadd.f32 0.0, %v2945
      %v2947 = vpop.f32.mrf.mxu0
      %v2948 = vadd.f32 0.0, %v2947
      %2949 = vmatmul.bf16.gmra.mxu0 %v2833
      %v2950 = vpop.f32.mrf.mxu0
      %v2951 = vadd.f32 0.0, %v2950
      %v2952 = vpop.f32.mrf.mxu0
      %v2953 = vadd.f32 0.0, %v2952
      %2954 = vmatmul.bf16.gmra.mxu0 %v2835
      %v2955 = vpop.f32.mrf.mxu0
      %v2956 = vadd.f32 0.0, %v2955
      %v2957 = vpop.f32.mrf.mxu0
      %v2958 = vadd.f32 0.0, %v2957
      %2959 = vmatmul.bf16.gmra.mxu0 %v2837
      %v2960 = vpop.f32.mrf.mxu0
      %v2961 = vadd.f32 0.0, %v2960
      %v2962 = vpop.f32.mrf.mxu0
      %v2963 = vadd.f32 0.0, %v2962
      %2964 = vmatmul.bf16.gmra.mxu0 %v2839
      %v2965 = vpop.f32.mrf.mxu0
      %v2966 = vadd.f32 0.0, %v2965
      %v2967 = vpop.f32.mrf.mxu0
      %v2968 = vadd.f32 0.0, %v2967
      %2969 = vmatmul.bf16.gmra.mxu0 %v2841
      %v2970 = vpop.f32.mrf.mxu0
      %v2971 = vadd.f32 0.0, %v2970
      %v2972 = vpop.f32.mrf.mxu0
      %v2973 = vadd.f32 0.0, %v2972
      %2974 = vdwg.mxu0
      %v2975 = vadd.f32 %v2741, %v2856
      %v2976 = vadd.f32 %v2742, %v2858
      %v2977 = vadd.f32 %v2743, %v2861
      %v2978 = vadd.f32 %v2744, %v2863
      %v2979 = vadd.f32 %v2745, %v2866
      %v2980 = vadd.f32 %v2746, %v2868
      %v2981 = vadd.f32 %v2747, %v2871
      %v2982 = vadd.f32 %v2748, %v2873
      %v2983 = vadd.f32 %v2749, %v2876
      %v2984 = vadd.f32 %v2750, %v2878
      %v2985 = vadd.f32 %v2751, %v2881
      %v2986 = vadd.f32 %v2752, %v2883
      %v2987 = vadd.f32 %v2753, %v2886
      %v2988 = vadd.f32 %v2754, %v2888
      %v2989 = vadd.f32 %v2755, %v2891
      %v2990 = vadd.f32 %v2756, %v2893
      %v2991 = vadd.f32 %v2757, %v2896
      %v2992 = vadd.f32 %v2758, %v2898
      %v2993 = vadd.f32 %v2759, %v2901
      %v2994 = vadd.f32 %v2760, %v2903
      %v2995 = vadd.f32 %v2761, %v2906
      %v2996 = vadd.f32 %v2762, %v2908
      %v2997 = vadd.f32 %v2763, %v2911
      %v2998 = vadd.f32 %v2764, %v2913
      %v2999 = vadd.f32 %v2765, %v2916
      %v3000 = vadd.f32 %v2766, %v2918
      %v3001 = vadd.f32 %v2767, %v2921
      %v3002 = vadd.f32 %v2768, %v2923
      %v3003 = vadd.f32 %v2769, %v2926
      %v3004 = vadd.f32 %v2770, %v2928
      %v3005 = vadd.f32 %v2771, %v2931
      %v3006 = vadd.f32 %v2772, %v2933
      %v3007 = vadd.f32 %v2773, %v2936
      %v3008 = vadd.f32 %v2774, %v2938
      %v3009 = vadd.f32 %v2775, %v2941
      %v3010 = vadd.f32 %v2776, %v2943
      %v3011 = vadd.f32 %v2777, %v2946
      %v3012 = vadd.f32 %v2778, %v2948
      %v3013 = vadd.f32 %v2779, %v2951
      %v3014 = vadd.f32 %v2780, %v2953
      %v3015 = vadd.f32 %v2781, %v2956
      %v3016 = vadd.f32 %v2782, %v2958
      %v3017 = vadd.f32 %v2783, %v2961
      %v3018 = vadd.f32 %v2784, %v2963
      %v3019 = vadd.f32 %v2785, %v2966
      %v3020 = vadd.f32 %v2786, %v2968
      %v3021 = vadd.f32 %v2787, %v2971
      %v3022 = vadd.f32 %v2788, %v2973
      %v3023 = vsel %vm889, %v2100, 0
      %v3025 = vsel %vm889, %v2101, 0
      %v3027 = vsel %vm889, %v2102, 0
      %v3029 = vsel %vm889, %v2103, 0
      %v3031 = vsel %vm889, %v2104, 0
      %v3033 = vsel %vm889, %v2105, 0
      %v3035 = vsel %vm889, %v2106, 0
      %v3037 = vsel %vm889, %v2107, 0
      %v3039 = vsel %vm889, %v2108, 0
      %v3041 = vsel %vm889, %v2109, 0
      %v3043 = vsel %vm889, %v2110, 0
      %v3045 = vsel %vm889, %v2111, 0
      %v3047 = vsel %vm889, %v2112, 0
      %v3049 = vsel %vm889, %v2113, 0
      %v3051 = vsel %vm889, %v2114, 0
      %v3053 = vsel %vm889, %v2115, 0
      %v3055 = vsel %vm889, %v2116, 0
      %v3057 = vsel %vm889, %v2117, 0
      %v3059 = vsel %vm889, %v2118, 0
      %v3061 = vsel %vm889, %v2119, 0
      %v3063 = vsel %vm889, %v2120, 0
      %v3065 = vsel %vm889, %v2121, 0
      %v3067 = vsel %vm889, %v2557, 0
      %v3069 = vsel %vm889, %v2558, 0
      %v3072 = vsel %vm980, %v1533, 0
      %3074 = vmatpush.bf16.msra.mxu0 0
      %3075 = vmatpush.bf16.msra.mxu0 0
      %3076 = vmatpush.bf16.msra.mxu0 0
      %3077 = vmatpush.bf16.msra.mxu0 0
      %3078 = vmatpush.bf16.msra.mxu0 0
      %3079 = vmatpush.bf16.msra.mxu0 0
      %3080 = vmatpush.bf16.msra.mxu0 0
      %3081 = vmatpush.bf16.msra.mxu0 %v3072
      %3082 = vmatmul.bf16.gmra.mxu0 %v3023
      %v3083 = vpop.f32.mrf.mxu0
      %v3084 = vadd.f32 0.0, %v3083
      %v3085 = vpop.f32.mrf.mxu0
      %v3086 = vadd.f32 0.0, %v3085
      %3087 = vmatmul.bf16.gmra.mxu0 %v3025
      %v3088 = vpop.f32.mrf.mxu0
      %v3089 = vadd.f32 0.0, %v3088
      %v3090 = vpop.f32.mrf.mxu0
      %v3091 = vadd.f32 0.0, %v3090
      %3092 = vmatmul.bf16.gmra.mxu0 %v3027
      %v3093 = vpop.f32.mrf.mxu0
      %v3094 = vadd.f32 0.0, %v3093
      %v3095 = vpop.f32.mrf.mxu0
      %v3096 = vadd.f32 0.0, %v3095
      %3097 = vmatmul.bf16.gmra.mxu0 %v3029
      %v3098 = vpop.f32.mrf.mxu0
      %v3099 = vadd.f32 0.0, %v3098
      %v3100 = vpop.f32.mrf.mxu0
      %v3101 = vadd.f32 0.0, %v3100
      %3102 = vmatmul.bf16.gmra.mxu0 %v3031
      %v3103 = vpop.f32.mrf.mxu0
      %v3104 = vadd.f32 0.0, %v3103
      %v3105 = vpop.f32.mrf.mxu0
      %v3106 = vadd.f32 0.0, %v3105
      %3107 = vmatmul.bf16.gmra.mxu0 %v3033
      %v3108 = vpop.f32.mrf.mxu0
      %v3109 = vadd.f32 0.0, %v3108
      %v3110 = vpop.f32.mrf.mxu0
      %v3111 = vadd.f32 0.0, %v3110
      %3112 = vmatmul.bf16.gmra.mxu0 %v3035
      %v3113 = vpop.f32.mrf.mxu0
      %v3114 = vadd.f32 0.0, %v3113
      %v3115 = vpop.f32.mrf.mxu0
      %v3116 = vadd.f32 0.0, %v3115
      %3117 = vmatmul.bf16.gmra.mxu0 %v3037
      %v3118 = vpop.f32.mrf.mxu0
      %v3119 = vadd.f32 0.0, %v3118
      %v3120 = vpop.f32.mrf.mxu0
      %v3121 = vadd.f32 0.0, %v3120
      %3122 = vmatmul.bf16.gmra.mxu0 %v3039
      %v3123 = vpop.f32.mrf.mxu0
      %v3124 = vadd.f32 0.0, %v3123
      %v3125 = vpop.f32.mrf.mxu0
      %v3126 = vadd.f32 0.0, %v3125
      %3127 = vmatmul.bf16.gmra.mxu0 %v3041
      %v3128 = vpop.f32.mrf.mxu0
      %v3129 = vadd.f32 0.0, %v3128
      %v3130 = vpop.f32.mrf.mxu0
      %v3131 = vadd.f32 0.0, %v3130
      %3132 = vmatmul.bf16.gmra.mxu0 %v3043
      %v3133 = vpop.f32.mrf.mxu0
      %v3134 = vadd.f32 0.0, %v3133
      %v3135 = vpop.f32.mrf.mxu0
      %v3136 = vadd.f32 0.0, %v3135
      %3137 = vmatmul.bf16.gmra.mxu0 %v3045
      %v3138 = vpop.f32.mrf.mxu0
      %v3139 = vadd.f32 0.0, %v3138
      %v3140 = vpop.f32.mrf.mxu0
      %v3141 = vadd.f32 0.0, %v3140
      %3142 = vmatmul.bf16.gmra.mxu0 %v3047
      %v3143 = vpop.f32.mrf.mxu0
      %v3144 = vadd.f32 0.0, %v3143
      %v3145 = vpop.f32.mrf.mxu0
      %v3146 = vadd.f32 0.0, %v3145
      %3147 = vmatmul.bf16.gmra.mxu0 %v3049
      %v3148 = vpop.f32.mrf.mxu0
      %v3149 = vadd.f32 0.0, %v3148
      %v3150 = vpop.f32.mrf.mxu0
      %v3151 = vadd.f32 0.0, %v3150
      %3152 = vmatmul.bf16.gmra.mxu0 %v3051
      %v3153 = vpop.f32.mrf.mxu0
      %v3154 = vadd.f32 0.0, %v3153
      %v3155 = vpop.f32.mrf.mxu0
      %v3156 = vadd.f32 0.0, %v3155
      %3157 = vmatmul.bf16.gmra.mxu0 %v3053
      %v3158 = vpop.f32.mrf.mxu0
      %v3159 = vadd.f32 0.0, %v3158
      %v3160 = vpop.f32.mrf.mxu0
      %v3161 = vadd.f32 0.0, %v3160
      %3162 = vmatmul.bf16.gmra.mxu0 %v3055
      %v3163 = vpop.f32.mrf.mxu0
      %v3164 = vadd.f32 0.0, %v3163
      %v3165 = vpop.f32.mrf.mxu0
      %v3166 = vadd.f32 0.0, %v3165
      %3167 = vmatmul.bf16.gmra.mxu0 %v3057
      %v3168 = vpop.f32.mrf.mxu0
      %v3169 = vadd.f32 0.0, %v3168
      %v3170 = vpop.f32.mrf.mxu0
      %v3171 = vadd.f32 0.0, %v3170
      %3172 = vmatmul.bf16.gmra.mxu0 %v3059
      %v3173 = vpop.f32.mrf.mxu0
      %v3174 = vadd.f32 0.0, %v3173
      %v3175 = vpop.f32.mrf.mxu0
      %v3176 = vadd.f32 0.0, %v3175
      %3177 = vmatmul.bf16.gmra.mxu0 %v3061
      %v3178 = vpop.f32.mrf.mxu0
      %v3179 = vadd.f32 0.0, %v3178
      %v3180 = vpop.f32.mrf.mxu0
      %v3181 = vadd.f32 0.0, %v3180
      %3182 = vmatmul.bf16.gmra.mxu0 %v3063
      %v3183 = vpop.f32.mrf.mxu0
      %v3184 = vadd.f32 0.0, %v3183
      %v3185 = vpop.f32.mrf.mxu0
      %v3186 = vadd.f32 0.0, %v3185
      %3187 = vmatmul.bf16.gmra.mxu0 %v3065
      %v3188 = vpop.f32.mrf.mxu0
      %v3189 = vadd.f32 0.0, %v3188
      %v3190 = vpop.f32.mrf.mxu0
      %v3191 = vadd.f32 0.0, %v3190
      %3192 = vmatmul.bf16.gmra.mxu0 %v3067
      %v3193 = vpop.f32.mrf.mxu0
      %v3194 = vadd.f32 0.0, %v3193
      %v3195 = vpop.f32.mrf.mxu0
      %v3196 = vadd.f32 0.0, %v3195
      %3197 = vmatmul.bf16.gmra.mxu0 %v3069
      %v3198 = vpop.f32.mrf.mxu0
      %v3199 = vadd.f32 0.0, %v3198
      %v3200 = vpop.f32.mrf.mxu0
      %v3201 = vadd.f32 0.0, %v3200
      %3202 = vdwg.mxu0
      %v3203 = vadd.f32 %v2975, %v3084
      %v3204 = vadd.f32 %v2976, %v3086
      %v3205 = vadd.f32 %v2977, %v3089
      %v3206 = vadd.f32 %v2978, %v3091
      %v3207 = vadd.f32 %v2979, %v3094
      %v3208 = vadd.f32 %v2980, %v3096
      %v3209 = vadd.f32 %v2981, %v3099
      %v3210 = vadd.f32 %v2982, %v3101
      %v3211 = vadd.f32 %v2983, %v3104
      %v3212 = vadd.f32 %v2984, %v3106
      %v3213 = vadd.f32 %v2985, %v3109
      %v3214 = vadd.f32 %v2986, %v3111
      %v3215 = vadd.f32 %v2987, %v3114
      %v3216 = vadd.f32 %v2988, %v3116
      %v3217 = vadd.f32 %v2989, %v3119
      %v3218 = vadd.f32 %v2990, %v3121
      %v3219 = vadd.f32 %v2991, %v3124
      %v3220 = vadd.f32 %v2992, %v3126
      %v3221 = vadd.f32 %v2993, %v3129
      %v3222 = vadd.f32 %v2994, %v3131
      %v3223 = vadd.f32 %v2995, %v3134
      %v3224 = vadd.f32 %v2996, %v3136
      %v3225 = vadd.f32 %v2997, %v3139
      %v3226 = vadd.f32 %v2998, %v3141
      %v3227 = vadd.f32 %v2999, %v3144
      %v3228 = vadd.f32 %v3000, %v3146
      %v3229 = vadd.f32 %v3001, %v3149
      %v3230 = vadd.f32 %v3002, %v3151
      %v3231 = vadd.f32 %v3003, %v3154
      %v3232 = vadd.f32 %v3004, %v3156
      %v3233 = vadd.f32 %v3005, %v3159
      %v3234 = vadd.f32 %v3006, %v3161
      %v3235 = vadd.f32 %v3007, %v3164
      %v3236 = vadd.f32 %v3008, %v3166
      %v3237 = vadd.f32 %v3009, %v3169
      %v3238 = vadd.f32 %v3010, %v3171
      %v3239 = vadd.f32 %v3011, %v3174
      %v3240 = vadd.f32 %v3012, %v3176
      %v3241 = vadd.f32 %v3013, %v3179
      %v3242 = vadd.f32 %v3014, %v3181
      %v3243 = vadd.f32 %v3015, %v3184
      %v3244 = vadd.f32 %v3016, %v3186
      %v3245 = vadd.f32 %v3017, %v3189
      %v3246 = vadd.f32 %v3018, %v3191
      %v3247 = vadd.f32 %v3019, %v3194
      %v3248 = vadd.f32 %v3020, %v3196
      %v3249 = vadd.f32 %v3021, %v3199
      %v3250 = vadd.f32 %v3022, %v3201
      %v3251 = vpack.c.b16 %v2554, %v1633
      %v3252 = vpack.c.b16 %v2556, %v2555
      %v3254 = vunpack.c.l.b16 %v1534
      %v3255 = vpack.c.b16 %v3254, %v3254
      %v3256 = vrot.slane %v3255, 2
      %v3257 = vsel %vm889, %v1657, 0
      %v3260 = vsel %vm889, %v3251, 0
      %v3263 = vsel %vm889, %v3252, 0
      %v3266 = vsel %vm980, %v3256, 0
      %3268 = vmatpush.bf16.msra.mxu0 0
      %3269 = vmatpush.bf16.msra.mxu0 0
      %3270 = vmatpush.bf16.msra.mxu0 0
      %3271 = vmatpush.bf16.msra.mxu0 0
      %3272 = vmatpush.bf16.msra.mxu0 0
      %3273 = vmatpush.bf16.msra.mxu0 0
      %3274 = vmatpush.bf16.msra.mxu0 0
      %3275 = vmatpush.bf16.msra.mxu0 %v3266
      %3276 = vmatmul.bf16.gmra.mxu0 %v2801
      %v3277 = vpop.f32.mrf.mxu0
      %v3278 = vadd.f32 0.0, %v3277
      %v3279 = vpop.f32.mrf.mxu0
      %v3280 = vadd.f32 0.0, %v3279
      %3281 = vmatmul.bf16.gmra.mxu0 %v2803
      %v3282 = vpop.f32.mrf.mxu0
      %v3283 = vadd.f32 0.0, %v3282
      %v3284 = vpop.f32.mrf.mxu0
      %v3285 = vadd.f32 0.0, %v3284
      %3286 = vmatmul.bf16.gmra.mxu0 %v2805
      %v3287 = vpop.f32.mrf.mxu0
      %v3288 = vadd.f32 0.0, %v3287
      %v3289 = vpop.f32.mrf.mxu0
      %v3290 = vadd.f32 0.0, %v3289
      %3291 = vmatmul.bf16.gmra.mxu0 %v2807
      %v3292 = vpop.f32.mrf.mxu0
      %v3293 = vadd.f32 0.0, %v3292
      %v3294 = vpop.f32.mrf.mxu0
      %v3295 = vadd.f32 0.0, %v3294
      %3296 = vmatmul.bf16.gmra.mxu0 %v2809
      %v3297 = vpop.f32.mrf.mxu0
      %v3298 = vadd.f32 0.0, %v3297
      %v3299 = vpop.f32.mrf.mxu0
      %v3300 = vadd.f32 0.0, %v3299
      %3301 = vmatmul.bf16.gmra.mxu0 %v2811
      %v3302 = vpop.f32.mrf.mxu0
      %v3303 = vadd.f32 0.0, %v3302
      %v3304 = vpop.f32.mrf.mxu0
      %v3305 = vadd.f32 0.0, %v3304
      %3306 = vmatmul.bf16.gmra.mxu0 %v2813
      %v3307 = vpop.f32.mrf.mxu0
      %v3308 = vadd.f32 0.0, %v3307
      %v3309 = vpop.f32.mrf.mxu0
      %v3310 = vadd.f32 0.0, %v3309
      %3311 = vmatmul.bf16.gmra.mxu0 %v2815
      %v3312 = vpop.f32.mrf.mxu0
      %v3313 = vadd.f32 0.0, %v3312
      %v3314 = vpop.f32.mrf.mxu0
      %v3315 = vadd.f32 0.0, %v3314
      %3316 = vmatmul.bf16.gmra.mxu0 %v2817
      %v3317 = vpop.f32.mrf.mxu0
      %v3318 = vadd.f32 0.0, %v3317
      %v3319 = vpop.f32.mrf.mxu0
      %v3320 = vadd.f32 0.0, %v3319
      %3321 = vmatmul.bf16.gmra.mxu0 %v2819
      %v3322 = vpop.f32.mrf.mxu0
      %v3323 = vadd.f32 0.0, %v3322
      %v3324 = vpop.f32.mrf.mxu0
      %v3325 = vadd.f32 0.0, %v3324
      %3326 = vmatmul.bf16.gmra.mxu0 %v2821
      %v3327 = vpop.f32.mrf.mxu0
      %v3328 = vadd.f32 0.0, %v3327
      %v3329 = vpop.f32.mrf.mxu0
      %v3330 = vadd.f32 0.0, %v3329
      %3331 = vmatmul.bf16.gmra.mxu0 %v2823
      %v3332 = vpop.f32.mrf.mxu0
      %v3333 = vadd.f32 0.0, %v3332
      %v3334 = vpop.f32.mrf.mxu0
      %v3335 = vadd.f32 0.0, %v3334
      %3336 = vmatmul.bf16.gmra.mxu0 %v2825
      %v3337 = vpop.f32.mrf.mxu0
      %v3338 = vadd.f32 0.0, %v3337
      %v3339 = vpop.f32.mrf.mxu0
      %v3340 = vadd.f32 0.0, %v3339
      %3341 = vmatmul.bf16.gmra.mxu0 %v2827
      %v3342 = vpop.f32.mrf.mxu0
      %v3343 = vadd.f32 0.0, %v3342
      %v3344 = vpop.f32.mrf.mxu0
      %v3345 = vadd.f32 0.0, %v3344
      %3346 = vmatmul.bf16.gmra.mxu0 %v2829
      %v3347 = vpop.f32.mrf.mxu0
      %v3348 = vadd.f32 0.0, %v3347
      %v3349 = vpop.f32.mrf.mxu0
      %v3350 = vadd.f32 0.0, %v3349
      %3351 = vmatmul.bf16.gmra.mxu0 %v2831
      %v3352 = vpop.f32.mrf.mxu0
      %v3353 = vadd.f32 0.0, %v3352
      %v3354 = vpop.f32.mrf.mxu0
      %v3355 = vadd.f32 0.0, %v3354
      %3356 = vmatmul.bf16.gmra.mxu0 %v2833
      %v3357 = vpop.f32.mrf.mxu0
      %v3358 = vadd.f32 0.0, %v3357
      %v3359 = vpop.f32.mrf.mxu0
      %v3360 = vadd.f32 0.0, %v3359
      %3361 = vmatmul.bf16.gmra.mxu0 %v2835
      %v3362 = vpop.f32.mrf.mxu0
      %v3363 = vadd.f32 0.0, %v3362
      %v3364 = vpop.f32.mrf.mxu0
      %v3365 = vadd.f32 0.0, %v3364
      %3366 = vmatmul.bf16.gmra.mxu0 %v2837
      %v3367 = vpop.f32.mrf.mxu0
      %v3368 = vadd.f32 0.0, %v3367
      %v3369 = vpop.f32.mrf.mxu0
      %v3370 = vadd.f32 0.0, %v3369
      %3371 = vmatmul.bf16.gmra.mxu0 %v2839
      %v3372 = vpop.f32.mrf.mxu0
      %v3373 = vadd.f32 0.0, %v3372
      %v3374 = vpop.f32.mrf.mxu0
      %v3375 = vadd.f32 0.0, %v3374
      %3376 = vmatmul.bf16.gmra.mxu0 %v2841
      %v3377 = vpop.f32.mrf.mxu0
      %v3378 = vadd.f32 0.0, %v3377
      %v3379 = vpop.f32.mrf.mxu0
      %v3380 = vadd.f32 0.0, %v3379
      %3381 = vmatmul.bf16.gmra.mxu0 %v3257
      %v3382 = vpop.f32.mrf.mxu0
      %v3383 = vadd.f32 0.0, %v3382
      %v3384 = vpop.f32.mrf.mxu0
      %v3385 = vadd.f32 0.0, %v3384
      %3386 = vmatmul.bf16.gmra.mxu0 %v3260
      %v3387 = vpop.f32.mrf.mxu0
      %v3388 = vadd.f32 0.0, %v3387
      %v3389 = vpop.f32.mrf.mxu0
      %v3390 = vadd.f32 0.0, %v3389
      %3391 = vmatmul.bf16.gmra.mxu0 %v3263
      %v3392 = vpop.f32.mrf.mxu0
      %v3393 = vadd.f32 0.0, %v3392
      %v3394 = vpop.f32.mrf.mxu0
      %v3395 = vadd.f32 0.0, %v3394
      %3396 = vdwg.mxu0
      %v3397 = vadd.f32 %v3203, %v3278
      %v3398 = vadd.f32 %v3204, %v3280
      %v3399 = vadd.f32 %v3205, %v3283
      %v3400 = vadd.f32 %v3206, %v3285
      %v3401 = vadd.f32 %v3207, %v3288
      %v3402 = vadd.f32 %v3208, %v3290
      %v3403 = vadd.f32 %v3209, %v3293
      %v3404 = vadd.f32 %v3210, %v3295
      %v3405 = vadd.f32 %v3211, %v3298
      %v3406 = vadd.f32 %v3212, %v3300
      %v3407 = vadd.f32 %v3213, %v3303
      %v3408 = vadd.f32 %v3214, %v3305
      %v3409 = vadd.f32 %v3215, %v3308
      %v3410 = vadd.f32 %v3216, %v3310
      %v3411 = vadd.f32 %v3217, %v3313
      %v3412 = vadd.f32 %v3218, %v3315
      %v3413 = vadd.f32 %v3219, %v3318
      %v3414 = vadd.f32 %v3220, %v3320
      %v3415 = vadd.f32 %v3221, %v3323
      %v3416 = vadd.f32 %v3222, %v3325
      %v3417 = vadd.f32 %v3223, %v3328
      %v3418 = vadd.f32 %v3224, %v3330
      %v3419 = vadd.f32 %v3225, %v3333
      %v3420 = vadd.f32 %v3226, %v3335
      %v3421 = vadd.f32 %v3227, %v3338
      %v3422 = vadd.f32 %v3228, %v3340
      %v3423 = vadd.f32 %v3229, %v3343
      %v3424 = vadd.f32 %v3230, %v3345
      %v3425 = vadd.f32 %v3231, %v3348
      %v3426 = vadd.f32 %v3232, %v3350
      %v3427 = vadd.f32 %v3233, %v3353
      %v3428 = vadd.f32 %v3234, %v3355
      %v3429 = vadd.f32 %v3235, %v3358
      %v3430 = vadd.f32 %v3236, %v3360
      %v3431 = vadd.f32 %v3237, %v3363
      %v3432 = vadd.f32 %v3238, %v3365
      %v3433 = vadd.f32 %v3239, %v3368
      %v3434 = vadd.f32 %v3240, %v3370
      %v3435 = vadd.f32 %v3241, %v3373
      %v3436 = vadd.f32 %v3242, %v3375
      %v3437 = vadd.f32 %v3243, %v3378
      %v3438 = vadd.f32 %v3244, %v3380
      %v3439 = vadd.f32 %v3245, %v3383
      %v3440 = vadd.f32 %v3246, %v3385
      %v3441 = vadd.f32 %v3247, %v3388
      %v3442 = vadd.f32 %v3248, %v3390
      %v3443 = vadd.f32 %v3249, %v3393
      %v3444 = vadd.f32 %v3250, %v3395
      %v3445 = vpack.c.b16 %v1631, %v1631
      %vm3446 = vsmask.f32 7424
      %v3447 = vshrl.u32 %v2789, 16
      %v3449 = vshll.u32 %v2789, 16
      %v3451 = vrot.slane %v3449, 1
      %v3452 = vor.u32 %v3447, %v3451
      %v3453 = vrot.slane %v1664, 1
      %v3454 = vsel %vm3446, %v3452, %v3453
      %v3455 = vor.u32 %v1661, %v3453
      %v3456 = vrot.slane %v1672, 1
      %v3457 = vsel %vm3446, %v3455, %v3456
      %v3458 = vor.u32 %v1669, %v3456
      %v3459 = vrot.slane %v1681, 1
      %v3460 = vsel %vm3446, %v3458, %v3459
      %v3461 = vor.u32 %v1678, %v3459
      %v3462 = vrot.slane %v1690, 1
      %v3463 = vsel %vm3446, %v3461, %v3462
      %v3464 = vor.u32 %v1687, %v3462
      %v3465 = vrot.slane %v1699, 1
      %v3466 = vsel %vm3446, %v3464, %v3465
      %v3467 = vor.u32 %v1696, %v3465
      %v3468 = vrot.slane %v1708, 1
      %v3469 = vsel %vm3446, %v3467, %v3468
      %v3470 = vor.u32 %v1705, %v3468
      %v3471 = vrot.slane %v1717, 1
      %v3472 = vsel %vm3446, %v3470, %v3471
      %v3473 = vor.u32 %v1714, %v3471
      %v3474 = vrot.slane %v1726, 1
      %v3475 = vsel %vm3446, %v3473, %v3474
      %v3476 = vor.u32 %v1723, %v3474
      %v3477 = vrot.slane %v1735, 1
      %v3478 = vsel %vm3446, %v3476, %v3477
      %v3479 = vor.u32 %v1732, %v3477
      %v3480 = vrot.slane %v1744, 1
      %v3481 = vsel %vm3446, %v3479, %v3480
      %v3482 = vor.u32 %v1741, %v3480
      %v3483 = vrot.slane %v1753, 1
      %v3484 = vsel %vm3446, %v3482, %v3483
      %v3485 = vor.u32 %v1750, %v3483
      %v3486 = vrot.slane %v1762, 1
      %v3487 = vsel %vm3446, %v3485, %v3486
      %v3488 = vor.u32 %v1759, %v3486
      %v3489 = vrot.slane %v1771, 1
      %v3490 = vsel %vm3446, %v3488, %v3489
      %v3491 = vor.u32 %v1768, %v3489
      %v3492 = vrot.slane %v1780, 1
      %v3493 = vsel %vm3446, %v3491, %v3492
      %v3494 = vor.u32 %v1777, %v3492
      %v3495 = vrot.slane %v1789, 1
      %v3496 = vsel %vm3446, %v3494, %v3495
      %v3497 = vor.u32 %v1786, %v3495
      %v3498 = vrot.slane %v1798, 1
      %v3499 = vsel %vm3446, %v3497, %v3498
      %v3500 = vor.u32 %v1795, %v3498
      %v3501 = vrot.slane %v1807, 1
      %v3502 = vsel %vm3446, %v3500, %v3501
      %v3503 = vor.u32 %v1804, %v3501
      %v3504 = vrot.slane %v1816, 1
      %v3505 = vsel %vm3446, %v3503, %v3504
      %v3506 = vor.u32 %v1813, %v3504
      %v3507 = vrot.slane %v1825, 1
      %v3508 = vsel %vm3446, %v3506, %v3507
      %v3509 = vor.u32 %v1822, %v3507
      %v3510 = vrot.slane %v1834, 1
      %v3511 = vsel %vm3446, %v3509, %v3510
      %v3512 = vor.u32 %v1831, %v3510
      %v3513 = vrot.slane %v1843, 1
      %v3514 = vsel %vm3446, %v3512, %v3513
      %v3515 = vor.u32 %v1840, %v3513
      %v3516 = vrot.slane %v1852, 1
      %v3517 = vsel %vm3446, %v3515, %v3516
      %v3518 = vor.u32 %v1849, %v3516
      %v3519 = vrot.slane %v1861, 1
      %v3520 = vsel %vm3446, %v3518, %v3519
      %v3521 = vor.u32 %v1858, %v3519
      %v3523 = vshll.u32 %v3445, 16
      %v3525 = vrot.slane %v3523, 1
      %v3526 = vsel %vm3446, %v3521, %v3525
      %v3528 = vsel %vm889, %v3454, 0
      %v3531 = vsel %vm889, %v3457, 0
      %v3534 = vsel %vm889, %v3460, 0
      %v3537 = vsel %vm889, %v3463, 0
      %v3540 = vsel %vm889, %v3466, 0
      %v3543 = vsel %vm889, %v3469, 0
      %v3546 = vsel %vm889, %v3472, 0
      %v3549 = vsel %vm889, %v3475, 0
      %v3552 = vsel %vm889, %v3478, 0
      %v3555 = vsel %vm889, %v3481, 0
      %v3558 = vsel %vm889, %v3484, 0
      %v3561 = vsel %vm889, %v3487, 0
      %v3564 = vsel %vm889, %v3490, 0
      %v3567 = vsel %vm889, %v3493, 0
      %v3570 = vsel %vm889, %v3496, 0
      %v3573 = vsel %vm889, %v3499, 0
      %v3576 = vsel %vm889, %v3502, 0
      %v3579 = vsel %vm889, %v3505, 0
      %v3582 = vsel %vm889, %v3508, 0
      %v3585 = vsel %vm889, %v3511, 0
      %v3588 = vsel %vm889, %v3514, 0
      %v3591 = vsel %vm889, %v3517, 0
      %v3594 = vsel %vm889, %v3520, 0
      %v3597 = vsel %vm889, %v3526, 0
      %v3600 = vsel %vm980, %v1532, 0
      %3602 = vmatpush.bf16.msra.mxu0 0
      %3603 = vmatpush.bf16.msra.mxu0 0
      %3604 = vmatpush.bf16.msra.mxu0 0
      %3605 = vmatpush.bf16.msra.mxu0 0
      %3606 = vmatpush.bf16.msra.mxu0 0
      %3607 = vmatpush.bf16.msra.mxu0 0
      %3608 = vmatpush.bf16.msra.mxu0 0
      %3609 = vmatpush.bf16.msra.mxu0 %v3600
      %3610 = vmatmul.bf16.gmra.mxu0 %v3528
      %v3611 = vpop.f32.mrf.mxu0
      %v3612 = vadd.f32 0.0, %v3611
      %v3613 = vpop.f32.mrf.mxu0
      %v3614 = vadd.f32 0.0, %v3613
      %3615 = vmatmul.bf16.gmra.mxu0 %v3531
      %v3616 = vpop.f32.mrf.mxu0
      %v3617 = vadd.f32 0.0, %v3616
      %v3618 = vpop.f32.mrf.mxu0
      %v3619 = vadd.f32 0.0, %v3618
      %3620 = vmatmul.bf16.gmra.mxu0 %v3534
      %v3621 = vpop.f32.mrf.mxu0
      %v3622 = vadd.f32 0.0, %v3621
      %v3623 = vpop.f32.mrf.mxu0
      %v3624 = vadd.f32 0.0, %v3623
      %3625 = vmatmul.bf16.gmra.mxu0 %v3537
      %v3626 = vpop.f32.mrf.mxu0
      %v3627 = vadd.f32 0.0, %v3626
      %v3628 = vpop.f32.mrf.mxu0
      %v3629 = vadd.f32 0.0, %v3628
      %3630 = vmatmul.bf16.gmra.mxu0 %v3540
      %v3631 = vpop.f32.mrf.mxu0
      %v3632 = vadd.f32 0.0, %v3631
      %v3633 = vpop.f32.mrf.mxu0
      %v3634 = vadd.f32 0.0, %v3633
      %3635 = vmatmul.bf16.gmra.mxu0 %v3543
      %v3636 = vpop.f32.mrf.mxu0
      %v3637 = vadd.f32 0.0, %v3636
      %v3638 = vpop.f32.mrf.mxu0
      %v3639 = vadd.f32 0.0, %v3638
      %3640 = vmatmul.bf16.gmra.mxu0 %v3546
      %v3641 = vpop.f32.mrf.mxu0
      %v3642 = vadd.f32 0.0, %v3641
      %v3643 = vpop.f32.mrf.mxu0
      %v3644 = vadd.f32 0.0, %v3643
      %3645 = vmatmul.bf16.gmra.mxu0 %v3549
      %v3646 = vpop.f32.mrf.mxu0
      %v3647 = vadd.f32 0.0, %v3646
      %v3648 = vpop.f32.mrf.mxu0
      %v3649 = vadd.f32 0.0, %v3648
      %3650 = vmatmul.bf16.gmra.mxu0 %v3552
      %v3651 = vpop.f32.mrf.mxu0
      %v3652 = vadd.f32 0.0, %v3651
      %v3653 = vpop.f32.mrf.mxu0
      %v3654 = vadd.f32 0.0, %v3653
      %3655 = vmatmul.bf16.gmra.mxu0 %v3555
      %v3656 = vpop.f32.mrf.mxu0
      %v3657 = vadd.f32 0.0, %v3656
      %v3658 = vpop.f32.mrf.mxu0
      %v3659 = vadd.f32 0.0, %v3658
      %3660 = vmatmul.bf16.gmra.mxu0 %v3558
      %v3661 = vpop.f32.mrf.mxu0
      %v3662 = vadd.f32 0.0, %v3661
      %v3663 = vpop.f32.mrf.mxu0
      %v3664 = vadd.f32 0.0, %v3663
      %3665 = vmatmul.bf16.gmra.mxu0 %v3561
      %v3666 = vpop.f32.mrf.mxu0
      %v3667 = vadd.f32 0.0, %v3666
      %v3668 = vpop.f32.mrf.mxu0
      %v3669 = vadd.f32 0.0, %v3668
      %3670 = vmatmul.bf16.gmra.mxu0 %v3564
      %v3671 = vpop.f32.mrf.mxu0
      %v3672 = vadd.f32 0.0, %v3671
      %v3673 = vpop.f32.mrf.mxu0
      %v3674 = vadd.f32 0.0, %v3673
      %3675 = vmatmul.bf16.gmra.mxu0 %v3567
      %v3676 = vpop.f32.mrf.mxu0
      %v3677 = vadd.f32 0.0, %v3676
      %v3678 = vpop.f32.mrf.mxu0
      %v3679 = vadd.f32 0.0, %v3678
      %3680 = vmatmul.bf16.gmra.mxu0 %v3570
      %v3681 = vpop.f32.mrf.mxu0
      %v3682 = vadd.f32 0.0, %v3681
      %v3683 = vpop.f32.mrf.mxu0
      %v3684 = vadd.f32 0.0, %v3683
      %3685 = vmatmul.bf16.gmra.mxu0 %v3573
      %v3686 = vpop.f32.mrf.mxu0
      %v3687 = vadd.f32 0.0, %v3686
      %v3688 = vpop.f32.mrf.mxu0
      %v3689 = vadd.f32 0.0, %v3688
      %3690 = vmatmul.bf16.gmra.mxu0 %v3576
      %v3691 = vpop.f32.mrf.mxu0
      %v3692 = vadd.f32 0.0, %v3691
      %v3693 = vpop.f32.mrf.mxu0
      %v3694 = vadd.f32 0.0, %v3693
      %3695 = vmatmul.bf16.gmra.mxu0 %v3579
      %v3696 = vpop.f32.mrf.mxu0
      %v3697 = vadd.f32 0.0, %v3696
      %v3698 = vpop.f32.mrf.mxu0
      %v3699 = vadd.f32 0.0, %v3698
      %3700 = vmatmul.bf16.gmra.mxu0 %v3582
      %v3701 = vpop.f32.mrf.mxu0
      %v3702 = vadd.f32 0.0, %v3701
      %v3703 = vpop.f32.mrf.mxu0
      %v3704 = vadd.f32 0.0, %v3703
      %3705 = vmatmul.bf16.gmra.mxu0 %v3585
      %v3706 = vpop.f32.mrf.mxu0
      %v3707 = vadd.f32 0.0, %v3706
      %v3708 = vpop.f32.mrf.mxu0
      %v3709 = vadd.f32 0.0, %v3708
      %3710 = vmatmul.bf16.gmra.mxu0 %v3588
      %v3711 = vpop.f32.mrf.mxu0
      %v3712 = vadd.f32 0.0, %v3711
      %v3713 = vpop.f32.mrf.mxu0
      %v3714 = vadd.f32 0.0, %v3713
      %3715 = vmatmul.bf16.gmra.mxu0 %v3591
      %v3716 = vpop.f32.mrf.mxu0
      %v3717 = vadd.f32 0.0, %v3716
      %v3718 = vpop.f32.mrf.mxu0
      %v3719 = vadd.f32 0.0, %v3718
      %3720 = vmatmul.bf16.gmra.mxu0 %v3594
      %v3721 = vpop.f32.mrf.mxu0
      %v3722 = vadd.f32 0.0, %v3721
      %v3723 = vpop.f32.mrf.mxu0
      %v3724 = vadd.f32 0.0, %v3723
      %3725 = vmatmul.bf16.gmra.mxu0 %v3597
      %v3726 = vpop.f32.mrf.mxu0
      %v3727 = vadd.f32 0.0, %v3726
      %v3728 = vpop.f32.mrf.mxu0
      %v3729 = vadd.f32 0.0, %v3728
      %3730 = vdwg.mxu0
      %v3731 = vadd.f32 %v3397, %v3612
      %v3732 = vadd.f32 %v3398, %v3614
      %v3733 = vadd.f32 %v3399, %v3617
      %v3734 = vadd.f32 %v3400, %v3619
      %v3735 = vadd.f32 %v3401, %v3622
      %v3736 = vadd.f32 %v3402, %v3624
      %v3737 = vadd.f32 %v3403, %v3627
      %v3738 = vadd.f32 %v3404, %v3629
      %v3739 = vadd.f32 %v3405, %v3632
      %v3740 = vadd.f32 %v3406, %v3634
      %v3741 = vadd.f32 %v3407, %v3637
      %v3742 = vadd.f32 %v3408, %v3639
      %v3743 = vadd.f32 %v3409, %v3642
      %v3744 = vadd.f32 %v3410, %v3644
      %v3745 = vadd.f32 %v3411, %v3647
      %v3746 = vadd.f32 %v3412, %v3649
      %v3747 = vadd.f32 %v3413, %v3652
      %v3748 = vadd.f32 %v3414, %v3654
      %v3749 = vadd.f32 %v3415, %v3657
      %v3750 = vadd.f32 %v3416, %v3659
      %v3751 = vadd.f32 %v3417, %v3662
      %v3752 = vadd.f32 %v3418, %v3664
      %v3753 = vadd.f32 %v3419, %v3667
      %v3754 = vadd.f32 %v3420, %v3669
      %v3755 = vadd.f32 %v3421, %v3672
      %v3756 = vadd.f32 %v3422, %v3674
      %v3757 = vadd.f32 %v3423, %v3677
      %v3758 = vadd.f32 %v3424, %v3679
      %v3759 = vadd.f32 %v3425, %v3682
      %v3760 = vadd.f32 %v3426, %v3684
      %v3761 = vadd.f32 %v3427, %v3687
      %v3762 = vadd.f32 %v3428, %v3689
      %v3763 = vadd.f32 %v3429, %v3692
      %v3764 = vadd.f32 %v3430, %v3694
      %v3765 = vadd.f32 %v3431, %v3697
      %v3766 = vadd.f32 %v3432, %v3699
      %v3767 = vadd.f32 %v3433, %v3702
      %v3768 = vadd.f32 %v3434, %v3704
      %v3769 = vadd.f32 %v3435, %v3707
      %v3770 = vadd.f32 %v3436, %v3709
      %v3771 = vadd.f32 %v3437, %v3712
      %v3772 = vadd.f32 %v3438, %v3714
      %v3773 = vadd.f32 %v3439, %v3717
      %v3774 = vadd.f32 %v3440, %v3719
      %v3775 = vadd.f32 %v3441, %v3722
      %v3776 = vadd.f32 %v3442, %v3724
      %v3777 = vadd.f32 %v3443, %v3727
      %v3778 = vadd.f32 %v3444, %v3729
      %v3779 = vpack.c.b16 %v2554, %v2554
      %v3780 = vrot.slane %v2144, 1
      %v3781 = vor.u32 %v2141, %v3780
      %v3782 = vrot.slane %v2153, 1
      %v3783 = vsel %vm3446, %v3781, %v3782
      %v3784 = vor.u32 %v2150, %v3782
      %v3785 = vrot.slane %v2162, 1
      %v3786 = vsel %vm3446, %v3784, %v3785
      %v3787 = vor.u32 %v2159, %v3785
      %v3788 = vrot.slane %v2171, 1
      %v3789 = vsel %vm3446, %v3787, %v3788
      %v3790 = vor.u32 %v2168, %v3788
      %v3791 = vrot.slane %v2180, 1
      %v3792 = vsel %vm3446, %v3790, %v3791
      %v3793 = vor.u32 %v2177, %v3791
      %v3794 = vrot.slane %v2189, 1
      %v3795 = vsel %vm3446, %v3793, %v3794
      %v3796 = vor.u32 %v2186, %v3794
      %v3797 = vrot.slane %v2198, 1
      %v3798 = vsel %vm3446, %v3796, %v3797
      %v3799 = vor.u32 %v2195, %v3797
      %v3800 = vrot.slane %v2207, 1
      %v3801 = vsel %vm3446, %v3799, %v3800
      %v3802 = vor.u32 %v2204, %v3800
      %v3803 = vrot.slane %v2216, 1
      %v3804 = vsel %vm3446, %v3802, %v3803
      %v3805 = vor.u32 %v2213, %v3803
      %v3806 = vrot.slane %v2225, 1
      %v3807 = vsel %vm3446, %v3805, %v3806
      %v3808 = vor.u32 %v2222, %v3806
      %v3809 = vrot.slane %v2234, 1
      %v3810 = vsel %vm3446, %v3808, %v3809
      %v3811 = vor.u32 %v2231, %v3809
      %v3812 = vrot.slane %v2243, 1
      %v3813 = vsel %vm3446, %v3811, %v3812
      %v3814 = vor.u32 %v2240, %v3812
      %v3815 = vrot.slane %v2252, 1
      %v3816 = vsel %vm3446, %v3814, %v3815
      %v3817 = vor.u32 %v2249, %v3815
      %v3818 = vrot.slane %v2261, 1
      %v3819 = vsel %vm3446, %v3817, %v3818
      %v3820 = vor.u32 %v2258, %v3818
      %v3821 = vrot.slane %v2270, 1
      %v3822 = vsel %vm3446, %v3820, %v3821
      %v3823 = vor.u32 %v2267, %v3821
      %v3824 = vrot.slane %v2279, 1
      %v3825 = vsel %vm3446, %v3823, %v3824
      %v3826 = vor.u32 %v2276, %v3824
      %v3827 = vrot.slane %v2288, 1
      %v3828 = vsel %vm3446, %v3826, %v3827
      %v3829 = vor.u32 %v2285, %v3827
      %v3830 = vrot.slane %v2297, 1
      %v3831 = vsel %vm3446, %v3829, %v3830
      %v3832 = vor.u32 %v2294, %v3830
      %v3833 = vrot.slane %v2306, 1
      %v3834 = vsel %vm3446, %v3832, %v3833
      %v3835 = vor.u32 %v2303, %v3833
      %v3836 = vrot.slane %v2315, 1
      %v3837 = vsel %vm3446, %v3835, %v3836
      %v3838 = vor.u32 %v2312, %v3836
      %v3839 = vrot.slane %v2324, 1
      %v3840 = vsel %vm3446, %v3838, %v3839
      %v3841 = vor.u32 %v2321, %v3839
      %v3842 = vrot.slane %v2333, 1
      %v3843 = vsel %vm3446, %v3841, %v3842
      %v3844 = vor.u32 %v2330, %v3842
      %v3845 = vrot.slane %v2565, 1
      %v3846 = vsel %vm3446, %v3844, %v3845
      %v3847 = vor.u32 %v2562, %v3845
      %v3848 = vrot.slane %v2574, 1
      %v3849 = vsel %vm3446, %v3847, %v3848
      %v3850 = vor.u32 %v2571, %v3848
      %v3852 = vshll.u32 %v3779, 16
      %v3854 = vrot.slane %v3852, 1
      %v3855 = vsel %vm3446, %v3850, %v3854
      %v3857 = vunpack.c.l.b16 %v1533
      %v3858 = vpack.c.b16 %v3857, %v3857
      %v3859 = vrot.slane %v3858, 2
      %v3861 = vsel %vm889, %v3783, 0
      %v3864 = vsel %vm889, %v3786, 0
      %v3867 = vsel %vm889, %v3789, 0
      %v3870 = vsel %vm889, %v3792, 0
      %v3873 = vsel %vm889, %v3795, 0
      %v3876 = vsel %vm889, %v3798, 0
      %v3879 = vsel %vm889, %v3801, 0
      %v3882 = vsel %vm889, %v3804, 0
      %v3885 = vsel %vm889, %v3807, 0
      %v3888 = vsel %vm889, %v3810, 0
      %v3891 = vsel %vm889, %v3813, 0
      %v3894 = vsel %vm889, %v3816, 0
      %v3897 = vsel %vm889, %v3819, 0
      %v3900 = vsel %vm889, %v3822, 0
      %v3903 = vsel %vm889, %v3825, 0
      %v3906 = vsel %vm889, %v3828, 0
      %v3909 = vsel %vm889, %v3831, 0
      %v3912 = vsel %vm889, %v3834, 0
      %v3915 = vsel %vm889, %v3837, 0
      %v3918 = vsel %vm889, %v3840, 0
      %v3921 = vsel %vm889, %v3843, 0
      %v3924 = vsel %vm889, %v3846, 0
      %v3927 = vsel %vm889, %v3849, 0
      %v3930 = vsel %vm889, %v3855, 0
      %v3933 = vsel %vm980, %v3859, 0
      %3935 = vmatpush.bf16.msra.mxu0 0
      %3936 = vmatpush.bf16.msra.mxu0 0
      %3937 = vmatpush.bf16.msra.mxu0 0
      %3938 = vmatpush.bf16.msra.mxu0 0
      %3939 = vmatpush.bf16.msra.mxu0 0
      %3940 = vmatpush.bf16.msra.mxu0 0
      %3941 = vmatpush.bf16.msra.mxu0 0
      %3942 = vmatpush.bf16.msra.mxu0 %v3933
      %3943 = vmatmul.bf16.gmra.mxu0 %v3861
      %v3944 = vpop.f32.mrf.mxu0
      %v3945 = vadd.f32 0.0, %v3944
      %v3946 = vpop.f32.mrf.mxu0
      %v3947 = vadd.f32 0.0, %v3946
      %3948 = vmatmul.bf16.gmra.mxu0 %v3864
      %v3949 = vpop.f32.mrf.mxu0
      %v3950 = vadd.f32 0.0, %v3949
      %v3951 = vpop.f32.mrf.mxu0
      %v3952 = vadd.f32 0.0, %v3951
      %3953 = vmatmul.bf16.gmra.mxu0 %v3867
      %v3954 = vpop.f32.mrf.mxu0
      %v3955 = vadd.f32 0.0, %v3954
      %v3956 = vpop.f32.mrf.mxu0
      %v3957 = vadd.f32 0.0, %v3956
      %3958 = vmatmul.bf16.gmra.mxu0 %v3870
      %v3959 = vpop.f32.mrf.mxu0
      %v3960 = vadd.f32 0.0, %v3959
      %v3961 = vpop.f32.mrf.mxu0
      %v3962 = vadd.f32 0.0, %v3961
      %3963 = vmatmul.bf16.gmra.mxu0 %v3873
      %v3964 = vpop.f32.mrf.mxu0
      %v3965 = vadd.f32 0.0, %v3964
      %v3966 = vpop.f32.mrf.mxu0
      %v3967 = vadd.f32 0.0, %v3966
      %3968 = vmatmul.bf16.gmra.mxu0 %v3876
      %v3969 = vpop.f32.mrf.mxu0
      %v3970 = vadd.f32 0.0, %v3969
      %v3971 = vpop.f32.mrf.mxu0
      %v3972 = vadd.f32 0.0, %v3971
      %3973 = vmatmul.bf16.gmra.mxu0 %v3879
      %v3974 = vpop.f32.mrf.mxu0
      %v3975 = vadd.f32 0.0, %v3974
      %v3976 = vpop.f32.mrf.mxu0
      %v3977 = vadd.f32 0.0, %v3976
      %3978 = vmatmul.bf16.gmra.mxu0 %v3882
      %v3979 = vpop.f32.mrf.mxu0
      %v3980 = vadd.f32 0.0, %v3979
      %v3981 = vpop.f32.mrf.mxu0
      %v3982 = vadd.f32 0.0, %v3981
      %3983 = vmatmul.bf16.gmra.mxu0 %v3885
      %v3984 = vpop.f32.mrf.mxu0
      %v3985 = vadd.f32 0.0, %v3984
      %v3986 = vpop.f32.mrf.mxu0
      %v3987 = vadd.f32 0.0, %v3986
      %3988 = vmatmul.bf16.gmra.mxu0 %v3888
      %v3989 = vpop.f32.mrf.mxu0
      %v3990 = vadd.f32 0.0, %v3989
      %v3991 = vpop.f32.mrf.mxu0
      %v3992 = vadd.f32 0.0, %v3991
      %3993 = vmatmul.bf16.gmra.mxu0 %v3891
      %v3994 = vpop.f32.mrf.mxu0
      %v3995 = vadd.f32 0.0, %v3994
      %v3996 = vpop.f32.mrf.mxu0
      %v3997 = vadd.f32 0.0, %v3996
      %3998 = vmatmul.bf16.gmra.mxu0 %v3894
      %v3999 = vpop.f32.mrf.mxu0
      %v4000 = vadd.f32 0.0, %v3999
      %v4001 = vpop.f32.mrf.mxu0
      %v4002 = vadd.f32 0.0, %v4001
      %4003 = vmatmul.bf16.gmra.mxu0 %v3897
      %v4004 = vpop.f32.mrf.mxu0
      %v4005 = vadd.f32 0.0, %v4004
      %v4006 = vpop.f32.mrf.mxu0
      %v4007 = vadd.f32 0.0, %v4006
      %4008 = vmatmul.bf16.gmra.mxu0 %v3900
      %v4009 = vpop.f32.mrf.mxu0
      %v4010 = vadd.f32 0.0, %v4009
      %v4011 = vpop.f32.mrf.mxu0
      %v4012 = vadd.f32 0.0, %v4011
      %4013 = vmatmul.bf16.gmra.mxu0 %v3903
      %v4014 = vpop.f32.mrf.mxu0
      %v4015 = vadd.f32 0.0, %v4014
      %v4016 = vpop.f32.mrf.mxu0
      %v4017 = vadd.f32 0.0, %v4016
      %4018 = vmatmul.bf16.gmra.mxu0 %v3906
      %v4019 = vpop.f32.mrf.mxu0
      %v4020 = vadd.f32 0.0, %v4019
      %v4021 = vpop.f32.mrf.mxu0
      %v4022 = vadd.f32 0.0, %v4021
      %4023 = vmatmul.bf16.gmra.mxu0 %v3909
      %v4024 = vpop.f32.mrf.mxu0
      %v4025 = vadd.f32 0.0, %v4024
      %v4026 = vpop.f32.mrf.mxu0
      %v4027 = vadd.f32 0.0, %v4026
      %4028 = vmatmul.bf16.gmra.mxu0 %v3912
      %v4029 = vpop.f32.mrf.mxu0
      %v4030 = vadd.f32 0.0, %v4029
      %v4031 = vpop.f32.mrf.mxu0
      %v4032 = vadd.f32 0.0, %v4031
      %4033 = vmatmul.bf16.gmra.mxu0 %v3915
      %v4034 = vpop.f32.mrf.mxu0
      %v4035 = vadd.f32 0.0, %v4034
      %v4036 = vpop.f32.mrf.mxu0
      %v4037 = vadd.f32 0.0, %v4036
      %4038 = vmatmul.bf16.gmra.mxu0 %v3918
      %v4039 = vpop.f32.mrf.mxu0
      %v4040 = vadd.f32 0.0, %v4039
      %v4041 = vpop.f32.mrf.mxu0
      %v4042 = vadd.f32 0.0, %v4041
      %4043 = vmatmul.bf16.gmra.mxu0 %v3921
      %v4044 = vpop.f32.mrf.mxu0
      %v4045 = vadd.f32 0.0, %v4044
      %v4046 = vpop.f32.mrf.mxu0
      %v4047 = vadd.f32 0.0, %v4046
      %4048 = vmatmul.bf16.gmra.mxu0 %v3924
      %v4049 = vpop.f32.mrf.mxu0
      %v4050 = vadd.f32 0.0, %v4049
      %v4051 = vpop.f32.mrf.mxu0
      %v4052 = vadd.f32 0.0, %v4051
      %4053 = vmatmul.bf16.gmra.mxu0 %v3927
      %v4054 = vpop.f32.mrf.mxu0
      %v4055 = vadd.f32 0.0, %v4054
      %v4056 = vpop.f32.mrf.mxu0
      %v4057 = vadd.f32 0.0, %v4056
      %4058 = vmatmul.bf16.gmra.mxu0 %v3930
      %v4059 = vpop.f32.mrf.mxu0
      %v4060 = vadd.f32 0.0, %v4059
      %v4061 = vpop.f32.mrf.mxu0
      %v4062 = vadd.f32 0.0, %v4061
      %4063 = vdwg.mxu0
      %v4064 = vadd.f32 %v3731, %v3945
      %v4065 = vadd.f32 %v3732, %v3947
      %v4066 = vadd.f32 %v3733, %v3950
      %v4067 = vadd.f32 %v3734, %v3952
      %v4068 = vadd.f32 %v3735, %v3955
      %v4069 = vadd.f32 %v3736, %v3957
      %v4070 = vadd.f32 %v3737, %v3960
      %v4071 = vadd.f32 %v3738, %v3962
      %v4072 = vadd.f32 %v3739, %v3965
      %v4073 = vadd.f32 %v3740, %v3967
      %v4074 = vadd.f32 %v3741, %v3970
      %v4075 = vadd.f32 %v3742, %v3972
      %v4076 = vadd.f32 %v3743, %v3975
      %v4077 = vadd.f32 %v3744, %v3977
      %v4078 = vadd.f32 %v3745, %v3980
      %v4079 = vadd.f32 %v3746, %v3982
      %v4080 = vadd.f32 %v3747, %v3985
      %v4081 = vadd.f32 %v3748, %v3987
      %v4082 = vadd.f32 %v3749, %v3990
      %v4083 = vadd.f32 %v3750, %v3992
      %v4084 = vadd.f32 %v3751, %v3995
      %v4085 = vadd.f32 %v3752, %v3997
      %v4086 = vadd.f32 %v3753, %v4000
      %v4087 = vadd.f32 %v3754, %v4002
      %v4088 = vadd.f32 %v3755, %v4005
      %v4089 = vadd.f32 %v3756, %v4007
      %v4090 = vadd.f32 %v3757, %v4010
      %v4091 = vadd.f32 %v3758, %v4012
      %v4092 = vadd.f32 %v3759, %v4015
      %v4093 = vadd.f32 %v3760, %v4017
      %v4094 = vadd.f32 %v3761, %v4020
      %v4095 = vadd.f32 %v3762, %v4022
      %v4096 = vadd.f32 %v3763, %v4025
      %v4097 = vadd.f32 %v3764, %v4027
      %v4098 = vadd.f32 %v3765, %v4030
      %v4099 = vadd.f32 %v3766, %v4032
      %v4100 = vadd.f32 %v3767, %v4035
      %v4101 = vadd.f32 %v3768, %v4037
      %v4102 = vadd.f32 %v3769, %v4040
      %v4103 = vadd.f32 %v3770, %v4042
      %v4104 = vadd.f32 %v3771, %v4045
      %v4105 = vadd.f32 %v3772, %v4047
      %v4106 = vadd.f32 %v3773, %v4050
      %v4107 = vadd.f32 %v3774, %v4052
      %v4108 = vadd.f32 %v3775, %v4055
      %v4109 = vadd.f32 %v3776, %v4057
      %v4110 = vadd.f32 %v3777, %v4060
      %v4111 = vadd.f32 %v3778, %v4062
      %v4113 = vunpack.c.l.b16 %v1530
      %v4114 = vpack.c.b16 %v4113, %v4113
      %v4115 = vrot.slane %v1870, 1
      %v4116 = vsel %vm3446, %v3521, %v4115
      %v4117 = vor.u32 %v1867, %v4115
      %v4118 = vshll.u32 %v3251, 16
      %v4120 = vrot.slane %v4118, 1
      %v4121 = vsel %vm3446, %v4117, %v4120
      %v4122 = vshrl.u32 %v3251, 16
      %v4124 = vor.u32 %v4122, %v4120
      %v4125 = vshll.u32 %v3252, 16
      %v4127 = vrot.slane %v4125, 1
      %v4128 = vsel %vm3446, %v4124, %v4127
      %v4129 = vshrl.u32 %v3252, 16
      %v4131 = vor.u32 %v4129, %v4127
      %v4133 = vshll.u32 %v4114, 16
      %v4135 = vrot.slane %v4133, 1
      %v4136 = vsel %vm3446, %v4131, %v4135
      %v4138 = vsel %vm889, %v4116, 0
      %v4141 = vsel %vm889, %v4121, 0
      %v4144 = vsel %vm889, %v4128, 0
      %v4147 = vsel %vm889, %v4136, 0
      %v4150 = vsel %vm980, %v1535, 0
      %4152 = vmatpush.bf16.msra.mxu0 0
      %4153 = vmatpush.bf16.msra.mxu0 0
      %4154 = vmatpush.bf16.msra.mxu0 0
      %4155 = vmatpush.bf16.msra.mxu0 0
      %4156 = vmatpush.bf16.msra.mxu0 0
      %4157 = vmatpush.bf16.msra.mxu0 0
      %4158 = vmatpush.bf16.msra.mxu0 0
      %4159 = vmatpush.bf16.msra.mxu0 %v4150
      %4160 = vmatmul.bf16.gmra.mxu0 %v3537
      %v4161 = vpop.f32.mrf.mxu0
      %v4162 = vadd.f32 0.0, %v4161
      %v4163 = vpop.f32.mrf.mxu0
      %v4164 = vadd.f32 0.0, %v4163
      %4165 = vmatmul.bf16.gmra.mxu0 %v3540
      %v4166 = vpop.f32.mrf.mxu0
      %v4167 = vadd.f32 0.0, %v4166
      %v4168 = vpop.f32.mrf.mxu0
      %v4169 = vadd.f32 0.0, %v4168
      %4170 = vmatmul.bf16.gmra.mxu0 %v3543
      %v4171 = vpop.f32.mrf.mxu0
      %v4172 = vadd.f32 0.0, %v4171
      %v4173 = vpop.f32.mrf.mxu0
      %v4174 = vadd.f32 0.0, %v4173
      %4175 = vmatmul.bf16.gmra.mxu0 %v3546
      %v4176 = vpop.f32.mrf.mxu0
      %v4177 = vadd.f32 0.0, %v4176
      %v4178 = vpop.f32.mrf.mxu0
      %v4179 = vadd.f32 0.0, %v4178
      %4180 = vmatmul.bf16.gmra.mxu0 %v3549
      %v4181 = vpop.f32.mrf.mxu0
      %v4182 = vadd.f32 0.0, %v4181
      %v4183 = vpop.f32.mrf.mxu0
      %v4184 = vadd.f32 0.0, %v4183
      %4185 = vmatmul.bf16.gmra.mxu0 %v3552
      %v4186 = vpop.f32.mrf.mxu0
      %v4187 = vadd.f32 0.0, %v4186
      %v4188 = vpop.f32.mrf.mxu0
      %v4189 = vadd.f32 0.0, %v4188
      %4190 = vmatmul.bf16.gmra.mxu0 %v3555
      %v4191 = vpop.f32.mrf.mxu0
      %v4192 = vadd.f32 0.0, %v4191
      %v4193 = vpop.f32.mrf.mxu0
      %v4194 = vadd.f32 0.0, %v4193
      %4195 = vmatmul.bf16.gmra.mxu0 %v3558
      %v4196 = vpop.f32.mrf.mxu0
      %v4197 = vadd.f32 0.0, %v4196
      %v4198 = vpop.f32.mrf.mxu0
      %v4199 = vadd.f32 0.0, %v4198
      %4200 = vmatmul.bf16.gmra.mxu0 %v3561
      %v4201 = vpop.f32.mrf.mxu0
      %v4202 = vadd.f32 0.0, %v4201
      %v4203 = vpop.f32.mrf.mxu0
      %v4204 = vadd.f32 0.0, %v4203
      %4205 = vmatmul.bf16.gmra.mxu0 %v3564
      %v4206 = vpop.f32.mrf.mxu0
      %v4207 = vadd.f32 0.0, %v4206
      %v4208 = vpop.f32.mrf.mxu0
      %v4209 = vadd.f32 0.0, %v4208
      %4210 = vmatmul.bf16.gmra.mxu0 %v3567
      %v4211 = vpop.f32.mrf.mxu0
      %v4212 = vadd.f32 0.0, %v4211
      %v4213 = vpop.f32.mrf.mxu0
      %v4214 = vadd.f32 0.0, %v4213
      %4215 = vmatmul.bf16.gmra.mxu0 %v3570
      %v4216 = vpop.f32.mrf.mxu0
      %v4217 = vadd.f32 0.0, %v4216
      %v4218 = vpop.f32.mrf.mxu0
      %v4219 = vadd.f32 0.0, %v4218
      %4220 = vmatmul.bf16.gmra.mxu0 %v3573
      %v4221 = vpop.f32.mrf.mxu0
      %v4222 = vadd.f32 0.0, %v4221
      %v4223 = vpop.f32.mrf.mxu0
      %v4224 = vadd.f32 0.0, %v4223
      %4225 = vmatmul.bf16.gmra.mxu0 %v3576
      %v4226 = vpop.f32.mrf.mxu0
      %v4227 = vadd.f32 0.0, %v4226
      %v4228 = vpop.f32.mrf.mxu0
      %v4229 = vadd.f32 0.0, %v4228
      %4230 = vmatmul.bf16.gmra.mxu0 %v3579
      %v4231 = vpop.f32.mrf.mxu0
      %v4232 = vadd.f32 0.0, %v4231
      %v4233 = vpop.f32.mrf.mxu0
      %v4234 = vadd.f32 0.0, %v4233
      %4235 = vmatmul.bf16.gmra.mxu0 %v3582
      %v4236 = vpop.f32.mrf.mxu0
      %v4237 = vadd.f32 0.0, %v4236
      %v4238 = vpop.f32.mrf.mxu0
      %v4239 = vadd.f32 0.0, %v4238
      %4240 = vmatmul.bf16.gmra.mxu0 %v3585
      %v4241 = vpop.f32.mrf.mxu0
      %v4242 = vadd.f32 0.0, %v4241
      %v4243 = vpop.f32.mrf.mxu0
      %v4244 = vadd.f32 0.0, %v4243
      %4245 = vmatmul.bf16.gmra.mxu0 %v3588
      %v4246 = vpop.f32.mrf.mxu0
      %v4247 = vadd.f32 0.0, %v4246
      %v4248 = vpop.f32.mrf.mxu0
      %v4249 = vadd.f32 0.0, %v4248
      %4250 = vmatmul.bf16.gmra.mxu0 %v3591
      %v4251 = vpop.f32.mrf.mxu0
      %v4252 = vadd.f32 0.0, %v4251
      %v4253 = vpop.f32.mrf.mxu0
      %v4254 = vadd.f32 0.0, %v4253
      %4255 = vmatmul.bf16.gmra.mxu0 %v3594
      %v4256 = vpop.f32.mrf.mxu0
      %v4257 = vadd.f32 0.0, %v4256
      %v4258 = vpop.f32.mrf.mxu0
      %v4259 = vadd.f32 0.0, %v4258
      %4260 = vmatmul.bf16.gmra.mxu0 %v4138
      %v4261 = vpop.f32.mrf.mxu0
      %v4262 = vadd.f32 0.0, %v4261
      %v4263 = vpop.f32.mrf.mxu0
      %v4264 = vadd.f32 0.0, %v4263
      %4265 = vmatmul.bf16.gmra.mxu0 %v4141
      %v4266 = vpop.f32.mrf.mxu0
      %v4267 = vadd.f32 0.0, %v4266
      %v4268 = vpop.f32.mrf.mxu0
      %v4269 = vadd.f32 0.0, %v4268
      %4270 = vmatmul.bf16.gmra.mxu0 %v4144
      %v4271 = vpop.f32.mrf.mxu0
      %v4272 = vadd.f32 0.0, %v4271
      %v4273 = vpop.f32.mrf.mxu0
      %v4274 = vadd.f32 0.0, %v4273
      %4275 = vmatmul.bf16.gmra.mxu0 %v4147
      %v4276 = vpop.f32.mrf.mxu0
      %v4277 = vadd.f32 0.0, %v4276
      %v4278 = vpop.f32.mrf.mxu0
      %v4279 = vadd.f32 0.0, %v4278
      %4280 = vdwg.mxu0
      %v4281 = vadd.f32 %v4064, %v4162
      %v4282 = vadd.f32 %v4065, %v4164
      %v4283 = vadd.f32 %v4066, %v4167
      %v4284 = vadd.f32 %v4067, %v4169
      %v4285 = vadd.f32 %v4068, %v4172
      %v4286 = vadd.f32 %v4069, %v4174
      %v4287 = vadd.f32 %v4070, %v4177
      %v4288 = vadd.f32 %v4071, %v4179
      %v4289 = vadd.f32 %v4072, %v4182
      %v4290 = vadd.f32 %v4073, %v4184
      %v4291 = vadd.f32 %v4074, %v4187
      %v4292 = vadd.f32 %v4075, %v4189
      %v4293 = vadd.f32 %v4076, %v4192
      %v4294 = vadd.f32 %v4077, %v4194
      %v4295 = vadd.f32 %v4078, %v4197
      %v4296 = vadd.f32 %v4079, %v4199
      %v4297 = vadd.f32 %v4080, %v4202
      %v4298 = vadd.f32 %v4081, %v4204
      %v4299 = vadd.f32 %v4082, %v4207
      %v4300 = vadd.f32 %v4083, %v4209
      %v4301 = vadd.f32 %v4084, %v4212
      %v4302 = vadd.f32 %v4085, %v4214
      %v4303 = vadd.f32 %v4086, %v4217
      %v4304 = vadd.f32 %v4087, %v4219
      %v4305 = vadd.f32 %v4088, %v4222
      %v4306 = vadd.f32 %v4089, %v4224
      %v4307 = vadd.f32 %v4090, %v4227
      %v4308 = vadd.f32 %v4091, %v4229
      %v4309 = vadd.f32 %v4092, %v4232
      %v4310 = vadd.f32 %v4093, %v4234
      %v4311 = vadd.f32 %v4094, %v4237
      %v4312 = vadd.f32 %v4095, %v4239
      %v4313 = vadd.f32 %v4096, %v4242
      %v4314 = vadd.f32 %v4097, %v4244
      %v4315 = vadd.f32 %v4098, %v4247
      %v4316 = vadd.f32 %v4099, %v4249
      %v4317 = vadd.f32 %v4100, %v4252
      %v4318 = vadd.f32 %v4101, %v4254
      %v4319 = vadd.f32 %v4102, %v4257
      %v4320 = vadd.f32 %v4103, %v4259
      %v4321 = vadd.f32 %v4104, %v4262
      %v4322 = vadd.f32 %v4105, %v4264
      %v4323 = vadd.f32 %v4106, %v4267
      %v4324 = vadd.f32 %v4107, %v4269
      %v4325 = vadd.f32 %v4108, %v4272
      %v4326 = vadd.f32 %v4109, %v4274
      %v4327 = vadd.f32 %v4110, %v4277
      %v4328 = vadd.f32 %v4111, %v4279
      %v4329 = vld [vmem:[%s10] sm:$0x1]
      %v4331 = vperm.slane %v4329, 0
      %v4333 = vadd.f32 %v4281, %v4331
      %v4334 = vadd.f32 %v4282, %v4331
      %v4335 = vadd.f32 %v4283, %v4331
      %v4336 = vadd.f32 %v4284, %v4331
      %v4337 = vadd.f32 %v4285, %v4331
      %v4338 = vadd.f32 %v4286, %v4331
      %v4339 = vadd.f32 %v4287, %v4331
      %v4340 = vadd.f32 %v4288, %v4331
      %v4341 = vadd.f32 %v4289, %v4331
      %v4342 = vadd.f32 %v4290, %v4331
      %v4343 = vadd.f32 %v4291, %v4331
      %v4344 = vadd.f32 %v4292, %v4331
      %v4345 = vadd.f32 %v4293, %v4331
      %v4346 = vadd.f32 %v4294, %v4331
      %v4347 = vadd.f32 %v4295, %v4331
      %v4348 = vadd.f32 %v4296, %v4331
      %v4349 = vadd.f32 %v4297, %v4331
      %v4350 = vadd.f32 %v4298, %v4331
      %v4351 = vadd.f32 %v4299, %v4331
      %v4352 = vadd.f32 %v4300, %v4331
      %v4353 = vadd.f32 %v4301, %v4331
      %v4354 = vadd.f32 %v4302, %v4331
      %v4355 = vadd.f32 %v4303, %v4331
      %v4356 = vadd.f32 %v4304, %v4331
      %v4357 = vadd.f32 %v4305, %v4331
      %v4358 = vadd.f32 %v4306, %v4331
      %v4359 = vadd.f32 %v4307, %v4331
      %v4360 = vadd.f32 %v4308, %v4331
      %v4361 = vadd.f32 %v4309, %v4331
      %v4362 = vadd.f32 %v4310, %v4331
      %v4363 = vadd.f32 %v4311, %v4331
      %v4364 = vadd.f32 %v4312, %v4331
      %v4365 = vadd.f32 %v4313, %v4331
      %v4366 = vadd.f32 %v4314, %v4331
      %v4367 = vadd.f32 %v4315, %v4331
      %v4368 = vadd.f32 %v4316, %v4331
      %v4369 = vadd.f32 %v4317, %v4331
      %v4370 = vadd.f32 %v4318, %v4331
      %v4371 = vadd.f32 %v4319, %v4331
      %v4372 = vadd.f32 %v4320, %v4331
      %v4373 = vadd.f32 %v4321, %v4331
      %v4374 = vadd.f32 %v4322, %v4331
      %v4375 = vadd.f32 %v4323, %v4331
      %v4376 = vadd.f32 %v4324, %v4331
      %v4377 = vadd.f32 %v4325, %v4331
      %v4378 = vadd.f32 %v4326, %v4331
      %v4379 = vadd.f32 %v4327, %v4331
      %v4380 = vadd.f32 %v4328, %v4331
      %4382 = vset.pattern.permute.xlu0 0
      %4383 = vperm.xlu0 %4382, %v626
      %v4384 = vpop.permute.xlu0 %4383
      %4387 = vset.pattern.permute.xlu0 0
      %4388 = vperm.xlu0 %4387, %v627
      %v4389 = vpop.permute.xlu0 %4388
      %4392 = vset.pattern.permute.xlu0 0
      %4393 = vperm.xlu0 %4392, %v628
      %v4394 = vpop.permute.xlu0 %4393
      %4397 = vset.pattern.permute.xlu0 0
      %4398 = vperm.xlu0 %4397, %v629
      %v4399 = vpop.permute.xlu0 %4398
      %4402 = vset.pattern.permute.xlu0 0
      %4403 = vperm.xlu0 %4402, %v630
      %v4404 = vpop.permute.xlu0 %4403
      %4407 = vset.pattern.permute.xlu0 0
      %4408 = vperm.xlu0 %4407, %v631
      %v4409 = vpop.permute.xlu0 %4408
      %4412 = vset.pattern.permute.xlu0 0
      %4413 = vperm.xlu0 %4412, %v632
      %v4414 = vpop.permute.xlu0 %4413
      %4417 = vset.pattern.permute.xlu0 0
      %4418 = vperm.xlu0 %4417, %v633
      %v4419 = vpop.permute.xlu0 %4418
      %4422 = vset.pattern.permute.xlu0 0
      %4423 = vperm.xlu0 %4422, %v634
      %v4424 = vpop.permute.xlu0 %4423
      %4427 = vset.pattern.permute.xlu0 0
      %4428 = vperm.xlu0 %4427, %v635
      %v4429 = vpop.permute.xlu0 %4428
      %4432 = vset.pattern.permute.xlu0 0
      %4433 = vperm.xlu0 %4432, %v636
      %v4434 = vpop.permute.xlu0 %4433
      %4437 = vset.pattern.permute.xlu0 0
      %4438 = vperm.xlu0 %4437, %v637
      %v4439 = vpop.permute.xlu0 %4438
      %4442 = vset.pattern.permute.xlu0 0
      %4443 = vperm.xlu0 %4442, %v638
      %v4444 = vpop.permute.xlu0 %4443
      %4447 = vset.pattern.permute.xlu0 0
      %4448 = vperm.xlu0 %4447, %v639
      %v4449 = vpop.permute.xlu0 %4448
      %4452 = vset.pattern.permute.xlu0 0
      %4453 = vperm.xlu0 %4452, %v640
      %v4454 = vpop.permute.xlu0 %4453
      %4457 = vset.pattern.permute.xlu0 0
      %4458 = vperm.xlu0 %4457, %v641
      %v4459 = vpop.permute.xlu0 %4458
      %4462 = vset.pattern.permute.xlu0 0
      %4463 = vperm.xlu0 %4462, %v642
      %v4464 = vpop.permute.xlu0 %4463
      %4467 = vset.pattern.permute.xlu0 0
      %4468 = vperm.xlu0 %4467, %v643
      %v4469 = vpop.permute.xlu0 %4468
      %4472 = vset.pattern.permute.xlu0 0
      %4473 = vperm.xlu0 %4472, %v644
      %v4474 = vpop.permute.xlu0 %4473
      %4477 = vset.pattern.permute.xlu0 0
      %4478 = vperm.xlu0 %4477, %v645
      %v4479 = vpop.permute.xlu0 %4478
      %4482 = vset.pattern.permute.xlu0 0
      %4483 = vperm.xlu0 %4482, %v646
      %v4484 = vpop.permute.xlu0 %4483
      %4487 = vset.pattern.permute.xlu0 0
      %4488 = vperm.xlu0 %4487, %v647
      %v4489 = vpop.permute.xlu0 %4488
      %4492 = vset.pattern.permute.xlu0 0
      %4493 = vperm.xlu0 %4492, %v648
      %v4494 = vpop.permute.xlu0 %4493
      %4497 = vset.pattern.permute.xlu0 0
      %4498 = vperm.xlu0 %4497, %v649
      %v4499 = vpop.permute.xlu0 %4498
      %4502 = vset.pattern.permute.xlu0 0
      %4503 = vperm.xlu0 %4502, %v650
      %v4504 = vpop.permute.xlu0 %4503
      %4507 = vset.pattern.permute.xlu0 0
      %4508 = vperm.xlu0 %4507, %v651
      %v4509 = vpop.permute.xlu0 %4508
      %4512 = vset.pattern.permute.xlu0 0
      %4513 = vperm.xlu0 %4512, %v652
      %v4514 = vpop.permute.xlu0 %4513
      %4517 = vset.pattern.permute.xlu0 0
      %4518 = vperm.xlu0 %4517, %v653
      %v4519 = vpop.permute.xlu0 %4518
      %4522 = vset.pattern.permute.xlu0 0
      %4523 = vperm.xlu0 %4522, %v654
      %v4524 = vpop.permute.xlu0 %4523
      %4527 = vset.pattern.permute.xlu0 0
      %4528 = vperm.xlu0 %4527, %v655
      %v4529 = vpop.permute.xlu0 %4528
      %4532 = vset.pattern.permute.xlu0 0
      %4533 = vperm.xlu0 %4532, %v656
      %v4534 = vpop.permute.xlu0 %4533
      %4537 = vset.pattern.permute.xlu0 0
      %4538 = vperm.xlu0 %4537, %v657
      %v4539 = vpop.permute.xlu0 %4538
      %4542 = vset.pattern.permute.xlu0 0
      %4543 = vperm.xlu0 %4542, %v658
      %v4544 = vpop.permute.xlu0 %4543
      %4547 = vset.pattern.permute.xlu0 0
      %4548 = vperm.xlu0 %4547, %v659
      %v4549 = vpop.permute.xlu0 %4548
      %4552 = vset.pattern.permute.xlu0 0
      %4553 = vperm.xlu0 %4552, %v660
      %v4554 = vpop.permute.xlu0 %4553
      %4557 = vset.pattern.permute.xlu0 0
      %4558 = vperm.xlu0 %4557, %v661
      %v4559 = vpop.permute.xlu0 %4558
      %4562 = vset.pattern.permute.xlu0 0
      %4563 = vperm.xlu0 %4562, %v662
      %v4564 = vpop.permute.xlu0 %4563
      %4567 = vset.pattern.permute.xlu0 0
      %4568 = vperm.xlu0 %4567, %v663
      %v4569 = vpop.permute.xlu0 %4568
      %4572 = vset.pattern.permute.xlu0 0
      %4573 = vperm.xlu0 %4572, %v664
      %v4574 = vpop.permute.xlu0 %4573
      %4577 = vset.pattern.permute.xlu0 0
      %4578 = vperm.xlu0 %4577, %v665
      %v4579 = vpop.permute.xlu0 %4578
      %4582 = vset.pattern.permute.xlu0 0
      %4583 = vperm.xlu0 %4582, %v666
      %v4584 = vpop.permute.xlu0 %4583
      %4587 = vset.pattern.permute.xlu0 0
      %4588 = vperm.xlu0 %4587, %v667
      %v4589 = vpop.permute.xlu0 %4588
      %4592 = vset.pattern.permute.xlu0 0
      %4593 = vperm.xlu0 %4592, %v668
      %v4594 = vpop.permute.xlu0 %4593
      %4597 = vset.pattern.permute.xlu0 0
      %4598 = vperm.xlu0 %4597, %v669
      %v4599 = vpop.permute.xlu0 %4598
      %4602 = vset.pattern.permute.xlu0 0
      %4603 = vperm.xlu0 %4602, %v670
      %v4604 = vpop.permute.xlu0 %4603
      %4607 = vset.pattern.permute.xlu0 0
      %4608 = vperm.xlu0 %4607, %v671
      %v4609 = vpop.permute.xlu0 %4608
      %4612 = vset.pattern.permute.xlu0 0
      %4613 = vperm.xlu0 %4612, %v672
      %v4614 = vpop.permute.xlu0 %4613
      %4617 = vset.pattern.permute.xlu0 0
      %4618 = vperm.xlu0 %4617, %v673
      %v4619 = vpop.permute.xlu0 %4618
      %v4621 = vmul.f32 %v4333, %v4384
      %v4622 = vmul.f32 %v4334, %v4389
      %v4623 = vmul.f32 %v4335, %v4394
      %v4624 = vmul.f32 %v4336, %v4399
      %v4625 = vmul.f32 %v4337, %v4404
      %v4626 = vmul.f32 %v4338, %v4409
      %v4627 = vmul.f32 %v4339, %v4414
      %v4628 = vmul.f32 %v4340, %v4419
      %v4629 = vmul.f32 %v4341, %v4424
      %v4630 = vmul.f32 %v4342, %v4429
      %v4631 = vmul.f32 %v4343, %v4434
      %v4632 = vmul.f32 %v4344, %v4439
      %v4633 = vmul.f32 %v4345, %v4444
      %v4634 = vmul.f32 %v4346, %v4449
      %v4635 = vmul.f32 %v4347, %v4454
      %v4636 = vmul.f32 %v4348, %v4459
      %v4637 = vmul.f32 %v4349, %v4464
      %v4638 = vmul.f32 %v4350, %v4469
      %v4639 = vmul.f32 %v4351, %v4474
      %v4640 = vmul.f32 %v4352, %v4479
      %v4641 = vmul.f32 %v4353, %v4484
      %v4642 = vmul.f32 %v4354, %v4489
      %v4643 = vmul.f32 %v4355, %v4494
      %v4644 = vmul.f32 %v4356, %v4499
      %v4645 = vmul.f32 %v4357, %v4504
      %v4646 = vmul.f32 %v4358, %v4509
      %v4647 = vmul.f32 %v4359, %v4514
      %v4648 = vmul.f32 %v4360, %v4519
      %v4649 = vmul.f32 %v4361, %v4524
      %v4650 = vmul.f32 %v4362, %v4529
      %v4651 = vmul.f32 %v4363, %v4534
      %v4652 = vmul.f32 %v4364, %v4539
      %v4653 = vmul.f32 %v4365, %v4544
      %v4654 = vmul.f32 %v4366, %v4549
      %v4655 = vmul.f32 %v4367, %v4554
      %v4656 = vmul.f32 %v4368, %v4559
      %v4657 = vmul.f32 %v4369, %v4564
      %v4658 = vmul.f32 %v4370, %v4569
      %v4659 = vmul.f32 %v4371, %v4574
      %v4660 = vmul.f32 %v4372, %v4579
      %v4661 = vmul.f32 %v4373, %v4584
      %v4662 = vmul.f32 %v4374, %v4589
      %v4663 = vmul.f32 %v4375, %v4594
      %v4664 = vmul.f32 %v4376, %v4599
      %v4665 = vmul.f32 %v4377, %v4604
      %v4666 = vmul.f32 %v4378, %v4609
      %v4667 = vmul.f32 %v4379, %v4614
      %v4668 = vmul.f32 %v4380, %v4619
      %v4669 = vld [vmem:[%s563] sm:$0xf]
      %v4670 = vld [vmem:[%s563 + $0x4] sm:$0xf]
      %v4671 = vld [vmem:[%s563 + $0x8] sm:$0xf]
      %v4672 = vld [vmem:[%s563 + $0xc] sm:$0xf]
      %v4673 = vld [vmem:[%s563 + $0x10] sm:$0xf]
      %v4674 = vld [vmem:[%s563 + $0x14] sm:$0xf]
      %v4675 = vld [vmem:[%s563 + $0x18] sm:$0xf]
      %v4676 = vld [vmem:[%s563 + $0x1c] sm:$0xf]
      %v4677 = vld [vmem:[%s563 + $0x20] sm:$0xf]
      %v4678 = vld [vmem:[%s563 + $0x24] sm:$0xf]
      %v4679 = vld [vmem:[%s563 + $0x28] sm:$0xf]
      %v4680 = vld [vmem:[%s563 + $0x2c] sm:$0xf]
      %v4681 = vld [vmem:[%s563 + $0x30] sm:$0xf]
      %v4682 = vld [vmem:[%s563 + $0x34] sm:$0xf]
      %v4683 = vld [vmem:[%s563 + $0x38] sm:$0xf]
      %v4684 = vld [vmem:[%s563 + $0x3c] sm:$0xf]
      %v4685 = vld [vmem:[%s563 + $0x40] sm:$0xf]
      %v4686 = vld [vmem:[%s563 + $0x44] sm:$0xf]
      %v4687 = vld [vmem:[%s563 + $0x48] sm:$0xf]
      %v4688 = vld [vmem:[%s563 + $0x4c] sm:$0xf]
      %v4689 = vld [vmem:[%s563 + $0x50] sm:$0xf]
      %v4690 = vld [vmem:[%s563 + $0x54] sm:$0xf]
      %v4691 = vld [vmem:[%s563 + $0x58] sm:$0xf]
      %v4692 = vld [vmem:[%s563 + $0x5c] sm:$0xf]
      %v4693 = vld [vmem:[%s563 + $0x60] sm:$0xf]
      %v4694 = vld [vmem:[%s563 + $0x64] sm:$0xf]
      %v4695 = vld [vmem:[%s563 + $0x68] sm:$0xf]
      %v4696 = vld [vmem:[%s563 + $0x6c] sm:$0xf]
      %v4697 = vld [vmem:[%s563 + $0x70] sm:$0xf]
      %v4698 = vld [vmem:[%s563 + $0x74] sm:$0xf]
      %v4699 = vld [vmem:[%s563 + $0x78] sm:$0xf]
      %v4700 = vld [vmem:[%s563 + $0x7c] sm:$0xf]
      %v4701 = vld [vmem:[%s563 + $0x80] sm:$0xf]
      %v4702 = vld [vmem:[%s563 + $0x84] sm:$0xf]
      %v4703 = vld [vmem:[%s563 + $0x88] sm:$0xf]
      %v4704 = vld [vmem:[%s563 + $0x8c] sm:$0xf]
      %v4705 = vld [vmem:[%s563 + $0x90] sm:$0xf]
      %v4706 = vld [vmem:[%s563 + $0x94] sm:$0xf]
      %v4707 = vld [vmem:[%s563 + $0x98] sm:$0xf]
      %v4708 = vld [vmem:[%s563 + $0x9c] sm:$0xf]
      %v4709 = vld [vmem:[%s563 + $0xa0] sm:$0xf]
      %v4710 = vld [vmem:[%s563 + $0xa4] sm:$0xf]
      %v4711 = vld [vmem:[%s563 + $0xa8] sm:$0xf]
      %v4712 = vld [vmem:[%s563 + $0xac] sm:$0xf]
      %v4713 = vld [vmem:[%s563 + $0xb0] sm:$0xf]
      %v4714 = vld [vmem:[%s563 + $0xb4] sm:$0xf]
      %v4715 = vld [vmem:[%s563 + $0xb8] sm:$0xf]
      %v4716 = vld [vmem:[%s563 + $0xbc] sm:$0xf]
      %v4717 = vld [vmem:[%s563 + $0xc0] sm:$0xf]
      %v4718 = vld [vmem:[%s563 + $0xc4] sm:$0xf]
      %v4719 = vld [vmem:[%s563 + $0xc8] sm:$0xf]
      %v4720 = vld [vmem:[%s563 + $0xcc] sm:$0xf]
      %v4721 = vld [vmem:[%s563 + $0xd0] sm:$0xf]
      %v4722 = vld [vmem:[%s563 + $0xd4] sm:$0xf]
      %v4723 = vld [vmem:[%s563 + $0xd8] sm:$0xf]
      %v4724 = vld [vmem:[%s563 + $0xdc] sm:$0xf]
      %v4725 = vld [vmem:[%s563 + $0xe0] sm:$0xf]
      %v4726 = vld [vmem:[%s563 + $0xe4] sm:$0xf]
      %v4727 = vld [vmem:[%s563 + $0xe8] sm:$0xf]
      %v4728 = vld [vmem:[%s563 + $0xec] sm:$0xf]
      %v4729 = vld [vmem:[%s11] sm:$0x3]
      %v4730 = vld [vmem:[%s12] sm:$0x1]
      %v4732 = vperm.slane %v4730, 0
      %v4794 = vunpack.c.l.b16 %v4669
      %v4795 = vunpack.c.l.b16 %v4670
      %v4796 = vunpack.c.l.b16 %v4671
      %v4797 = vunpack.c.l.b16 %v4672
      %v4798 = vunpack.c.l.b16 %v4673
      %v4799 = vunpack.c.l.b16 %v4674
      %v4800 = vunpack.c.l.b16 %v4675
      %v4801 = vunpack.c.l.b16 %v4676
      %v4802 = vunpack.c.l.b16 %v4677
      %v4803 = vunpack.c.l.b16 %v4678
      %v4804 = vunpack.c.l.b16 %v4679
      %v4805 = vunpack.c.l.b16 %v4680
      %v4806 = vunpack.c.l.b16 %v4681
      %v4807 = vunpack.c.l.b16 %v4682
      %v4808 = vunpack.c.l.b16 %v4683
      %v4809 = vunpack.c.l.b16 %v4684
      %v4810 = vunpack.c.l.b16 %v4685
      %v4811 = vunpack.c.l.b16 %v4686
      %v4812 = vunpack.c.l.b16 %v4687
      %v4813 = vunpack.c.l.b16 %v4688
      %v4814 = vunpack.c.l.b16 %v4689
      %v4815 = vunpack.c.l.b16 %v4690
      %v4816 = vunpack.c.l.b16 %v4691
      %v4817 = vunpack.c.l.b16 %v4692
      %v4818 = vunpack.c.l.b16 %v4693
      %v4819 = vunpack.c.l.b16 %v4694
      %v4820 = vunpack.c.l.b16 %v4695
      %v4821 = vunpack.c.l.b16 %v4696
      %v4822 = vunpack.c.l.b16 %v4697
      %v4823 = vunpack.c.l.b16 %v4698
      %v4824 = vunpack.c.l.b16 %v4699
      %v4825 = vunpack.c.l.b16 %v4700
      %v4826 = vunpack.c.l.b16 %v4701
      %v4827 = vunpack.c.l.b16 %v4702
      %v4828 = vunpack.c.l.b16 %v4703
      %v4829 = vunpack.c.l.b16 %v4704
      %v4830 = vunpack.c.l.b16 %v4705
      %v4831 = vunpack.c.l.b16 %v4706
      %v4832 = vunpack.c.l.b16 %v4707
      %v4833 = vunpack.c.l.b16 %v4708
      %v4834 = vunpack.c.l.b16 %v4709
      %v4835 = vunpack.c.l.b16 %v4710
      %v4836 = vunpack.c.l.b16 %v4711
      %v4837 = vunpack.c.l.b16 %v4712
      %v4838 = vunpack.c.l.b16 %v4713
      %v4839 = vunpack.c.l.b16 %v4714
      %v4840 = vunpack.c.l.b16 %v4715
      %v4841 = vunpack.c.l.b16 %v4716
      %v4842 = vunpack.c.l.b16 %v4717
      %v4843 = vunpack.c.l.b16 %v4718
      %v4844 = vunpack.c.l.b16 %v4719
      %v4845 = vunpack.c.l.b16 %v4720
      %v4846 = vunpack.c.l.b16 %v4721
      %v4847 = vunpack.c.l.b16 %v4722
      %v4848 = vunpack.c.l.b16 %v4723
      %v4849 = vunpack.c.l.b16 %v4724
      %v4850 = vunpack.c.l.b16 %v4725
      %v4851 = vunpack.c.l.b16 %v4726
      %v4852 = vunpack.c.l.b16 %v4727
      %v4853 = vunpack.c.l.b16 %v4728
      %v4854 = vpack.c.b16 %v4795, %v4794
      %v4855 = vpack.c.b16 %v4797, %v4796
      %v4856 = vpack.c.b16 %v4799, %v4798
      %v4857 = vpack.c.b16 %v4801, %v4800
      %v4858 = vpack.c.b16 %v4803, %v4802
      %v4859 = vpack.c.b16 %v4805, %v4804
      %v4860 = vpack.c.b16 %v4807, %v4806
      %v4861 = vpack.c.b16 %v4809, %v4808
      %v4862 = vpack.c.b16 %v4811, %v4810
      %v4863 = vpack.c.b16 %v4813, %v4812
      %v4864 = vpack.c.b16 %v4815, %v4814
      %v4865 = vpack.c.b16 %v4817, %v4816
      %v4866 = vpack.c.b16 %v4819, %v4818
      %v4867 = vpack.c.b16 %v4821, %v4820
      %v4868 = vpack.c.b16 %v4823, %v4822
      %v4869 = vpack.c.b16 %v4825, %v4824
      %v4870 = vpack.c.b16 %v4827, %v4826
      %v4871 = vpack.c.b16 %v4829, %v4828
      %v4872 = vpack.c.b16 %v4831, %v4830
      %v4873 = vpack.c.b16 %v4833, %v4832
      %v4874 = vpack.c.b16 %v4835, %v4834
      %v4875 = vpack.c.b16 %v4837, %v4836
      %v4876 = vpack.c.b16 %v4839, %v4838
      %v4877 = vpack.c.b16 %v4841, %v4840
      %v4878 = vpack.c.b16 %v4843, %v4842
      %v4879 = vpack.c.b16 %v4845, %v4844
      %v4880 = vpack.c.b16 %v4847, %v4846
      %v4881 = vpack.c.b16 %v4849, %v4848
      %v4882 = vpack.c.b16 %v4851, %v4850
      %v4883 = vpack.c.b16 %v4853, %v4852
      %v4885 = vsel %vm889, %v4854, 0
      %v4888 = vsel %vm889, %v4855, 0
      %v4891 = vsel %vm889, %v4856, 0
      %v4894 = vsel %vm889, %v4857, 0
      %v4897 = vsel %vm889, %v4858, 0
      %v4900 = vsel %vm889, %v4859, 0
      %v4903 = vsel %vm889, %v4860, 0
      %v4906 = vsel %vm889, %v4861, 0
      %v4909 = vsel %vm889, %v4862, 0
      %v4912 = vsel %vm889, %v4863, 0
      %v4915 = vsel %vm889, %v4864, 0
      %v4918 = vsel %vm889, %v4865, 0
      %v4921 = vsel %vm889, %v4866, 0
      %v4924 = vsel %vm889, %v4867, 0
      %v4927 = vsel %vm889, %v4868, 0
      %v4930 = vsel %vm889, %v4869, 0
      %v4933 = vsel %vm889, %v4870, 0
      %v4936 = vsel %vm889, %v4871, 0
      %v4939 = vsel %vm889, %v4872, 0
      %v4942 = vsel %vm889, %v4873, 0
      %v4945 = vsel %vm889, %v4874, 0
      %v4948 = vsel %vm889, %v4875, 0
      %v4951 = vsel %vm889, %v4876, 0
      %v4954 = vsel %vm889, %v4877, 0
      %v4957 = vsel %vm889, %v4878, 0
      %v4960 = vsel %vm889, %v4879, 0
      %v4963 = vsel %vm889, %v4880, 0
      %v4966 = vsel %vm889, %v4881, 0
      %v4969 = vsel %vm889, %v4882, 0
      %v4972 = vsel %vm889, %v4883, 0
      %v4975 = vsel %vm980, %v4729, 0
      %4977 = vmatpush.bf16.msra.mxu0 0
      %4978 = vmatpush.bf16.msra.mxu0 0
      %4979 = vmatpush.bf16.msra.mxu0 0
      %4980 = vmatpush.bf16.msra.mxu0 0
      %4981 = vmatpush.bf16.msra.mxu0 0
      %4982 = vmatpush.bf16.msra.mxu0 0
      %4983 = vmatpush.bf16.msra.mxu0 0
      %4984 = vmatpush.bf16.msra.mxu0 %v4975
      %4985 = vmatmul.bf16.gmra.mxu0 %v4885
      %v4986 = vpop.f32.mrf.mxu0
      %v4987 = vpop.f32.mrf.mxu0
      %4988 = vmatmul.bf16.gmra.mxu0 %v4888
      %v4989 = vpop.f32.mrf.mxu0
      %v4990 = vadd.f32 %v4732, %v4989
      %v4991 = vpop.f32.mrf.mxu0
      %v4992 = vadd.f32 %v4732, %v4991
      %4993 = vmatmul.bf16.gmra.mxu0 %v4891
      %v4994 = vpop.f32.mrf.mxu0
      %v4995 = vadd.f32 %v4732, %v4994
      %v4996 = vpop.f32.mrf.mxu0
      %v4997 = vadd.f32 %v4732, %v4996
      %4998 = vmatmul.bf16.gmra.mxu0 %v4894
      %v4999 = vpop.f32.mrf.mxu0
      %v5000 = vadd.f32 %v4732, %v4999
      %v5001 = vpop.f32.mrf.mxu0
      %v5002 = vadd.f32 %v4732, %v5001
      %5003 = vmatmul.bf16.gmra.mxu0 %v4897
      %v5004 = vpop.f32.mrf.mxu0
      %v5005 = vadd.f32 %v4732, %v5004
      %v5006 = vpop.f32.mrf.mxu0
      %v5007 = vadd.f32 %v4732, %v5006
      %5008 = vmatmul.bf16.gmra.mxu0 %v4900
      %v5009 = vpop.f32.mrf.mxu0
      %v5010 = vadd.f32 %v4732, %v5009
      %v5011 = vpop.f32.mrf.mxu0
      %v5012 = vadd.f32 %v4732, %v5011
      %5013 = vmatmul.bf16.gmra.mxu0 %v4903
      %v5014 = vpop.f32.mrf.mxu0
      %v5015 = vadd.f32 %v4732, %v5014
      %v5016 = vpop.f32.mrf.mxu0
      %v5017 = vadd.f32 %v4732, %v5016
      %5018 = vmatmul.bf16.gmra.mxu0 %v4906
      %v5019 = vpop.f32.mrf.mxu0
      %v5020 = vadd.f32 %v4732, %v5019
      %v5021 = vpop.f32.mrf.mxu0
      %v5022 = vadd.f32 %v4732, %v5021
      %5023 = vmatmul.bf16.gmra.mxu0 %v4909
      %v5024 = vpop.f32.mrf.mxu0
      %v5025 = vadd.f32 %v4732, %v5024
      %v5026 = vpop.f32.mrf.mxu0
      %v5027 = vadd.f32 %v4732, %v5026
      %5028 = vmatmul.bf16.gmra.mxu0 %v4912
      %v5029 = vpop.f32.mrf.mxu0
      %v5030 = vadd.f32 %v4732, %v5029
      %v5031 = vpop.f32.mrf.mxu0
      %v5032 = vadd.f32 %v4732, %v5031
      %5033 = vmatmul.bf16.gmra.mxu0 %v4915
      %v5034 = vpop.f32.mrf.mxu0
      %v5035 = vadd.f32 %v4732, %v5034
      %v5036 = vpop.f32.mrf.mxu0
      %v5037 = vadd.f32 %v4732, %v5036
      %5038 = vmatmul.bf16.gmra.mxu0 %v4918
      %v5039 = vpop.f32.mrf.mxu0
      %v5040 = vadd.f32 %v4732, %v5039
      %v5041 = vpop.f32.mrf.mxu0
      %v5042 = vadd.f32 %v4732, %v5041
      %5043 = vmatmul.bf16.gmra.mxu0 %v4921
      %v5044 = vpop.f32.mrf.mxu0
      %v5045 = vadd.f32 %v4732, %v5044
      %v5046 = vpop.f32.mrf.mxu0
      %v5047 = vadd.f32 %v4732, %v5046
      %5048 = vmatmul.bf16.gmra.mxu0 %v4924
      %v5049 = vpop.f32.mrf.mxu0
      %v5050 = vadd.f32 %v4732, %v5049
      %v5051 = vpop.f32.mrf.mxu0
      %v5052 = vadd.f32 %v4732, %v5051
      %5053 = vmatmul.bf16.gmra.mxu0 %v4927
      %v5054 = vpop.f32.mrf.mxu0
      %v5055 = vadd.f32 %v4732, %v5054
      %v5056 = vpop.f32.mrf.mxu0
      %v5057 = vadd.f32 %v4732, %v5056
      %5058 = vmatmul.bf16.gmra.mxu0 %v4930
      %v5059 = vpop.f32.mrf.mxu0
      %v5060 = vadd.f32 %v4732, %v5059
      %v5061 = vpop.f32.mrf.mxu0
      %v5062 = vadd.f32 %v4732, %v5061
      %5063 = vmatmul.bf16.gmra.mxu0 %v4933
      %v5064 = vpop.f32.mrf.mxu0
      %v5065 = vadd.f32 %v4732, %v5064
      %v5066 = vpop.f32.mrf.mxu0
      %v5067 = vadd.f32 %v4732, %v5066
      %5068 = vmatmul.bf16.gmra.mxu0 %v4936
      %v5069 = vpop.f32.mrf.mxu0
      %v5070 = vadd.f32 %v4732, %v5069
      %v5071 = vpop.f32.mrf.mxu0
      %v5072 = vadd.f32 %v4732, %v5071
      %5073 = vmatmul.bf16.gmra.mxu0 %v4939
      %v5074 = vpop.f32.mrf.mxu0
      %v5075 = vadd.f32 %v4732, %v5074
      %v5076 = vpop.f32.mrf.mxu0
      %v5077 = vadd.f32 %v4732, %v5076
      %5078 = vmatmul.bf16.gmra.mxu0 %v4942
      %v5079 = vpop.f32.mrf.mxu0
      %v5080 = vadd.f32 %v4732, %v5079
      %v5081 = vpop.f32.mrf.mxu0
      %v5082 = vadd.f32 %v4732, %v5081
      %5083 = vmatmul.bf16.gmra.mxu0 %v4945
      %v5084 = vpop.f32.mrf.mxu0
      %v5085 = vadd.f32 %v4732, %v5084
      %v5086 = vpop.f32.mrf.mxu0
      %v5087 = vadd.f32 %v4732, %v5086
      %5088 = vmatmul.bf16.gmra.mxu0 %v4948
      %v5089 = vpop.f32.mrf.mxu0
      %v5090 = vadd.f32 %v4732, %v5089
      %v5091 = vpop.f32.mrf.mxu0
      %v5092 = vadd.f32 %v4732, %v5091
      %5093 = vmatmul.bf16.gmra.mxu0 %v4951
      %v5094 = vpop.f32.mrf.mxu0
      %v5095 = vadd.f32 %v4732, %v5094
      %v5096 = vpop.f32.mrf.mxu0
      %v5097 = vadd.f32 %v4732, %v5096
      %5098 = vmatmul.bf16.gmra.mxu0 %v4954
      %v5099 = vpop.f32.mrf.mxu0
      %v5100 = vadd.f32 %v4732, %v5099
      %v5101 = vpop.f32.mrf.mxu0
      %v5102 = vadd.f32 %v4732, %v5101
      %5103 = vmatmul.bf16.gmra.mxu0 %v4957
      %v5104 = vpop.f32.mrf.mxu0
      %v5105 = vadd.f32 %v4732, %v5104
      %v5106 = vpop.f32.mrf.mxu0
      %v5107 = vadd.f32 %v4732, %v5106
      %5108 = vmatmul.bf16.gmra.mxu0 %v4960
      %v5109 = vpop.f32.mrf.mxu0
      %v5110 = vadd.f32 %v4732, %v5109
      %v5111 = vpop.f32.mrf.mxu0
      %v5112 = vadd.f32 %v4732, %v5111
      %5113 = vmatmul.bf16.gmra.mxu0 %v4963
      %v5114 = vpop.f32.mrf.mxu0
      %v5115 = vadd.f32 %v4732, %v5114
      %v5116 = vpop.f32.mrf.mxu0
      %v5117 = vadd.f32 %v4732, %v5116
      %5118 = vmatmul.bf16.gmra.mxu0 %v4966
      %v5119 = vpop.f32.mrf.mxu0
      %v5120 = vadd.f32 %v4732, %v5119
      %v5121 = vpop.f32.mrf.mxu0
      %v5122 = vadd.f32 %v4732, %v5121
      %5123 = vmatmul.bf16.gmra.mxu0 %v4969
      %v5124 = vpop.f32.mrf.mxu0
      %v5125 = vadd.f32 %v4732, %v5124
      %v5126 = vpop.f32.mrf.mxu0
      %v5127 = vadd.f32 %v4732, %v5126
      %5128 = vmatmul.bf16.gmra.mxu0 %v4972
      %v5129 = vpop.f32.mrf.mxu0
      %v5130 = vpop.f32.mrf.mxu0
      %5131 = vdwg.mxu0
      %v5132 = vmul.f32 %v4990, %v1142
      %v5133 = vmul.f32 %v4992, %v1147
      %v5134 = vmul.f32 %v4995, %v1152
      %v5135 = vmul.f32 %v4997, %v1157
      %v5136 = vmul.f32 %v5000, %v1162
      %v5137 = vmul.f32 %v5002, %v1167
      %v5138 = vmul.f32 %v5005, %v1172
      %v5139 = vmul.f32 %v5007, %v1177
      %v5140 = vmul.f32 %v5010, %v1182
      %v5141 = vmul.f32 %v5012, %v1187
      %v5142 = vmul.f32 %v5015, %v1192
      %v5143 = vmul.f32 %v5017, %v1197
      %v5144 = vmul.f32 %v5020, %v1202
      %v5145 = vmul.f32 %v5022, %v1207
      %v5146 = vmul.f32 %v5025, %v1212
      %v5147 = vmul.f32 %v5027, %v1217
      %v5148 = vmul.f32 %v5030, %v1222
      %v5149 = vmul.f32 %v5032, %v1227
      %v5150 = vmul.f32 %v5035, %v1232
      %v5151 = vmul.f32 %v5037, %v1237
      %v5152 = vmul.f32 %v5040, %v1242
      %v5153 = vmul.f32 %v5042, %v1247
      %v5154 = vmul.f32 %v5045, %v1252
      %v5155 = vmul.f32 %v5047, %v1257
      %v5156 = vmul.f32 %v5050, %v1262
      %v5157 = vmul.f32 %v5052, %v1267
      %v5158 = vmul.f32 %v5055, %v1272
      %v5159 = vmul.f32 %v5057, %v1277
      %v5160 = vmul.f32 %v5060, %v1282
      %v5161 = vmul.f32 %v5062, %v1287
      %v5162 = vmul.f32 %v5065, %v1292
      %v5163 = vmul.f32 %v5067, %v1297
      %v5164 = vmul.f32 %v5070, %v1302
      %v5165 = vmul.f32 %v5072, %v1307
      %v5166 = vmul.f32 %v5075, %v1312
      %v5167 = vmul.f32 %v5077, %v1317
      %v5168 = vmul.f32 %v5080, %v1322
      %v5169 = vmul.f32 %v5082, %v1327
      %v5170 = vmul.f32 %v5085, %v1332
      %v5171 = vmul.f32 %v5087, %v1337
      %v5172 = vmul.f32 %v5090, %v1342
      %v5173 = vmul.f32 %v5092, %v1347
      %v5174 = vmul.f32 %v5095, %v1352
      %v5175 = vmul.f32 %v5097, %v1357
      %v5176 = vmul.f32 %v5100, %v1362
      %v5177 = vmul.f32 %v5102, %v1367
      %v5178 = vmul.f32 %v5105, %v1372
      %v5179 = vmul.f32 %v5107, %v1377
      %v5180 = vmul.f32 %v5110, %v1382
      %v5181 = vmul.f32 %v5112, %v1387
      %v5182 = vmul.f32 %v5115, %v1392
      %v5183 = vmul.f32 %v5117, %v1397
      %v5184 = vmul.f32 %v5120, %v1402
      %v5185 = vmul.f32 %v5122, %v1407
      %v5186 = vmul.f32 %v5125, %v1412
      %v5187 = vmul.f32 %v5127, %v1417
      %v5188 = vld [vmem:[%s13] sm:$0xff]
      %v5189 = vld [vmem:[%s13 + $0x8] sm:$0x1]
      %v5190 = vperm.slane %v5188, 0
      %v5191 = vmul.f32 %v5132, %v5190
      %v5192 = vmul.f32 %v5133, %v5190
      %v5193 = vmul.f32 %v5134, %v5190
      %v5194 = vmul.f32 %v5135, %v5190
      %v5195 = vmul.f32 %v5136, %v5190
      %v5196 = vmul.f32 %v5137, %v5190
      %v5197 = vmul.f32 %v5138, %v5190
      %v5198 = vmul.f32 %v5139, %v5190
      %v5199 = vmul.f32 %v5140, %v5190
      %v5200 = vmul.f32 %v5141, %v5190
      %v5201 = vmul.f32 %v5142, %v5190
      %v5202 = vmul.f32 %v5143, %v5190
      %v5203 = vmul.f32 %v5144, %v5190
      %v5204 = vmul.f32 %v5145, %v5190
      %v5205 = vmul.f32 %v5146, %v5190
      %v5206 = vmul.f32 %v5147, %v5190
      %v5207 = vmul.f32 %v5148, %v5190
      %v5208 = vmul.f32 %v5149, %v5190
      %v5209 = vmul.f32 %v5150, %v5190
      %v5210 = vmul.f32 %v5151, %v5190
      %v5211 = vmul.f32 %v5152, %v5190
      %v5212 = vmul.f32 %v5153, %v5190
      %v5213 = vmul.f32 %v5154, %v5190
      %v5214 = vmul.f32 %v5155, %v5190
      %v5215 = vmul.f32 %v5156, %v5190
      %v5216 = vmul.f32 %v5157, %v5190
      %v5217 = vmul.f32 %v5158, %v5190
      %v5218 = vmul.f32 %v5159, %v5190
      %v5219 = vmul.f32 %v5160, %v5190
      %v5220 = vmul.f32 %v5161, %v5190
      %v5221 = vmul.f32 %v5162, %v5190
      %v5222 = vmul.f32 %v5163, %v5190
      %v5223 = vmul.f32 %v5164, %v5190
      %v5224 = vmul.f32 %v5165, %v5190
      %v5225 = vmul.f32 %v5166, %v5190
      %v5226 = vmul.f32 %v5167, %v5190
      %v5227 = vmul.f32 %v5168, %v5190
      %v5228 = vmul.f32 %v5169, %v5190
      %v5229 = vmul.f32 %v5170, %v5190
      %v5230 = vmul.f32 %v5171, %v5190
      %v5231 = vmul.f32 %v5172, %v5190
      %v5232 = vmul.f32 %v5173, %v5190
      %v5233 = vmul.f32 %v5174, %v5190
      %v5234 = vmul.f32 %v5175, %v5190
      %v5235 = vmul.f32 %v5176, %v5190
      %v5236 = vmul.f32 %v5177, %v5190
      %v5237 = vmul.f32 %v5178, %v5190
      %v5238 = vmul.f32 %v5179, %v5190
      %v5239 = vmul.f32 %v5180, %v5190
      %v5240 = vadd.f32 %v5191, 0.0
      %v5241 = vadd.f32 %v5192, 0.0
      %v5242 = vadd.f32 %v5193, 0.0
      %v5243 = vadd.f32 %v5194, 0.0
      %v5244 = vadd.f32 %v5195, 0.0
      %v5245 = vadd.f32 %v5196, 0.0
      %v5246 = vadd.f32 %v5197, 0.0
      %v5247 = vadd.f32 %v5198, 0.0
      %v5248 = vadd.f32 %v5199, 0.0
      %v5249 = vadd.f32 %v5200, 0.0
      %v5250 = vadd.f32 %v5201, 0.0
      %v5251 = vadd.f32 %v5202, 0.0
      %v5252 = vadd.f32 %v5203, 0.0
      %v5253 = vadd.f32 %v5204, 0.0
      %v5254 = vadd.f32 %v5205, 0.0
      %v5255 = vadd.f32 %v5206, 0.0
      %v5256 = vadd.f32 %v5207, 0.0
      %v5257 = vadd.f32 %v5208, 0.0
      %v5258 = vadd.f32 %v5209, 0.0
      %v5259 = vadd.f32 %v5210, 0.0
      %v5260 = vadd.f32 %v5211, 0.0
      %v5261 = vadd.f32 %v5212, 0.0
      %v5262 = vadd.f32 %v5213, 0.0
      %v5263 = vadd.f32 %v5214, 0.0
      %v5264 = vadd.f32 %v5215, 0.0
      %v5265 = vadd.f32 %v5216, 0.0
      %v5266 = vadd.f32 %v5217, 0.0
      %v5267 = vadd.f32 %v5218, 0.0
      %v5268 = vadd.f32 %v5219, 0.0
      %v5269 = vadd.f32 %v5220, 0.0
      %v5270 = vadd.f32 %v5221, 0.0
      %v5271 = vadd.f32 %v5222, 0.0
      %v5272 = vadd.f32 %v5223, 0.0
      %v5273 = vadd.f32 %v5224, 0.0
      %v5274 = vadd.f32 %v5225, 0.0
      %v5275 = vadd.f32 %v5226, 0.0
      %v5276 = vadd.f32 %v5227, 0.0
      %v5277 = vadd.f32 %v5228, 0.0
      %v5278 = vadd.f32 %v5229, 0.0
      %v5279 = vadd.f32 %v5230, 0.0
      %v5280 = vadd.f32 %v5231, 0.0
      %v5281 = vadd.f32 %v5232, 0.0
      %v5282 = vadd.f32 %v5233, 0.0
      %v5283 = vadd.f32 %v5234, 0.0
      %v5284 = vadd.f32 %v5235, 0.0
      %v5285 = vadd.f32 %v5236, 0.0
      %v5286 = vadd.f32 %v5237, 0.0
      %v5287 = vadd.f32 %v5238, 0.0
      %v5288 = vadd.f32 %v5239, 0.0
      %v5289 = vperm.slane %v5188, 3
      %v5290 = vmul.f32 %v5135, %v5289
      %v5291 = vmul.f32 %v5136, %v5289
      %v5292 = vmul.f32 %v5137, %v5289
      %v5293 = vmul.f32 %v5138, %v5289
      %v5294 = vmul.f32 %v5139, %v5289
      %v5295 = vmul.f32 %v5140, %v5289
      %v5296 = vmul.f32 %v5141, %v5289
      %v5297 = vmul.f32 %v5142, %v5289
      %v5298 = vmul.f32 %v5143, %v5289
      %v5299 = vmul.f32 %v5144, %v5289
      %v5300 = vmul.f32 %v5145, %v5289
      %v5301 = vmul.f32 %v5146, %v5289
      %v5302 = vmul.f32 %v5147, %v5289
      %v5303 = vmul.f32 %v5148, %v5289
      %v5304 = vmul.f32 %v5149, %v5289
      %v5305 = vmul.f32 %v5150, %v5289
      %v5306 = vmul.f32 %v5151, %v5289
      %v5307 = vmul.f32 %v5152, %v5289
      %v5308 = vmul.f32 %v5153, %v5289
      %v5309 = vmul.f32 %v5154, %v5289
      %v5310 = vmul.f32 %v5155, %v5289
      %v5311 = vmul.f32 %v5156, %v5289
      %v5312 = vmul.f32 %v5157, %v5289
      %v5313 = vmul.f32 %v5158, %v5289
      %v5314 = vmul.f32 %v5159, %v5289
      %v5315 = vmul.f32 %v5160, %v5289
      %v5316 = vmul.f32 %v5161, %v5289
      %v5317 = vmul.f32 %v5162, %v5289
      %v5318 = vmul.f32 %v5163, %v5289
      %v5319 = vmul.f32 %v5164, %v5289
      %v5320 = vmul.f32 %v5165, %v5289
      %v5321 = vmul.f32 %v5166, %v5289
      %v5322 = vmul.f32 %v5167, %v5289
      %v5323 = vmul.f32 %v5168, %v5289
      %v5324 = vmul.f32 %v5169, %v5289
      %v5325 = vmul.f32 %v5170, %v5289
      %v5326 = vmul.f32 %v5171, %v5289
      %v5327 = vmul.f32 %v5172, %v5289
      %v5328 = vmul.f32 %v5173, %v5289
      %v5329 = vmul.f32 %v5174, %v5289
      %v5330 = vmul.f32 %v5175, %v5289
      %v5331 = vmul.f32 %v5176, %v5289
      %v5332 = vmul.f32 %v5177, %v5289
      %v5333 = vmul.f32 %v5178, %v5289
      %v5334 = vmul.f32 %v5179, %v5289
      %v5335 = vmul.f32 %v5180, %v5289
      %v5336 = vmul.f32 %v5181, %v5289
      %v5337 = vmul.f32 %v5182, %v5289
      %v5338 = vmul.f32 %v5183, %v5289
      %v5339 = vadd.f32 %v5240, %v5290
      %v5340 = vadd.f32 %v5241, %v5291
      %v5341 = vadd.f32 %v5242, %v5292
      %v5342 = vadd.f32 %v5243, %v5293
      %v5343 = vadd.f32 %v5244, %v5294
      %v5344 = vadd.f32 %v5245, %v5295
      %v5345 = vadd.f32 %v5246, %v5296
      %v5346 = vadd.f32 %v5247, %v5297
      %v5347 = vadd.f32 %v5248, %v5298
      %v5348 = vadd.f32 %v5249, %v5299
      %v5349 = vadd.f32 %v5250, %v5300
      %v5350 = vadd.f32 %v5251, %v5301
      %v5351 = vadd.f32 %v5252, %v5302
      %v5352 = vadd.f32 %v5253, %v5303
      %v5353 = vadd.f32 %v5254, %v5304
      %v5354 = vadd.f32 %v5255, %v5305
      %v5355 = vadd.f32 %v5256, %v5306
      %v5356 = vadd.f32 %v5257, %v5307
      %v5357 = vadd.f32 %v5258, %v5308
      %v5358 = vadd.f32 %v5259, %v5309
      %v5359 = vadd.f32 %v5260, %v5310
      %v5360 = vadd.f32 %v5261, %v5311
      %v5361 = vadd.f32 %v5262, %v5312
      %v5362 = vadd.f32 %v5263, %v5313
      %v5363 = vadd.f32 %v5264, %v5314
      %v5364 = vadd.f32 %v5265, %v5315
      %v5365 = vadd.f32 %v5266, %v5316
      %v5366 = vadd.f32 %v5267, %v5317
      %v5367 = vadd.f32 %v5268, %v5318
      %v5368 = vadd.f32 %v5269, %v5319
      %v5369 = vadd.f32 %v5270, %v5320
      %v5370 = vadd.f32 %v5271, %v5321
      %v5371 = vadd.f32 %v5272, %v5322
      %v5372 = vadd.f32 %v5273, %v5323
      %v5373 = vadd.f32 %v5274, %v5324
      %v5374 = vadd.f32 %v5275, %v5325
      %v5375 = vadd.f32 %v5276, %v5326
      %v5376 = vadd.f32 %v5277, %v5327
      %v5377 = vadd.f32 %v5278, %v5328
      %v5378 = vadd.f32 %v5279, %v5329
      %v5379 = vadd.f32 %v5280, %v5330
      %v5380 = vadd.f32 %v5281, %v5331
      %v5381 = vadd.f32 %v5282, %v5332
      %v5382 = vadd.f32 %v5283, %v5333
      %v5383 = vadd.f32 %v5284, %v5334
      %v5384 = vadd.f32 %v5285, %v5335
      %v5385 = vadd.f32 %v5286, %v5336
      %v5386 = vadd.f32 %v5287, %v5337
      %v5387 = vadd.f32 %v5288, %v5338
      %v5388 = vperm.slane %v5188, 6
      %v5389 = vmul.f32 %v5138, %v5388
      %v5390 = vmul.f32 %v5139, %v5388
      %v5391 = vmul.f32 %v5140, %v5388
      %v5392 = vmul.f32 %v5141, %v5388
      %v5393 = vmul.f32 %v5142, %v5388
      %v5394 = vmul.f32 %v5143, %v5388
      %v5395 = vmul.f32 %v5144, %v5388
      %v5396 = vmul.f32 %v5145, %v5388
      %v5397 = vmul.f32 %v5146, %v5388
      %v5398 = vmul.f32 %v5147, %v5388
      %v5399 = vmul.f32 %v5148, %v5388
      %v5400 = vmul.f32 %v5149, %v5388
      %v5401 = vmul.f32 %v5150, %v5388
      %v5402 = vmul.f32 %v5151, %v5388
      %v5403 = vmul.f32 %v5152, %v5388
      %v5404 = vmul.f32 %v5153, %v5388
      %v5405 = vmul.f32 %v5154, %v5388
      %v5406 = vmul.f32 %v5155, %v5388
      %v5407 = vmul.f32 %v5156, %v5388
      %v5408 = vmul.f32 %v5157, %v5388
      %v5409 = vmul.f32 %v5158, %v5388
      %v5410 = vmul.f32 %v5159, %v5388
      %v5411 = vmul.f32 %v5160, %v5388
      %v5412 = vmul.f32 %v5161, %v5388
      %v5413 = vmul.f32 %v5162, %v5388
      %v5414 = vmul.f32 %v5163, %v5388
      %v5415 = vmul.f32 %v5164, %v5388
      %v5416 = vmul.f32 %v5165, %v5388
      %v5417 = vmul.f32 %v5166, %v5388
      %v5418 = vmul.f32 %v5167, %v5388
      %v5419 = vmul.f32 %v5168, %v5388
      %v5420 = vmul.f32 %v5169, %v5388
      %v5421 = vmul.f32 %v5170, %v5388
      %v5422 = vmul.f32 %v5171, %v5388
      %v5423 = vmul.f32 %v5172, %v5388
      %v5424 = vmul.f32 %v5173, %v5388
      %v5425 = vmul.f32 %v5174, %v5388
      %v5426 = vmul.f32 %v5175, %v5388
      %v5427 = vmul.f32 %v5176, %v5388
      %v5428 = vmul.f32 %v5177, %v5388
      %v5429 = vmul.f32 %v5178, %v5388
      %v5430 = vmul.f32 %v5179, %v5388
      %v5431 = vmul.f32 %v5180, %v5388
      %v5432 = vmul.f32 %v5181, %v5388
      %v5433 = vmul.f32 %v5182, %v5388
      %v5434 = vmul.f32 %v5183, %v5388
      %v5435 = vmul.f32 %v5184, %v5388
      %v5436 = vmul.f32 %v5185, %v5388
      %v5437 = vmul.f32 %v5186, %v5388
      %v5438 = vadd.f32 %v5339, %v5389
      %v5439 = vadd.f32 %v5340, %v5390
      %v5440 = vadd.f32 %v5341, %v5391
      %v5441 = vadd.f32 %v5342, %v5392
      %v5442 = vadd.f32 %v5343, %v5393
      %v5443 = vadd.f32 %v5344, %v5394
      %v5444 = vadd.f32 %v5345, %v5395
      %v5445 = vadd.f32 %v5346, %v5396
      %v5446 = vadd.f32 %v5347, %v5397
      %v5447 = vadd.f32 %v5348, %v5398
      %v5448 = vadd.f32 %v5349, %v5399
      %v5449 = vadd.f32 %v5350, %v5400
      %v5450 = vadd.f32 %v5351, %v5401
      %v5451 = vadd.f32 %v5352, %v5402
      %v5452 = vadd.f32 %v5353, %v5403
      %v5453 = vadd.f32 %v5354, %v5404
      %v5454 = vadd.f32 %v5355, %v5405
      %v5455 = vadd.f32 %v5356, %v5406
      %v5456 = vadd.f32 %v5357, %v5407
      %v5457 = vadd.f32 %v5358, %v5408
      %v5458 = vadd.f32 %v5359, %v5409
      %v5459 = vadd.f32 %v5360, %v5410
      %v5460 = vadd.f32 %v5361, %v5411
      %v5461 = vadd.f32 %v5362, %v5412
      %v5462 = vadd.f32 %v5363, %v5413
      %v5463 = vadd.f32 %v5364, %v5414
      %v5464 = vadd.f32 %v5365, %v5415
      %v5465 = vadd.f32 %v5366, %v5416
      %v5466 = vadd.f32 %v5367, %v5417
      %v5467 = vadd.f32 %v5368, %v5418
      %v5468 = vadd.f32 %v5369, %v5419
      %v5469 = vadd.f32 %v5370, %v5420
      %v5470 = vadd.f32 %v5371, %v5421
      %v5471 = vadd.f32 %v5372, %v5422
      %v5472 = vadd.f32 %v5373, %v5423
      %v5473 = vadd.f32 %v5374, %v5424
      %v5474 = vadd.f32 %v5375, %v5425
      %v5475 = vadd.f32 %v5376, %v5426
      %v5476 = vadd.f32 %v5377, %v5427
      %v5477 = vadd.f32 %v5378, %v5428
      %v5478 = vadd.f32 %v5379, %v5429
      %v5479 = vadd.f32 %v5380, %v5430
      %v5480 = vadd.f32 %v5381, %v5431
      %v5481 = vadd.f32 %v5382, %v5432
      %v5482 = vadd.f32 %v5383, %v5433
      %v5483 = vadd.f32 %v5384, %v5434
      %v5484 = vadd.f32 %v5385, %v5435
      %v5485 = vadd.f32 %v5386, %v5436
      %v5486 = vadd.f32 %v5387, %v5437
      %v5487 = vperm.slane %v5188, 1
      %v5488 = vmul.f32 %v5133, %v5487
      %v5489 = vmul.f32 %v5134, %v5487
      %v5490 = vmul.f32 %v5135, %v5487
      %v5491 = vmul.f32 %v5136, %v5487
      %v5492 = vmul.f32 %v5137, %v5487
      %v5493 = vmul.f32 %v5138, %v5487
      %v5494 = vmul.f32 %v5139, %v5487
      %v5495 = vmul.f32 %v5140, %v5487
      %v5496 = vmul.f32 %v5141, %v5487
      %v5497 = vmul.f32 %v5142, %v5487
      %v5498 = vmul.f32 %v5143, %v5487
      %v5499 = vmul.f32 %v5144, %v5487
      %v5500 = vmul.f32 %v5145, %v5487
      %v5501 = vmul.f32 %v5146, %v5487
      %v5502 = vmul.f32 %v5147, %v5487
      %v5503 = vmul.f32 %v5148, %v5487
      %v5504 = vmul.f32 %v5149, %v5487
      %v5505 = vmul.f32 %v5150, %v5487
      %v5506 = vmul.f32 %v5151, %v5487
      %v5507 = vmul.f32 %v5152, %v5487
      %v5508 = vmul.f32 %v5153, %v5487
      %v5509 = vmul.f32 %v5154, %v5487
      %v5510 = vmul.f32 %v5155, %v5487
      %v5511 = vmul.f32 %v5156, %v5487
      %v5512 = vmul.f32 %v5157, %v5487
      %v5513 = vmul.f32 %v5158, %v5487
      %v5514 = vmul.f32 %v5159, %v5487
      %v5515 = vmul.f32 %v5160, %v5487
      %v5516 = vmul.f32 %v5161, %v5487
      %v5517 = vmul.f32 %v5162, %v5487
      %v5518 = vmul.f32 %v5163, %v5487
      %v5519 = vmul.f32 %v5164, %v5487
      %v5520 = vmul.f32 %v5165, %v5487
      %v5521 = vmul.f32 %v5166, %v5487
      %v5522 = vmul.f32 %v5167, %v5487
      %v5523 = vmul.f32 %v5168, %v5487
      %v5524 = vmul.f32 %v5169, %v5487
      %v5525 = vmul.f32 %v5170, %v5487
      %v5526 = vmul.f32 %v5171, %v5487
      %v5527 = vmul.f32 %v5172, %v5487
      %v5528 = vmul.f32 %v5173, %v5487
      %v5529 = vmul.f32 %v5174, %v5487
      %v5530 = vmul.f32 %v5175, %v5487
      %v5531 = vmul.f32 %v5176, %v5487
      %v5532 = vmul.f32 %v5177, %v5487
      %v5533 = vmul.f32 %v5178, %v5487
      %v5534 = vmul.f32 %v5179, %v5487
      %v5535 = vmul.f32 %v5180, %v5487
      %vm5584 = vcmask 1046528
      %v5585 = vrot.slane %v5488, 1
      %v5586 = vrot.slane %v5489, 1
      %v5587 = vsel %vm5584, %v5585, %v5586
      %v5588 = vrot.slane %v5490, 1
      %v5589 = vsel %vm5584, %v5586, %v5588
      %v5590 = vrot.slane %v5491, 1
      %v5591 = vsel %vm5584, %v5588, %v5590
      %v5592 = vrot.slane %v5492, 1
      %v5593 = vsel %vm5584, %v5590, %v5592
      %v5594 = vrot.slane %v5493, 1
      %v5595 = vsel %vm5584, %v5592, %v5594
      %v5596 = vrot.slane %v5494, 1
      %v5597 = vsel %vm5584, %v5594, %v5596
      %v5598 = vrot.slane %v5495, 1
      %v5599 = vsel %vm5584, %v5596, %v5598
      %v5600 = vrot.slane %v5496, 1
      %v5601 = vsel %vm5584, %v5598, %v5600
      %v5602 = vrot.slane %v5497, 1
      %v5603 = vsel %vm5584, %v5600, %v5602
      %v5604 = vrot.slane %v5498, 1
      %v5605 = vsel %vm5584, %v5602, %v5604
      %v5606 = vrot.slane %v5499, 1
      %v5607 = vsel %vm5584, %v5604, %v5606
      %v5608 = vrot.slane %v5500, 1
      %v5609 = vsel %vm5584, %v5606, %v5608
      %v5610 = vrot.slane %v5501, 1
      %v5611 = vsel %vm5584, %v5608, %v5610
      %v5612 = vrot.slane %v5502, 1
      %v5613 = vsel %vm5584, %v5610, %v5612
      %v5614 = vrot.slane %v5503, 1
      %v5615 = vsel %vm5584, %v5612, %v5614
      %v5616 = vrot.slane %v5504, 1
      %v5617 = vsel %vm5584, %v5614, %v5616
      %v5618 = vrot.slane %v5505, 1
      %v5619 = vsel %vm5584, %v5616, %v5618
      %v5620 = vrot.slane %v5506, 1
      %v5621 = vsel %vm5584, %v5618, %v5620
      %v5622 = vrot.slane %v5507, 1
      %v5623 = vsel %vm5584, %v5620, %v5622
      %v5624 = vrot.slane %v5508, 1
      %v5625 = vsel %vm5584, %v5622, %v5624
      %v5626 = vrot.slane %v5509, 1
      %v5627 = vsel %vm5584, %v5624, %v5626
      %v5628 = vrot.slane %v5510, 1
      %v5629 = vsel %vm5584, %v5626, %v5628
      %v5630 = vrot.slane %v5511, 1
      %v5631 = vsel %vm5584, %v5628, %v5630
      %v5632 = vrot.slane %v5512, 1
      %v5633 = vsel %vm5584, %v5630, %v5632
      %v5634 = vrot.slane %v5513, 1
      %v5635 = vsel %vm5584, %v5632, %v5634
      %v5636 = vrot.slane %v5514, 1
      %v5637 = vsel %vm5584, %v5634, %v5636
      %v5638 = vrot.slane %v5515, 1
      %v5639 = vsel %vm5584, %v5636, %v5638
      %v5640 = vrot.slane %v5516, 1
      %v5641 = vsel %vm5584, %v5638, %v5640
      %v5642 = vrot.slane %v5517, 1
      %v5643 = vsel %vm5584, %v5640, %v5642
      %v5644 = vrot.slane %v5518, 1
      %v5645 = vsel %vm5584, %v5642, %v5644
      %v5646 = vrot.slane %v5519, 1
      %v5647 = vsel %vm5584, %v5644, %v5646
      %v5648 = vrot.slane %v5520, 1
      %v5649 = vsel %vm5584, %v5646, %v5648
      %v5650 = vrot.slane %v5521, 1
      %v5651 = vsel %vm5584, %v5648, %v5650
      %v5652 = vrot.slane %v5522, 1
      %v5653 = vsel %vm5584, %v5650, %v5652
      %v5654 = vrot.slane %v5523, 1
      %v5655 = vsel %vm5584, %v5652, %v5654
      %v5656 = vrot.slane %v5524, 1
      %v5657 = vsel %vm5584, %v5654, %v5656
      %v5658 = vrot.slane %v5525, 1
      %v5659 = vsel %vm5584, %v5656, %v5658
      %v5660 = vrot.slane %v5526, 1
      %v5661 = vsel %vm5584, %v5658, %v5660
      %v5662 = vrot.slane %v5527, 1
      %v5663 = vsel %vm5584, %v5660, %v5662
      %v5664 = vrot.slane %v5528, 1
      %v5665 = vsel %vm5584, %v5662, %v5664
      %v5666 = vrot.slane %v5529, 1
      %v5667 = vsel %vm5584, %v5664, %v5666
      %v5668 = vrot.slane %v5530, 1
      %v5669 = vsel %vm5584, %v5666, %v5668
      %v5670 = vrot.slane %v5531, 1
      %v5671 = vsel %vm5584, %v5668, %v5670
      %v5672 = vrot.slane %v5532, 1
      %v5673 = vsel %vm5584, %v5670, %v5672
      %v5674 = vrot.slane %v5533, 1
      %v5675 = vsel %vm5584, %v5672, %v5674
      %v5676 = vrot.slane %v5534, 1
      %v5677 = vsel %vm5584, %v5674, %v5676
      %v5678 = vrot.slane %v5535, 1
      %v5679 = vsel %vm5584, %v5676, %v5678
      %v5729 = vadd.f32 %v5438, %v5585
      %v5730 = vadd.f32 %v5439, %v5587
      %v5731 = vadd.f32 %v5440, %v5589
      %v5732 = vadd.f32 %v5441, %v5591
      %v5733 = vadd.f32 %v5442, %v5593
      %v5734 = vadd.f32 %v5443, %v5595
      %v5735 = vadd.f32 %v5444, %v5597
      %v5736 = vadd.f32 %v5445, %v5599
      %v5737 = vadd.f32 %v5446, %v5601
      %v5738 = vadd.f32 %v5447, %v5603
      %v5739 = vadd.f32 %v5448, %v5605
      %v5740 = vadd.f32 %v5449, %v5607
      %v5741 = vadd.f32 %v5450, %v5609
      %v5742 = vadd.f32 %v5451, %v5611
      %v5743 = vadd.f32 %v5452, %v5613
      %v5744 = vadd.f32 %v5453, %v5615
      %v5745 = vadd.f32 %v5454, %v5617
      %v5746 = vadd.f32 %v5455, %v5619
      %v5747 = vadd.f32 %v5456, %v5621
      %v5748 = vadd.f32 %v5457, %v5623
      %v5749 = vadd.f32 %v5458, %v5625
      %v5750 = vadd.f32 %v5459, %v5627
      %v5751 = vadd.f32 %v5460, %v5629
      %v5752 = vadd.f32 %v5461, %v5631
      %v5753 = vadd.f32 %v5462, %v5633
      %v5754 = vadd.f32 %v5463, %v5635
      %v5755 = vadd.f32 %v5464, %v5637
      %v5756 = vadd.f32 %v5465, %v5639
      %v5757 = vadd.f32 %v5466, %v5641
      %v5758 = vadd.f32 %v5467, %v5643
      %v5759 = vadd.f32 %v5468, %v5645
      %v5760 = vadd.f32 %v5469, %v5647
      %v5761 = vadd.f32 %v5470, %v5649
      %v5762 = vadd.f32 %v5471, %v5651
      %v5763 = vadd.f32 %v5472, %v5653
      %v5764 = vadd.f32 %v5473, %v5655
      %v5765 = vadd.f32 %v5474, %v5657
      %v5766 = vadd.f32 %v5475, %v5659
      %v5767 = vadd.f32 %v5476, %v5661
      %v5768 = vadd.f32 %v5477, %v5663
      %v5769 = vadd.f32 %v5478, %v5665
      %v5770 = vadd.f32 %v5479, %v5667
      %v5771 = vadd.f32 %v5480, %v5669
      %v5772 = vadd.f32 %v5481, %v5671
      %v5773 = vadd.f32 %v5482, %v5673
      %v5774 = vadd.f32 %v5483, %v5675
      %v5775 = vadd.f32 %v5484, %v5677
      %v5776 = vadd.f32 %v5485, %v5679
      %v5777 = vadd.f32 %v5486, %v5678
      %v5778 = vperm.slane %v5188, 4
      %v5779 = vmul.f32 %v5136, %v5778
      %v5780 = vmul.f32 %v5137, %v5778
      %v5781 = vmul.f32 %v5138, %v5778
      %v5782 = vmul.f32 %v5139, %v5778
      %v5783 = vmul.f32 %v5140, %v5778
      %v5784 = vmul.f32 %v5141, %v5778
      %v5785 = vmul.f32 %v5142, %v5778
      %v5786 = vmul.f32 %v5143, %v5778
      %v5787 = vmul.f32 %v5144, %v5778
      %v5788 = vmul.f32 %v5145, %v5778
      %v5789 = vmul.f32 %v5146, %v5778
      %v5790 = vmul.f32 %v5147, %v5778
      %v5791 = vmul.f32 %v5148, %v5778
      %v5792 = vmul.f32 %v5149, %v5778
      %v5793 = vmul.f32 %v5150, %v5778
      %v5794 = vmul.f32 %v5151, %v5778
      %v5795 = vmul.f32 %v5152, %v5778
      %v5796 = vmul.f32 %v5153, %v5778
      %v5797 = vmul.f32 %v5154, %v5778
      %v5798 = vmul.f32 %v5155, %v5778
      %v5799 = vmul.f32 %v5156, %v5778
      %v5800 = vmul.f32 %v5157, %v5778
      %v5801 = vmul.f32 %v5158, %v5778
      %v5802 = vmul.f32 %v5159, %v5778
      %v5803 = vmul.f32 %v5160, %v5778
      %v5804 = vmul.f32 %v5161, %v5778
      %v5805 = vmul.f32 %v5162, %v5778
      %v5806 = vmul.f32 %v5163, %v5778
      %v5807 = vmul.f32 %v5164, %v5778
      %v5808 = vmul.f32 %v5165, %v5778
      %v5809 = vmul.f32 %v5166, %v5778
      %v5810 = vmul.f32 %v5167, %v5778
      %v5811 = vmul.f32 %v5168, %v5778
      %v5812 = vmul.f32 %v5169, %v5778
      %v5813 = vmul.f32 %v5170, %v5778
      %v5814 = vmul.f32 %v5171, %v5778
      %v5815 = vmul.f32 %v5172, %v5778
      %v5816 = vmul.f32 %v5173, %v5778
      %v5817 = vmul.f32 %v5174, %v5778
      %v5818 = vmul.f32 %v5175, %v5778
      %v5819 = vmul.f32 %v5176, %v5778
      %v5820 = vmul.f32 %v5177, %v5778
      %v5821 = vmul.f32 %v5178, %v5778
      %v5822 = vmul.f32 %v5179, %v5778
      %v5823 = vmul.f32 %v5180, %v5778
      %v5824 = vmul.f32 %v5181, %v5778
      %v5825 = vmul.f32 %v5182, %v5778
      %v5826 = vmul.f32 %v5183, %v5778
      %v5875 = vrot.slane %v5779, 1
      %v5876 = vrot.slane %v5780, 1
      %v5877 = vsel %vm5584, %v5875, %v5876
      %v5878 = vrot.slane %v5781, 1
      %v5879 = vsel %vm5584, %v5876, %v5878
      %v5880 = vrot.slane %v5782, 1
      %v5881 = vsel %vm5584, %v5878, %v5880
      %v5882 = vrot.slane %v5783, 1
      %v5883 = vsel %vm5584, %v5880, %v5882
      %v5884 = vrot.slane %v5784, 1
      %v5885 = vsel %vm5584, %v5882, %v5884
      %v5886 = vrot.slane %v5785, 1
      %v5887 = vsel %vm5584, %v5884, %v5886
      %v5888 = vrot.slane %v5786, 1
      %v5889 = vsel %vm5584, %v5886, %v5888
      %v5890 = vrot.slane %v5787, 1
      %v5891 = vsel %vm5584, %v5888, %v5890
      %v5892 = vrot.slane %v5788, 1
      %v5893 = vsel %vm5584, %v5890, %v5892
      %v5894 = vrot.slane %v5789, 1
      %v5895 = vsel %vm5584, %v5892, %v5894
      %v5896 = vrot.slane %v5790, 1
      %v5897 = vsel %vm5584, %v5894, %v5896
      %v5898 = vrot.slane %v5791, 1
      %v5899 = vsel %vm5584, %v5896, %v5898
      %v5900 = vrot.slane %v5792, 1
      %v5901 = vsel %vm5584, %v5898, %v5900
      %v5902 = vrot.slane %v5793, 1
      %v5903 = vsel %vm5584, %v5900, %v5902
      %v5904 = vrot.slane %v5794, 1
      %v5905 = vsel %vm5584, %v5902, %v5904
      %v5906 = vrot.slane %v5795, 1
      %v5907 = vsel %vm5584, %v5904, %v5906
      %v5908 = vrot.slane %v5796, 1
      %v5909 = vsel %vm5584, %v5906, %v5908
      %v5910 = vrot.slane %v5797, 1
      %v5911 = vsel %vm5584, %v5908, %v5910
      %v5912 = vrot.slane %v5798, 1
      %v5913 = vsel %vm5584, %v5910, %v5912
      %v5914 = vrot.slane %v5799, 1
      %v5915 = vsel %vm5584, %v5912, %v5914
      %v5916 = vrot.slane %v5800, 1
      %v5917 = vsel %vm5584, %v5914, %v5916
      %v5918 = vrot.slane %v5801, 1
      %v5919 = vsel %vm5584, %v5916, %v5918
      %v5920 = vrot.slane %v5802, 1
      %v5921 = vsel %vm5584, %v5918, %v5920
      %v5922 = vrot.slane %v5803, 1
      %v5923 = vsel %vm5584, %v5920, %v5922
      %v5924 = vrot.slane %v5804, 1
      %v5925 = vsel %vm5584, %v5922, %v5924
      %v5926 = vrot.slane %v5805, 1
      %v5927 = vsel %vm5584, %v5924, %v5926
      %v5928 = vrot.slane %v5806, 1
      %v5929 = vsel %vm5584, %v5926, %v5928
      %v5930 = vrot.slane %v5807, 1
      %v5931 = vsel %vm5584, %v5928, %v5930
      %v5932 = vrot.slane %v5808, 1
      %v5933 = vsel %vm5584, %v5930, %v5932
      %v5934 = vrot.slane %v5809, 1
      %v5935 = vsel %vm5584, %v5932, %v5934
      %v5936 = vrot.slane %v5810, 1
      %v5937 = vsel %vm5584, %v5934, %v5936
      %v5938 = vrot.slane %v5811, 1
      %v5939 = vsel %vm5584, %v5936, %v5938
      %v5940 = vrot.slane %v5812, 1
      %v5941 = vsel %vm5584, %v5938, %v5940
      %v5942 = vrot.slane %v5813, 1
      %v5943 = vsel %vm5584, %v5940, %v5942
      %v5944 = vrot.slane %v5814, 1
      %v5945 = vsel %vm5584, %v5942, %v5944
      %v5946 = vrot.slane %v5815, 1
      %v5947 = vsel %vm5584, %v5944, %v5946
      %v5948 = vrot.slane %v5816, 1
      %v5949 = vsel %vm5584, %v5946, %v5948
      %v5950 = vrot.slane %v5817, 1
      %v5951 = vsel %vm5584, %v5948, %v5950
      %v5952 = vrot.slane %v5818, 1
      %v5953 = vsel %vm5584, %v5950, %v5952
      %v5954 = vrot.slane %v5819, 1
      %v5955 = vsel %vm5584, %v5952, %v5954
      %v5956 = vrot.slane %v5820, 1
      %v5957 = vsel %vm5584, %v5954, %v5956
      %v5958 = vrot.slane %v5821, 1
      %v5959 = vsel %vm5584, %v5956, %v5958
      %v5960 = vrot.slane %v5822, 1
      %v5961 = vsel %vm5584, %v5958, %v5960
      %v5962 = vrot.slane %v5823, 1
      %v5963 = vsel %vm5584, %v5960, %v5962
      %v5964 = vrot.slane %v5824, 1
      %v5965 = vsel %vm5584, %v5962, %v5964
      %v5966 = vrot.slane %v5825, 1
      %v5967 = vsel %vm5584, %v5964, %v5966
      %v5968 = vrot.slane %v5826, 1
      %v5969 = vsel %vm5584, %v5966, %v5968
      %v6019 = vadd.f32 %v5729, %v5875
      %v6020 = vadd.f32 %v5730, %v5877
      %v6021 = vadd.f32 %v5731, %v5879
      %v6022 = vadd.f32 %v5732, %v5881
      %v6023 = vadd.f32 %v5733, %v5883
      %v6024 = vadd.f32 %v5734, %v5885
      %v6025 = vadd.f32 %v5735, %v5887
      %v6026 = vadd.f32 %v5736, %v5889
      %v6027 = vadd.f32 %v5737, %v5891
      %v6028 = vadd.f32 %v5738, %v5893
      %v6029 = vadd.f32 %v5739, %v5895
      %v6030 = vadd.f32 %v5740, %v5897
      %v6031 = vadd.f32 %v5741, %v5899
      %v6032 = vadd.f32 %v5742, %v5901
      %v6033 = vadd.f32 %v5743, %v5903
      %v6034 = vadd.f32 %v5744, %v5905
      %v6035 = vadd.f32 %v5745, %v5907
      %v6036 = vadd.f32 %v5746, %v5909
      %v6037 = vadd.f32 %v5747, %v5911
      %v6038 = vadd.f32 %v5748, %v5913
      %v6039 = vadd.f32 %v5749, %v5915
      %v6040 = vadd.f32 %v5750, %v5917
      %v6041 = vadd.f32 %v5751, %v5919
      %v6042 = vadd.f32 %v5752, %v5921
      %v6043 = vadd.f32 %v5753, %v5923
      %v6044 = vadd.f32 %v5754, %v5925
      %v6045 = vadd.f32 %v5755, %v5927
      %v6046 = vadd.f32 %v5756, %v5929
      %v6047 = vadd.f32 %v5757, %v5931
      %v6048 = vadd.f32 %v5758, %v5933
      %v6049 = vadd.f32 %v5759, %v5935
      %v6050 = vadd.f32 %v5760, %v5937
      %v6051 = vadd.f32 %v5761, %v5939
      %v6052 = vadd.f32 %v5762, %v5941
      %v6053 = vadd.f32 %v5763, %v5943
      %v6054 = vadd.f32 %v5764, %v5945
      %v6055 = vadd.f32 %v5765, %v5947
      %v6056 = vadd.f32 %v5766, %v5949
      %v6057 = vadd.f32 %v5767, %v5951
      %v6058 = vadd.f32 %v5768, %v5953
      %v6059 = vadd.f32 %v5769, %v5955
      %v6060 = vadd.f32 %v5770, %v5957
      %v6061 = vadd.f32 %v5771, %v5959
      %v6062 = vadd.f32 %v5772, %v5961
      %v6063 = vadd.f32 %v5773, %v5963
      %v6064 = vadd.f32 %v5774, %v5965
      %v6065 = vadd.f32 %v5775, %v5967
      %v6066 = vadd.f32 %v5776, %v5969
      %v6067 = vadd.f32 %v5777, %v5968
      %v6068 = vperm.slane %v5188, 7
      %v6069 = vmul.f32 %v5139, %v6068
      %v6070 = vmul.f32 %v5140, %v6068
      %v6071 = vmul.f32 %v5141, %v6068
      %v6072 = vmul.f32 %v5142, %v6068
      %v6073 = vmul.f32 %v5143, %v6068
      %v6074 = vmul.f32 %v5144, %v6068
      %v6075 = vmul.f32 %v5145, %v6068
      %v6076 = vmul.f32 %v5146, %v6068
      %v6077 = vmul.f32 %v5147, %v6068
      %v6078 = vmul.f32 %v5148, %v6068
      %v6079 = vmul.f32 %v5149, %v6068
      %v6080 = vmul.f32 %v5150, %v6068
      %v6081 = vmul.f32 %v5151, %v6068
      %v6082 = vmul.f32 %v5152, %v6068
      %v6083 = vmul.f32 %v5153, %v6068
      %v6084 = vmul.f32 %v5154, %v6068
      %v6085 = vmul.f32 %v5155, %v6068
      %v6086 = vmul.f32 %v5156, %v6068
      %v6087 = vmul.f32 %v5157, %v6068
      %v6088 = vmul.f32 %v5158, %v6068
      %v6089 = vmul.f32 %v5159, %v6068
      %v6090 = vmul.f32 %v5160, %v6068
      %v6091 = vmul.f32 %v5161, %v6068
      %v6092 = vmul.f32 %v5162, %v6068
      %v6093 = vmul.f32 %v5163, %v6068
      %v6094 = vmul.f32 %v5164, %v6068
      %v6095 = vmul.f32 %v5165, %v6068
      %v6096 = vmul.f32 %v5166, %v6068
      %v6097 = vmul.f32 %v5167, %v6068
      %v6098 = vmul.f32 %v5168, %v6068
      %v6099 = vmul.f32 %v5169, %v6068
      %v6100 = vmul.f32 %v5170, %v6068
      %v6101 = vmul.f32 %v5171, %v6068
      %v6102 = vmul.f32 %v5172, %v6068
      %v6103 = vmul.f32 %v5173, %v6068
      %v6104 = vmul.f32 %v5174, %v6068
      %v6105 = vmul.f32 %v5175, %v6068
      %v6106 = vmul.f32 %v5176, %v6068
      %v6107 = vmul.f32 %v5177, %v6068
      %v6108 = vmul.f32 %v5178, %v6068
      %v6109 = vmul.f32 %v5179, %v6068
      %v6110 = vmul.f32 %v5180, %v6068
      %v6111 = vmul.f32 %v5181, %v6068
      %v6112 = vmul.f32 %v5182, %v6068
      %v6113 = vmul.f32 %v5183, %v6068
      %v6114 = vmul.f32 %v5184, %v6068
      %v6115 = vmul.f32 %v5185, %v6068
      %v6116 = vmul.f32 %v5186, %v6068
      %v6165 = vrot.slane %v6069, 1
      %v6166 = vrot.slane %v6070, 1
      %v6167 = vsel %vm5584, %v6165, %v6166
      %v6168 = vrot.slane %v6071, 1
      %v6169 = vsel %vm5584, %v6166, %v6168
      %v6170 = vrot.slane %v6072, 1
      %v6171 = vsel %vm5584, %v6168, %v6170
      %v6172 = vrot.slane %v6073, 1
      %v6173 = vsel %vm5584, %v6170, %v6172
      %v6174 = vrot.slane %v6074, 1
      %v6175 = vsel %vm5584, %v6172, %v6174
      %v6176 = vrot.slane %v6075, 1
      %v6177 = vsel %vm5584, %v6174, %v6176
      %v6178 = vrot.slane %v6076, 1
      %v6179 = vsel %vm5584, %v6176, %v6178
      %v6180 = vrot.slane %v6077, 1
      %v6181 = vsel %vm5584, %v6178, %v6180
      %v6182 = vrot.slane %v6078, 1
      %v6183 = vsel %vm5584, %v6180, %v6182
      %v6184 = vrot.slane %v6079, 1
      %v6185 = vsel %vm5584, %v6182, %v6184
      %v6186 = vrot.slane %v6080, 1
      %v6187 = vsel %vm5584, %v6184, %v6186
      %v6188 = vrot.slane %v6081, 1
      %v6189 = vsel %vm5584, %v6186, %v6188
      %v6190 = vrot.slane %v6082, 1
      %v6191 = vsel %vm5584, %v6188, %v6190
      %v6192 = vrot.slane %v6083, 1
      %v6193 = vsel %vm5584, %v6190, %v6192
      %v6194 = vrot.slane %v6084, 1
      %v6195 = vsel %vm5584, %v6192, %v6194
      %v6196 = vrot.slane %v6085, 1
      %v6197 = vsel %vm5584, %v6194, %v6196
      %v6198 = vrot.slane %v6086, 1
      %v6199 = vsel %vm5584, %v6196, %v6198
      %v6200 = vrot.slane %v6087, 1
      %v6201 = vsel %vm5584, %v6198, %v6200
      %v6202 = vrot.slane %v6088, 1
      %v6203 = vsel %vm5584, %v6200, %v6202
      %v6204 = vrot.slane %v6089, 1
      %v6205 = vsel %vm5584, %v6202, %v6204
      %v6206 = vrot.slane %v6090, 1
      %v6207 = vsel %vm5584, %v6204, %v6206
      %v6208 = vrot.slane %v6091, 1
      %v6209 = vsel %vm5584, %v6206, %v6208
      %v6210 = vrot.slane %v6092, 1
      %v6211 = vsel %vm5584, %v6208, %v6210
      %v6212 = vrot.slane %v6093, 1
      %v6213 = vsel %vm5584, %v6210, %v6212
      %v6214 = vrot.slane %v6094, 1
      %v6215 = vsel %vm5584, %v6212, %v6214
      %v6216 = vrot.slane %v6095, 1
      %v6217 = vsel %vm5584, %v6214, %v6216
      %v6218 = vrot.slane %v6096, 1
      %v6219 = vsel %vm5584, %v6216, %v6218
      %v6220 = vrot.slane %v6097, 1
      %v6221 = vsel %vm5584, %v6218, %v6220
      %v6222 = vrot.slane %v6098, 1
      %v6223 = vsel %vm5584, %v6220, %v6222
      %v6224 = vrot.slane %v6099, 1
      %v6225 = vsel %vm5584, %v6222, %v6224
      %v6226 = vrot.slane %v6100, 1
      %v6227 = vsel %vm5584, %v6224, %v6226
      %v6228 = vrot.slane %v6101, 1
      %v6229 = vsel %vm5584, %v6226, %v6228
      %v6230 = vrot.slane %v6102, 1
      %v6231 = vsel %vm5584, %v6228, %v6230
      %v6232 = vrot.slane %v6103, 1
      %v6233 = vsel %vm5584, %v6230, %v6232
      %v6234 = vrot.slane %v6104, 1
      %v6235 = vsel %vm5584, %v6232, %v6234
      %v6236 = vrot.slane %v6105, 1
      %v6237 = vsel %vm5584, %v6234, %v6236
      %v6238 = vrot.slane %v6106, 1
      %v6239 = vsel %vm5584, %v6236, %v6238
      %v6240 = vrot.slane %v6107, 1
      %v6241 = vsel %vm5584, %v6238, %v6240
      %v6242 = vrot.slane %v6108, 1
      %v6243 = vsel %vm5584, %v6240, %v6242
      %v6244 = vrot.slane %v6109, 1
      %v6245 = vsel %vm5584, %v6242, %v6244
      %v6246 = vrot.slane %v6110, 1
      %v6247 = vsel %vm5584, %v6244, %v6246
      %v6248 = vrot.slane %v6111, 1
      %v6249 = vsel %vm5584, %v6246, %v6248
      %v6250 = vrot.slane %v6112, 1
      %v6251 = vsel %vm5584, %v6248, %v6250
      %v6252 = vrot.slane %v6113, 1
      %v6253 = vsel %vm5584, %v6250, %v6252
      %v6254 = vrot.slane %v6114, 1
      %v6255 = vsel %vm5584, %v6252, %v6254
      %v6256 = vrot.slane %v6115, 1
      %v6257 = vsel %vm5584, %v6254, %v6256
      %v6258 = vrot.slane %v6116, 1
      %v6259 = vsel %vm5584, %v6256, %v6258
      %v6309 = vadd.f32 %v6019, %v6165
      %v6310 = vadd.f32 %v6020, %v6167
      %v6311 = vadd.f32 %v6021, %v6169
      %v6312 = vadd.f32 %v6022, %v6171
      %v6313 = vadd.f32 %v6023, %v6173
      %v6314 = vadd.f32 %v6024, %v6175
      %v6315 = vadd.f32 %v6025, %v6177
      %v6316 = vadd.f32 %v6026, %v6179
      %v6317 = vadd.f32 %v6027, %v6181
      %v6318 = vadd.f32 %v6028, %v6183
      %v6319 = vadd.f32 %v6029, %v6185
      %v6320 = vadd.f32 %v6030, %v6187
      %v6321 = vadd.f32 %v6031, %v6189
      %v6322 = vadd.f32 %v6032, %v6191
      %v6323 = vadd.f32 %v6033, %v6193
      %v6324 = vadd.f32 %v6034, %v6195
      %v6325 = vadd.f32 %v6035, %v6197
      %v6326 = vadd.f32 %v6036, %v6199
      %v6327 = vadd.f32 %v6037, %v6201
      %v6328 = vadd.f32 %v6038, %v6203
      %v6329 = vadd.f32 %v6039, %v6205
      %v6330 = vadd.f32 %v6040, %v6207
      %v6331 = vadd.f32 %v6041, %v6209
      %v6332 = vadd.f32 %v6042, %v6211
      %v6333 = vadd.f32 %v6043, %v6213
      %v6334 = vadd.f32 %v6044, %v6215
      %v6335 = vadd.f32 %v6045, %v6217
      %v6336 = vadd.f32 %v6046, %v6219
      %v6337 = vadd.f32 %v6047, %v6221
      %v6338 = vadd.f32 %v6048, %v6223
      %v6339 = vadd.f32 %v6049, %v6225
      %v6340 = vadd.f32 %v6050, %v6227
      %v6341 = vadd.f32 %v6051, %v6229
      %v6342 = vadd.f32 %v6052, %v6231
      %v6343 = vadd.f32 %v6053, %v6233
      %v6344 = vadd.f32 %v6054, %v6235
      %v6345 = vadd.f32 %v6055, %v6237
      %v6346 = vadd.f32 %v6056, %v6239
      %v6347 = vadd.f32 %v6057, %v6241
      %v6348 = vadd.f32 %v6058, %v6243
      %v6349 = vadd.f32 %v6059, %v6245
      %v6350 = vadd.f32 %v6060, %v6247
      %v6351 = vadd.f32 %v6061, %v6249
      %v6352 = vadd.f32 %v6062, %v6251
      %v6353 = vadd.f32 %v6063, %v6253
      %v6354 = vadd.f32 %v6064, %v6255
      %v6355 = vadd.f32 %v6065, %v6257
      %v6356 = vadd.f32 %v6066, %v6259
      %v6357 = vadd.f32 %v6067, %v6258
      %v6358 = vperm.slane %v5188, 2
      %v6359 = vmul.f32 %v5133, %v6358
      %v6360 = vmul.f32 %v5134, %v6358
      %v6361 = vmul.f32 %v5135, %v6358
      %v6362 = vmul.f32 %v5136, %v6358
      %v6363 = vmul.f32 %v5137, %v6358
      %v6364 = vmul.f32 %v5138, %v6358
      %v6365 = vmul.f32 %v5139, %v6358
      %v6366 = vmul.f32 %v5140, %v6358
      %v6367 = vmul.f32 %v5141, %v6358
      %v6368 = vmul.f32 %v5142, %v6358
      %v6369 = vmul.f32 %v5143, %v6358
      %v6370 = vmul.f32 %v5144, %v6358
      %v6371 = vmul.f32 %v5145, %v6358
      %v6372 = vmul.f32 %v5146, %v6358
      %v6373 = vmul.f32 %v5147, %v6358
      %v6374 = vmul.f32 %v5148, %v6358
      %v6375 = vmul.f32 %v5149, %v6358
      %v6376 = vmul.f32 %v5150, %v6358
      %v6377 = vmul.f32 %v5151, %v6358
      %v6378 = vmul.f32 %v5152, %v6358
      %v6379 = vmul.f32 %v5153, %v6358
      %v6380 = vmul.f32 %v5154, %v6358
      %v6381 = vmul.f32 %v5155, %v6358
      %v6382 = vmul.f32 %v5156, %v6358
      %v6383 = vmul.f32 %v5157, %v6358
      %v6384 = vmul.f32 %v5158, %v6358
      %v6385 = vmul.f32 %v5159, %v6358
      %v6386 = vmul.f32 %v5160, %v6358
      %v6387 = vmul.f32 %v5161, %v6358
      %v6388 = vmul.f32 %v5162, %v6358
      %v6389 = vmul.f32 %v5163, %v6358
      %v6390 = vmul.f32 %v5164, %v6358
      %v6391 = vmul.f32 %v5165, %v6358
      %v6392 = vmul.f32 %v5166, %v6358
      %v6393 = vmul.f32 %v5167, %v6358
      %v6394 = vmul.f32 %v5168, %v6358
      %v6395 = vmul.f32 %v5169, %v6358
      %v6396 = vmul.f32 %v5170, %v6358
      %v6397 = vmul.f32 %v5171, %v6358
      %v6398 = vmul.f32 %v5172, %v6358
      %v6399 = vmul.f32 %v5173, %v6358
      %v6400 = vmul.f32 %v5174, %v6358
      %v6401 = vmul.f32 %v5175, %v6358
      %v6402 = vmul.f32 %v5176, %v6358
      %v6403 = vmul.f32 %v5177, %v6358
      %v6404 = vmul.f32 %v5178, %v6358
      %v6405 = vmul.f32 %v5179, %v6358
      %v6406 = vmul.f32 %v5180, %v6358
      %v6407 = vmul.f32 %v5181, %v6358
      %vm6457 = vcmask 1045504
      %v6458 = vrot.slane %v6359, 2
      %v6459 = vrot.slane %v6360, 2
      %v6460 = vsel %vm6457, %v6458, %v6459
      %v6461 = vrot.slane %v6361, 2
      %v6462 = vsel %vm6457, %v6459, %v6461
      %v6463 = vrot.slane %v6362, 2
      %v6464 = vsel %vm6457, %v6461, %v6463
      %v6465 = vrot.slane %v6363, 2
      %v6466 = vsel %vm6457, %v6463, %v6465
      %v6467 = vrot.slane %v6364, 2
      %v6468 = vsel %vm6457, %v6465, %v6467
      %v6469 = vrot.slane %v6365, 2
      %v6470 = vsel %vm6457, %v6467, %v6469
      %v6471 = vrot.slane %v6366, 2
      %v6472 = vsel %vm6457, %v6469, %v6471
      %v6473 = vrot.slane %v6367, 2
      %v6474 = vsel %vm6457, %v6471, %v6473
      %v6475 = vrot.slane %v6368, 2
      %v6476 = vsel %vm6457, %v6473, %v6475
      %v6477 = vrot.slane %v6369, 2
      %v6478 = vsel %vm6457, %v6475, %v6477
      %v6479 = vrot.slane %v6370, 2
      %v6480 = vsel %vm6457, %v6477, %v6479
      %v6481 = vrot.slane %v6371, 2
      %v6482 = vsel %vm6457, %v6479, %v6481
      %v6483 = vrot.slane %v6372, 2
      %v6484 = vsel %vm6457, %v6481, %v6483
      %v6485 = vrot.slane %v6373, 2
      %v6486 = vsel %vm6457, %v6483, %v6485
      %v6487 = vrot.slane %v6374, 2
      %v6488 = vsel %vm6457, %v6485, %v6487
      %v6489 = vrot.slane %v6375, 2
      %v6490 = vsel %vm6457, %v6487, %v6489
      %v6491 = vrot.slane %v6376, 2
      %v6492 = vsel %vm6457, %v6489, %v6491
      %v6493 = vrot.slane %v6377, 2
      %v6494 = vsel %vm6457, %v6491, %v6493
      %v6495 = vrot.slane %v6378, 2
      %v6496 = vsel %vm6457, %v6493, %v6495
      %v6497 = vrot.slane %v6379, 2
      %v6498 = vsel %vm6457, %v6495, %v6497
      %v6499 = vrot.slane %v6380, 2
      %v6500 = vsel %vm6457, %v6497, %v6499
      %v6501 = vrot.slane %v6381, 2
      %v6502 = vsel %vm6457, %v6499, %v6501
      %v6503 = vrot.slane %v6382, 2
      %v6504 = vsel %vm6457, %v6501, %v6503
      %v6505 = vrot.slane %v6383, 2
      %v6506 = vsel %vm6457, %v6503, %v6505
      %v6507 = vrot.slane %v6384, 2
      %v6508 = vsel %vm6457, %v6505, %v6507
      %v6509 = vrot.slane %v6385, 2
      %v6510 = vsel %vm6457, %v6507, %v6509
      %v6511 = vrot.slane %v6386, 2
      %v6512 = vsel %vm6457, %v6509, %v6511
      %v6513 = vrot.slane %v6387, 2
      %v6514 = vsel %vm6457, %v6511, %v6513
      %v6515 = vrot.slane %v6388, 2
      %v6516 = vsel %vm6457, %v6513, %v6515
      %v6517 = vrot.slane %v6389, 2
      %v6518 = vsel %vm6457, %v6515, %v6517
      %v6519 = vrot.slane %v6390, 2
      %v6520 = vsel %vm6457, %v6517, %v6519
      %v6521 = vrot.slane %v6391, 2
      %v6522 = vsel %vm6457, %v6519, %v6521
      %v6523 = vrot.slane %v6392, 2
      %v6524 = vsel %vm6457, %v6521, %v6523
      %v6525 = vrot.slane %v6393, 2
      %v6526 = vsel %vm6457, %v6523, %v6525
      %v6527 = vrot.slane %v6394, 2
      %v6528 = vsel %vm6457, %v6525, %v6527
      %v6529 = vrot.slane %v6395, 2
      %v6530 = vsel %vm6457, %v6527, %v6529
      %v6531 = vrot.slane %v6396, 2
      %v6532 = vsel %vm6457, %v6529, %v6531
      %v6533 = vrot.slane %v6397, 2
      %v6534 = vsel %vm6457, %v6531, %v6533
      %v6535 = vrot.slane %v6398, 2
      %v6536 = vsel %vm6457, %v6533, %v6535
      %v6537 = vrot.slane %v6399, 2
      %v6538 = vsel %vm6457, %v6535, %v6537
      %v6539 = vrot.slane %v6400, 2
      %v6540 = vsel %vm6457, %v6537, %v6539
      %v6541 = vrot.slane %v6401, 2
      %v6542 = vsel %vm6457, %v6539, %v6541
      %v6543 = vrot.slane %v6402, 2
      %v6544 = vsel %vm6457, %v6541, %v6543
      %v6545 = vrot.slane %v6403, 2
      %v6546 = vsel %vm6457, %v6543, %v6545
      %v6547 = vrot.slane %v6404, 2
      %v6548 = vsel %vm6457, %v6545, %v6547
      %v6549 = vrot.slane %v6405, 2
      %v6550 = vsel %vm6457, %v6547, %v6549
      %v6551 = vrot.slane %v6406, 2
      %v6552 = vsel %vm6457, %v6549, %v6551
      %v6553 = vrot.slane %v6407, 2
      %v6554 = vsel %vm6457, %v6551, %v6553
      %v6604 = vadd.f32 %v6309, %v6458
      %v6605 = vadd.f32 %v6310, %v6460
      %v6606 = vadd.f32 %v6311, %v6462
      %v6607 = vadd.f32 %v6312, %v6464
      %v6608 = vadd.f32 %v6313, %v6466
      %v6609 = vadd.f32 %v6314, %v6468
      %v6610 = vadd.f32 %v6315, %v6470
      %v6611 = vadd.f32 %v6316, %v6472
      %v6612 = vadd.f32 %v6317, %v6474
      %v6613 = vadd.f32 %v6318, %v6476
      %v6614 = vadd.f32 %v6319, %v6478
      %v6615 = vadd.f32 %v6320, %v6480
      %v6616 = vadd.f32 %v6321, %v6482
      %v6617 = vadd.f32 %v6322, %v6484
      %v6618 = vadd.f32 %v6323, %v6486
      %v6619 = vadd.f32 %v6324, %v6488
      %v6620 = vadd.f32 %v6325, %v6490
      %v6621 = vadd.f32 %v6326, %v6492
      %v6622 = vadd.f32 %v6327, %v6494
      %v6623 = vadd.f32 %v6328, %v6496
      %v6624 = vadd.f32 %v6329, %v6498
      %v6625 = vadd.f32 %v6330, %v6500
      %v6626 = vadd.f32 %v6331, %v6502
      %v6627 = vadd.f32 %v6332, %v6504
      %v6628 = vadd.f32 %v6333, %v6506
      %v6629 = vadd.f32 %v6334, %v6508
      %v6630 = vadd.f32 %v6335, %v6510
      %v6631 = vadd.f32 %v6336, %v6512
      %v6632 = vadd.f32 %v6337, %v6514
      %v6633 = vadd.f32 %v6338, %v6516
      %v6634 = vadd.f32 %v6339, %v6518
      %v6635 = vadd.f32 %v6340, %v6520
      %v6636 = vadd.f32 %v6341, %v6522
      %v6637 = vadd.f32 %v6342, %v6524
      %v6638 = vadd.f32 %v6343, %v6526
      %v6639 = vadd.f32 %v6344, %v6528
      %v6640 = vadd.f32 %v6345, %v6530
      %v6641 = vadd.f32 %v6346, %v6532
      %v6642 = vadd.f32 %v6347, %v6534
      %v6643 = vadd.f32 %v6348, %v6536
      %v6644 = vadd.f32 %v6349, %v6538
      %v6645 = vadd.f32 %v6350, %v6540
      %v6646 = vadd.f32 %v6351, %v6542
      %v6647 = vadd.f32 %v6352, %v6544
      %v6648 = vadd.f32 %v6353, %v6546
      %v6649 = vadd.f32 %v6354, %v6548
      %v6650 = vadd.f32 %v6355, %v6550
      %v6651 = vadd.f32 %v6356, %v6552
      %v6652 = vadd.f32 %v6357, %v6554
      %v6653 = vperm.slane %v5188, 5
      %v6654 = vmul.f32 %v5136, %v6653
      %v6655 = vmul.f32 %v5137, %v6653
      %v6656 = vmul.f32 %v5138, %v6653
      %v6657 = vmul.f32 %v5139, %v6653
      %v6658 = vmul.f32 %v5140, %v6653
      %v6659 = vmul.f32 %v5141, %v6653
      %v6660 = vmul.f32 %v5142, %v6653
      %v6661 = vmul.f32 %v5143, %v6653
      %v6662 = vmul.f32 %v5144, %v6653
      %v6663 = vmul.f32 %v5145, %v6653
      %v6664 = vmul.f32 %v5146, %v6653
      %v6665 = vmul.f32 %v5147, %v6653
      %v6666 = vmul.f32 %v5148, %v6653
      %v6667 = vmul.f32 %v5149, %v6653
      %v6668 = vmul.f32 %v5150, %v6653
      %v6669 = vmul.f32 %v5151, %v6653
      %v6670 = vmul.f32 %v5152, %v6653
      %v6671 = vmul.f32 %v5153, %v6653
      %v6672 = vmul.f32 %v5154, %v6653
      %v6673 = vmul.f32 %v5155, %v6653
      %v6674 = vmul.f32 %v5156, %v6653
      %v6675 = vmul.f32 %v5157, %v6653
      %v6676 = vmul.f32 %v5158, %v6653
      %v6677 = vmul.f32 %v5159, %v6653
      %v6678 = vmul.f32 %v5160, %v6653
      %v6679 = vmul.f32 %v5161, %v6653
      %v6680 = vmul.f32 %v5162, %v6653
      %v6681 = vmul.f32 %v5163, %v6653
      %v6682 = vmul.f32 %v5164, %v6653
      %v6683 = vmul.f32 %v5165, %v6653
      %v6684 = vmul.f32 %v5166, %v6653
      %v6685 = vmul.f32 %v5167, %v6653
      %v6686 = vmul.f32 %v5168, %v6653
      %v6687 = vmul.f32 %v5169, %v6653
      %v6688 = vmul.f32 %v5170, %v6653
      %v6689 = vmul.f32 %v5171, %v6653
      %v6690 = vmul.f32 %v5172, %v6653
      %v6691 = vmul.f32 %v5173, %v6653
      %v6692 = vmul.f32 %v5174, %v6653
      %v6693 = vmul.f32 %v5175, %v6653
      %v6694 = vmul.f32 %v5176, %v6653
      %v6695 = vmul.f32 %v5177, %v6653
      %v6696 = vmul.f32 %v5178, %v6653
      %v6697 = vmul.f32 %v5179, %v6653
      %v6698 = vmul.f32 %v5180, %v6653
      %v6699 = vmul.f32 %v5181, %v6653
      %v6700 = vmul.f32 %v5182, %v6653
      %v6701 = vmul.f32 %v5183, %v6653
      %v6702 = vmul.f32 %v5184, %v6653
      %v6752 = vrot.slane %v6654, 2
      %v6753 = vrot.slane %v6655, 2
      %v6754 = vsel %vm6457, %v6752, %v6753
      %v6755 = vrot.slane %v6656, 2
      %v6756 = vsel %vm6457, %v6753, %v6755
      %v6757 = vrot.slane %v6657, 2
      %v6758 = vsel %vm6457, %v6755, %v6757
      %v6759 = vrot.slane %v6658, 2
      %v6760 = vsel %vm6457, %v6757, %v6759
      %v6761 = vrot.slane %v6659, 2
      %v6762 = vsel %vm6457, %v6759, %v6761
      %v6763 = vrot.slane %v6660, 2
      %v6764 = vsel %vm6457, %v6761, %v6763
      %v6765 = vrot.slane %v6661, 2
      %v6766 = vsel %vm6457, %v6763, %v6765
      %v6767 = vrot.slane %v6662, 2
      %v6768 = vsel %vm6457, %v6765, %v6767
      %v6769 = vrot.slane %v6663, 2
      %v6770 = vsel %vm6457, %v6767, %v6769
      %v6771 = vrot.slane %v6664, 2
      %v6772 = vsel %vm6457, %v6769, %v6771
      %v6773 = vrot.slane %v6665, 2
      %v6774 = vsel %vm6457, %v6771, %v6773
      %v6775 = vrot.slane %v6666, 2
      %v6776 = vsel %vm6457, %v6773, %v6775
      %v6777 = vrot.slane %v6667, 2
      %v6778 = vsel %vm6457, %v6775, %v6777
      %v6779 = vrot.slane %v6668, 2
      %v6780 = vsel %vm6457, %v6777, %v6779
      %v6781 = vrot.slane %v6669, 2
      %v6782 = vsel %vm6457, %v6779, %v6781
      %v6783 = vrot.slane %v6670, 2
      %v6784 = vsel %vm6457, %v6781, %v6783
      %v6785 = vrot.slane %v6671, 2
      %v6786 = vsel %vm6457, %v6783, %v6785
      %v6787 = vrot.slane %v6672, 2
      %v6788 = vsel %vm6457, %v6785, %v6787
      %v6789 = vrot.slane %v6673, 2
      %v6790 = vsel %vm6457, %v6787, %v6789
      %v6791 = vrot.slane %v6674, 2
      %v6792 = vsel %vm6457, %v6789, %v6791
      %v6793 = vrot.slane %v6675, 2
      %v6794 = vsel %vm6457, %v6791, %v6793
      %v6795 = vrot.slane %v6676, 2
      %v6796 = vsel %vm6457, %v6793, %v6795
      %v6797 = vrot.slane %v6677, 2
      %v6798 = vsel %vm6457, %v6795, %v6797
      %v6799 = vrot.slane %v6678, 2
      %v6800 = vsel %vm6457, %v6797, %v6799
      %v6801 = vrot.slane %v6679, 2
      %v6802 = vsel %vm6457, %v6799, %v6801
      %v6803 = vrot.slane %v6680, 2
      %v6804 = vsel %vm6457, %v6801, %v6803
      %v6805 = vrot.slane %v6681, 2
      %v6806 = vsel %vm6457, %v6803, %v6805
      %v6807 = vrot.slane %v6682, 2
      %v6808 = vsel %vm6457, %v6805, %v6807
      %v6809 = vrot.slane %v6683, 2
      %v6810 = vsel %vm6457, %v6807, %v6809
      %v6811 = vrot.slane %v6684, 2
      %v6812 = vsel %vm6457, %v6809, %v6811
      %v6813 = vrot.slane %v6685, 2
      %v6814 = vsel %vm6457, %v6811, %v6813
      %v6815 = vrot.slane %v6686, 2
      %v6816 = vsel %vm6457, %v6813, %v6815
      %v6817 = vrot.slane %v6687, 2
      %v6818 = vsel %vm6457, %v6815, %v6817
      %v6819 = vrot.slane %v6688, 2
      %v6820 = vsel %vm6457, %v6817, %v6819
      %v6821 = vrot.slane %v6689, 2
      %v6822 = vsel %vm6457, %v6819, %v6821
      %v6823 = vrot.slane %v6690, 2
      %v6824 = vsel %vm6457, %v6821, %v6823
      %v6825 = vrot.slane %v6691, 2
      %v6826 = vsel %vm6457, %v6823, %v6825
      %v6827 = vrot.slane %v6692, 2
      %v6828 = vsel %vm6457, %v6825, %v6827
      %v6829 = vrot.slane %v6693, 2
      %v6830 = vsel %vm6457, %v6827, %v6829
      %v6831 = vrot.slane %v6694, 2
      %v6832 = vsel %vm6457, %v6829, %v6831
      %v6833 = vrot.slane %v6695, 2
      %v6834 = vsel %vm6457, %v6831, %v6833
      %v6835 = vrot.slane %v6696, 2
      %v6836 = vsel %vm6457, %v6833, %v6835
      %v6837 = vrot.slane %v6697, 2
      %v6838 = vsel %vm6457, %v6835, %v6837
      %v6839 = vrot.slane %v6698, 2
      %v6840 = vsel %vm6457, %v6837, %v6839
      %v6841 = vrot.slane %v6699, 2
      %v6842 = vsel %vm6457, %v6839, %v6841
      %v6843 = vrot.slane %v6700, 2
      %v6844 = vsel %vm6457, %v6841, %v6843
      %v6845 = vrot.slane %v6701, 2
      %v6846 = vsel %vm6457, %v6843, %v6845
      %v6847 = vrot.slane %v6702, 2
      %v6848 = vsel %vm6457, %v6845, %v6847
      %v6898 = vadd.f32 %v6604, %v6752
      %v6899 = vadd.f32 %v6605, %v6754
      %v6900 = vadd.f32 %v6606, %v6756
      %v6901 = vadd.f32 %v6607, %v6758
      %v6902 = vadd.f32 %v6608, %v6760
      %v6903 = vadd.f32 %v6609, %v6762
      %v6904 = vadd.f32 %v6610, %v6764
      %v6905 = vadd.f32 %v6611, %v6766
      %v6906 = vadd.f32 %v6612, %v6768
      %v6907 = vadd.f32 %v6613, %v6770
      %v6908 = vadd.f32 %v6614, %v6772
      %v6909 = vadd.f32 %v6615, %v6774
      %v6910 = vadd.f32 %v6616, %v6776
      %v6911 = vadd.f32 %v6617, %v6778
      %v6912 = vadd.f32 %v6618, %v6780
      %v6913 = vadd.f32 %v6619, %v6782
      %v6914 = vadd.f32 %v6620, %v6784
      %v6915 = vadd.f32 %v6621, %v6786
      %v6916 = vadd.f32 %v6622, %v6788
      %v6917 = vadd.f32 %v6623, %v6790
      %v6918 = vadd.f32 %v6624, %v6792
      %v6919 = vadd.f32 %v6625, %v6794
      %v6920 = vadd.f32 %v6626, %v6796
      %v6921 = vadd.f32 %v6627, %v6798
      %v6922 = vadd.f32 %v6628, %v6800
      %v6923 = vadd.f32 %v6629, %v6802
      %v6924 = vadd.f32 %v6630, %v6804
      %v6925 = vadd.f32 %v6631, %v6806
      %v6926 = vadd.f32 %v6632, %v6808
      %v6927 = vadd.f32 %v6633, %v6810
      %v6928 = vadd.f32 %v6634, %v6812
      %v6929 = vadd.f32 %v6635, %v6814
      %v6930 = vadd.f32 %v6636, %v6816
      %v6931 = vadd.f32 %v6637, %v6818
      %v6932 = vadd.f32 %v6638, %v6820
      %v6933 = vadd.f32 %v6639, %v6822
      %v6934 = vadd.f32 %v6640, %v6824
      %v6935 = vadd.f32 %v6641, %v6826
      %v6936 = vadd.f32 %v6642, %v6828
      %v6937 = vadd.f32 %v6643, %v6830
      %v6938 = vadd.f32 %v6644, %v6832
      %v6939 = vadd.f32 %v6645, %v6834
      %v6940 = vadd.f32 %v6646, %v6836
      %v6941 = vadd.f32 %v6647, %v6838
      %v6942 = vadd.f32 %v6648, %v6840
      %v6943 = vadd.f32 %v6649, %v6842
      %v6944 = vadd.f32 %v6650, %v6844
      %v6945 = vadd.f32 %v6651, %v6846
      %v6946 = vadd.f32 %v6652, %v6848
      %v6947 = vperm.slane %v5189, 0
      %v6948 = vmul.f32 %v5139, %v6947
      %v6949 = vmul.f32 %v5140, %v6947
      %v6950 = vmul.f32 %v5141, %v6947
      %v6951 = vmul.f32 %v5142, %v6947
      %v6952 = vmul.f32 %v5143, %v6947
      %v6953 = vmul.f32 %v5144, %v6947
      %v6954 = vmul.f32 %v5145, %v6947
      %v6955 = vmul.f32 %v5146, %v6947
      %v6956 = vmul.f32 %v5147, %v6947
      %v6957 = vmul.f32 %v5148, %v6947
      %v6958 = vmul.f32 %v5149, %v6947
      %v6959 = vmul.f32 %v5150, %v6947
      %v6960 = vmul.f32 %v5151, %v6947
      %v6961 = vmul.f32 %v5152, %v6947
      %v6962 = vmul.f32 %v5153, %v6947
      %v6963 = vmul.f32 %v5154, %v6947
      %v6964 = vmul.f32 %v5155, %v6947
      %v6965 = vmul.f32 %v5156, %v6947
      %v6966 = vmul.f32 %v5157, %v6947
      %v6967 = vmul.f32 %v5158, %v6947
      %v6968 = vmul.f32 %v5159, %v6947
      %v6969 = vmul.f32 %v5160, %v6947
      %v6970 = vmul.f32 %v5161, %v6947
      %v6971 = vmul.f32 %v5162, %v6947
      %v6972 = vmul.f32 %v5163, %v6947
      %v6973 = vmul.f32 %v5164, %v6947
      %v6974 = vmul.f32 %v5165, %v6947
      %v6975 = vmul.f32 %v5166, %v6947
      %v6976 = vmul.f32 %v5167, %v6947
      %v6977 = vmul.f32 %v5168, %v6947
      %v6978 = vmul.f32 %v5169, %v6947
      %v6979 = vmul.f32 %v5170, %v6947
      %v6980 = vmul.f32 %v5171, %v6947
      %v6981 = vmul.f32 %v5172, %v6947
      %v6982 = vmul.f32 %v5173, %v6947
      %v6983 = vmul.f32 %v5174, %v6947
      %v6984 = vmul.f32 %v5175, %v6947
      %v6985 = vmul.f32 %v5176, %v6947
      %v6986 = vmul.f32 %v5177, %v6947
      %v6987 = vmul.f32 %v5178, %v6947
      %v6988 = vmul.f32 %v5179, %v6947
      %v6989 = vmul.f32 %v5180, %v6947
      %v6990 = vmul.f32 %v5181, %v6947
      %v6991 = vmul.f32 %v5182, %v6947
      %v6992 = vmul.f32 %v5183, %v6947
      %v6993 = vmul.f32 %v5184, %v6947
      %v6994 = vmul.f32 %v5185, %v6947
      %v6995 = vmul.f32 %v5186, %v6947
      %v6996 = vmul.f32 %v5187, %v6947
      %v7046 = vrot.slane %v6948, 2
      %v7047 = vrot.slane %v6949, 2
      %v7048 = vsel %vm6457, %v7046, %v7047
      %v7049 = vrot.slane %v6950, 2
      %v7050 = vsel %vm6457, %v7047, %v7049
      %v7051 = vrot.slane %v6951, 2
      %v7052 = vsel %vm6457, %v7049, %v7051
      %v7053 = vrot.slane %v6952, 2
      %v7054 = vsel %vm6457, %v7051, %v7053
      %v7055 = vrot.slane %v6953, 2
      %v7056 = vsel %vm6457, %v7053, %v7055
      %v7057 = vrot.slane %v6954, 2
      %v7058 = vsel %vm6457, %v7055, %v7057
      %v7059 = vrot.slane %v6955, 2
      %v7060 = vsel %vm6457, %v7057, %v7059
      %v7061 = vrot.slane %v6956, 2
      %v7062 = vsel %vm6457, %v7059, %v7061
      %v7063 = vrot.slane %v6957, 2
      %v7064 = vsel %vm6457, %v7061, %v7063
      %v7065 = vrot.slane %v6958, 2
      %v7066 = vsel %vm6457, %v7063, %v7065
      %v7067 = vrot.slane %v6959, 2
      %v7068 = vsel %vm6457, %v7065, %v7067
      %v7069 = vrot.slane %v6960, 2
      %v7070 = vsel %vm6457, %v7067, %v7069
      %v7071 = vrot.slane %v6961, 2
      %v7072 = vsel %vm6457, %v7069, %v7071
      %v7073 = vrot.slane %v6962, 2
      %v7074 = vsel %vm6457, %v7071, %v7073
      %v7075 = vrot.slane %v6963, 2
      %v7076 = vsel %vm6457, %v7073, %v7075
      %v7077 = vrot.slane %v6964, 2
      %v7078 = vsel %vm6457, %v7075, %v7077
      %v7079 = vrot.slane %v6965, 2
      %v7080 = vsel %vm6457, %v7077, %v7079
      %v7081 = vrot.slane %v6966, 2
      %v7082 = vsel %vm6457, %v7079, %v7081
      %v7083 = vrot.slane %v6967, 2
      %v7084 = vsel %vm6457, %v7081, %v7083
      %v7085 = vrot.slane %v6968, 2
      %v7086 = vsel %vm6457, %v7083, %v7085
      %v7087 = vrot.slane %v6969, 2
      %v7088 = vsel %vm6457, %v7085, %v7087
      %v7089 = vrot.slane %v6970, 2
      %v7090 = vsel %vm6457, %v7087, %v7089
      %v7091 = vrot.slane %v6971, 2
      %v7092 = vsel %vm6457, %v7089, %v7091
      %v7093 = vrot.slane %v6972, 2
      %v7094 = vsel %vm6457, %v7091, %v7093
      %v7095 = vrot.slane %v6973, 2
      %v7096 = vsel %vm6457, %v7093, %v7095
      %v7097 = vrot.slane %v6974, 2
      %v7098 = vsel %vm6457, %v7095, %v7097
      %v7099 = vrot.slane %v6975, 2
      %v7100 = vsel %vm6457, %v7097, %v7099
      %v7101 = vrot.slane %v6976, 2
      %v7102 = vsel %vm6457, %v7099, %v7101
      %v7103 = vrot.slane %v6977, 2
      %v7104 = vsel %vm6457, %v7101, %v7103
      %v7105 = vrot.slane %v6978, 2
      %v7106 = vsel %vm6457, %v7103, %v7105
      %v7107 = vrot.slane %v6979, 2
      %v7108 = vsel %vm6457, %v7105, %v7107
      %v7109 = vrot.slane %v6980, 2
      %v7110 = vsel %vm6457, %v7107, %v7109
      %v7111 = vrot.slane %v6981, 2
      %v7112 = vsel %vm6457, %v7109, %v7111
      %v7113 = vrot.slane %v6982, 2
      %v7114 = vsel %vm6457, %v7111, %v7113
      %v7115 = vrot.slane %v6983, 2
      %v7116 = vsel %vm6457, %v7113, %v7115
      %v7117 = vrot.slane %v6984, 2
      %v7118 = vsel %vm6457, %v7115, %v7117
      %v7119 = vrot.slane %v6985, 2
      %v7120 = vsel %vm6457, %v7117, %v7119
      %v7121 = vrot.slane %v6986, 2
      %v7122 = vsel %vm6457, %v7119, %v7121
      %v7123 = vrot.slane %v6987, 2
      %v7124 = vsel %vm6457, %v7121, %v7123
      %v7125 = vrot.slane %v6988, 2
      %v7126 = vsel %vm6457, %v7123, %v7125
      %v7127 = vrot.slane %v6989, 2
      %v7128 = vsel %vm6457, %v7125, %v7127
      %v7129 = vrot.slane %v6990, 2
      %v7130 = vsel %vm6457, %v7127, %v7129
      %v7131 = vrot.slane %v6991, 2
      %v7132 = vsel %vm6457, %v7129, %v7131
      %v7133 = vrot.slane %v6992, 2
      %v7134 = vsel %vm6457, %v7131, %v7133
      %v7135 = vrot.slane %v6993, 2
      %v7136 = vsel %vm6457, %v7133, %v7135
      %v7137 = vrot.slane %v6994, 2
      %v7138 = vsel %vm6457, %v7135, %v7137
      %v7139 = vrot.slane %v6995, 2
      %v7140 = vsel %vm6457, %v7137, %v7139
      %v7141 = vrot.slane %v6996, 2
      %v7142 = vsel %vm6457, %v7139, %v7141
      %v7192 = vadd.f32 %v6898, %v7046
      %v7193 = vadd.f32 %v6899, %v7048
      %v7194 = vadd.f32 %v6900, %v7050
      %v7195 = vadd.f32 %v6901, %v7052
      %v7196 = vadd.f32 %v6902, %v7054
      %v7197 = vadd.f32 %v6903, %v7056
      %v7198 = vadd.f32 %v6904, %v7058
      %v7199 = vadd.f32 %v6905, %v7060
      %v7200 = vadd.f32 %v6906, %v7062
      %v7201 = vadd.f32 %v6907, %v7064
      %v7202 = vadd.f32 %v6908, %v7066
      %v7203 = vadd.f32 %v6909, %v7068
      %v7204 = vadd.f32 %v6910, %v7070
      %v7205 = vadd.f32 %v6911, %v7072
      %v7206 = vadd.f32 %v6912, %v7074
      %v7207 = vadd.f32 %v6913, %v7076
      %v7208 = vadd.f32 %v6914, %v7078
      %v7209 = vadd.f32 %v6915, %v7080
      %v7210 = vadd.f32 %v6916, %v7082
      %v7211 = vadd.f32 %v6917, %v7084
      %v7212 = vadd.f32 %v6918, %v7086
      %v7213 = vadd.f32 %v6919, %v7088
      %v7214 = vadd.f32 %v6920, %v7090
      %v7215 = vadd.f32 %v6921, %v7092
      %v7216 = vadd.f32 %v6922, %v7094
      %v7217 = vadd.f32 %v6923, %v7096
      %v7218 = vadd.f32 %v6924, %v7098
      %v7219 = vadd.f32 %v6925, %v7100
      %v7220 = vadd.f32 %v6926, %v7102
      %v7221 = vadd.f32 %v6927, %v7104
      %v7222 = vadd.f32 %v6928, %v7106
      %v7223 = vadd.f32 %v6929, %v7108
      %v7224 = vadd.f32 %v6930, %v7110
      %v7225 = vadd.f32 %v6931, %v7112
      %v7226 = vadd.f32 %v6932, %v7114
      %v7227 = vadd.f32 %v6933, %v7116
      %v7228 = vadd.f32 %v6934, %v7118
      %v7229 = vadd.f32 %v6935, %v7120
      %v7230 = vadd.f32 %v6936, %v7122
      %v7231 = vadd.f32 %v6937, %v7124
      %v7232 = vadd.f32 %v6938, %v7126
      %v7233 = vadd.f32 %v6939, %v7128
      %v7234 = vadd.f32 %v6940, %v7130
      %v7235 = vadd.f32 %v6941, %v7132
      %v7236 = vadd.f32 %v6942, %v7134
      %v7237 = vadd.f32 %v6943, %v7136
      %v7238 = vadd.f32 %v6944, %v7138
      %v7239 = vadd.f32 %v6945, %v7140
      %v7240 = vadd.f32 %v6946, %v7142
      %v7241 = vld [vmem:[%s14] sm:$0x1]
      %v7243 = vperm.slane %v7241, 0
      %v7245 = vadd.f32 %v7192, %v7243
      %v7246 = vadd.f32 %v7193, %v7243
      %v7247 = vadd.f32 %v7194, %v7243
      %v7248 = vadd.f32 %v7195, %v7243
      %v7249 = vadd.f32 %v7196, %v7243
      %v7250 = vadd.f32 %v7197, %v7243
      %v7251 = vadd.f32 %v7198, %v7243
      %v7252 = vadd.f32 %v7199, %v7243
      %v7253 = vadd.f32 %v7200, %v7243
      %v7254 = vadd.f32 %v7201, %v7243
      %v7255 = vadd.f32 %v7202, %v7243
      %v7256 = vadd.f32 %v7203, %v7243
      %v7257 = vadd.f32 %v7204, %v7243
      %v7258 = vadd.f32 %v7205, %v7243
      %v7259 = vadd.f32 %v7206, %v7243
      %v7260 = vadd.f32 %v7207, %v7243
      %v7261 = vadd.f32 %v7208, %v7243
      %v7262 = vadd.f32 %v7209, %v7243
      %v7263 = vadd.f32 %v7210, %v7243
      %v7264 = vadd.f32 %v7211, %v7243
      %v7265 = vadd.f32 %v7212, %v7243
      %v7266 = vadd.f32 %v7213, %v7243
      %v7267 = vadd.f32 %v7214, %v7243
      %v7268 = vadd.f32 %v7215, %v7243
      %v7269 = vadd.f32 %v7216, %v7243
      %v7270 = vadd.f32 %v7217, %v7243
      %v7271 = vadd.f32 %v7218, %v7243
      %v7272 = vadd.f32 %v7219, %v7243
      %v7273 = vadd.f32 %v7220, %v7243
      %v7274 = vadd.f32 %v7221, %v7243
      %v7275 = vadd.f32 %v7222, %v7243
      %v7276 = vadd.f32 %v7223, %v7243
      %v7277 = vadd.f32 %v7224, %v7243
      %v7278 = vadd.f32 %v7225, %v7243
      %v7279 = vadd.f32 %v7226, %v7243
      %v7280 = vadd.f32 %v7227, %v7243
      %v7281 = vadd.f32 %v7228, %v7243
      %v7282 = vadd.f32 %v7229, %v7243
      %v7283 = vadd.f32 %v7230, %v7243
      %v7284 = vadd.f32 %v7231, %v7243
      %v7285 = vadd.f32 %v7232, %v7243
      %v7286 = vadd.f32 %v7233, %v7243
      %v7287 = vadd.f32 %v7234, %v7243
      %v7288 = vadd.f32 %v7235, %v7243
      %v7289 = vadd.f32 %v7236, %v7243
      %v7290 = vadd.f32 %v7237, %v7243
      %v7291 = vadd.f32 %v7238, %v7243
      %v7292 = vadd.f32 %v7239, %v7243
      %v7293 = vadd.f32 %v7240, %v7243
      %v7294 = vrot.slane %v4384, 1
      %v7295 = vrot.slane %v4389, 1
      %v7296 = vsel %vm5584, %v7294, %v7295
      %v7297 = vrot.slane %v4394, 1
      %v7298 = vsel %vm5584, %v7295, %v7297
      %v7299 = vrot.slane %v4399, 1
      %v7300 = vsel %vm5584, %v7297, %v7299
      %v7301 = vrot.slane %v4404, 1
      %v7302 = vsel %vm5584, %v7299, %v7301
      %v7303 = vrot.slane %v4409, 1
      %v7304 = vsel %vm5584, %v7301, %v7303
      %v7305 = vrot.slane %v4414, 1
      %v7306 = vsel %vm5584, %v7303, %v7305
      %v7307 = vrot.slane %v4419, 1
      %v7308 = vsel %vm5584, %v7305, %v7307
      %v7309 = vrot.slane %v4424, 1
      %v7310 = vsel %vm5584, %v7307, %v7309
      %v7311 = vrot.slane %v4429, 1
      %v7312 = vsel %vm5584, %v7309, %v7311
      %v7313 = vrot.slane %v4434, 1
      %v7314 = vsel %vm5584, %v7311, %v7313
      %v7315 = vrot.slane %v4439, 1
      %v7316 = vsel %vm5584, %v7313, %v7315
      %v7317 = vrot.slane %v4444, 1
      %v7318 = vsel %vm5584, %v7315, %v7317
      %v7319 = vrot.slane %v4449, 1
      %v7320 = vsel %vm5584, %v7317, %v7319
      %v7321 = vrot.slane %v4454, 1
      %v7322 = vsel %vm5584, %v7319, %v7321
      %v7323 = vrot.slane %v4459, 1
      %v7324 = vsel %vm5584, %v7321, %v7323
      %v7325 = vrot.slane %v4464, 1
      %v7326 = vsel %vm5584, %v7323, %v7325
      %v7327 = vrot.slane %v4469, 1
      %v7328 = vsel %vm5584, %v7325, %v7327
      %v7329 = vrot.slane %v4474, 1
      %v7330 = vsel %vm5584, %v7327, %v7329
      %v7331 = vrot.slane %v4479, 1
      %v7332 = vsel %vm5584, %v7329, %v7331
      %v7333 = vrot.slane %v4484, 1
      %v7334 = vsel %vm5584, %v7331, %v7333
      %v7335 = vrot.slane %v4489, 1
      %v7336 = vsel %vm5584, %v7333, %v7335
      %v7337 = vrot.slane %v4494, 1
      %v7338 = vsel %vm5584, %v7335, %v7337
      %v7339 = vrot.slane %v4499, 1
      %v7340 = vsel %vm5584, %v7337, %v7339
      %v7341 = vrot.slane %v4504, 1
      %v7342 = vsel %vm5584, %v7339, %v7341
      %v7343 = vrot.slane %v4509, 1
      %v7344 = vsel %vm5584, %v7341, %v7343
      %v7345 = vrot.slane %v4514, 1
      %v7346 = vsel %vm5584, %v7343, %v7345
      %v7347 = vrot.slane %v4519, 1
      %v7348 = vsel %vm5584, %v7345, %v7347
      %v7349 = vrot.slane %v4524, 1
      %v7350 = vsel %vm5584, %v7347, %v7349
      %v7351 = vrot.slane %v4529, 1
      %v7352 = vsel %vm5584, %v7349, %v7351
      %v7353 = vrot.slane %v4534, 1
      %v7354 = vsel %vm5584, %v7351, %v7353
      %v7355 = vrot.slane %v4539, 1
      %v7356 = vsel %vm5584, %v7353, %v7355
      %v7357 = vrot.slane %v4544, 1
      %v7358 = vsel %vm5584, %v7355, %v7357
      %v7359 = vrot.slane %v4549, 1
      %v7360 = vsel %vm5584, %v7357, %v7359
      %v7361 = vrot.slane %v4554, 1
      %v7362 = vsel %vm5584, %v7359, %v7361
      %v7363 = vrot.slane %v4559, 1
      %v7364 = vsel %vm5584, %v7361, %v7363
      %v7365 = vrot.slane %v4564, 1
      %v7366 = vsel %vm5584, %v7363, %v7365
      %v7367 = vrot.slane %v4569, 1
      %v7368 = vsel %vm5584, %v7365, %v7367
      %v7369 = vrot.slane %v4574, 1
      %v7370 = vsel %vm5584, %v7367, %v7369
      %v7371 = vrot.slane %v4579, 1
      %v7372 = vsel %vm5584, %v7369, %v7371
      %v7373 = vrot.slane %v4584, 1
      %v7374 = vsel %vm5584, %v7371, %v7373
      %v7375 = vrot.slane %v4589, 1
      %v7376 = vsel %vm5584, %v7373, %v7375
      %v7377 = vrot.slane %v4594, 1
      %v7378 = vsel %vm5584, %v7375, %v7377
      %v7379 = vrot.slane %v4599, 1
      %v7380 = vsel %vm5584, %v7377, %v7379
      %v7381 = vrot.slane %v4604, 1
      %v7382 = vsel %vm5584, %v7379, %v7381
      %v7383 = vrot.slane %v4609, 1
      %v7384 = vsel %vm5584, %v7381, %v7383
      %v7385 = vrot.slane %v4614, 1
      %v7386 = vsel %vm5584, %v7383, %v7385
      %v7387 = vrot.slane %v4619, 1
      %v7388 = vsel %vm5584, %v7385, %v7387
      %v7438 = vmul.f32 %v7245, %v7294
      %v7439 = vmul.f32 %v7246, %v7296
      %v7440 = vmul.f32 %v7247, %v7298
      %v7441 = vmul.f32 %v7248, %v7300
      %v7442 = vmul.f32 %v7249, %v7302
      %v7443 = vmul.f32 %v7250, %v7304
      %v7444 = vmul.f32 %v7251, %v7306
      %v7445 = vmul.f32 %v7252, %v7308
      %v7446 = vmul.f32 %v7253, %v7310
      %v7447 = vmul.f32 %v7254, %v7312
      %v7448 = vmul.f32 %v7255, %v7314
      %v7449 = vmul.f32 %v7256, %v7316
      %v7450 = vmul.f32 %v7257, %v7318
      %v7451 = vmul.f32 %v7258, %v7320
      %v7452 = vmul.f32 %v7259, %v7322
      %v7453 = vmul.f32 %v7260, %v7324
      %v7454 = vmul.f32 %v7261, %v7326
      %v7455 = vmul.f32 %v7262, %v7328
      %v7456 = vmul.f32 %v7263, %v7330
      %v7457 = vmul.f32 %v7264, %v7332
      %v7458 = vmul.f32 %v7265, %v7334
      %v7459 = vmul.f32 %v7266, %v7336
      %v7460 = vmul.f32 %v7267, %v7338
      %v7461 = vmul.f32 %v7268, %v7340
      %v7462 = vmul.f32 %v7269, %v7342
      %v7463 = vmul.f32 %v7270, %v7344
      %v7464 = vmul.f32 %v7271, %v7346
      %v7465 = vmul.f32 %v7272, %v7348
      %v7466 = vmul.f32 %v7273, %v7350
      %v7467 = vmul.f32 %v7274, %v7352
      %v7468 = vmul.f32 %v7275, %v7354
      %v7469 = vmul.f32 %v7276, %v7356
      %v7470 = vmul.f32 %v7277, %v7358
      %v7471 = vmul.f32 %v7278, %v7360
      %v7472 = vmul.f32 %v7279, %v7362
      %v7473 = vmul.f32 %v7280, %v7364
      %v7474 = vmul.f32 %v7281, %v7366
      %v7475 = vmul.f32 %v7282, %v7368
      %v7476 = vmul.f32 %v7283, %v7370
      %v7477 = vmul.f32 %v7284, %v7372
      %v7478 = vmul.f32 %v7285, %v7374
      %v7479 = vmul.f32 %v7286, %v7376
      %v7480 = vmul.f32 %v7287, %v7378
      %v7481 = vmul.f32 %v7288, %v7380
      %v7482 = vmul.f32 %v7289, %v7382
      %v7483 = vmul.f32 %v7290, %v7384
      %v7484 = vmul.f32 %v7291, %v7386
      %v7485 = vmul.f32 %v7292, %v7388
      %v7486 = vmul.f32 %v7293, %v7387
      %v7487 = vmul.f32 %v4621, %v4621
      %v7488 = vmul.f32 %v4622, %v4622
      %v7489 = vmul.f32 %v4623, %v4623
      %v7490 = vmul.f32 %v4624, %v4624
      %v7491 = vmul.f32 %v4625, %v4625
      %v7492 = vmul.f32 %v4626, %v4626
      %v7493 = vmul.f32 %v4627, %v4627
      %v7494 = vmul.f32 %v4628, %v4628
      %v7495 = vmul.f32 %v4629, %v4629
      %v7496 = vmul.f32 %v4630, %v4630
      %v7497 = vmul.f32 %v4631, %v4631
      %v7498 = vmul.f32 %v4632, %v4632
      %v7499 = vmul.f32 %v4633, %v4633
      %v7500 = vmul.f32 %v4634, %v4634
      %v7501 = vmul.f32 %v4635, %v4635
      %v7502 = vmul.f32 %v4636, %v4636
      %v7503 = vmul.f32 %v4637, %v4637
      %v7504 = vmul.f32 %v4638, %v4638
      %v7505 = vmul.f32 %v4639, %v4639
      %v7506 = vmul.f32 %v4640, %v4640
      %v7507 = vmul.f32 %v4641, %v4641
      %v7508 = vmul.f32 %v4642, %v4642
      %v7509 = vmul.f32 %v4643, %v4643
      %v7510 = vmul.f32 %v4644, %v4644
      %v7511 = vmul.f32 %v4645, %v4645
      %v7512 = vmul.f32 %v4646, %v4646
      %v7513 = vmul.f32 %v4647, %v4647
      %v7514 = vmul.f32 %v4648, %v4648
      %v7515 = vmul.f32 %v4649, %v4649
      %v7516 = vmul.f32 %v4650, %v4650
      %v7517 = vmul.f32 %v4651, %v4651
      %v7518 = vmul.f32 %v4652, %v4652
      %v7519 = vmul.f32 %v4653, %v4653
      %v7520 = vmul.f32 %v4654, %v4654
      %v7521 = vmul.f32 %v4655, %v4655
      %v7522 = vmul.f32 %v4656, %v4656
      %v7523 = vmul.f32 %v4657, %v4657
      %v7524 = vmul.f32 %v4658, %v4658
      %v7525 = vmul.f32 %v4659, %v4659
      %v7526 = vmul.f32 %v4660, %v4660
      %v7527 = vmul.f32 %v4661, %v4661
      %v7528 = vmul.f32 %v4662, %v4662
      %v7529 = vmul.f32 %v4663, %v4663
      %v7530 = vmul.f32 %v4664, %v4664
      %v7531 = vmul.f32 %v4665, %v4665
      %v7532 = vmul.f32 %v4666, %v4666
      %v7533 = vmul.f32 %v4667, %v4667
      %v7534 = vmul.f32 %v4668, %v4668
      %v7535 = vsel %vm889, %v7487, 0.0
      %v7536 = vsel %vm889, %v7488, 0.0
      %v7537 = vadd.f32 %v7535, %v7536
      %v7538 = vsel %vm889, %v7489, 0.0
      %v7539 = vadd.f32 %v7537, %v7538
      %v7540 = vsel %vm889, %v7490, 0.0
      %v7541 = vadd.f32 %v7539, %v7540
      %v7542 = vsel %vm889, %v7491, 0.0
      %v7543 = vadd.f32 %v7541, %v7542
      %v7544 = vsel %vm889, %v7492, 0.0
      %v7545 = vadd.f32 %v7543, %v7544
      %v7546 = vsel %vm889, %v7493, 0.0
      %v7547 = vadd.f32 %v7545, %v7546
      %v7548 = vsel %vm889, %v7494, 0.0
      %v7549 = vadd.f32 %v7547, %v7548
      %v7550 = vsel %vm889, %v7495, 0.0
      %v7551 = vadd.f32 %v7549, %v7550
      %v7552 = vsel %vm889, %v7496, 0.0
      %v7553 = vadd.f32 %v7551, %v7552
      %v7554 = vsel %vm889, %v7497, 0.0
      %v7555 = vadd.f32 %v7553, %v7554
      %v7556 = vsel %vm889, %v7498, 0.0
      %v7557 = vadd.f32 %v7555, %v7556
      %v7558 = vsel %vm889, %v7499, 0.0
      %v7559 = vadd.f32 %v7557, %v7558
      %v7560 = vsel %vm889, %v7500, 0.0
      %v7561 = vadd.f32 %v7559, %v7560
      %v7562 = vsel %vm889, %v7501, 0.0
      %v7563 = vadd.f32 %v7561, %v7562
      %v7564 = vsel %vm889, %v7502, 0.0
      %v7565 = vadd.f32 %v7563, %v7564
      %v7566 = vsel %vm889, %v7503, 0.0
      %v7567 = vadd.f32 %v7565, %v7566
      %v7568 = vsel %vm889, %v7504, 0.0
      %v7569 = vadd.f32 %v7567, %v7568
      %v7570 = vsel %vm889, %v7505, 0.0
      %v7571 = vadd.f32 %v7569, %v7570
      %v7572 = vsel %vm889, %v7506, 0.0
      %v7573 = vadd.f32 %v7571, %v7572
      %v7574 = vsel %vm889, %v7507, 0.0
      %v7575 = vadd.f32 %v7573, %v7574
      %v7576 = vsel %vm889, %v7508, 0.0
      %v7577 = vadd.f32 %v7575, %v7576
      %v7578 = vsel %vm889, %v7509, 0.0
      %v7579 = vadd.f32 %v7577, %v7578
      %v7580 = vsel %vm889, %v7510, 0.0
      %v7581 = vadd.f32 %v7579, %v7580
      %v7582 = vsel %vm889, %v7511, 0.0
      %v7583 = vadd.f32 %v7581, %v7582
      %v7584 = vsel %vm889, %v7512, 0.0
      %v7585 = vadd.f32 %v7583, %v7584
      %v7586 = vsel %vm889, %v7513, 0.0
      %v7587 = vadd.f32 %v7585, %v7586
      %v7588 = vsel %vm889, %v7514, 0.0
      %v7589 = vadd.f32 %v7587, %v7588
      %v7590 = vsel %vm889, %v7515, 0.0
      %v7591 = vadd.f32 %v7589, %v7590
      %v7592 = vsel %vm889, %v7516, 0.0
      %v7593 = vadd.f32 %v7591, %v7592
      %v7594 = vsel %vm889, %v7517, 0.0
      %v7595 = vadd.f32 %v7593, %v7594
      %v7596 = vsel %vm889, %v7518, 0.0
      %v7597 = vadd.f32 %v7595, %v7596
      %v7598 = vsel %vm889, %v7519, 0.0
      %v7599 = vadd.f32 %v7597, %v7598
      %v7600 = vsel %vm889, %v7520, 0.0
      %v7601 = vadd.f32 %v7599, %v7600
      %v7602 = vsel %vm889, %v7521, 0.0
      %v7603 = vadd.f32 %v7601, %v7602
      %v7604 = vsel %vm889, %v7522, 0.0
      %v7605 = vadd.f32 %v7603, %v7604
      %v7606 = vsel %vm889, %v7523, 0.0
      %v7607 = vadd.f32 %v7605, %v7606
      %v7608 = vsel %vm889, %v7524, 0.0
      %v7609 = vadd.f32 %v7607, %v7608
      %v7610 = vsel %vm889, %v7525, 0.0
      %v7611 = vadd.f32 %v7609, %v7610
      %v7612 = vsel %vm889, %v7526, 0.0
      %v7613 = vadd.f32 %v7611, %v7612
      %v7614 = vsel %vm889, %v7527, 0.0
      %v7615 = vadd.f32 %v7613, %v7614
      %v7616 = vsel %vm889, %v7528, 0.0
      %v7617 = vadd.f32 %v7615, %v7616
      %v7618 = vsel %vm889, %v7529, 0.0
      %v7619 = vadd.f32 %v7617, %v7618
      %v7620 = vsel %vm889, %v7530, 0.0
      %v7621 = vadd.f32 %v7619, %v7620
      %v7622 = vsel %vm889, %v7531, 0.0
      %v7623 = vadd.f32 %v7621, %v7622
      %v7624 = vsel %vm889, %v7532, 0.0
      %v7625 = vadd.f32 %v7623, %v7624
      %v7626 = vsel %vm889, %v7533, 0.0
      %v7627 = vadd.f32 %v7625, %v7626
      %v7628 = vsel %vm889, %v7534, 0.0
      %v7629 = vadd.f32 %v7627, %v7628
      %v7630 = vrot.slane %v7629, 4
      %v7631 = vadd.f32 %v7629, %v7630
      %v7632 = vrot.slane %v7631, 2
      %v7633 = vadd.f32 %v7631, %v7632
      %v7634 = vrot.slane %v7633, 1
      %v7635 = vadd.f32 %v7633, %v7634
      %v7636 = vmul.f32 %v7438, %v7438
      %v7637 = vmul.f32 %v7439, %v7439
      %v7638 = vmul.f32 %v7440, %v7440
      %v7639 = vmul.f32 %v7441, %v7441
      %v7640 = vmul.f32 %v7442, %v7442
      %v7641 = vmul.f32 %v7443, %v7443
      %v7642 = vmul.f32 %v7444, %v7444
      %v7643 = vmul.f32 %v7445, %v7445
      %v7644 = vmul.f32 %v7446, %v7446
      %v7645 = vmul.f32 %v7447, %v7447
      %v7646 = vmul.f32 %v7448, %v7448
      %v7647 = vmul.f32 %v7449, %v7449
      %v7648 = vmul.f32 %v7450, %v7450
      %v7649 = vmul.f32 %v7451, %v7451
      %v7650 = vmul.f32 %v7452, %v7452
      %v7651 = vmul.f32 %v7453, %v7453
      %v7652 = vmul.f32 %v7454, %v7454
      %v7653 = vmul.f32 %v7455, %v7455
      %v7654 = vmul.f32 %v7456, %v7456
      %v7655 = vmul.f32 %v7457, %v7457
      %v7656 = vmul.f32 %v7458, %v7458
      %v7657 = vmul.f32 %v7459, %v7459
      %v7658 = vmul.f32 %v7460, %v7460
      %v7659 = vmul.f32 %v7461, %v7461
      %v7660 = vmul.f32 %v7462, %v7462
      %v7661 = vmul.f32 %v7463, %v7463
      %v7662 = vmul.f32 %v7464, %v7464
      %v7663 = vmul.f32 %v7465, %v7465
      %v7664 = vmul.f32 %v7466, %v7466
      %v7665 = vmul.f32 %v7467, %v7467
      %v7666 = vmul.f32 %v7468, %v7468
      %v7667 = vmul.f32 %v7469, %v7469
      %v7668 = vmul.f32 %v7470, %v7470
      %v7669 = vmul.f32 %v7471, %v7471
      %v7670 = vmul.f32 %v7472, %v7472
      %v7671 = vmul.f32 %v7473, %v7473
      %v7672 = vmul.f32 %v7474, %v7474
      %v7673 = vmul.f32 %v7475, %v7475
      %v7674 = vmul.f32 %v7476, %v7476
      %v7675 = vmul.f32 %v7477, %v7477
      %v7676 = vmul.f32 %v7478, %v7478
      %v7677 = vmul.f32 %v7479, %v7479
      %v7678 = vmul.f32 %v7480, %v7480
      %v7679 = vmul.f32 %v7481, %v7481
      %v7680 = vmul.f32 %v7482, %v7482
      %v7681 = vmul.f32 %v7483, %v7483
      %v7682 = vmul.f32 %v7484, %v7484
      %v7683 = vmul.f32 %v7485, %v7485
      %v7684 = vmul.f32 %v7486, %v7486
      %vm7734 = vcmask 1040384
      %v7735 = vrot.slane %v7636, 7
      %v7736 = vrot.slane %v7637, 7
      %v7737 = vsel %vm7734, %v7735, %v7736
      %v7738 = vrot.slane %v7638, 7
      %v7739 = vsel %vm7734, %v7736, %v7738
      %v7740 = vrot.slane %v7639, 7
      %v7741 = vsel %vm7734, %v7738, %v7740
      %v7742 = vrot.slane %v7640, 7
      %v7743 = vsel %vm7734, %v7740, %v7742
      %v7744 = vrot.slane %v7641, 7
      %v7745 = vsel %vm7734, %v7742, %v7744
      %v7746 = vrot.slane %v7642, 7
      %v7747 = vsel %vm7734, %v7744, %v7746
      %v7748 = vrot.slane %v7643, 7
      %v7749 = vsel %vm7734, %v7746, %v7748
      %v7750 = vrot.slane %v7644, 7
      %v7751 = vsel %vm7734, %v7748, %v7750
      %v7752 = vrot.slane %v7645, 7
      %v7753 = vsel %vm7734, %v7750, %v7752
      %v7754 = vrot.slane %v7646, 7
      %v7755 = vsel %vm7734, %v7752, %v7754
      %v7756 = vrot.slane %v7647, 7
      %v7757 = vsel %vm7734, %v7754, %v7756
      %v7758 = vrot.slane %v7648, 7
      %v7759 = vsel %vm7734, %v7756, %v7758
      %v7760 = vrot.slane %v7649, 7
      %v7761 = vsel %vm7734, %v7758, %v7760
      %v7762 = vrot.slane %v7650, 7
      %v7763 = vsel %vm7734, %v7760, %v7762
      %v7764 = vrot.slane %v7651, 7
      %v7765 = vsel %vm7734, %v7762, %v7764
      %v7766 = vrot.slane %v7652, 7
      %v7767 = vsel %vm7734, %v7764, %v7766
      %v7768 = vrot.slane %v7653, 7
      %v7769 = vsel %vm7734, %v7766, %v7768
      %v7770 = vrot.slane %v7654, 7
      %v7771 = vsel %vm7734, %v7768, %v7770
      %v7772 = vrot.slane %v7655, 7
      %v7773 = vsel %vm7734, %v7770, %v7772
      %v7774 = vrot.slane %v7656, 7
      %v7775 = vsel %vm7734, %v7772, %v7774
      %v7776 = vrot.slane %v7657, 7
      %v7777 = vsel %vm7734, %v7774, %v7776
      %v7778 = vrot.slane %v7658, 7
      %v7779 = vsel %vm7734, %v7776, %v7778
      %v7780 = vrot.slane %v7659, 7
      %v7781 = vsel %vm7734, %v7778, %v7780
      %v7782 = vrot.slane %v7660, 7
      %v7783 = vsel %vm7734, %v7780, %v7782
      %v7784 = vrot.slane %v7661, 7
      %v7785 = vsel %vm7734, %v7782, %v7784
      %v7786 = vrot.slane %v7662, 7
      %v7787 = vsel %vm7734, %v7784, %v7786
      %v7788 = vrot.slane %v7663, 7
      %v7789 = vsel %vm7734, %v7786, %v7788
      %v7790 = vrot.slane %v7664, 7
      %v7791 = vsel %vm7734, %v7788, %v7790
      %v7792 = vrot.slane %v7665, 7
      %v7793 = vsel %vm7734, %v7790, %v7792
      %v7794 = vrot.slane %v7666, 7
      %v7795 = vsel %vm7734, %v7792, %v7794
      %v7796 = vrot.slane %v7667, 7
      %v7797 = vsel %vm7734, %v7794, %v7796
      %v7798 = vrot.slane %v7668, 7
      %v7799 = vsel %vm7734, %v7796, %v7798
      %v7800 = vrot.slane %v7669, 7
      %v7801 = vsel %vm7734, %v7798, %v7800
      %v7802 = vrot.slane %v7670, 7
      %v7803 = vsel %vm7734, %v7800, %v7802
      %v7804 = vrot.slane %v7671, 7
      %v7805 = vsel %vm7734, %v7802, %v7804
      %v7806 = vrot.slane %v7672, 7
      %v7807 = vsel %vm7734, %v7804, %v7806
      %v7808 = vrot.slane %v7673, 7
      %v7809 = vsel %vm7734, %v7806, %v7808
      %v7810 = vrot.slane %v7674, 7
      %v7811 = vsel %vm7734, %v7808, %v7810
      %v7812 = vrot.slane %v7675, 7
      %v7813 = vsel %vm7734, %v7810, %v7812
      %v7814 = vrot.slane %v7676, 7
      %v7815 = vsel %vm7734, %v7812, %v7814
      %v7816 = vrot.slane %v7677, 7
      %v7817 = vsel %vm7734, %v7814, %v7816
      %v7818 = vrot.slane %v7678, 7
      %v7819 = vsel %vm7734, %v7816, %v7818
      %v7820 = vrot.slane %v7679, 7
      %v7821 = vsel %vm7734, %v7818, %v7820
      %v7822 = vrot.slane %v7680, 7
      %v7823 = vsel %vm7734, %v7820, %v7822
      %v7824 = vrot.slane %v7681, 7
      %v7825 = vsel %vm7734, %v7822, %v7824
      %v7826 = vrot.slane %v7682, 7
      %v7827 = vsel %vm7734, %v7824, %v7826
      %v7828 = vrot.slane %v7683, 7
      %v7829 = vsel %vm7734, %v7826, %v7828
      %v7830 = vrot.slane %v7684, 7
      %v7831 = vsel %vm7734, %v7828, %v7830
      %v7880 = vsel %vm889, %v7737, 0.0
      %v7881 = vsel %vm889, %v7739, 0.0
      %v7882 = vadd.f32 %v7880, %v7881
      %v7883 = vsel %vm889, %v7741, 0.0
      %v7884 = vadd.f32 %v7882, %v7883
      %v7885 = vsel %vm889, %v7743, 0.0
      %v7886 = vadd.f32 %v7884, %v7885
      %v7887 = vsel %vm889, %v7745, 0.0
      %v7888 = vadd.f32 %v7886, %v7887
      %v7889 = vsel %vm889, %v7747, 0.0
      %v7890 = vadd.f32 %v7888, %v7889
      %v7891 = vsel %vm889, %v7749, 0.0
      %v7892 = vadd.f32 %v7890, %v7891
      %v7893 = vsel %vm889, %v7751, 0.0
      %v7894 = vadd.f32 %v7892, %v7893
      %v7895 = vsel %vm889, %v7753, 0.0
      %v7896 = vadd.f32 %v7894, %v7895
      %v7897 = vsel %vm889, %v7755, 0.0
      %v7898 = vadd.f32 %v7896, %v7897
      %v7899 = vsel %vm889, %v7757, 0.0
      %v7900 = vadd.f32 %v7898, %v7899
      %v7901 = vsel %vm889, %v7759, 0.0
      %v7902 = vadd.f32 %v7900, %v7901
      %v7903 = vsel %vm889, %v7761, 0.0
      %v7904 = vadd.f32 %v7902, %v7903
      %v7905 = vsel %vm889, %v7763, 0.0
      %v7906 = vadd.f32 %v7904, %v7905
      %v7907 = vsel %vm889, %v7765, 0.0
      %v7908 = vadd.f32 %v7906, %v7907
      %v7909 = vsel %vm889, %v7767, 0.0
      %v7910 = vadd.f32 %v7908, %v7909
      %v7911 = vsel %vm889, %v7769, 0.0
      %v7912 = vadd.f32 %v7910, %v7911
      %v7913 = vsel %vm889, %v7771, 0.0
      %v7914 = vadd.f32 %v7912, %v7913
      %v7915 = vsel %vm889, %v7773, 0.0
      %v7916 = vadd.f32 %v7914, %v7915
      %v7917 = vsel %vm889, %v7775, 0.0
      %v7918 = vadd.f32 %v7916, %v7917
      %v7919 = vsel %vm889, %v7777, 0.0
      %v7920 = vadd.f32 %v7918, %v7919
      %v7921 = vsel %vm889, %v7779, 0.0
      %v7922 = vadd.f32 %v7920, %v7921
      %v7923 = vsel %vm889, %v7781, 0.0
      %v7924 = vadd.f32 %v7922, %v7923
      %v7925 = vsel %vm889, %v7783, 0.0
      %v7926 = vadd.f32 %v7924, %v7925
      %v7927 = vsel %vm889, %v7785, 0.0
      %v7928 = vadd.f32 %v7926, %v7927
      %v7929 = vsel %vm889, %v7787, 0.0
      %v7930 = vadd.f32 %v7928, %v7929
      %v7931 = vsel %vm889, %v7789, 0.0
      %v7932 = vadd.f32 %v7930, %v7931
      %v7933 = vsel %vm889, %v7791, 0.0
      %v7934 = vadd.f32 %v7932, %v7933
      %v7935 = vsel %vm889, %v7793, 0.0
      %v7936 = vadd.f32 %v7934, %v7935
      %v7937 = vsel %vm889, %v7795, 0.0
      %v7938 = vadd.f32 %v7936, %v7937
      %v7939 = vsel %vm889, %v7797, 0.0
      %v7940 = vadd.f32 %v7938, %v7939
      %v7941 = vsel %vm889, %v7799, 0.0
      %v7942 = vadd.f32 %v7940, %v7941
      %v7943 = vsel %vm889, %v7801, 0.0
      %v7944 = vadd.f32 %v7942, %v7943
      %v7945 = vsel %vm889, %v7803, 0.0
      %v7946 = vadd.f32 %v7944, %v7945
      %v7947 = vsel %vm889, %v7805, 0.0
      %v7948 = vadd.f32 %v7946, %v7947
      %v7949 = vsel %vm889, %v7807, 0.0
      %v7950 = vadd.f32 %v7948, %v7949
      %v7951 = vsel %vm889, %v7809, 0.0
      %v7952 = vadd.f32 %v7950, %v7951
      %v7953 = vsel %vm889, %v7811, 0.0
      %v7954 = vadd.f32 %v7952, %v7953
      %v7955 = vsel %vm889, %v7813, 0.0
      %v7956 = vadd.f32 %v7954, %v7955
      %v7957 = vsel %vm889, %v7815, 0.0
      %v7958 = vadd.f32 %v7956, %v7957
      %v7959 = vsel %vm889, %v7817, 0.0
      %v7960 = vadd.f32 %v7958, %v7959
      %v7961 = vsel %vm889, %v7819, 0.0
      %v7962 = vadd.f32 %v7960, %v7961
      %v7963 = vsel %vm889, %v7821, 0.0
      %v7964 = vadd.f32 %v7962, %v7963
      %v7965 = vsel %vm889, %v7823, 0.0
      %v7966 = vadd.f32 %v7964, %v7965
      %v7967 = vsel %vm889, %v7825, 0.0
      %v7968 = vadd.f32 %v7966, %v7967
      %v7969 = vsel %vm889, %v7827, 0.0
      %v7970 = vadd.f32 %v7968, %v7969
      %v7971 = vsel %vm889, %v7829, 0.0
      %v7972 = vadd.f32 %v7970, %v7971
      %v7973 = vsel %vm889, %v7831, 0.0
      %v7974 = vadd.f32 %v7972, %v7973
      %v7975 = vrot.slane %v7974, 4
      %v7976 = vadd.f32 %v7974, %v7975
      %v7977 = vrot.slane %v7976, 2
      %v7978 = vadd.f32 %v7976, %v7977
      %v7979 = vrot.slane %v7978, 1
      %v7980 = vadd.f32 %v7978, %v7979
      %v7981 = vmax.f32 %v7635, 1e-24
      %v7982 = vrsqrt.pop %v7981
      %v7983 = vmul.f32 %v7982, %v7981
      %v7984 = vmul.f32 %v7983, %v7982
      %v7985 = vmul.f32 0.5, %v7984
      %v7986 = vsub.f32 1.5, %v7985
      %v7987 = vmul.f32 %v7982, %v7986
      %vm7988 = vweird.f32 %v7981
      %vm7989 = vweird.f32 %v7982
      %vm7990 = vmor %vm7988, %vm7989
      %v7991 = vsel %vm7990, %v7982, %v7987
      %v7992 = vmax.f32 %v7980, 1e-24
      %v7993 = vrsqrt.pop %v7992
      %v7994 = vmul.f32 %v7993, %v7992
      %v7995 = vmul.f32 %v7994, %v7993
      %v7996 = vmul.f32 0.5, %v7995
      %v7997 = vsub.f32 1.5, %v7996
      %v7998 = vmul.f32 %v7993, %v7997
      %vm7999 = vweird.f32 %v7992
      %vm8000 = vweird.f32 %v7993
      %vm8001 = vmor %vm7999, %vm8000
      %v8002 = vsel %vm8001, %v7993, %v7998
      %v8003 = vld [vmem:[%s0] sm:$0x1]
      %v8004 = vmul.f32 %v7991, %v8003
      %v8005 = vperm.slane %v8004, 0
      %v8006 = vmul.f32 %v4621, %v8005
      %v8007 = vmul.f32 %v4622, %v8005
      %v8008 = vmul.f32 %v4623, %v8005
      %v8009 = vmul.f32 %v4624, %v8005
      %v8010 = vmul.f32 %v4625, %v8005
      %v8011 = vmul.f32 %v4626, %v8005
      %v8012 = vmul.f32 %v4627, %v8005
      %v8013 = vmul.f32 %v4628, %v8005
      %v8014 = vmul.f32 %v4629, %v8005
      %v8015 = vmul.f32 %v4630, %v8005
      %v8016 = vmul.f32 %v4631, %v8005
      %v8017 = vmul.f32 %v4632, %v8005
      %v8018 = vmul.f32 %v4633, %v8005
      %v8019 = vmul.f32 %v4634, %v8005
      %v8020 = vmul.f32 %v4635, %v8005
      %v8021 = vmul.f32 %v4636, %v8005
      %v8022 = vmul.f32 %v4637, %v8005
      %v8023 = vmul.f32 %v4638, %v8005
      %v8024 = vmul.f32 %v4639, %v8005
      %v8025 = vmul.f32 %v4640, %v8005
      %v8026 = vmul.f32 %v4641, %v8005
      %v8027 = vmul.f32 %v4642, %v8005
      %v8028 = vmul.f32 %v4643, %v8005
      %v8029 = vmul.f32 %v4644, %v8005
      %v8030 = vmul.f32 %v4645, %v8005
      %v8031 = vmul.f32 %v4646, %v8005
      %v8032 = vmul.f32 %v4647, %v8005
      %v8033 = vmul.f32 %v4648, %v8005
      %v8034 = vmul.f32 %v4649, %v8005
      %v8035 = vmul.f32 %v4650, %v8005
      %v8036 = vmul.f32 %v4651, %v8005
      %v8037 = vmul.f32 %v4652, %v8005
      %v8038 = vmul.f32 %v4653, %v8005
      %v8039 = vmul.f32 %v4654, %v8005
      %v8040 = vmul.f32 %v4655, %v8005
      %v8041 = vmul.f32 %v4656, %v8005
      %v8042 = vmul.f32 %v4657, %v8005
      %v8043 = vmul.f32 %v4658, %v8005
      %v8044 = vmul.f32 %v4659, %v8005
      %v8045 = vmul.f32 %v4660, %v8005
      %v8046 = vmul.f32 %v4661, %v8005
      %v8047 = vmul.f32 %v4662, %v8005
      %v8048 = vmul.f32 %v4663, %v8005
      %v8049 = vmul.f32 %v4664, %v8005
      %v8050 = vmul.f32 %v4665, %v8005
      %v8051 = vmul.f32 %v4666, %v8005
      %v8052 = vmul.f32 %v4667, %v8005
      %v8053 = vmul.f32 %v4668, %v8005
      %v8054 = vld [vmem:[%s2] sm:$0xf]
      %v8056 = vsel %vm889, %v8054, 0
      %v8059 = vsel %vm889, %v8006, 0
      %v8062 = vsel %vm889, %v8007, 0
      %v8065 = vsel %vm889, %v8008, 0
      %v8068 = vsel %vm889, %v8009, 0
      %v8071 = vsel %vm889, %v8010, 0
      %v8074 = vsel %vm889, %v8011, 0
      %v8077 = vsel %vm889, %v8012, 0
      %v8080 = vsel %vm889, %v8013, 0
      %v8083 = vsel %vm889, %v8014, 0
      %v8086 = vsel %vm889, %v8015, 0
      %v8089 = vsel %vm889, %v8016, 0
      %v8092 = vsel %vm889, %v8017, 0
      %v8095 = vsel %vm889, %v8018, 0
      %v8098 = vsel %vm889, %v8019, 0
      %v8101 = vsel %vm889, %v8020, 0
      %v8104 = vsel %vm889, %v8021, 0
      %v8107 = vsel %vm889, %v8022, 0
      %v8110 = vsel %vm889, %v8023, 0
      %v8113 = vsel %vm889, %v8024, 0
      %v8116 = vsel %vm889, %v8025, 0
      %v8119 = vsel %vm889, %v8026, 0
      %v8122 = vsel %vm889, %v8027, 0
      %v8125 = vsel %vm889, %v8028, 0
      %v8128 = vsel %vm889, %v8029, 0
      %v8131 = vsel %vm889, %v8030, 0
      %v8134 = vsel %vm889, %v8031, 0
      %v8137 = vsel %vm889, %v8032, 0
      %v8140 = vsel %vm889, %v8033, 0
      %v8143 = vsel %vm889, %v8034, 0
      %v8146 = vsel %vm889, %v8035, 0
      %v8149 = vsel %vm889, %v8036, 0
      %v8152 = vsel %vm889, %v8037, 0
      %v8155 = vsel %vm889, %v8038, 0
      %v8158 = vsel %vm889, %v8039, 0
      %v8161 = vsel %vm889, %v8040, 0
      %v8164 = vsel %vm889, %v8041, 0
      %v8167 = vsel %vm889, %v8042, 0
      %v8170 = vsel %vm889, %v8043, 0
      %v8173 = vsel %vm889, %v8044, 0
      %v8176 = vsel %vm889, %v8045, 0
      %v8179 = vsel %vm889, %v8046, 0
      %v8182 = vsel %vm889, %v8047, 0
      %v8185 = vsel %vm889, %v8048, 0
      %v8188 = vsel %vm889, %v8049, 0
      %v8191 = vsel %vm889, %v8050, 0
      %v8194 = vsel %vm889, %v8051, 0
      %v8197 = vsel %vm889, %v8052, 0
      %v8200 = vsel %vm889, %v8053, 0
      %8202 = vmatpush.xpose.msra.mxu0 %v8104
      %8203 = vmatpush.xpose.msra.mxu0 %v8101
      %8204 = vmatpush.xpose.msra.mxu0 %v8098
      %8205 = vmatpush.xpose.msra.mxu0 %v8095
      %8206 = vmatpush.xpose.msra.mxu0 %v8092
      %8207 = vmatpush.xpose.msra.mxu0 %v8089
      %8208 = vmatpush.xpose.msra.mxu0 %v8086
      %8209 = vmatpush.xpose.msra.mxu0 %v8083
      %8210 = vmatpush.xpose.msra.mxu0 %v8080
      %8211 = vmatpush.xpose.msra.mxu0 %v8077
      %8212 = vmatpush.xpose.msra.mxu0 %v8074
      %8213 = vmatpush.xpose.msra.mxu0 %v8071
      %8214 = vmatpush.xpose.msra.mxu0 %v8068
      %8215 = vmatpush.xpose.msra.mxu0 %v8065
      %8216 = vmatpush.xpose.msra.mxu0 %v8062
      %8217 = vmatpush.xpose.msra.mxu0 %v8059
      %8218 = vmatmul.f32.gmra.mxu0 %v8056
      %v8219 = vpop.f32.mrf.mxu0
      %v8220 = vadd.f32 0.0, %v8219
      %8221 = vdwg.mxu0
      %8222 = vmatpush.xpose.msra.mxu0 %v8152
      %8223 = vmatpush.xpose.msra.mxu0 %v8149
      %8224 = vmatpush.xpose.msra.mxu0 %v8146
      %8225 = vmatpush.xpose.msra.mxu0 %v8143
      %8226 = vmatpush.xpose.msra.mxu0 %v8140
      %8227 = vmatpush.xpose.msra.mxu0 %v8137
      %8228 = vmatpush.xpose.msra.mxu0 %v8134
      %8229 = vmatpush.xpose.msra.mxu0 %v8131
      %8230 = vmatpush.xpose.msra.mxu0 %v8128
      %8231 = vmatpush.xpose.msra.mxu0 %v8125
      %8232 = vmatpush.xpose.msra.mxu0 %v8122
      %8233 = vmatpush.xpose.msra.mxu0 %v8119
      %8234 = vmatpush.xpose.msra.mxu0 %v8116
      %8235 = vmatpush.xpose.msra.mxu0 %v8113
      %8236 = vmatpush.xpose.msra.mxu0 %v8110
      %8237 = vmatpush.xpose.msra.mxu0 %v8107
      %8238 = vmatmul.f32.gmra.mxu0 %v8056
      %v8239 = vpop.f32.mrf.mxu0
      %v8240 = vadd.f32 0.0, %v8239
      %8241 = vdwg.mxu0
      %8242 = vmatpush.xpose.msra.mxu0 %v8200
      %8243 = vmatpush.xpose.msra.mxu0 %v8197
      %8244 = vmatpush.xpose.msra.mxu0 %v8194
      %8245 = vmatpush.xpose.msra.mxu0 %v8191
      %8246 = vmatpush.xpose.msra.mxu0 %v8188
      %8247 = vmatpush.xpose.msra.mxu0 %v8185
      %8248 = vmatpush.xpose.msra.mxu0 %v8182
      %8249 = vmatpush.xpose.msra.mxu0 %v8179
      %8250 = vmatpush.xpose.msra.mxu0 %v8176
      %8251 = vmatpush.xpose.msra.mxu0 %v8173
      %8252 = vmatpush.xpose.msra.mxu0 %v8170
      %8253 = vmatpush.xpose.msra.mxu0 %v8167
      %8254 = vmatpush.xpose.msra.mxu0 %v8164
      %8255 = vmatpush.xpose.msra.mxu0 %v8161
      %8256 = vmatpush.xpose.msra.mxu0 %v8158
      %8257 = vmatpush.xpose.msra.mxu0 %v8155
      %8258 = vmatmul.f32.gmra.mxu0 %v8056
      %v8259 = vpop.f32.mrf.mxu0
      %v8260 = vadd.f32 0.0, %v8259
      %8261 = vdwg.mxu0
      %v8311 = vrot.slane %v7438, 7
      %v8312 = vrot.slane %v7439, 7
      %v8313 = vsel %vm7734, %v8311, %v8312
      %v8314 = vrot.slane %v7440, 7
      %v8315 = vsel %vm7734, %v8312, %v8314
      %v8316 = vrot.slane %v7441, 7
      %v8317 = vsel %vm7734, %v8314, %v8316
      %v8318 = vrot.slane %v7442, 7
      %v8319 = vsel %vm7734, %v8316, %v8318
      %v8320 = vrot.slane %v7443, 7
      %v8321 = vsel %vm7734, %v8318, %v8320
      %v8322 = vrot.slane %v7444, 7
      %v8323 = vsel %vm7734, %v8320, %v8322
      %v8324 = vrot.slane %v7445, 7
      %v8325 = vsel %vm7734, %v8322, %v8324
      %v8326 = vrot.slane %v7446, 7
      %v8327 = vsel %vm7734, %v8324, %v8326
      %v8328 = vrot.slane %v7447, 7
      %v8329 = vsel %vm7734, %v8326, %v8328
      %v8330 = vrot.slane %v7448, 7
      %v8331 = vsel %vm7734, %v8328, %v8330
      %v8332 = vrot.slane %v7449, 7
      %v8333 = vsel %vm7734, %v8330, %v8332
      %v8334 = vrot.slane %v7450, 7
      %v8335 = vsel %vm7734, %v8332, %v8334
      %v8336 = vrot.slane %v7451, 7
      %v8337 = vsel %vm7734, %v8334, %v8336
      %v8338 = vrot.slane %v7452, 7
      %v8339 = vsel %vm7734, %v8336, %v8338
      %v8340 = vrot.slane %v7453, 7
      %v8341 = vsel %vm7734, %v8338, %v8340
      %v8342 = vrot.slane %v7454, 7
      %v8343 = vsel %vm7734, %v8340, %v8342
      %v8344 = vrot.slane %v7455, 7
      %v8345 = vsel %vm7734, %v8342, %v8344
      %v8346 = vrot.slane %v7456, 7
      %v8347 = vsel %vm7734, %v8344, %v8346
      %v8348 = vrot.slane %v7457, 7
      %v8349 = vsel %vm7734, %v8346, %v8348
      %v8350 = vrot.slane %v7458, 7
      %v8351 = vsel %vm7734, %v8348, %v8350
      %v8352 = vrot.slane %v7459, 7
      %v8353 = vsel %vm7734, %v8350, %v8352
      %v8354 = vrot.slane %v7460, 7
      %v8355 = vsel %vm7734, %v8352, %v8354
      %v8356 = vrot.slane %v7461, 7
      %v8357 = vsel %vm7734, %v8354, %v8356
      %v8358 = vrot.slane %v7462, 7
      %v8359 = vsel %vm7734, %v8356, %v8358
      %v8360 = vrot.slane %v7463, 7
      %v8361 = vsel %vm7734, %v8358, %v8360
      %v8362 = vrot.slane %v7464, 7
      %v8363 = vsel %vm7734, %v8360, %v8362
      %v8364 = vrot.slane %v7465, 7
      %v8365 = vsel %vm7734, %v8362, %v8364
      %v8366 = vrot.slane %v7466, 7
      %v8367 = vsel %vm7734, %v8364, %v8366
      %v8368 = vrot.slane %v7467, 7
      %v8369 = vsel %vm7734, %v8366, %v8368
      %v8370 = vrot.slane %v7468, 7
      %v8371 = vsel %vm7734, %v8368, %v8370
      %v8372 = vrot.slane %v7469, 7
      %v8373 = vsel %vm7734, %v8370, %v8372
      %v8374 = vrot.slane %v7470, 7
      %v8375 = vsel %vm7734, %v8372, %v8374
      %v8376 = vrot.slane %v7471, 7
      %v8377 = vsel %vm7734, %v8374, %v8376
      %v8378 = vrot.slane %v7472, 7
      %v8379 = vsel %vm7734, %v8376, %v8378
      %v8380 = vrot.slane %v7473, 7
      %v8381 = vsel %vm7734, %v8378, %v8380
      %v8382 = vrot.slane %v7474, 7
      %v8383 = vsel %vm7734, %v8380, %v8382
      %v8384 = vrot.slane %v7475, 7
      %v8385 = vsel %vm7734, %v8382, %v8384
      %v8386 = vrot.slane %v7476, 7
      %v8387 = vsel %vm7734, %v8384, %v8386
      %v8388 = vrot.slane %v7477, 7
      %v8389 = vsel %vm7734, %v8386, %v8388
      %v8390 = vrot.slane %v7478, 7
      %v8391 = vsel %vm7734, %v8388, %v8390
      %v8392 = vrot.slane %v7479, 7
      %v8393 = vsel %vm7734, %v8390, %v8392
      %v8394 = vrot.slane %v7480, 7
      %v8395 = vsel %vm7734, %v8392, %v8394
      %v8396 = vrot.slane %v7481, 7
      %v8397 = vsel %vm7734, %v8394, %v8396
      %v8398 = vrot.slane %v7482, 7
      %v8399 = vsel %vm7734, %v8396, %v8398
      %v8400 = vrot.slane %v7483, 7
      %v8401 = vsel %vm7734, %v8398, %v8400
      %v8402 = vrot.slane %v7484, 7
      %v8403 = vsel %vm7734, %v8400, %v8402
      %v8404 = vrot.slane %v7485, 7
      %v8405 = vsel %vm7734, %v8402, %v8404
      %v8406 = vrot.slane %v7486, 7
      %v8407 = vsel %vm7734, %v8404, %v8406
      %8456 = vmatpush.msra.mxu0 %v8343
      %8457 = vmatpush.msra.mxu0 %v8341
      %8458 = vmatpush.msra.mxu0 %v8339
      %8459 = vmatpush.msra.mxu0 %v8337
      %8460 = vmatpush.msra.mxu0 %v8335
      %8461 = vmatpush.msra.mxu0 %v8333
      %8462 = vmatpush.msra.mxu0 %v8331
      %8463 = vmatpush.msra.mxu0 %v8329
      %8464 = vmatpush.msra.mxu0 %v8327
      %8465 = vmatpush.msra.mxu0 %v8325
      %8466 = vmatpush.msra.mxu0 %v8323
      %8467 = vmatpush.msra.mxu0 %v8321
      %8468 = vmatpush.msra.mxu0 %v8319
      %8469 = vmatpush.msra.mxu0 %v8317
      %8470 = vmatpush.msra.mxu0 %v8315
      %8471 = vmatpush.msra.mxu0 %v8313
      %8472 = vmatmul.f32.gmra.mxu0 %v8220
      %v8473 = vpop.f32.mrf.mxu0
      %v8474 = vadd.f32 0.0, %v8473
      %8475 = vdwg.mxu0
      %8476 = vmatpush.msra.mxu0 %v8375
      %8477 = vmatpush.msra.mxu0 %v8373
      %8478 = vmatpush.msra.mxu0 %v8371
      %8479 = vmatpush.msra.mxu0 %v8369
      %8480 = vmatpush.msra.mxu0 %v8367
      %8481 = vmatpush.msra.mxu0 %v8365
      %8482 = vmatpush.msra.mxu0 %v8363
      %8483 = vmatpush.msra.mxu0 %v8361
      %8484 = vmatpush.msra.mxu0 %v8359
      %8485 = vmatpush.msra.mxu0 %v8357
      %8486 = vmatpush.msra.mxu0 %v8355
      %8487 = vmatpush.msra.mxu0 %v8353
      %8488 = vmatpush.msra.mxu0 %v8351
      %8489 = vmatpush.msra.mxu0 %v8349
      %8490 = vmatpush.msra.mxu0 %v8347
      %8491 = vmatpush.msra.mxu0 %v8345
      %8492 = vmatmul.f32.gmra.mxu0 %v8240
      %v8493 = vpop.f32.mrf.mxu0
      %v8494 = vadd.f32 %v8474, %v8493
      %8495 = vdwg.mxu0
      %8496 = vmatpush.msra.mxu0 %v8407
      %8497 = vmatpush.msra.mxu0 %v8405
      %8498 = vmatpush.msra.mxu0 %v8403
      %8499 = vmatpush.msra.mxu0 %v8401
      %8500 = vmatpush.msra.mxu0 %v8399
      %8501 = vmatpush.msra.mxu0 %v8397
      %8502 = vmatpush.msra.mxu0 %v8395
      %8503 = vmatpush.msra.mxu0 %v8393
      %8504 = vmatpush.msra.mxu0 %v8391
      %8505 = vmatpush.msra.mxu0 %v8389
      %8506 = vmatpush.msra.mxu0 %v8387
      %8507 = vmatpush.msra.mxu0 %v8385
      %8508 = vmatpush.msra.mxu0 %v8383
      %8509 = vmatpush.msra.mxu0 %v8381
      %8510 = vmatpush.msra.mxu0 %v8379
      %8511 = vmatpush.msra.mxu0 %v8377
      %8512 = vmatmul.f32.gmra.mxu0 %v8260
      %v8513 = vpop.f32.mrf.mxu0
      %v8514 = vadd.f32 %v8494, %v8513
      %8515 = vdwg.mxu0
      %v8516 = vmul.f32 %v8514, %v8002
      %v8517 = vld [vmem:[%s1] sm:$0xf]
      %v8518 = vadd.f32 %v8516, %v8517
      %vm8519 = vcmask 27648
      %v8520 = vsel %vm8519, %v8518, -inf
      %8521 = vmax.xlane.f32.xlu0 %v8520
      %v8522 = vpop.xlane.xlu0 %8521
      %v8523 = vsub.f32 %v8518, %v8522
      %v8524 = vmul.f32 %v8523, 1.442695
      %v8525 = vpow.pop %v8524
      %v8526 = vsel %vm8519, %v8525, 0.0
      %8527 = vadd.xlane.f32.xlu0 %v8526
      %v8528 = vpop.xlane.xlu0 %8527
      %v8529 = vrcp.pop %v8528
      %v8530 = vmul.f32 %v8525, %v8529
      %8531 = vrot.lane.b32.xlu0 %v8313, 124
      %v8532 = vpop.permute.xlu0 %8531
      %8533 = vrot.lane.b32.xlu0 %v8315, 124
      %v8534 = vpop.permute.xlu0 %8533
      %8535 = vrot.lane.b32.xlu0 %v8317, 124
      %v8536 = vpop.permute.xlu0 %8535
      %8537 = vrot.lane.b32.xlu0 %v8319, 124
      %v8538 = vpop.permute.xlu0 %8537
      %8539 = vrot.lane.b32.xlu0 %v8321, 124
      %v8540 = vpop.permute.xlu0 %8539
      %8541 = vrot.lane.b32.xlu0 %v8323, 124
      %v8542 = vpop.permute.xlu0 %8541
      %8543 = vrot.lane.b32.xlu0 %v8325, 124
      %v8544 = vpop.permute.xlu0 %8543
      %8545 = vrot.lane.b32.xlu0 %v8327, 124
      %v8546 = vpop.permute.xlu0 %8545
      %8547 = vrot.lane.b32.xlu0 %v8329, 124
      %v8548 = vpop.permute.xlu0 %8547
      %8549 = vrot.lane.b32.xlu0 %v8331, 124
      %v8550 = vpop.permute.xlu0 %8549
      %8551 = vrot.lane.b32.xlu0 %v8333, 124
      %v8552 = vpop.permute.xlu0 %8551
      %8553 = vrot.lane.b32.xlu0 %v8335, 124
      %v8554 = vpop.permute.xlu0 %8553
      %8555 = vrot.lane.b32.xlu0 %v8337, 124
      %v8556 = vpop.permute.xlu0 %8555
      %8557 = vrot.lane.b32.xlu0 %v8339, 124
      %v8558 = vpop.permute.xlu0 %8557
      %8559 = vrot.lane.b32.xlu0 %v8341, 124
      %v8560 = vpop.permute.xlu0 %8559
      %8561 = vrot.lane.b32.xlu0 %v8343, 124
      %v8562 = vpop.permute.xlu0 %8561
      %8563 = vrot.lane.b32.xlu0 %v8345, 124
      %v8564 = vpop.permute.xlu0 %8563
      %8565 = vrot.lane.b32.xlu0 %v8347, 124
      %v8566 = vpop.permute.xlu0 %8565
      %8567 = vrot.lane.b32.xlu0 %v8349, 124
      %v8568 = vpop.permute.xlu0 %8567
      %8569 = vrot.lane.b32.xlu0 %v8351, 124
      %v8570 = vpop.permute.xlu0 %8569
      %8571 = vrot.lane.b32.xlu0 %v8353, 124
      %v8572 = vpop.permute.xlu0 %8571
      %8573 = vrot.lane.b32.xlu0 %v8355, 124
      %v8574 = vpop.permute.xlu0 %8573
      %8575 = vrot.lane.b32.xlu0 %v8357, 124
      %v8576 = vpop.permute.xlu0 %8575
      %8577 = vrot.lane.b32.xlu0 %v8359, 124
      %v8578 = vpop.permute.xlu0 %8577
      %8579 = vrot.lane.b32.xlu0 %v8361, 124
      %v8580 = vpop.permute.xlu0 %8579
      %8581 = vrot.lane.b32.xlu0 %v8363, 124
      %v8582 = vpop.permute.xlu0 %8581
      %8583 = vrot.lane.b32.xlu0 %v8365, 124
      %v8584 = vpop.permute.xlu0 %8583
      %8585 = vrot.lane.b32.xlu0 %v8367, 124
      %v8586 = vpop.permute.xlu0 %8585
      %8587 = vrot.lane.b32.xlu0 %v8369, 124
      %v8588 = vpop.permute.xlu0 %8587
      %8589 = vrot.lane.b32.xlu0 %v8371, 124
      %v8590 = vpop.permute.xlu0 %8589
      %8591 = vrot.lane.b32.xlu0 %v8373, 124
      %v8592 = vpop.permute.xlu0 %8591
      %8593 = vrot.lane.b32.xlu0 %v8375, 124
      %v8594 = vpop.permute.xlu0 %8593
      %8595 = vrot.lane.b32.xlu0 %v8377, 124
      %v8596 = vpop.permute.xlu0 %8595
      %8597 = vrot.lane.b32.xlu0 %v8379, 124
      %v8598 = vpop.permute.xlu0 %8597
      %8599 = vrot.lane.b32.xlu0 %v8381, 124
      %v8600 = vpop.permute.xlu0 %8599
      %8601 = vrot.lane.b32.xlu0 %v8383, 124
      %v8602 = vpop.permute.xlu0 %8601
      %8603 = vrot.lane.b32.xlu0 %v8385, 124
      %v8604 = vpop.permute.xlu0 %8603
      %8605 = vrot.lane.b32.xlu0 %v8387, 124
      %v8606 = vpop.permute.xlu0 %8605
      %8607 = vrot.lane.b32.xlu0 %v8389, 124
      %v8608 = vpop.permute.xlu0 %8607
      %8609 = vrot.lane.b32.xlu0 %v8391, 124
      %v8610 = vpop.permute.xlu0 %8609
      %8611 = vrot.lane.b32.xlu0 %v8393, 124
      %v8612 = vpop.permute.xlu0 %8611
      %8613 = vrot.lane.b32.xlu0 %v8395, 124
      %v8614 = vpop.permute.xlu0 %8613
      %8615 = vrot.lane.b32.xlu0 %v8397, 124
      %v8616 = vpop.permute.xlu0 %8615
      %8617 = vrot.lane.b32.xlu0 %v8399, 124
      %v8618 = vpop.permute.xlu0 %8617
      %8619 = vrot.lane.b32.xlu0 %v8401, 124
      %v8620 = vpop.permute.xlu0 %8619
      %8621 = vrot.lane.b32.xlu0 %v8403, 124
      %v8622 = vpop.permute.xlu0 %8621
      %8623 = vrot.lane.b32.xlu0 %v8405, 124
      %v8624 = vpop.permute.xlu0 %8623
      %8625 = vrot.lane.b32.xlu0 %v8407, 124
      %v8626 = vpop.permute.xlu0 %8625
      %v8627 = vsel %vm889, %v8532, 0
      %v8629 = vsel %vm889, %v8534, 0
      %v8631 = vsel %vm889, %v8536, 0
      %v8633 = vsel %vm889, %v8538, 0
      %v8635 = vsel %vm889, %v8540, 0
      %v8637 = vsel %vm889, %v8542, 0
      %v8639 = vsel %vm889, %v8544, 0
      %v8641 = vsel %vm889, %v8546, 0
      %v8643 = vsel %vm889, %v8548, 0
      %v8645 = vsel %vm889, %v8550, 0
      %v8647 = vsel %vm889, %v8552, 0
      %v8649 = vsel %vm889, %v8554, 0
      %v8651 = vsel %vm889, %v8556, 0
      %v8653 = vsel %vm889, %v8558, 0
      %v8655 = vsel %vm889, %v8560, 0
      %v8657 = vsel %vm889, %v8562, 0
      %v8659 = vsel %vm889, %v8564, 0
      %v8661 = vsel %vm889, %v8566, 0
      %v8663 = vsel %vm889, %v8568, 0
      %v8665 = vsel %vm889, %v8570, 0
      %v8667 = vsel %vm889, %v8572, 0
      %v8669 = vsel %vm889, %v8574, 0
      %v8671 = vsel %vm889, %v8576, 0
      %v8673 = vsel %vm889, %v8578, 0
      %v8675 = vsel %vm889, %v8580, 0
      %v8677 = vsel %vm889, %v8582, 0
      %v8679 = vsel %vm889, %v8584, 0
      %v8681 = vsel %vm889, %v8586, 0
      %v8683 = vsel %vm889, %v8588, 0
      %v8685 = vsel %vm889, %v8590, 0
      %v8687 = vsel %vm889, %v8592, 0
      %v8689 = vsel %vm889, %v8594, 0
      %v8691 = vsel %vm889, %v8596, 0
      %v8693 = vsel %vm889, %v8598, 0
      %v8695 = vsel %vm889, %v8600, 0
      %v8697 = vsel %vm889, %v8602, 0
      %v8699 = vsel %vm889, %v8604, 0
      %v8701 = vsel %vm889, %v8606, 0
      %v8703 = vsel %vm889, %v8608, 0
      %v8705 = vsel %vm889, %v8610, 0
      %v8707 = vsel %vm889, %v8612, 0
      %v8709 = vsel %vm889, %v8614, 0
      %v8711 = vsel %vm889, %v8616, 0
      %v8713 = vsel %vm889, %v8618, 0
      %v8715 = vsel %vm889, %v8620, 0
      %v8717 = vsel %vm889, %v8622, 0
      %v8719 = vsel %vm889, %v8624, 0
      %v8721 = vsel %vm889, %v8626, 0
      %v8724 = vsel %vm889, %v8530, 0
      %8726 = vmatpush.xpose.msra.mxu0 0.0
      %8727 = vmatpush.xpose.msra.mxu0 0.0
      %8728 = vmatpush.xpose.msra.mxu0 0.0
      %8729 = vmatpush.xpose.msra.mxu0 0.0
      %8730 = vmatpush.xpose.msra.mxu0 0.0
      %8731 = vmatpush.xpose.msra.mxu0 0.0
      %8732 = vmatpush.xpose.msra.mxu0 0.0
      %8733 = vmatpush.xpose.msra.mxu0 0.0
      %8734 = vmatpush.xpose.msra.mxu0 0.0
      %8735 = vmatpush.xpose.msra.mxu0 0.0
      %8736 = vmatpush.xpose.msra.mxu0 0.0
      %8737 = vmatpush.xpose.msra.mxu0 0.0
      %8738 = vmatpush.xpose.msra.mxu0 0.0
      %8739 = vmatpush.xpose.msra.mxu0 0.0
      %8740 = vmatpush.xpose.msra.mxu0 0.0
      %8741 = vmatpush.xpose.msra.mxu0 %v8724
      %8742 = vmatmul.f32.gmra.mxu0 %v8627
      %v8743 = vpop.f32.mrf.mxu0
      %v8744 = vadd.f32 0.0, %v8743
      %8745 = vmatmul.f32.gmra.mxu0 %v8629
      %v8746 = vpop.f32.mrf.mxu0
      %v8747 = vadd.f32 0.0, %v8746
      %8748 = vmatmul.f32.gmra.mxu0 %v8631
      %v8749 = vpop.f32.mrf.mxu0
      %v8750 = vadd.f32 0.0, %v8749
      %8751 = vmatmul.f32.gmra.mxu0 %v8633
      %v8752 = vpop.f32.mrf.mxu0
      %v8753 = vadd.f32 0.0, %v8752
      %8754 = vmatmul.f32.gmra.mxu0 %v8635
      %v8755 = vpop.f32.mrf.mxu0
      %v8756 = vadd.f32 0.0, %v8755
      %8757 = vmatmul.f32.gmra.mxu0 %v8637
      %v8758 = vpop.f32.mrf.mxu0
      %v8759 = vadd.f32 0.0, %v8758
      %8760 = vmatmul.f32.gmra.mxu0 %v8639
      %v8761 = vpop.f32.mrf.mxu0
      %v8762 = vadd.f32 0.0, %v8761
      %8763 = vmatmul.f32.gmra.mxu0 %v8641
      %v8764 = vpop.f32.mrf.mxu0
      %v8765 = vadd.f32 0.0, %v8764
      %8766 = vmatmul.f32.gmra.mxu0 %v8643
      %v8767 = vpop.f32.mrf.mxu0
      %v8768 = vadd.f32 0.0, %v8767
      %8769 = vmatmul.f32.gmra.mxu0 %v8645
      %v8770 = vpop.f32.mrf.mxu0
      %v8771 = vadd.f32 0.0, %v8770
      %8772 = vmatmul.f32.gmra.mxu0 %v8647
      %v8773 = vpop.f32.mrf.mxu0
      %v8774 = vadd.f32 0.0, %v8773
      %8775 = vmatmul.f32.gmra.mxu0 %v8649
      %v8776 = vpop.f32.mrf.mxu0
      %v8777 = vadd.f32 0.0, %v8776
      %8778 = vmatmul.f32.gmra.mxu0 %v8651
      %v8779 = vpop.f32.mrf.mxu0
      %v8780 = vadd.f32 0.0, %v8779
      %8781 = vmatmul.f32.gmra.mxu0 %v8653
      %v8782 = vpop.f32.mrf.mxu0
      %v8783 = vadd.f32 0.0, %v8782
      %8784 = vmatmul.f32.gmra.mxu0 %v8655
      %v8785 = vpop.f32.mrf.mxu0
      %v8786 = vadd.f32 0.0, %v8785
      %8787 = vmatmul.f32.gmra.mxu0 %v8657
      %v8788 = vpop.f32.mrf.mxu0
      %v8789 = vadd.f32 0.0, %v8788
      %8790 = vmatmul.f32.gmra.mxu0 %v8659
      %v8791 = vpop.f32.mrf.mxu0
      %v8792 = vadd.f32 0.0, %v8791
      %8793 = vmatmul.f32.gmra.mxu0 %v8661
      %v8794 = vpop.f32.mrf.mxu0
      %v8795 = vadd.f32 0.0, %v8794
      %8796 = vmatmul.f32.gmra.mxu0 %v8663
      %v8797 = vpop.f32.mrf.mxu0
      %v8798 = vadd.f32 0.0, %v8797
      %8799 = vmatmul.f32.gmra.mxu0 %v8665
      %v8800 = vpop.f32.mrf.mxu0
      %v8801 = vadd.f32 0.0, %v8800
      %8802 = vmatmul.f32.gmra.mxu0 %v8667
      %v8803 = vpop.f32.mrf.mxu0
      %v8804 = vadd.f32 0.0, %v8803
      %8805 = vmatmul.f32.gmra.mxu0 %v8669
      %v8806 = vpop.f32.mrf.mxu0
      %v8807 = vadd.f32 0.0, %v8806
      %8808 = vmatmul.f32.gmra.mxu0 %v8671
      %v8809 = vpop.f32.mrf.mxu0
      %v8810 = vadd.f32 0.0, %v8809
      %8811 = vmatmul.f32.gmra.mxu0 %v8673
      %v8812 = vpop.f32.mrf.mxu0
      %v8813 = vadd.f32 0.0, %v8812
      %8814 = vmatmul.f32.gmra.mxu0 %v8675
      %v8815 = vpop.f32.mrf.mxu0
      %v8816 = vadd.f32 0.0, %v8815
      %8817 = vmatmul.f32.gmra.mxu0 %v8677
      %v8818 = vpop.f32.mrf.mxu0
      %v8819 = vadd.f32 0.0, %v8818
      %8820 = vmatmul.f32.gmra.mxu0 %v8679
      %v8821 = vpop.f32.mrf.mxu0
      %v8822 = vadd.f32 0.0, %v8821
      %8823 = vmatmul.f32.gmra.mxu0 %v8681
      %v8824 = vpop.f32.mrf.mxu0
      %v8825 = vadd.f32 0.0, %v8824
      %8826 = vmatmul.f32.gmra.mxu0 %v8683
      %v8827 = vpop.f32.mrf.mxu0
      %v8828 = vadd.f32 0.0, %v8827
      %8829 = vmatmul.f32.gmra.mxu0 %v8685
      %v8830 = vpop.f32.mrf.mxu0
      %v8831 = vadd.f32 0.0, %v8830
      %8832 = vmatmul.f32.gmra.mxu0 %v8687
      %v8833 = vpop.f32.mrf.mxu0
      %v8834 = vadd.f32 0.0, %v8833
      %8835 = vmatmul.f32.gmra.mxu0 %v8689
      %v8836 = vpop.f32.mrf.mxu0
      %v8837 = vadd.f32 0.0, %v8836
      %8838 = vmatmul.f32.gmra.mxu0 %v8691
      %v8839 = vpop.f32.mrf.mxu0
      %v8840 = vadd.f32 0.0, %v8839
      %8841 = vmatmul.f32.gmra.mxu0 %v8693
      %v8842 = vpop.f32.mrf.mxu0
      %v8843 = vadd.f32 0.0, %v8842
      %8844 = vmatmul.f32.gmra.mxu0 %v8695
      %v8845 = vpop.f32.mrf.mxu0
      %v8846 = vadd.f32 0.0, %v8845
      %8847 = vmatmul.f32.gmra.mxu0 %v8697
      %v8848 = vpop.f32.mrf.mxu0
      %v8849 = vadd.f32 0.0, %v8848
      %8850 = vmatmul.f32.gmra.mxu0 %v8699
      %v8851 = vpop.f32.mrf.mxu0
      %v8852 = vadd.f32 0.0, %v8851
      %8853 = vmatmul.f32.gmra.mxu0 %v8701
      %v8854 = vpop.f32.mrf.mxu0
      %v8855 = vadd.f32 0.0, %v8854
      %8856 = vmatmul.f32.gmra.mxu0 %v8703
      %v8857 = vpop.f32.mrf.mxu0
      %v8858 = vadd.f32 0.0, %v8857
      %8859 = vmatmul.f32.gmra.mxu0 %v8705
      %v8860 = vpop.f32.mrf.mxu0
      %v8861 = vadd.f32 0.0, %v8860
      %8862 = vmatmul.f32.gmra.mxu0 %v8707
      %v8863 = vpop.f32.mrf.mxu0
      %v8864 = vadd.f32 0.0, %v8863
      %8865 = vmatmul.f32.gmra.mxu0 %v8709
      %v8866 = vpop.f32.mrf.mxu0
      %v8867 = vadd.f32 0.0, %v8866
      %8868 = vmatmul.f32.gmra.mxu0 %v8711
      %v8869 = vpop.f32.mrf.mxu0
      %v8870 = vadd.f32 0.0, %v8869
      %8871 = vmatmul.f32.gmra.mxu0 %v8713
      %v8872 = vpop.f32.mrf.mxu0
      %v8873 = vadd.f32 0.0, %v8872
      %8874 = vmatmul.f32.gmra.mxu0 %v8715
      %v8875 = vpop.f32.mrf.mxu0
      %v8876 = vadd.f32 0.0, %v8875
      %8877 = vmatmul.f32.gmra.mxu0 %v8717
      %v8878 = vpop.f32.mrf.mxu0
      %v8879 = vadd.f32 0.0, %v8878
      %8880 = vmatmul.f32.gmra.mxu0 %v8719
      %v8881 = vpop.f32.mrf.mxu0
      %v8882 = vadd.f32 0.0, %v8881
      %8883 = vmatmul.f32.gmra.mxu0 %v8721
      %v8884 = vpop.f32.mrf.mxu0
      %v8885 = vadd.f32 0.0, %v8884
      %8886 = vdwg.mxu0
      %v8887 = vpack.c.bf16 %v8747, %v8744
      %v8888 = vpack.c.bf16 %v8753, %v8750
      %v8889 = vpack.c.bf16 %v8759, %v8756
      %v8890 = vpack.c.bf16 %v8765, %v8762
      %v8891 = vpack.c.bf16 %v8771, %v8768
      %v8892 = vpack.c.bf16 %v8777, %v8774
      %v8893 = vpack.c.bf16 %v8783, %v8780
      %v8894 = vpack.c.bf16 %v8789, %v8786
      %v8895 = vpack.c.bf16 %v8795, %v8792
      %v8896 = vpack.c.bf16 %v8801, %v8798
      %v8897 = vpack.c.bf16 %v8807, %v8804
      %v8898 = vpack.c.bf16 %v8813, %v8810
      %v8899 = vpack.c.bf16 %v8819, %v8816
      %v8900 = vpack.c.bf16 %v8825, %v8822
      %v8901 = vpack.c.bf16 %v8831, %v8828
      %v8902 = vpack.c.bf16 %v8837, %v8834
      %v8903 = vpack.c.bf16 %v8843, %v8840
      %v8904 = vpack.c.bf16 %v8849, %v8846
      %v8905 = vpack.c.bf16 %v8855, %v8852
      %v8906 = vpack.c.bf16 %v8861, %v8858
      %v8907 = vpack.c.bf16 %v8867, %v8864
      %v8908 = vpack.c.bf16 %v8873, %v8870
      %v8909 = vpack.c.bf16 %v8879, %v8876
      %v8910 = vpack.c.bf16 %v8885, %v8882
      %v8911 = vld [vmem:[%s15] sm:$0x3]
      %v8912 = vld [vmem:[%s16] sm:$0x1]
      %v8914 = vperm.slane %v8912, 0
      %v8917 = vsel %vm889, %v8887, 0
      %v8920 = vsel %vm889, %v8888, 0
      %v8923 = vsel %vm889, %v8889, 0
      %v8926 = vsel %vm889, %v8890, 0
      %v8929 = vsel %vm889, %v8891, 0
      %v8932 = vsel %vm889, %v8892, 0
      %v8935 = vsel %vm889, %v8893, 0
      %v8938 = vsel %vm889, %v8894, 0
      %v8941 = vsel %vm889, %v8895, 0
      %v8944 = vsel %vm889, %v8896, 0
      %v8947 = vsel %vm889, %v8897, 0
      %v8950 = vsel %vm889, %v8898, 0
      %v8953 = vsel %vm889, %v8899, 0
      %v8956 = vsel %vm889, %v8900, 0
      %v8959 = vsel %vm889, %v8901, 0
      %v8962 = vsel %vm889, %v8902, 0
      %v8965 = vsel %vm889, %v8903, 0
      %v8968 = vsel %vm889, %v8904, 0
      %v8971 = vsel %vm889, %v8905, 0
      %v8974 = vsel %vm889, %v8906, 0
      %v8977 = vsel %vm889, %v8907, 0
      %v8980 = vsel %vm889, %v8908, 0
      %v8983 = vsel %vm889, %v8909, 0
      %v8986 = vsel %vm889, %v8910, 0
      %v8989 = vsel %vm980, %v8911, 0
      %8991 = vmatpush.bf16.msra.mxu0 0
      %8992 = vmatpush.bf16.msra.mxu0 0
      %8993 = vmatpush.bf16.msra.mxu0 0
      %8994 = vmatpush.bf16.msra.mxu0 0
      %8995 = vmatpush.bf16.msra.mxu0 0
      %8996 = vmatpush.bf16.msra.mxu0 0
      %8997 = vmatpush.bf16.msra.mxu0 0
      %8998 = vmatpush.bf16.msra.mxu0 %v8989
      %8999 = vmatmul.bf16.gmra.mxu0 %v8917
      %v9000 = vpop.f32.mrf.mxu0
      %v9001 = vadd.f32 %v8914, %v9000
      %v9002 = vpop.f32.mrf.mxu0
      %v9003 = vadd.f32 %v8914, %v9002
      %9004 = vmatmul.bf16.gmra.mxu0 %v8920
      %v9005 = vpop.f32.mrf.mxu0
      %v9006 = vadd.f32 %v8914, %v9005
      %v9007 = vpop.f32.mrf.mxu0
      %v9008 = vadd.f32 %v8914, %v9007
      %9009 = vmatmul.bf16.gmra.mxu0 %v8923
      %v9010 = vpop.f32.mrf.mxu0
      %v9011 = vadd.f32 %v8914, %v9010
      %v9012 = vpop.f32.mrf.mxu0
      %v9013 = vadd.f32 %v8914, %v9012
      %9014 = vmatmul.bf16.gmra.mxu0 %v8926
      %v9015 = vpop.f32.mrf.mxu0
      %v9016 = vadd.f32 %v8914, %v9015
      %v9017 = vpop.f32.mrf.mxu0
      %v9018 = vadd.f32 %v8914, %v9017
      %9019 = vmatmul.bf16.gmra.mxu0 %v8929
      %v9020 = vpop.f32.mrf.mxu0
      %v9021 = vadd.f32 %v8914, %v9020
      %v9022 = vpop.f32.mrf.mxu0
      %v9023 = vadd.f32 %v8914, %v9022
      %9024 = vmatmul.bf16.gmra.mxu0 %v8932
      %v9025 = vpop.f32.mrf.mxu0
      %v9026 = vadd.f32 %v8914, %v9025
      %v9027 = vpop.f32.mrf.mxu0
      %v9028 = vadd.f32 %v8914, %v9027
      %9029 = vmatmul.bf16.gmra.mxu0 %v8935
      %v9030 = vpop.f32.mrf.mxu0
      %v9031 = vadd.f32 %v8914, %v9030
      %v9032 = vpop.f32.mrf.mxu0
      %v9033 = vadd.f32 %v8914, %v9032
      %9034 = vmatmul.bf16.gmra.mxu0 %v8938
      %v9035 = vpop.f32.mrf.mxu0
      %v9036 = vadd.f32 %v8914, %v9035
      %v9037 = vpop.f32.mrf.mxu0
      %v9038 = vadd.f32 %v8914, %v9037
      %9039 = vmatmul.bf16.gmra.mxu0 %v8941
      %v9040 = vpop.f32.mrf.mxu0
      %v9041 = vadd.f32 %v8914, %v9040
      %v9042 = vpop.f32.mrf.mxu0
      %v9043 = vadd.f32 %v8914, %v9042
      %9044 = vmatmul.bf16.gmra.mxu0 %v8944
      %v9045 = vpop.f32.mrf.mxu0
      %v9046 = vadd.f32 %v8914, %v9045
      %v9047 = vpop.f32.mrf.mxu0
      %v9048 = vadd.f32 %v8914, %v9047
      %9049 = vmatmul.bf16.gmra.mxu0 %v8947
      %v9050 = vpop.f32.mrf.mxu0
      %v9051 = vadd.f32 %v8914, %v9050
      %v9052 = vpop.f32.mrf.mxu0
      %v9053 = vadd.f32 %v8914, %v9052
      %9054 = vmatmul.bf16.gmra.mxu0 %v8950
      %v9055 = vpop.f32.mrf.mxu0
      %v9056 = vadd.f32 %v8914, %v9055
      %v9057 = vpop.f32.mrf.mxu0
      %v9058 = vadd.f32 %v8914, %v9057
      %9059 = vmatmul.bf16.gmra.mxu0 %v8953
      %v9060 = vpop.f32.mrf.mxu0
      %v9061 = vadd.f32 %v8914, %v9060
      %v9062 = vpop.f32.mrf.mxu0
      %v9063 = vadd.f32 %v8914, %v9062
      %9064 = vmatmul.bf16.gmra.mxu0 %v8956
      %v9065 = vpop.f32.mrf.mxu0
      %v9066 = vadd.f32 %v8914, %v9065
      %v9067 = vpop.f32.mrf.mxu0
      %v9068 = vadd.f32 %v8914, %v9067
      %9069 = vmatmul.bf16.gmra.mxu0 %v8959
      %v9070 = vpop.f32.mrf.mxu0
      %v9071 = vadd.f32 %v8914, %v9070
      %v9072 = vpop.f32.mrf.mxu0
      %v9073 = vadd.f32 %v8914, %v9072
      %9074 = vmatmul.bf16.gmra.mxu0 %v8962
      %v9075 = vpop.f32.mrf.mxu0
      %v9076 = vadd.f32 %v8914, %v9075
      %v9077 = vpop.f32.mrf.mxu0
      %v9078 = vadd.f32 %v8914, %v9077
      %9079 = vmatmul.bf16.gmra.mxu0 %v8965
      %v9080 = vpop.f32.mrf.mxu0
      %v9081 = vadd.f32 %v8914, %v9080
      %v9082 = vpop.f32.mrf.mxu0
      %v9083 = vadd.f32 %v8914, %v9082
      %9084 = vmatmul.bf16.gmra.mxu0 %v8968
      %v9085 = vpop.f32.mrf.mxu0
      %v9086 = vadd.f32 %v8914, %v9085
      %v9087 = vpop.f32.mrf.mxu0
      %v9088 = vadd.f32 %v8914, %v9087
      %9089 = vmatmul.bf16.gmra.mxu0 %v8971
      %v9090 = vpop.f32.mrf.mxu0
      %v9091 = vadd.f32 %v8914, %v9090
      %v9092 = vpop.f32.mrf.mxu0
      %v9093 = vadd.f32 %v8914, %v9092
      %9094 = vmatmul.bf16.gmra.mxu0 %v8974
      %v9095 = vpop.f32.mrf.mxu0
      %v9096 = vadd.f32 %v8914, %v9095
      %v9097 = vpop.f32.mrf.mxu0
      %v9098 = vadd.f32 %v8914, %v9097
      %9099 = vmatmul.bf16.gmra.mxu0 %v8977
      %v9100 = vpop.f32.mrf.mxu0
      %v9101 = vadd.f32 %v8914, %v9100
      %v9102 = vpop.f32.mrf.mxu0
      %v9103 = vadd.f32 %v8914, %v9102
      %9104 = vmatmul.bf16.gmra.mxu0 %v8980
      %v9105 = vpop.f32.mrf.mxu0
      %v9106 = vadd.f32 %v8914, %v9105
      %v9107 = vpop.f32.mrf.mxu0
      %v9108 = vadd.f32 %v8914, %v9107
      %9109 = vmatmul.bf16.gmra.mxu0 %v8983
      %v9110 = vpop.f32.mrf.mxu0
      %v9111 = vadd.f32 %v8914, %v9110
      %v9112 = vpop.f32.mrf.mxu0
      %v9113 = vadd.f32 %v8914, %v9112
      %9114 = vmatmul.bf16.gmra.mxu0 %v8986
      %v9115 = vpop.f32.mrf.mxu0
      %v9116 = vadd.f32 %v8914, %v9115
      %v9117 = vpop.f32.mrf.mxu0
      %v9118 = vadd.f32 %v8914, %v9117
      %9119 = vdwg.mxu0
      %9120 = vst.msk [vmem:[%s568] sm:$0xff] %vm889, %v9001
      %9121 = vst.msk [vmem:[%s568 + $0x8] sm:$0xff] %vm889, %v9003
      %9122 = vst.msk [vmem:[%s568 + $0x10] sm:$0xff] %vm889, %v9006
      %9123 = vst.msk [vmem:[%s568 + $0x18] sm:$0xff] %vm889, %v9008
      %9124 = vst.msk [vmem:[%s568 + $0x20] sm:$0xff] %vm889, %v9011
      %9125 = vst.msk [vmem:[%s568 + $0x28] sm:$0xff] %vm889, %v9013
      %9126 = vst.msk [vmem:[%s568 + $0x30] sm:$0xff] %vm889, %v9016
      %9127 = vst.msk [vmem:[%s568 + $0x38] sm:$0xff] %vm889, %v9018
      %9128 = vst.msk [vmem:[%s568 + $0x40] sm:$0xff] %vm889, %v9021
      %9129 = vst.msk [vmem:[%s568 + $0x48] sm:$0xff] %vm889, %v9023
      %9130 = vst.msk [vmem:[%s568 + $0x50] sm:$0xff] %vm889, %v9026
      %9131 = vst.msk [vmem:[%s568 + $0x58] sm:$0xff] %vm889, %v9028
      %9132 = vst.msk [vmem:[%s568 + $0x60] sm:$0xff] %vm889, %v9031
      %9133 = vst.msk [vmem:[%s568 + $0x68] sm:$0xff] %vm889, %v9033
      %9134 = vst.msk [vmem:[%s568 + $0x70] sm:$0xff] %vm889, %v9036
      %9135 = vst.msk [vmem:[%s568 + $0x78] sm:$0xff] %vm889, %v9038
      %9136 = vst.msk [vmem:[%s568 + $0x80] sm:$0xff] %vm889, %v9041
      %9137 = vst.msk [vmem:[%s568 + $0x88] sm:$0xff] %vm889, %v9043
      %9138 = vst.msk [vmem:[%s568 + $0x90] sm:$0xff] %vm889, %v9046
      %9139 = vst.msk [vmem:[%s568 + $0x98] sm:$0xff] %vm889, %v9048
      %9140 = vst.msk [vmem:[%s568 + $0xa0] sm:$0xff] %vm889, %v9051
      %9141 = vst.msk [vmem:[%s568 + $0xa8] sm:$0xff] %vm889, %v9053
      %9142 = vst.msk [vmem:[%s568 + $0xb0] sm:$0xff] %vm889, %v9056
      %9143 = vst.msk [vmem:[%s568 + $0xb8] sm:$0xff] %vm889, %v9058
      %9144 = vst.msk [vmem:[%s568 + $0xc0] sm:$0xff] %vm889, %v9061
      %9145 = vst.msk [vmem:[%s568 + $0xc8] sm:$0xff] %vm889, %v9063
      %9146 = vst.msk [vmem:[%s568 + $0xd0] sm:$0xff] %vm889, %v9066
      %9147 = vst.msk [vmem:[%s568 + $0xd8] sm:$0xff] %vm889, %v9068
      %9148 = vst.msk [vmem:[%s568 + $0xe0] sm:$0xff] %vm889, %v9071
      %9149 = vst.msk [vmem:[%s568 + $0xe8] sm:$0xff] %vm889, %v9073
      %9150 = vst.msk [vmem:[%s568 + $0xf0] sm:$0xff] %vm889, %v9076
      %9151 = vst.msk [vmem:[%s568 + $0xf8] sm:$0xff] %vm889, %v9078
      %9152 = vst.msk [vmem:[%s568 + $0x100] sm:$0xff] %vm889, %v9081
      %9153 = vst.msk [vmem:[%s568 + $0x108] sm:$0xff] %vm889, %v9083
      %9154 = vst.msk [vmem:[%s568 + $0x110] sm:$0xff] %vm889, %v9086
      %9155 = vst.msk [vmem:[%s568 + $0x118] sm:$0xff] %vm889, %v9088
      %9156 = vst.msk [vmem:[%s568 + $0x120] sm:$0xff] %vm889, %v9091
      %9157 = vst.msk [vmem:[%s568 + $0x128] sm:$0xff] %vm889, %v9093
      %9158 = vst.msk [vmem:[%s568 + $0x130] sm:$0xff] %vm889, %v9096
      %9159 = vst.msk [vmem:[%s568 + $0x138] sm:$0xff] %vm889, %v9098
      %9160 = vst.msk [vmem:[%s568 + $0x140] sm:$0xff] %vm889, %v9101
      %9161 = vst.msk [vmem:[%s568 + $0x148] sm:$0xff] %vm889, %v9103
      %9162 = vst.msk [vmem:[%s568 + $0x150] sm:$0xff] %vm889, %v9106
      %9163 = vst.msk [vmem:[%s568 + $0x158] sm:$0xff] %vm889, %v9108
      %9164 = vst.msk [vmem:[%s568 + $0x160] sm:$0xff] %vm889, %v9111
      %9165 = vst.msk [vmem:[%s568 + $0x168] sm:$0xff] %vm889, %v9113
      %9166 = vst.msk [vmem:[%s568 + $0x170] sm:$0xff] %vm889, %v9116
      %9167 = vst.msk [vmem:[%s568 + $0x178] sm:$0xff] %vm889, %v9118
      %p9168 = scmp.lt.s32.totalorder %s28, 1
      %s9169 = scalar_select %p9168, %s28, 1
      %s9170 = smul.addr %s9169, 48
      %s9171 = smul.addr %s9170, 8
      %s9172 = scalar_lea.vmem %s17, %s9171
      // Predicated region
      $region89: #{cross_attention.1} parent=87 // pred_check
        %p9173 = pneg %p413
      $region90: #{cross_attention.1} parent=87 // pred_check_branch
        %9175 = sbr.rel (%p9173) target = $region92
      $region91: #{cross_attention.1} parent=87 // pred_region
        _
      $region92: #{cross_attention.1} parent=87 // pred_fallthru
        _
    $region88: #{cross_attention.1} parent=5 // pred_fallthru
      _
    %p9176 = scmp.le.s32.totalorder 2, %s23
    // Predicated region
    $region93: #{cross_attention.1} parent=5 // pred_check
      %p9177 = pneg %p9176
    $region94: #{cross_attention.1} parent=5 // pred_check_branch
      %9179 = sbr.rel (%p9177) target = $region96
    $region95: #{cross_attention.1} parent=5 // pred_region
      %s9180 = ssub.s32 %s23, 2
      // Predicated region
      $region97: #{cross_attention.1} parent=95 // pred_check
        %p9181 = pneg %p419
      $region98: #{cross_attention.1} parent=95 // pred_check_branch
        %9183 = sbr.rel (%p9181) target = $region100
      $region99: #{cross_attention.1} parent=95 // pred_region
        %p9184 = scmp.lt.s32.totalorder %s29, 1
        %s9185 = scalar_select %p9184, %s29, 1
        %s9186 = smul.addr %s9185, 48
        %s9187 = smul.addr %s9186, 8
        %s9188 = scalar_lea.vmem %s17, %s9187
      $region100: #{cross_attention.1} parent=95 // pred_fallthru
        _
    $region96: #{cross_attention.1} parent=5 // pred_fallthru
      _
  $region6: #{cross_attention.1} parent=0 // loop_footer
    %s27 = sadd.s32 1, %s23
  $region7: #{cross_attention.1} parent=0 // loop_footer_branch
    %22 = sbr.rel target = $region3
  $region8: #{cross_attention.1} parent=0 // loop_exit
    _

</llo_original>
